<compile_context>
chip_gen: v7x
topology: tpu7x:2x2x1
jax: 0.10.0
libtpu: 0.0.40
codegen_flags: <defaults>
</compile_context>

<pallas_src>
import jax
import jax.numpy as jnp
from jax.experimental import pallas as pl
from jax.experimental.pallas import tpu as pltpu

D_FEAT = 768          # per-input feature width (feature_type=0)
HIDDEN = 768
OUT = 2
OUT_PAD = 128         # lane-dense padded logit width


def _mlp_kernel(x_ref, y_ref, w1x_ref, w1y_ref, b1_ref, w2_ref, b2_ref, o_ref):
    # Layer 1 on the concatenated features; concat fused as two bf16 MXU
    # matmuls with f32 accumulation:  [x|y] @ W1 == x @ W1x + y @ W1y.
    h = jnp.dot(x_ref[...], w1x_ref[...], preferred_element_type=jnp.float32)
    h = h + jnp.dot(y_ref[...], w1y_ref[...], preferred_element_type=jnp.float32)
    h = h + b1_ref[...]                 # (1, H) f32 bias broadcasts over batch
    h = jnp.maximum(h, 0.0)             # ReLU in f32
    # Layer 2 -> lane-dense padded logits (first OUT columns are the real ones).
    o = jnp.dot(h.astype(jnp.bfloat16), w2_ref[...],
                preferred_element_type=jnp.float32)
    o_ref[...] = (o + b2_ref[...]).astype(o_ref.dtype)


def _pick_batch_tile(B, tile_b):
    """Largest batch tile <= tile_b that divides B and is layout-friendly,
    while keeping >= 2 grid steps for v7x's two TensorCores when B allows."""
    TB = min(tile_b, B)
    if B % TB != 0 or (TB != B and TB % 8 != 0):
        TB = B
        cand = (min(tile_b, B) // 8) * 8
        while cand >= 8:
            if B % cand == 0:
                TB = cand
                break
            cand -= 8
    # The batch axis is the only "parallel" grid axis: keep the grid >= 2 (and
    # even) when feasible so both v7x TensorCores get work.
    if B // TB < 2 and B >= 16 and (B // 2) % 8 == 0:
        TB = B // 2
    return TB


def _build_call(B, D, H, OP, TB, out_dtype, single_buffer_weights):
    # Resident operands (constant index_map) don't need a second pipeline
    # buffer; single-buffering them saves ~2.6 MB VMEM.
    resident_kwargs = (
        dict(pipeline_mode=pl.Buffered(1)) if single_buffer_weights else {}
    )
    grid = (B // TB,)
    cost = pl.CostEstimate(
        flops=2 * B * (2 * D) * H + 2 * B * H * OP,
        transcendentals=0,
        bytes_accessed=(2 * B * D * 2                 # x, y activations (bf16)
                        + (2 * D * H + H * OP) * 2    # bf16 weights
                        + (H + OP) * 4                # f32 biases
                        + B * OP * 2),                # bf16 padded output
    )
    return pl.pallas_call(
        _mlp_kernel,
        out_shape=jax.ShapeDtypeStruct((B, OP), out_dtype),
        grid_spec=pltpu.PrefetchScalarGridSpec(
            num_scalar_prefetch=0,
            grid=grid,
            in_specs=[
                pl.BlockSpec((TB, D), lambda i: (i, 0)),    # x tile (pipelined)
                pl.BlockSpec((TB, D), lambda i: (i, 0)),    # y tile (pipelined)
                pl.BlockSpec((D, H), lambda i: (0, 0), **resident_kwargs),   # W1x
                pl.BlockSpec((D, H), lambda i: (0, 0), **resident_kwargs),   # W1y
                pl.BlockSpec((1, H), lambda i: (0, 0), **resident_kwargs),   # b1
                pl.BlockSpec((H, OP), lambda i: (0, 0), **resident_kwargs),  # W2 (padded)
                pl.BlockSpec((1, OP), lambda i: (0, 0), **resident_kwargs),  # b2 (padded)
            ],
            out_specs=pl.BlockSpec((TB, OP), lambda i: (i, 0)),
        ),
        compiler_params=pltpu.CompilerParams(
            dimension_semantics=("parallel",),           # batch tiles split across TCs
            vmem_limit_bytes=48 * 1024 * 1024,           # fits v7x's 64 MiB with headroom
        ),
        cost_estimate=cost,
    )


def net_forward(x, y, params, *, out_features=OUT, tile_b=512):
    """x, y: (B, 768), ideally bfloat16. Returns (B, out_features) bf16 logits."""
    w1x, w1y, b1, w2p, b2p = params
    B, D = x.shape
    H = w1x.shape[1]
    OP = w2p.shape[1]
    assert y.shape == (B, D) and w1x.shape[0] == D and w1y.shape[0] == D

    # TODO(synk): the bf16 cast belongs in the producer of x/y (emit/store the
    # activations in bf16 upstream); this fallback only keeps f32 callers working.
    if x.dtype != jnp.bfloat16:
        x = x.astype(jnp.bfloat16)
    if y.dtype != jnp.bfloat16:
        y = y.astype(jnp.bfloat16)

    TB = _pick_batch_tile(B, tile_b)

    try:
        out_padded = _build_call(B, D, H, OP, TB, jnp.bfloat16, True)(
            x, y, w1x, w1y, b1, w2p, b2p)
    except Exception:
        # Fallback for Pallas builds without single-buffer pipeline_mode support.
        out_padded = _build_call(B, D, H, OP, TB, jnp.bfloat16, False)(
            x, y, w1x, w1y, b1, w2p, b2p)

    return out_padded[:, :out_features]


def init_params(key, in_size=2 * D_FEAT, hidden=HIDDEN, out=OUT, out_pad=OUT_PAD):
    """Deterministic init mimicking nn.Linear's uniform(-1/sqrt(fan_in), 1/sqrt(fan_in)).

    Weights stored bf16 (kernel-ready), biases f32.  W2/b2 zero-padded to
    `out_pad` columns for a lane-dense output store.
    """
    k1, k2, k3, k4 = jax.random.split(key, 4)
    bound1 = 1.0 / jnp.sqrt(in_size).astype(jnp.float32)
    bound2 = 1.0 / jnp.sqrt(hidden).astype(jnp.float32)
    w1 = jax.random.uniform(k1, (in_size, hidden), jnp.float32, -bound1, bound1)
    b1 = jax.random.uniform(k2, (1, hidden), jnp.float32, -bound1, bound1)
    w2 = jax.random.uniform(k3, (hidden, out), jnp.float32, -bound2, bound2)
    b2 = jax.random.uniform(k4, (1, out), jnp.float32, -bound2, bound2)

    # torch.cat((x, y), 1) @ W1  ==  x @ W1[:768] + y @ W1[768:]
    w1x = w1[: in_size // 2].astype(jnp.bfloat16)
    w1y = w1[in_size // 2:].astype(jnp.bfloat16)

    w2p = jnp.zeros((hidden, out_pad), jnp.float32).at[:, :out].set(w2)
    w2p = w2p.astype(jnp.bfloat16)
    b2p = jnp.zeros((1, out_pad), jnp.float32).at[:, :out].set(b2)

    return (w1x, w1y, b1, w2p, b2p)


if __name__ == "__main__":
    key = jax.random.PRNGKey(0)
    kx, ky, kp = jax.random.split(key, 3)

    B, D = 64, D_FEAT                       # feature_type=0 -> x, y each (B, 768)
    x = jax.random.normal(kx, (B, D), jnp.bfloat16)   # producer emits bf16
    y = jax.random.normal(ky, (B, D), jnp.bfloat16)
    params = init_params(kp)

    out = net_forward(x, y, params)         # picks TB=32 -> grid=(2,), both TCs busy
    out = jax.block_until_ready(out)
    assert out.shape == (B, OUT)

    # True-f32 reference: full-precision math over the stored parameters and
    # the same bf16 activations -> validates the bf16-operand / f32-accumulate
    # kernel against f32 semantics (not just a same-recipe reference).
    w1x, w1y, b1, w2p, b2p = params
    a = jnp.concatenate([x, y], axis=1).astype(jnp.float32)
    w1 = jnp.concatenate([w1x, w1y], axis=0).astype(jnp.float32)
    h = jnp.maximum(a @ w1 + b1, 0.0)
    ref = (h @ w2p.astype(jnp.float32) + b2p)[:, :OUT]

    assert jnp.allclose(out.astype(jnp.float32), ref, atol=3e-2, rtol=3e-2)

    print("KERNEL_OK")
</pallas_src>

<mosaic_0001>
module attributes {stable_mosaic.version = 11 : i64} {
  func.func @_mlp_kernel(%arg0: i32, %arg1: memref<32x768xbf16, #tpu.memory_space<vmem>>, %arg2: memref<32x768xbf16, #tpu.memory_space<vmem>>, %arg3: memref<768x768xbf16, #tpu.memory_space<vmem>>, %arg4: memref<768x768xbf16, #tpu.memory_space<vmem>>, %arg5: memref<1x768xf32, #tpu.memory_space<vmem>>, %arg6: memref<768x128xbf16, #tpu.memory_space<vmem>>, %arg7: memref<1x128xf32, #tpu.memory_space<vmem>>, %arg8: memref<32x128xbf16, #tpu.memory_space<vmem>>) attributes {dimension_semantics = [#tpu.dimension_semantics<parallel>], iteration_bounds = array<i64: 2>, scalar_prefetch = 0 : i64, scratch_operands = 0 : i64, tpu.core_type = #tpu.core_type<tc>, window_params = [{transform_indices = @transform_0, window_bounds = array<i64: 32, 768>}, {transform_indices = @transform_1, window_bounds = array<i64: 32, 768>}, {pipeline_mode = #tpu.pipeline_mode<synchronous>, transform_indices = @transform_2, window_bounds = array<i64: 768, 768>}, {pipeline_mode = #tpu.pipeline_mode<synchronous>, transform_indices = @transform_3, window_bounds = array<i64: 768, 768>}, {pipeline_mode = #tpu.pipeline_mode<synchronous>, transform_indices = @transform_4, window_bounds = array<i64: 1, 768>}, {pipeline_mode = #tpu.pipeline_mode<synchronous>, transform_indices = @transform_5, window_bounds = array<i64: 768, 128>}, {pipeline_mode = #tpu.pipeline_mode<synchronous>, transform_indices = @transform_6, window_bounds = array<i64: 1, 128>}, {transform_indices = @transform_7, window_bounds = array<i64: 32, 128>}]} {
    %c0 = arith.constant 0 : index
    %c0_0 = arith.constant 0 : index
    %0 = vector.load %arg1[%c0, %c0_0] : memref<32x768xbf16, #tpu.memory_space<vmem>>, vector<32x768xbf16>
    %c0_1 = arith.constant 0 : index
    %c0_2 = arith.constant 0 : index
    %1 = vector.load %arg3[%c0_1, %c0_2] : memref<768x768xbf16, #tpu.memory_space<vmem>>, vector<768x768xbf16>
    %cst = arith.constant dense<0.000000e+00> : vector<32x768xf32>
    %2 = tpu.matmul %0, %1, %cst {dimension_numbers = #tpu.dot_dimension_numbers<[1], [0], [0], [1], [0, 0, 1, 1], [], []>} : vector<32x768xbf16>, vector<768x768xbf16>, vector<32x768xf32> -> vector<32x768xf32>
    %c0_3 = arith.constant 0 : index
    %c0_4 = arith.constant 0 : index
    %3 = vector.load %arg2[%c0_3, %c0_4] : memref<32x768xbf16, #tpu.memory_space<vmem>>, vector<32x768xbf16>
    %c0_5 = arith.constant 0 : index
    %c0_6 = arith.constant 0 : index
    %4 = vector.load %arg4[%c0_5, %c0_6] : memref<768x768xbf16, #tpu.memory_space<vmem>>, vector<768x768xbf16>
    %cst_7 = arith.constant dense<0.000000e+00> : vector<32x768xf32>
    %5 = tpu.matmul %3, %4, %cst_7 {dimension_numbers = #tpu.dot_dimension_numbers<[1], [0], [0], [1], [0, 0, 1, 1], [], []>} : vector<32x768xbf16>, vector<768x768xbf16>, vector<32x768xf32> -> vector<32x768xf32>
    %6 = arith.addf %2, %5 : vector<32x768xf32>
    %c0_8 = arith.constant 0 : index
    %c0_9 = arith.constant 0 : index
    %7 = vector.load %arg5[%c0_8, %c0_9] : memref<1x768xf32, #tpu.memory_space<vmem>>, vector<1x768xf32>
    %8 = vector.broadcast %7 : vector<1x768xf32> to vector<32x768xf32>
    %9 = arith.addf %6, %8 : vector<32x768xf32>
    %cst_10 = arith.constant 0.000000e+00 : f32
    %10 = vector.broadcast %cst_10 : f32 to vector<32x768xf32>
    %11 = arith.maximumf %9, %10 : vector<32x768xf32>
    %12 = arith.truncf %11 : vector<32x768xf32> to vector<32x768xbf16>
    %c0_11 = arith.constant 0 : index
    %c0_12 = arith.constant 0 : index
    %13 = vector.load %arg6[%c0_11, %c0_12] : memref<768x128xbf16, #tpu.memory_space<vmem>>, vector<768x128xbf16>
    %cst_13 = arith.constant dense<0.000000e+00> : vector<32x128xf32>
    %14 = tpu.matmul %12, %13, %cst_13 {dimension_numbers = #tpu.dot_dimension_numbers<[1], [0], [0], [1], [0, 0, 1, 1], [], []>} : vector<32x768xbf16>, vector<768x128xbf16>, vector<32x128xf32> -> vector<32x128xf32>
    %c0_14 = arith.constant 0 : index
    %c0_15 = arith.constant 0 : index
    %15 = vector.load %arg7[%c0_14, %c0_15] : memref<1x128xf32, #tpu.memory_space<vmem>>, vector<1x128xf32>
    %16 = vector.broadcast %15 : vector<1x128xf32> to vector<32x128xf32>
    %17 = arith.addf %14, %16 : vector<32x128xf32>
    %18 = arith.truncf %17 : vector<32x128xf32> to vector<32x128xbf16>
    %c0_16 = arith.constant 0 : index
    %c0_17 = arith.constant 0 : index
    %19 = vector.load %arg8[%c0_16, %c0_17] : memref<32x128xbf16, #tpu.memory_space<vmem>>, vector<32x128xbf16>
    tpu.vector_store %arg8[%c0_16, %c0_17], %18 {strides = array<i32>} : memref<32x128xbf16, #tpu.memory_space<vmem>>, vector<32x128xbf16>,
    return
  }
  func.func @transform_0(%arg0: i32) -> (i32, i32) {
    %c0_i32 = arith.constant 0 : i32
    %c0_i32_0 = arith.constant 0 : i32
    return %arg0, %c0_i32 : i32, i32
  }
  func.func @transform_1(%arg0: i32) -> (i32, i32) {
    %c0_i32 = arith.constant 0 : i32
    %c0_i32_0 = arith.constant 0 : i32
    return %arg0, %c0_i32 : i32, i32
  }
  func.func @transform_2(%arg0: i32) -> (i32, i32) {
    %c0_i32 = arith.constant 0 : i32
    %c0_i32_0 = arith.constant 0 : i32
    %c0_i32_1 = arith.constant 0 : i32
    return %c0_i32, %c0_i32_0 : i32, i32
  }
  func.func @transform_3(%arg0: i32) -> (i32, i32) {
    %c0_i32 = arith.constant 0 : i32
    %c0_i32_0 = arith.constant 0 : i32
    %c0_i32_1 = arith.constant 0 : i32
    return %c0_i32, %c0_i32_0 : i32, i32
  }
  func.func @transform_4(%arg0: i32) -> (i32, i32) {
    %c0_i32 = arith.constant 0 : i32
    %c0_i32_0 = arith.constant 0 : i32
    %c0_i32_1 = arith.constant 0 : i32
    return %c0_i32, %c0_i32_0 : i32, i32
  }
  func.func @transform_5(%arg0: i32) -> (i32, i32) {
    %c0_i32 = arith.constant 0 : i32
    %c0_i32_0 = arith.constant 0 : i32
    %c0_i32_1 = arith.constant 0 : i32
    return %c0_i32, %c0_i32_0 : i32, i32
  }
  func.func @transform_6(%arg0: i32) -> (i32, i32) {
    %c0_i32 = arith.constant 0 : i32
    %c0_i32_0 = arith.constant 0 : i32
    %c0_i32_1 = arith.constant 0 : i32
    return %c0_i32, %c0_i32_0 : i32, i32
  }
  func.func @transform_7(%arg0: i32) -> (i32, i32) {
    %c0_i32 = arith.constant 0 : i32
    %c0_i32_0 = arith.constant 0 : i32
    return %arg0, %c0_i32 : i32, i32
  }
}

module attributes {stable_mosaic.version = 11 : i64} {
  func.func @_mlp_kernel(%arg0: i32, %arg1: memref<32x768xbf16, #tpu.memory_space<vmem>>, %arg2: memref<32x768xbf16, #tpu.memory_space<vmem>>, %arg3: memref<768x768xbf16, #tpu.memory_space<vmem>>, %arg4: memref<768x768xbf16, #tpu.memory_space<vmem>>, %arg5: memref<1x768xf32, #tpu.memory_space<vmem>>, %arg6: memref<768x128xbf16, #tpu.memory_space<vmem>>, %arg7: memref<1x128xf32, #tpu.memory_space<vmem>>, %arg8: memref<32x128xbf16, #tpu.memory_space<vmem>>) attributes {dimension_semantics = [#tpu.dimension_semantics<parallel>], iteration_bounds = array<i64: 2>, scalar_prefetch = 0 : i64, scratch_operands = 0 : i64, tpu.core_type = #tpu.core_type<tc>, window_params = [{transform_indices = @transform_0, window_bounds = array<i64: 32, 768>}, {transform_indices = @transform_1, window_bounds = array<i64: 32, 768>}, {pipeline_mode = #tpu.pipeline_mode<synchronous>, transform_indices = @transform_2, window_bounds = array<i64: 768, 768>}, {pipeline_mode = #tpu.pipeline_mode<synchronous>, transform_indices = @transform_3, window_bounds = array<i64: 768, 768>}, {pipeline_mode = #tpu.pipeline_mode<synchronous>, transform_indices = @transform_4, window_bounds = array<i64: 1, 768>}, {pipeline_mode = #tpu.pipeline_mode<synchronous>, transform_indices = @transform_5, window_bounds = array<i64: 768, 128>}, {pipeline_mode = #tpu.pipeline_mode<synchronous>, transform_indices = @transform_6, window_bounds = array<i64: 1, 128>}, {transform_indices = @transform_7, window_bounds = array<i64: 32, 128>}]} {
    %c0 = arith.constant 0 : index
    %c0_0 = arith.constant 0 : index
    %0 = vector.load %arg1[%c0, %c0_0] : memref<32x768xbf16, #tpu.memory_space<vmem>>, vector<32x768xbf16>
    %c0_1 = arith.constant 0 : index
    %c0_2 = arith.constant 0 : index
    %1 = vector.load %arg3[%c0_1, %c0_2] : memref<768x768xbf16, #tpu.memory_space<vmem>>, vector<768x768xbf16>
    %cst = arith.constant dense<0.000000e+00> : vector<32x768xf32>
    %2 = tpu.matmul %0, %1, %cst {dimension_numbers = #tpu.dot_dimension_numbers<[1], [0], [0], [1], [0, 0, 1, 1], [], []>} : vector<32x768xbf16>, vector<768x768xbf16>, vector<32x768xf32> -> vector<32x768xf32>
    %c0_3 = arith.constant 0 : index
    %c0_4 = arith.constant 0 : index
    %3 = vector.load %arg2[%c0_3, %c0_4] : memref<32x768xbf16, #tpu.memory_space<vmem>>, vector<32x768xbf16>
    %c0_5 = arith.constant 0 : index
    %c0_6 = arith.constant 0 : index
    %4 = vector.load %arg4[%c0_5, %c0_6] : memref<768x768xbf16, #tpu.memory_space<vmem>>, vector<768x768xbf16>
    %cst_7 = arith.constant dense<0.000000e+00> : vector<32x768xf32>
    %5 = tpu.matmul %3, %4, %cst_7 {dimension_numbers = #tpu.dot_dimension_numbers<[1], [0], [0], [1], [0, 0, 1, 1], [], []>} : vector<32x768xbf16>, vector<768x768xbf16>, vector<32x768xf32> -> vector<32x768xf32>
    %6 = arith.addf %2, %5 : vector<32x768xf32>
    %c0_8 = arith.constant 0 : index
    %c0_9 = arith.constant 0 : index
    %7 = vector.load %arg5[%c0_8, %c0_9] : memref<1x768xf32, #tpu.memory_space<vmem>>, vector<1x768xf32>
    %8 = vector.broadcast %7 : vector<1x768xf32> to vector<32x768xf32>
    %9 = arith.addf %6, %8 : vector<32x768xf32>
    %cst_10 = arith.constant 0.000000e+00 : f32
    %10 = vector.broadcast %cst_10 : f32 to vector<32x768xf32>
    %11 = arith.maximumf %9, %10 : vector<32x768xf32>
    %12 = arith.truncf %11 : vector<32x768xf32> to vector<32x768xbf16>
    %c0_11 = arith.constant 0 : index
    %c0_12 = arith.constant 0 : index
    %13 = vector.load %arg6[%c0_11, %c0_12] : memref<768x128xbf16, #tpu.memory_space<vmem>>, vector<768x128xbf16>
    %cst_13 = arith.constant dense<0.000000e+00> : vector<32x128xf32>
    %14 = tpu.matmul %12, %13, %cst_13 {dimension_numbers = #tpu.dot_dimension_numbers<[1], [0], [0], [1], [0, 0, 1, 1], [], []>} : vector<32x768xbf16>, vector<768x128xbf16>, vector<32x128xf32> -> vector<32x128xf32>
    %c0_14 = arith.constant 0 : index
    %c0_15 = arith.constant 0 : index
    %15 = vector.load %arg7[%c0_14, %c0_15] : memref<1x128xf32, #tpu.memory_space<vmem>>, vector<1x128xf32>
    %16 = vector.broadcast %15 : vector<1x128xf32> to vector<32x128xf32>
    %17 = arith.addf %14, %16 : vector<32x128xf32>
    %18 = arith.truncf %17 : vector<32x128xf32> to vector<32x128xbf16>
    %c0_16 = arith.constant 0 : index
    %c0_17 = arith.constant 0 : index
    %19 = vector.load %arg8[%c0_16, %c0_17] : memref<32x128xbf16, #tpu.memory_space<vmem>>, vector<32x128xbf16>
    tpu.vector_store %arg8[%c0_16, %c0_17], %18 {strides = array<i32>} : memref<32x128xbf16, #tpu.memory_space<vmem>>, vector<32x128xbf16>,
    return
  }
  func.func @transform_0(%arg0: i32) -> (i32, i32) {
    %c0_i32 = arith.constant 0 : i32
    %c0_i32_0 = arith.constant 0 : i32
    return %arg0, %c0_i32 : i32, i32
  }
  func.func @transform_1(%arg0: i32) -> (i32, i32) {
    %c0_i32 = arith.constant 0 : i32
    %c0_i32_0 = arith.constant 0 : i32
    return %arg0, %c0_i32 : i32, i32
  }
  func.func @transform_2(%arg0: i32) -> (i32, i32) {
    %c0_i32 = arith.constant 0 : i32
    %c0_i32_0 = arith.constant 0 : i32
    %c0_i32_1 = arith.constant 0 : i32
    return %c0_i32, %c0_i32_0 : i32, i32
  }
  func.func @transform_3(%arg0: i32) -> (i32, i32) {
    %c0_i32 = arith.constant 0 : i32
    %c0_i32_0 = arith.constant 0 : i32
    %c0_i32_1 = arith.constant 0 : i32
    return %c0_i32, %c0_i32_0 : i32, i32
  }
  func.func @transform_4(%arg0: i32) -> (i32, i32) {
    %c0_i32 = arith.constant 0 : i32
    %c0_i32_0 = arith.constant 0 : i32
    %c0_i32_1 = arith.constant 0 : i32
    return %c0_i32, %c0_i32_0 : i32, i32
  }
  func.func @transform_5(%arg0: i32) -> (i32, i32) {
    %c0_i32 = arith.constant 0 : i32
    %c0_i32_0 = arith.constant 0 : i32
    %c0_i32_1 = arith.constant 0 : i32
    return %c0_i32, %c0_i32_0 : i32, i32
  }
  func.func @transform_6(%arg0: i32) -> (i32, i32) {
    %c0_i32 = arith.constant 0 : i32
    %c0_i32_0 = arith.constant 0 : i32
    %c0_i32_1 = arith.constant 0 : i32
    return %c0_i32, %c0_i32_0 : i32, i32
  }
  func.func @transform_7(%arg0: i32) -> (i32, i32) {
    %c0_i32 = arith.constant 0 : i32
    %c0_i32_0 = arith.constant 0 : i32
    return %arg0, %c0_i32 : i32, i32
  }
}

</mosaic_0001>

<llo_original>
// kernel: tpu_custom_call.1
$region0: #{tpu_custom_call.1}
  #allocation0 [shape = 'u32[]', space=smem, size = 0x4, offset = 0x4, fixed_abs, tag = 'smem constant byte address 0x4 - core index']
  #allocation1 [shape = 'u32[144,128]{1,0:T(1,128)}', space=vmem, size = 0x12000, scoped, tag = 'internal scratch']
  %s0 = inlined_call_operand.hbm [shape: bf16[64,768], index: 0, kind: input, shape index: {}]
  %s1 = inlined_call_operand.hbm [shape: bf16[64,768], index: 1, kind: input, shape index: {}]
  %s2 = inlined_call_operand.hbm [shape: bf16[768,768], index: 2, kind: input, shape index: {}]
  %s3 = inlined_call_operand.hbm [shape: bf16[768,768], index: 3, kind: input, shape index: {}]
  %s4 = inlined_call_operand.hbm [shape: f32[1,768], index: 4, kind: input, shape index: {}]
  %s5 = inlined_call_operand.hbm [shape: bf16[768,128], index: 5, kind: input, shape index: {}]
  %s6 = inlined_call_operand.hbm [shape: f32[1,128], index: 6, kind: input, shape index: {}]
  %s7 = inlined_call_operand.hbm [shape: bf16[64,128], index: 7, kind: output, shape index: {}]
  %s8 = sld [smem:[#allocation0]]
  $region89: #{tpu_custom_call.1} parent=0
    _
  %s10 = ssub.s32 1, %s8
  %s11 = scalar_select 0, %s10, %s8
  $region1: #{tpu_custom_call.1} parent=0
    #allocation2 [shape = 'u8[98304]{0}', space=vmem, size = 0x18000, scoped, tag = 'input window, operand 0']
    #allocation3 [shape = 's32[2]{0}', space=sflag, size = 0x8, scoped, tag = 'scoped memory for tpu_custom_call.1']
    #allocation4 [shape = 's32[2]{0}', space=sflag, size = 0x8, scoped, tag = 'scoped memory for tpu_custom_call.1']
    #allocation5 [shape = 'u8[98304]{0}', space=vmem, size = 0x18000, scoped, tag = 'input window, operand 1']
    #allocation6 [shape = 's32[2]{0}', space=sflag, size = 0x8, scoped, tag = 'scoped memory for tpu_custom_call.1']
    #allocation7 [shape = 'u8[1179648]{0}', space=vmem, size = 0x120000, scoped, tag = 'input window, operand 2, single buffered']
    #allocation8 [shape = 'u8[1179648]{0}', space=vmem, size = 0x120000, scoped, tag = 'input window, operand 3, single buffered']
    #allocation9 [shape = 's32[1]{0}', space=sflag, size = 0x4, scoped, tag = 'scoped memory for tpu_custom_call.1']
    #allocation10 [shape = 'u8[3072]{0}', space=vmem, size = 0xc00, scoped, tag = 'input window, operand 4, single buffered']
    #allocation11 [shape = 'u8[196608]{0}', space=vmem, size = 0x30000, scoped, tag = 'input window, operand 5, single buffered']
    #allocation12 [shape = 's32[1]{0}', space=sflag, size = 0x4, scoped, tag = 'scoped memory for tpu_custom_call.1']
    #allocation13 [shape = 'u8[512]{0}', space=vmem, size = 0x400, scoped, tag = 'input window, operand 6, single buffered']
    #allocation14 [shape = 'u8[16384]{0}', space=vmem, size = 0x4000, scoped, tag = 'output window, operand 0']
    %12 = vsyncpa [#allocation3], 0
    %s13 = scalar_lea.sflag [#allocation3], 1
    %14 = vsyncpa %s13, 0
    %15 = vsyncpa [#allocation6], 0
    %s16 = scalar_lea.sflag [#allocation6], 1
    %17 = vsyncpa %s16, 0
    %18 = vsyncpa [#allocation9], 0
    %19 = vsyncpa [#allocation12], 0
    %20 = vsyncpa [#allocation4], 0
    %s21 = scalar_lea.sflag [#allocation4], 1
    %22 = vsyncpa %s21, 0
    loop: start=0, step=1, limit=4
    $region2: #{tpu_custom_call.1} parent=1 // loop_pre_header
      _
    $region3: #{tpu_custom_call.1} parent=1 // loop_header
      %s24 = sphi 0, %s28
      %p25 = scmp.ge.s32.totalorder %s24, 4
      %s34 = sphi 0, %s36
      %s37 = sphi 0, %s34
      %s38 = sphi 0, %s37
      %s54 = sphi 0, %s38
      %s60 = sphi 0, %s62
      %s63 = sphi 0, %s60
      %s64 = sphi 0, %s63
      %s80 = sphi 0, %s64
      %s84 = sphi 0, %s84
      %s86 = sphi 0, %s84
      %s87 = sphi 0, %s86
      %s101 = sphi 0, %s87
      %s105 = sphi 0, %s105
      %s107 = sphi 0, %s105
      %s108 = sphi 0, %s107
      %s122 = sphi 0, %s108
      %s126 = sphi 0, %s126
      %s128 = sphi 0, %s126
      %s129 = sphi 0, %s128
      %s143 = sphi 0, %s129
      %s147 = sphi 0, %s147
      %s149 = sphi 0, %s147
      %s150 = sphi 0, %s149
      %s164 = sphi 0, %s150
      %s168 = sphi 0, %s168
      %s170 = sphi 0, %s168
      %s171 = sphi 0, %s170
      %s185 = sphi 0, %s171
      %s191 = sphi 0, %s193
      %s194 = sphi 0, %s191
      %s195 = sphi 0, %s194
      %s211 = sphi 0, %s195
    $region4: #{tpu_custom_call.1} parent=1 // loop_header_branch
      %27 = sbr.rel (%p25) target = $region8
    $region5: #{tpu_custom_call.1} parent=1 // loop_body
      %s29 = ssub.s32 %s24, 1
      %s30 = ssub.s32 %s24, 2
      %s31 = sadd.s32 %s24, 1
      %s32 = ssub.s32 %s24, %s31
      %p33 = scmp.eq.s32.totalorder %s32, 0
      %s35 = sadd.s32 %s34, 1
      %s36 = scalar_select %p33, %s34, %s35
      %p39 = pneg %p33
      %p40 = scmp.eq.s32.totalorder %s24, 1
      %p41 = por %p39, %p40
      %p42 = scmp.ne.s32.totalorder %s34, %s37
      %p43 = scmp.eq.s32.totalorder %s24, 0
      %p44 = por %p42, %p43
      %p45 = scmp.ne.s32.totalorder %s34, %s37
      %p46 = scmp.eq.s32.totalorder %s29, 1
      %p47 = por %p45, %p46
      %p48 = scmp.ne.s32.totalorder %s37, %s38
      %p49 = scmp.eq.s32.totalorder %s29, 0
      %p50 = por %p48, %p49
      %p51 = scmp.ne.s32.totalorder %s37, %s38
      %p52 = scmp.eq.s32.totalorder %s30, 1
      %p53 = por %p51, %p52
      %p55 = scmp.ne.s32.totalorder %s38, %s54
      %p56 = scmp.eq.s32.totalorder %s30, 0
      %p57 = por %p55, %p56
      %s58 = ssub.s32 %s24, %s31
      %p59 = scmp.eq.s32.totalorder %s58, 0
      %s61 = sadd.s32 %s60, 1
      %s62 = scalar_select %p59, %s60, %s61
      %p65 = pneg %p59
      %p66 = scmp.eq.s32.totalorder %s24, 1
      %p67 = por %p65, %p66
      %p68 = scmp.ne.s32.totalorder %s60, %s63
      %p69 = scmp.eq.s32.totalorder %s24, 0
      %p70 = por %p68, %p69
      %p71 = scmp.ne.s32.totalorder %s60, %s63
      %p72 = scmp.eq.s32.totalorder %s29, 1
      %p73 = por %p71, %p72
      %p74 = scmp.ne.s32.totalorder %s63, %s64
      %p75 = scmp.eq.s32.totalorder %s29, 0
      %p76 = por %p74, %p75
      %p77 = scmp.ne.s32.totalorder %s63, %s64
      %p78 = scmp.eq.s32.totalorder %s30, 1
      %p79 = por %p77, %p78
      %p81 = scmp.ne.s32.totalorder %s64, %s80
      %p82 = scmp.eq.s32.totalorder %s30, 0
      %p83 = por %p81, %p82
      %s85 = sadd.s32 %s84, 1
      %p88 = scmp.eq.s32.totalorder %s24, 1
      %p89 = scmp.ne.s32.totalorder %s84, %s86
      %p90 = scmp.eq.s32.totalorder %s24, 0
      %p91 = por %p89, %p90
      %p92 = scmp.ne.s32.totalorder %s84, %s86
      %p93 = scmp.eq.s32.totalorder %s29, 1
      %p94 = por %p92, %p93
      %p95 = scmp.ne.s32.totalorder %s86, %s87
      %p96 = scmp.eq.s32.totalorder %s29, 0
      %p97 = por %p95, %p96
      %p98 = scmp.ne.s32.totalorder %s86, %s87
      %p99 = scmp.eq.s32.totalorder %s30, 1
      %p100 = por %p98, %p99
      %p102 = scmp.ne.s32.totalorder %s87, %s101
      %p103 = scmp.eq.s32.totalorder %s30, 0
      %p104 = por %p102, %p103
      %s106 = sadd.s32 %s105, 1
      %p109 = scmp.eq.s32.totalorder %s24, 1
      %p110 = scmp.ne.s32.totalorder %s105, %s107
      %p111 = scmp.eq.s32.totalorder %s24, 0
      %p112 = por %p110, %p111
      %p113 = scmp.ne.s32.totalorder %s105, %s107
      %p114 = scmp.eq.s32.totalorder %s29, 1
      %p115 = por %p113, %p114
      %p116 = scmp.ne.s32.totalorder %s107, %s108
      %p117 = scmp.eq.s32.totalorder %s29, 0
      %p118 = por %p116, %p117
      %p119 = scmp.ne.s32.totalorder %s107, %s108
      %p120 = scmp.eq.s32.totalorder %s30, 1
      %p121 = por %p119, %p120
      %p123 = scmp.ne.s32.totalorder %s108, %s122
      %p124 = scmp.eq.s32.totalorder %s30, 0
      %p125 = por %p123, %p124
      %s127 = sadd.s32 %s126, 1
      %p130 = scmp.eq.s32.totalorder %s24, 1
      %p131 = scmp.ne.s32.totalorder %s126, %s128
      %p132 = scmp.eq.s32.totalorder %s24, 0
      %p133 = por %p131, %p132
      %p134 = scmp.ne.s32.totalorder %s126, %s128
      %p135 = scmp.eq.s32.totalorder %s29, 1
      %p136 = por %p134, %p135
      %p137 = scmp.ne.s32.totalorder %s128, %s129
      %p138 = scmp.eq.s32.totalorder %s29, 0
      %p139 = por %p137, %p138
      %p140 = scmp.ne.s32.totalorder %s128, %s129
      %p141 = scmp.eq.s32.totalorder %s30, 1
      %p142 = por %p140, %p141
      %p144 = scmp.ne.s32.totalorder %s129, %s143
      %p145 = scmp.eq.s32.totalorder %s30, 0
      %p146 = por %p144, %p145
      %s148 = sadd.s32 %s147, 1
      %p151 = scmp.eq.s32.totalorder %s24, 1
      %p152 = scmp.ne.s32.totalorder %s147, %s149
      %p153 = scmp.eq.s32.totalorder %s24, 0
      %p154 = por %p152, %p153
      %p155 = scmp.ne.s32.totalorder %s147, %s149
      %p156 = scmp.eq.s32.totalorder %s29, 1
      %p157 = por %p155, %p156
      %p158 = scmp.ne.s32.totalorder %s149, %s150
      %p159 = scmp.eq.s32.totalorder %s29, 0
      %p160 = por %p158, %p159
      %p161 = scmp.ne.s32.totalorder %s149, %s150
      %p162 = scmp.eq.s32.totalorder %s30, 1
      %p163 = por %p161, %p162
      %p165 = scmp.ne.s32.totalorder %s150, %s164
      %p166 = scmp.eq.s32.totalorder %s30, 0
      %p167 = por %p165, %p166
      %s169 = sadd.s32 %s168, 1
      %p172 = scmp.eq.s32.totalorder %s24, 1
      %p173 = scmp.ne.s32.totalorder %s168, %s170
      %p174 = scmp.eq.s32.totalorder %s24, 0
      %p175 = por %p173, %p174
      %p176 = scmp.ne.s32.totalorder %s168, %s170
      %p177 = scmp.eq.s32.totalorder %s29, 1
      %p178 = por %p176, %p177
      %p179 = scmp.ne.s32.totalorder %s170, %s171
      %p180 = scmp.eq.s32.totalorder %s29, 0
      %p181 = por %p179, %p180
      %p182 = scmp.ne.s32.totalorder %s170, %s171
      %p183 = scmp.eq.s32.totalorder %s30, 1
      %p184 = por %p182, %p183
      %p186 = scmp.ne.s32.totalorder %s171, %s185
      %p187 = scmp.eq.s32.totalorder %s30, 0
      %p188 = por %p186, %p187
      %s189 = ssub.s32 %s24, %s31
      %p190 = scmp.eq.s32.totalorder %s189, 0
      %s192 = sadd.s32 %s191, 1
      %s193 = scalar_select %p190, %s191, %s192
      %p196 = pneg %p190
      %p197 = scmp.eq.s32.totalorder %s24, 1
      %p198 = por %p196, %p197
      %p199 = scmp.ne.s32.totalorder %s191, %s194
      %p200 = scmp.eq.s32.totalorder %s24, 0
      %p201 = por %p199, %p200
      %p202 = scmp.ne.s32.totalorder %s191, %s194
      %p203 = scmp.eq.s32.totalorder %s29, 1
      %p204 = por %p202, %p203
      %p205 = scmp.ne.s32.totalorder %s194, %s195
      %p206 = scmp.eq.s32.totalorder %s29, 0
      %p207 = por %p205, %p206
      %p208 = scmp.ne.s32.totalorder %s194, %s195
      %p209 = scmp.eq.s32.totalorder %s30, 1
      %p210 = por %p208, %p209
      %p212 = scmp.ne.s32.totalorder %s195, %s211
      %p213 = scmp.eq.s32.totalorder %s30, 0
      %p214 = por %p212, %p213
      %p215 = scmp.le.s32.totalorder 1, %s24
      %p216 = scmp.lt.s32.totalorder %s24, 3
      %p217 = pnand %p215, %p216
      %p218 = pneg %p217
      // Predicated region
      $region9: #{tpu_custom_call.1} parent=5 // pred_check
        _
      $region10: #{tpu_custom_call.1} parent=5 // pred_check_branch
        %220 = sbr.rel (%p217) target = $region12
      $region11: #{tpu_custom_call.1} parent=5 // pred_region
        %s221 = ssub.s32 %s24, 1
        // Predicated region
        $region13: #{tpu_custom_call.1} parent=11 // pred_check
          %p222 = pneg %p97
        $region14: #{tpu_custom_call.1} parent=11 // pred_check_branch
          %224 = sbr.rel (%p222) target = $region16
        $region15: #{tpu_custom_call.1} parent=11 // pred_region
          %s226 = ssub.s32 36864, 36864
          %227 = vsyncadd [#allocation6], %s226
          %s228 = sshll.u32 [#allocation7], 4
          %s229 = int_to_ptr.vmem [resolvable:$true] %s228
          %234 = dma.hbm_to_vmem [thread:$0]  %s2, 36864, %s229, [#allocation6], 384, 384, 24
        $region16: #{tpu_custom_call.1} parent=11 // pred_fallthru
          _
        // Predicated region
        $region17: #{tpu_custom_call.1} parent=11 // pred_check
          %p235 = pneg %p118
        $region18: #{tpu_custom_call.1} parent=11 // pred_check_branch
          %237 = sbr.rel (%p235) target = $region20
        $region19: #{tpu_custom_call.1} parent=11 // pred_region
          %s239 = ssub.s32 36864, 36864
          %240 = vsyncadd [#allocation9], %s239
          %s241 = sshll.u32 [#allocation8], 4
          %s242 = int_to_ptr.vmem [resolvable:$true] %s241
          %247 = dma.hbm_to_vmem [thread:$0]  %s3, 36864, %s242, [#allocation9], 384, 384, 24
        $region20: #{tpu_custom_call.1} parent=11 // pred_fallthru
          _
        // Predicated region
        $region21: #{tpu_custom_call.1} parent=11 // pred_check
          %p248 = pneg %p139
        $region22: #{tpu_custom_call.1} parent=11 // pred_check_branch
          %250 = sbr.rel (%p248) target = $region24
        $region23: #{tpu_custom_call.1} parent=11 // pred_region
          %s252 = ssub.s32 96, 96
          %253 = vsyncadd [#allocation9], %s252
          %s255 = sshll.u32 [#allocation10], 4
          %s256 = int_to_ptr.vmem [resolvable:$true] %s255
          %258 = dma.hbm_to_vmem [thread:$0]  %s4, 96, %s256, [#allocation9]
        $region24: #{tpu_custom_call.1} parent=11 // pred_fallthru
          _
        // Predicated region
        $region25: #{tpu_custom_call.1} parent=11 // pred_check
          %p259 = pneg %p160
        $region26: #{tpu_custom_call.1} parent=11 // pred_check_branch
          %261 = sbr.rel (%p259) target = $region28
        $region27: #{tpu_custom_call.1} parent=11 // pred_region
          %s263 = ssub.s32 6144, 6144
          %264 = vsyncadd [#allocation12], %s263
          %s265 = sshll.u32 [#allocation11], 4
          %s266 = int_to_ptr.vmem [resolvable:$true] %s265
          %271 = dma.hbm_to_vmem [thread:$0]  %s5, 6144, %s266, [#allocation12], 64, 64, 4
        $region28: #{tpu_custom_call.1} parent=11 // pred_fallthru
          _
        // Predicated region
        $region29: #{tpu_custom_call.1} parent=11 // pred_check
          %p272 = pneg %p181
        $region30: #{tpu_custom_call.1} parent=11 // pred_check_branch
          %274 = sbr.rel (%p272) target = $region32
        $region31: #{tpu_custom_call.1} parent=11 // pred_region
          %s276 = ssub.s32 16, 16
          %277 = vsyncadd [#allocation12], %s276
          %s279 = sshll.u32 [#allocation13], 4
          %s280 = int_to_ptr.vmem [resolvable:$true] %s279
          %282 = dma.hbm_to_vmem [thread:$0]  %s6, 16, %s280, [#allocation12]
        $region32: #{tpu_custom_call.1} parent=11 // pred_fallthru
          _
      $region12: #{tpu_custom_call.1} parent=5 // pred_fallthru
        _
      %p283 = scmp.lt.s32.totalorder %s24, 2
      // Predicated region
      $region33: #{tpu_custom_call.1} parent=5 // pred_check
        %p284 = pneg %p283
      $region34: #{tpu_custom_call.1} parent=5 // pred_check_branch
        %286 = sbr.rel (%p284) target = $region36
      $region35: #{tpu_custom_call.1} parent=5 // pred_region
        // Predicated region
        $region37: #{tpu_custom_call.1} parent=35 // pred_check
          %p287 = pneg %p44
        $region38: #{tpu_custom_call.1} parent=35 // pred_check_branch
          %289 = sbr.rel (%p287) target = $region40
        $region39: #{tpu_custom_call.1} parent=35 // pred_region
          %s290 = sand.u32 %s34, 1
          %s291 = scalar_lea.sflag [#allocation3], %s290
          %s292 = sand.u32 %s34, 1
          %s293 = smul.addr %s292, 96
          %s294 = scalar_lea.vmem [#allocation2], %s293
          %s295 = smul.u32 4, %s24
          %s297 = ssub.s32 1536, 1536
          %298 = vsyncadd %s291, %s297
          %s299 = smul.addr %s295, 6
          %s300 = smul.addr %s299, 64
          %s301 = scalar_lea.hbm %s0, %s300
          %s302 = sshll.u32 %s294, 4
          %s303 = int_to_ptr.vmem [resolvable:$true] %s302
          %308 = dma.hbm_to_vmem [thread:$0]  %s301, 1536, %s303, %s291, 384, 384, 24
        $region40: #{tpu_custom_call.1} parent=35 // pred_fallthru
          _
        // Predicated region
        $region41: #{tpu_custom_call.1} parent=35 // pred_check
          %p309 = pneg %p70
        $region42: #{tpu_custom_call.1} parent=35 // pred_check_branch
          %311 = sbr.rel (%p309) target = $region44
        $region43: #{tpu_custom_call.1} parent=35 // pred_region
          %s312 = sand.u32 %s24, 1
          %s313 = scalar_lea.sflag [#allocation6], %s312
          %s314 = sand.u32 %s60, 1
          %s315 = smul.addr %s314, 96
          %s316 = scalar_lea.vmem [#allocation5], %s315
          %s317 = smul.u32 4, %s24
          %s319 = ssub.s32 1536, 1536
          %320 = vsyncadd %s313, %s319
          %s321 = smul.addr %s317, 6
          %s322 = smul.addr %s321, 64
          %s323 = scalar_lea.hbm %s1, %s322
          %s324 = sshll.u32 %s316, 4
          %s325 = int_to_ptr.vmem [resolvable:$true] %s324
          %330 = dma.hbm_to_vmem [thread:$0]  %s323, 1536, %s325, %s313, 384, 384, 24
        $region44: #{tpu_custom_call.1} parent=35 // pred_fallthru
          _
      $region36: #{tpu_custom_call.1} parent=5 // pred_fallthru
        _
      %p331 = scmp.le.s32.totalorder 1, %s24
      %p332 = scmp.lt.s32.totalorder %s24, 3
      %p333 = pnand %p331, %p332
      %p334 = pneg %p333
      // Predicated region
      $region45: #{tpu_custom_call.1} parent=5 // pred_check
        _
      $region46: #{tpu_custom_call.1} parent=5 // pred_check_branch
        %336 = sbr.rel (%p333) target = $region48
      $region47: #{tpu_custom_call.1} parent=5 // pred_region
        %s337 = ssub.s32 %s24, 1
        %s338 = sand.u32 %s37, 1
        %s339 = scalar_lea.sflag [#allocation3], %s338
        %s340 = sand.u32 %s37, 1
        %s341 = smul.addr %s340, 96
        %s342 = scalar_lea.vmem [#allocation2], %s341
        // Predicated region
        $region49: #{tpu_custom_call.1} parent=47 // pred_check
          %p343 = pneg %p50
        $region50: #{tpu_custom_call.1} parent=47 // pred_check_branch
          %345 = sbr.rel (%p343) target = $region52
        $region51: #{tpu_custom_call.1} parent=47 // pred_region
          %346 = dma.done %s339, 1536
        $region52: #{tpu_custom_call.1} parent=47 // pred_fallthru
          _
        %s347 = sand.u32 %s29, 1
        %s348 = scalar_lea.sflag [#allocation6], %s347
        %s349 = sand.u32 %s63, 1
        %s350 = smul.addr %s349, 96
        %s351 = scalar_lea.vmem [#allocation5], %s350
        // Predicated region
        $region53: #{tpu_custom_call.1} parent=47 // pred_check
          %p352 = pneg %p76
        $region54: #{tpu_custom_call.1} parent=47 // pred_check_branch
          %354 = sbr.rel (%p352) target = $region56
        $region55: #{tpu_custom_call.1} parent=47 // pred_region
          %355 = dma.done %s348, 1536
        $region56: #{tpu_custom_call.1} parent=47 // pred_fallthru
          _
        // Predicated region
        $region57: #{tpu_custom_call.1} parent=47 // pred_check
          %p356 = pneg %p97
        $region58: #{tpu_custom_call.1} parent=47 // pred_check_branch
          %358 = sbr.rel (%p356) target = $region60
        $region59: #{tpu_custom_call.1} parent=47 // pred_region
          %359 = dma.done [#allocation6], 36864
        $region60: #{tpu_custom_call.1} parent=47 // pred_fallthru
          _
        // Predicated region
        $region61: #{tpu_custom_call.1} parent=47 // pred_check
          %p360 = pneg %p118
        $region62: #{tpu_custom_call.1} parent=47 // pred_check_branch
          %362 = sbr.rel (%p360) target = $region64
        $region63: #{tpu_custom_call.1} parent=47 // pred_region
          %363 = dma.done [#allocation9], 36864
        $region64: #{tpu_custom_call.1} parent=47 // pred_fallthru
          _
        // Predicated region
        $region65: #{tpu_custom_call.1} parent=47 // pred_check
          %p364 = pneg %p139
        $region66: #{tpu_custom_call.1} parent=47 // pred_check_branch
          %366 = sbr.rel (%p364) target = $region68
        $region67: #{tpu_custom_call.1} parent=47 // pred_region
          %367 = dma.done [#allocation9], 96
        $region68: #{tpu_custom_call.1} parent=47 // pred_fallthru
          _
        // Predicated region
        $region69: #{tpu_custom_call.1} parent=47 // pred_check
          %p368 = pneg %p160
        $region70: #{tpu_custom_call.1} parent=47 // pred_check_branch
          %370 = sbr.rel (%p368) target = $region72
        $region71: #{tpu_custom_call.1} parent=47 // pred_region
          %371 = dma.done [#allocation12], 6144
        $region72: #{tpu_custom_call.1} parent=47 // pred_fallthru
          _
        // Predicated region
        $region73: #{tpu_custom_call.1} parent=47 // pred_check
          %p372 = pneg %p181
        $region74: #{tpu_custom_call.1} parent=47 // pred_check_branch
          %374 = sbr.rel (%p372) target = $region76
        $region75: #{tpu_custom_call.1} parent=47 // pred_region
          %375 = dma.done [#allocation12], 16
        $region76: #{tpu_custom_call.1} parent=47 // pred_fallthru
          _
        %s376 = sand.u32 %s37, 1
        %s377 = scalar_lea.sflag [#allocation3], %s376
        %s378 = sand.u32 %s37, 1
        %s379 = smul.addr %s378, 96
        %s380 = scalar_lea.vmem [#allocation2], %s379
        %p381 = pneg %p50
        %p382 = pneg %p47
        %s383 = sand.u32 %s29, 1
        %s384 = scalar_lea.sflag [#allocation6], %s383
        %s385 = sand.u32 %s63, 1
        %s386 = smul.addr %s385, 96
        %s387 = scalar_lea.vmem [#allocation5], %s386
        %p388 = pneg %p76
        %p389 = pneg %p73
        %p390 = pneg %p97
        %p391 = pneg %p94
        %p392 = pneg %p118
        %p393 = pneg %p115
        %p394 = pneg %p139
        %p395 = pneg %p136
        %p396 = pneg %p160
        %p397 = pneg %p157
        %p398 = pneg %p181
        %p399 = pneg %p178
        %p400 = pneg %p207
        %p401 = pneg %p204
        %s402 = sand.u32 %s194, 1
        %s403 = scalar_lea.sflag [#allocation4], %s402
        %s404 = sand.u32 %s194, 1
        %s405 = smul.addr %s404, 16
        %s406 = scalar_lea.vmem [#allocation14], %s405
        %s407 = smul.u32 4, %s29
        %s408 = smul.u32 4, %s29
        %s409 = smul.u32 4, %s29
        %v411 = vld [vmem:[%s342] sm:$0xff]
        %v412 = vld [vmem:[%s342 + $0x8] sm:$0xff]
        %v413 = vld [vmem:[%s342 + $0x10] sm:$0xff]
        %v414 = vld [vmem:[%s342 + $0x18] sm:$0xff]
        %v415 = vld [vmem:[%s342 + $0x20] sm:$0xff]
        %v416 = vld [vmem:[%s342 + $0x28] sm:$0xff]
        %v417 = vld [vmem:[%s342 + $0x30] sm:$0xff]
        %v418 = vld [vmem:[%s342 + $0x38] sm:$0xff]
        %v419 = vld [vmem:[%s342 + $0x40] sm:$0xff]
        %v420 = vld [vmem:[%s342 + $0x48] sm:$0xff]
        %v421 = vld [vmem:[%s342 + $0x50] sm:$0xff]
        %v422 = vld [vmem:[%s342 + $0x58] sm:$0xff]
        %v423 = vld [vmem:[#allocation7] sm:$0xff]
        %v424 = vld [vmem:[#allocation7 + $0x8] sm:$0xff]
        %v425 = vld [vmem:[#allocation7 + $0x10] sm:$0xff]
        %v426 = vld [vmem:[#allocation7 + $0x18] sm:$0xff]
        %v427 = vld [vmem:[#allocation7 + $0x20] sm:$0xff]
        %v428 = vld [vmem:[#allocation7 + $0x28] sm:$0xff]
        %v429 = vld [vmem:[#allocation7 + $0x30] sm:$0xff]
        %v430 = vld [vmem:[#allocation7 + $0x38] sm:$0xff]
        %v431 = vld [vmem:[#allocation7 + $0x40] sm:$0xff]
        %v432 = vld [vmem:[#allocation7 + $0x48] sm:$0xff]
        %v433 = vld [vmem:[#allocation7 + $0x50] sm:$0xff]
        %v434 = vld [vmem:[#allocation7 + $0x58] sm:$0xff]
        %v435 = vld [vmem:[#allocation7 + $0x60] sm:$0xff]
        %v436 = vld [vmem:[#allocation7 + $0x68] sm:$0xff]
        %v437 = vld [vmem:[#allocation7 + $0x70] sm:$0xff]
        %v438 = vld [vmem:[#allocation7 + $0x78] sm:$0xff]
        %v439 = vld [vmem:[#allocation7 + $0x80] sm:$0xff]
        %v440 = vld [vmem:[#allocation7 + $0x88] sm:$0xff]
        %v441 = vld [vmem:[#allocation7 + $0x90] sm:$0xff]
        %v442 = vld [vmem:[#allocation7 + $0x98] sm:$0xff]
        %v443 = vld [vmem:[#allocation7 + $0xa0] sm:$0xff]
        %v444 = vld [vmem:[#allocation7 + $0xa8] sm:$0xff]
        %v445 = vld [vmem:[#allocation7 + $0xb0] sm:$0xff]
        %v446 = vld [vmem:[#allocation7 + $0xb8] sm:$0xff]
        %v447 = vld [vmem:[#allocation7 + $0xc0] sm:$0xff]
        %v448 = vld [vmem:[#allocation7 + $0xc8] sm:$0xff]
        %v449 = vld [vmem:[#allocation7 + $0xd0] sm:$0xff]
        %v450 = vld [vmem:[#allocation7 + $0xd8] sm:$0xff]
        %v451 = vld [vmem:[#allocation7 + $0xe0] sm:$0xff]
        %v452 = vld [vmem:[#allocation7 + $0xe8] sm:$0xff]
        %v453 = vld [vmem:[#allocation7 + $0xf0] sm:$0xff]
        %v454 = vld [vmem:[#allocation7 + $0xf8] sm:$0xff]
        %v455 = vld [vmem:[#allocation7 + $0x100] sm:$0xff]
        %v456 = vld [vmem:[#allocation7 + $0x108] sm:$0xff]
        %v457 = vld [vmem:[#allocation7 + $0x110] sm:$0xff]
        %v458 = vld [vmem:[#allocation7 + $0x118] sm:$0xff]
        %v459 = vld [vmem:[#allocation7 + $0x120] sm:$0xff]
        %v460 = vld [vmem:[#allocation7 + $0x128] sm:$0xff]
        %v461 = vld [vmem:[#allocation7 + $0x130] sm:$0xff]
        %v462 = vld [vmem:[#allocation7 + $0x138] sm:$0xff]
        %v463 = vld [vmem:[#allocation7 + $0x140] sm:$0xff]
        %v464 = vld [vmem:[#allocation7 + $0x148] sm:$0xff]
        %v465 = vld [vmem:[#allocation7 + $0x150] sm:$0xff]
        %v466 = vld [vmem:[#allocation7 + $0x158] sm:$0xff]
        %v467 = vld [vmem:[#allocation7 + $0x160] sm:$0xff]
        %v468 = vld [vmem:[#allocation7 + $0x168] sm:$0xff]
        %v469 = vld [vmem:[#allocation7 + $0x170] sm:$0xff]
        %v470 = vld [vmem:[#allocation7 + $0x178] sm:$0xff]
        %v471 = vld [vmem:[#allocation7 + $0x180] sm:$0xff]
        %v472 = vld [vmem:[#allocation7 + $0x188] sm:$0xff]
        %v473 = vld [vmem:[#allocation7 + $0x190] sm:$0xff]
        %v474 = vld [vmem:[#allocation7 + $0x198] sm:$0xff]
        %v475 = vld [vmem:[#allocation7 + $0x1a0] sm:$0xff]
        %v476 = vld [vmem:[#allocation7 + $0x1a8] sm:$0xff]
        %v477 = vld [vmem:[#allocation7 + $0x1b0] sm:$0xff]
        %v478 = vld [vmem:[#allocation7 + $0x1b8] sm:$0xff]
        %v479 = vld [vmem:[#allocation7 + $0x1c0] sm:$0xff]
        %v480 = vld [vmem:[#allocation7 + $0x1c8] sm:$0xff]
        %v481 = vld [vmem:[#allocation7 + $0x1d0] sm:$0xff]
        %v482 = vld [vmem:[#allocation7 + $0x1d8] sm:$0xff]
        %v483 = vld [vmem:[#allocation7 + $0x1e0] sm:$0xff]
        %v484 = vld [vmem:[#allocation7 + $0x1e8] sm:$0xff]
        %v485 = vld [vmem:[#allocation7 + $0x1f0] sm:$0xff]
        %v486 = vld [vmem:[#allocation7 + $0x1f8] sm:$0xff]
        %v487 = vld [vmem:[#allocation7 + $0x200] sm:$0xff]
        %v488 = vld [vmem:[#allocation7 + $0x208] sm:$0xff]
        %v489 = vld [vmem:[#allocation7 + $0x210] sm:$0xff]
        %v490 = vld [vmem:[#allocation7 + $0x218] sm:$0xff]
        %v491 = vld [vmem:[#allocation7 + $0x220] sm:$0xff]
        %v492 = vld [vmem:[#allocation7 + $0x228] sm:$0xff]
        %v493 = vld [vmem:[#allocation7 + $0x230] sm:$0xff]
        %v494 = vld [vmem:[#allocation7 + $0x238] sm:$0xff]
        %v495 = vld [vmem:[#allocation7 + $0x240] sm:$0xff]
        %v496 = vld [vmem:[#allocation7 + $0x248] sm:$0xff]
        %v497 = vld [vmem:[#allocation7 + $0x250] sm:$0xff]
        %v498 = vld [vmem:[#allocation7 + $0x258] sm:$0xff]
        %v499 = vld [vmem:[#allocation7 + $0x260] sm:$0xff]
        %v500 = vld [vmem:[#allocation7 + $0x268] sm:$0xff]
        %v501 = vld [vmem:[#allocation7 + $0x270] sm:$0xff]
        %v502 = vld [vmem:[#allocation7 + $0x278] sm:$0xff]
        %v503 = vld [vmem:[#allocation7 + $0x280] sm:$0xff]
        %v504 = vld [vmem:[#allocation7 + $0x288] sm:$0xff]
        %v505 = vld [vmem:[#allocation7 + $0x290] sm:$0xff]
        %v506 = vld [vmem:[#allocation7 + $0x298] sm:$0xff]
        %v507 = vld [vmem:[#allocation7 + $0x2a0] sm:$0xff]
        %v508 = vld [vmem:[#allocation7 + $0x2a8] sm:$0xff]
        %v509 = vld [vmem:[#allocation7 + $0x2b0] sm:$0xff]
        %v510 = vld [vmem:[#allocation7 + $0x2b8] sm:$0xff]
        %v511 = vld [vmem:[#allocation7 + $0x2c0] sm:$0xff]
        %v512 = vld [vmem:[#allocation7 + $0x2c8] sm:$0xff]
        %v513 = vld [vmem:[#allocation7 + $0x2d0] sm:$0xff]
        %v514 = vld [vmem:[#allocation7 + $0x2d8] sm:$0xff]
        %v515 = vld [vmem:[#allocation7 + $0x2e0] sm:$0xff]
        %v516 = vld [vmem:[#allocation7 + $0x2e8] sm:$0xff]
        %v517 = vld [vmem:[#allocation7 + $0x2f0] sm:$0xff]
        %v518 = vld [vmem:[#allocation7 + $0x2f8] sm:$0xff]
        %v519 = vld [vmem:[#allocation7 + $0x300] sm:$0xff]
        %v520 = vld [vmem:[#allocation7 + $0x308] sm:$0xff]
        %v521 = vld [vmem:[#allocation7 + $0x310] sm:$0xff]
        %v522 = vld [vmem:[#allocation7 + $0x318] sm:$0xff]
        %v523 = vld [vmem:[#allocation7 + $0x320] sm:$0xff]
        %v524 = vld [vmem:[#allocation7 + $0x328] sm:$0xff]
        %v525 = vld [vmem:[#allocation7 + $0x330] sm:$0xff]
        %v526 = vld [vmem:[#allocation7 + $0x338] sm:$0xff]
        %v527 = vld [vmem:[#allocation7 + $0x340] sm:$0xff]
        %v528 = vld [vmem:[#allocation7 + $0x348] sm:$0xff]
        %v529 = vld [vmem:[#allocation7 + $0x350] sm:$0xff]
        %v530 = vld [vmem:[#allocation7 + $0x358] sm:$0xff]
        %v531 = vld [vmem:[#allocation7 + $0x360] sm:$0xff]
        %v532 = vld [vmem:[#allocation7 + $0x368] sm:$0xff]
        %v533 = vld [vmem:[#allocation7 + $0x370] sm:$0xff]
        %v534 = vld [vmem:[#allocation7 + $0x378] sm:$0xff]
        %v535 = vld [vmem:[#allocation7 + $0x380] sm:$0xff]
        %v536 = vld [vmem:[#allocation7 + $0x388] sm:$0xff]
        %v537 = vld [vmem:[#allocation7 + $0x390] sm:$0xff]
        %v538 = vld [vmem:[#allocation7 + $0x398] sm:$0xff]
        %v539 = vld [vmem:[#allocation7 + $0x3a0] sm:$0xff]
        %v540 = vld [vmem:[#allocation7 + $0x3a8] sm:$0xff]
        %v541 = vld [vmem:[#allocation7 + $0x3b0] sm:$0xff]
        %v542 = vld [vmem:[#allocation7 + $0x3b8] sm:$0xff]
        %v543 = vld [vmem:[#allocation7 + $0x3c0] sm:$0xff]
        %v544 = vld [vmem:[#allocation7 + $0x3c8] sm:$0xff]
        %v545 = vld [vmem:[#allocation7 + $0x3d0] sm:$0xff]
        %v546 = vld [vmem:[#allocation7 + $0x3d8] sm:$0xff]
        %v547 = vld [vmem:[#allocation7 + $0x3e0] sm:$0xff]
        %v548 = vld [vmem:[#allocation7 + $0x3e8] sm:$0xff]
        %v549 = vld [vmem:[#allocation7 + $0x3f0] sm:$0xff]
        %v550 = vld [vmem:[#allocation7 + $0x3f8] sm:$0xff]
        %v551 = vld [vmem:[#allocation7 + $0x400] sm:$0xff]
        %v552 = vld [vmem:[#allocation7 + $0x408] sm:$0xff]
        %v553 = vld [vmem:[#allocation7 + $0x410] sm:$0xff]
        %v554 = vld [vmem:[#allocation7 + $0x418] sm:$0xff]
        %v555 = vld [vmem:[#allocation7 + $0x420] sm:$0xff]
        %v556 = vld [vmem:[#allocation7 + $0x428] sm:$0xff]
        %v557 = vld [vmem:[#allocation7 + $0x430] sm:$0xff]
        %v558 = vld [vmem:[#allocation7 + $0x438] sm:$0xff]
        %v559 = vld [vmem:[#allocation7 + $0x440] sm:$0xff]
        %v560 = vld [vmem:[#allocation7 + $0x448] sm:$0xff]
        %v561 = vld [vmem:[#allocation7 + $0x450] sm:$0xff]
        %v562 = vld [vmem:[#allocation7 + $0x458] sm:$0xff]
        %v563 = vld [vmem:[#allocation7 + $0x460] sm:$0xff]
        %v564 = vld [vmem:[#allocation7 + $0x468] sm:$0xff]
        %v565 = vld [vmem:[#allocation7 + $0x470] sm:$0xff]
        %v566 = vld [vmem:[#allocation7 + $0x478] sm:$0xff]
        %v567 = vld [vmem:[#allocation7 + $0x480] sm:$0xff]
        %v568 = vld [vmem:[#allocation7 + $0x488] sm:$0xff]
        %v569 = vld [vmem:[#allocation7 + $0x490] sm:$0xff]
        %v570 = vld [vmem:[#allocation7 + $0x498] sm:$0xff]
        %v571 = vld [vmem:[#allocation7 + $0x4a0] sm:$0xff]
        %v572 = vld [vmem:[#allocation7 + $0x4a8] sm:$0xff]
        %v573 = vld [vmem:[#allocation7 + $0x4b0] sm:$0xff]
        %v574 = vld [vmem:[#allocation7 + $0x4b8] sm:$0xff]
        %v575 = vld [vmem:[#allocation7 + $0x4c0] sm:$0xff]
        %v576 = vld [vmem:[#allocation7 + $0x4c8] sm:$0xff]
        %v577 = vld [vmem:[#allocation7 + $0x4d0] sm:$0xff]
        %v578 = vld [vmem:[#allocation7 + $0x4d8] sm:$0xff]
        %v579 = vld [vmem:[#allocation7 + $0x4e0] sm:$0xff]
        %v580 = vld [vmem:[#allocation7 + $0x4e8] sm:$0xff]
        %v581 = vld [vmem:[#allocation7 + $0x4f0] sm:$0xff]
        %v582 = vld [vmem:[#allocation7 + $0x4f8] sm:$0xff]
        %v583 = vld [vmem:[#allocation7 + $0x500] sm:$0xff]
        %v584 = vld [vmem:[#allocation7 + $0x508] sm:$0xff]
        %v585 = vld [vmem:[#allocation7 + $0x510] sm:$0xff]
        %v586 = vld [vmem:[#allocation7 + $0x518] sm:$0xff]
        %v587 = vld [vmem:[#allocation7 + $0x520] sm:$0xff]
        %v588 = vld [vmem:[#allocation7 + $0x528] sm:$0xff]
        %v589 = vld [vmem:[#allocation7 + $0x530] sm:$0xff]
        %v590 = vld [vmem:[#allocation7 + $0x538] sm:$0xff]
        %v591 = vld [vmem:[#allocation7 + $0x540] sm:$0xff]
        %v592 = vld [vmem:[#allocation7 + $0x548] sm:$0xff]
        %v593 = vld [vmem:[#allocation7 + $0x550] sm:$0xff]
        %v594 = vld [vmem:[#allocation7 + $0x558] sm:$0xff]
        %v595 = vld [vmem:[#allocation7 + $0x560] sm:$0xff]
        %v596 = vld [vmem:[#allocation7 + $0x568] sm:$0xff]
        %v597 = vld [vmem:[#allocation7 + $0x570] sm:$0xff]
        %v598 = vld [vmem:[#allocation7 + $0x578] sm:$0xff]
        %v599 = vld [vmem:[#allocation7 + $0x580] sm:$0xff]
        %v600 = vld [vmem:[#allocation7 + $0x588] sm:$0xff]
        %v601 = vld [vmem:[#allocation7 + $0x590] sm:$0xff]
        %v602 = vld [vmem:[#allocation7 + $0x598] sm:$0xff]
        %v603 = vld [vmem:[#allocation7 + $0x5a0] sm:$0xff]
        %v604 = vld [vmem:[#allocation7 + $0x5a8] sm:$0xff]
        %v605 = vld [vmem:[#allocation7 + $0x5b0] sm:$0xff]
        %v606 = vld [vmem:[#allocation7 + $0x5b8] sm:$0xff]
        %v607 = vld [vmem:[#allocation7 + $0x5c0] sm:$0xff]
        %v608 = vld [vmem:[#allocation7 + $0x5c8] sm:$0xff]
        %v609 = vld [vmem:[#allocation7 + $0x5d0] sm:$0xff]
        %v610 = vld [vmem:[#allocation7 + $0x5d8] sm:$0xff]
        %v611 = vld [vmem:[#allocation7 + $0x5e0] sm:$0xff]
        %v612 = vld [vmem:[#allocation7 + $0x5e8] sm:$0xff]
        %v613 = vld [vmem:[#allocation7 + $0x5f0] sm:$0xff]
        %v614 = vld [vmem:[#allocation7 + $0x5f8] sm:$0xff]
        %v615 = vld [vmem:[#allocation7 + $0x600] sm:$0xff]
        %v616 = vld [vmem:[#allocation7 + $0x608] sm:$0xff]
        %v617 = vld [vmem:[#allocation7 + $0x610] sm:$0xff]
        %v618 = vld [vmem:[#allocation7 + $0x618] sm:$0xff]
        %v619 = vld [vmem:[#allocation7 + $0x620] sm:$0xff]
        %v620 = vld [vmem:[#allocation7 + $0x628] sm:$0xff]
        %v621 = vld [vmem:[#allocation7 + $0x630] sm:$0xff]
        %v622 = vld [vmem:[#allocation7 + $0x638] sm:$0xff]
        %v623 = vld [vmem:[#allocation7 + $0x640] sm:$0xff]
        %v624 = vld [vmem:[#allocation7 + $0x648] sm:$0xff]
        %v625 = vld [vmem:[#allocation7 + $0x650] sm:$0xff]
        %v626 = vld [vmem:[#allocation7 + $0x658] sm:$0xff]
        %v627 = vld [vmem:[#allocation7 + $0x660] sm:$0xff]
        %v628 = vld [vmem:[#allocation7 + $0x668] sm:$0xff]
        %v629 = vld [vmem:[#allocation7 + $0x670] sm:$0xff]
        %v630 = vld [vmem:[#allocation7 + $0x678] sm:$0xff]
        %v631 = vld [vmem:[#allocation7 + $0x680] sm:$0xff]
        %v632 = vld [vmem:[#allocation7 + $0x688] sm:$0xff]
        %v633 = vld [vmem:[#allocation7 + $0x690] sm:$0xff]
        %v634 = vld [vmem:[#allocation7 + $0x698] sm:$0xff]
        %v635 = vld [vmem:[#allocation7 + $0x6a0] sm:$0xff]
        %v636 = vld [vmem:[#allocation7 + $0x6a8] sm:$0xff]
        %v637 = vld [vmem:[#allocation7 + $0x6b0] sm:$0xff]
        %v638 = vld [vmem:[#allocation7 + $0x6b8] sm:$0xff]
        %v639 = vld [vmem:[#allocation7 + $0x6c0] sm:$0xff]
        %v640 = vld [vmem:[#allocation7 + $0x6c8] sm:$0xff]
        %v641 = vld [vmem:[#allocation7 + $0x6d0] sm:$0xff]
        %v642 = vld [vmem:[#allocation7 + $0x6d8] sm:$0xff]
        %v643 = vld [vmem:[#allocation7 + $0x6e0] sm:$0xff]
        %v644 = vld [vmem:[#allocation7 + $0x6e8] sm:$0xff]
        %v645 = vld [vmem:[#allocation7 + $0x6f0] sm:$0xff]
        %v646 = vld [vmem:[#allocation7 + $0x6f8] sm:$0xff]
        %v647 = vld [vmem:[#allocation7 + $0x700] sm:$0xff]
        %v648 = vld [vmem:[#allocation7 + $0x708] sm:$0xff]
        %v649 = vld [vmem:[#allocation7 + $0x710] sm:$0xff]
        %v650 = vld [vmem:[#allocation7 + $0x718] sm:$0xff]
        %v651 = vld [vmem:[#allocation7 + $0x720] sm:$0xff]
        %v652 = vld [vmem:[#allocation7 + $0x728] sm:$0xff]
        %v653 = vld [vmem:[#allocation7 + $0x730] sm:$0xff]
        %v654 = vld [vmem:[#allocation7 + $0x738] sm:$0xff]
        %v655 = vld [vmem:[#allocation7 + $0x740] sm:$0xff]
        %v656 = vld [vmem:[#allocation7 + $0x748] sm:$0xff]
        %v657 = vld [vmem:[#allocation7 + $0x750] sm:$0xff]
        %v658 = vld [vmem:[#allocation7 + $0x758] sm:$0xff]
        %v659 = vld [vmem:[#allocation7 + $0x760] sm:$0xff]
        %v660 = vld [vmem:[#allocation7 + $0x768] sm:$0xff]
        %v661 = vld [vmem:[#allocation7 + $0x770] sm:$0xff]
        %v662 = vld [vmem:[#allocation7 + $0x778] sm:$0xff]
        %v663 = vld [vmem:[#allocation7 + $0x780] sm:$0xff]
        %v664 = vld [vmem:[#allocation7 + $0x788] sm:$0xff]
        %v665 = vld [vmem:[#allocation7 + $0x790] sm:$0xff]
        %v666 = vld [vmem:[#allocation7 + $0x798] sm:$0xff]
        %v667 = vld [vmem:[#allocation7 + $0x7a0] sm:$0xff]
        %v668 = vld [vmem:[#allocation7 + $0x7a8] sm:$0xff]
        %v669 = vld [vmem:[#allocation7 + $0x7b0] sm:$0xff]
        %v670 = vld [vmem:[#allocation7 + $0x7b8] sm:$0xff]
        %v671 = vld [vmem:[#allocation7 + $0x7c0] sm:$0xff]
        %v672 = vld [vmem:[#allocation7 + $0x7c8] sm:$0xff]
        %v673 = vld [vmem:[#allocation7 + $0x7d0] sm:$0xff]
        %v674 = vld [vmem:[#allocation7 + $0x7d8] sm:$0xff]
        %v675 = vld [vmem:[#allocation7 + $0x7e0] sm:$0xff]
        %v676 = vld [vmem:[#allocation7 + $0x7e8] sm:$0xff]
        %v677 = vld [vmem:[#allocation7 + $0x7f0] sm:$0xff]
        %v678 = vld [vmem:[#allocation7 + $0x7f8] sm:$0xff]
        %v679 = vld [vmem:[#allocation7 + $0x800] sm:$0xff]
        %v680 = vld [vmem:[#allocation7 + $0x808] sm:$0xff]
        %v681 = vld [vmem:[#allocation7 + $0x810] sm:$0xff]
        %v682 = vld [vmem:[#allocation7 + $0x818] sm:$0xff]
        %v683 = vld [vmem:[#allocation7 + $0x820] sm:$0xff]
        %v684 = vld [vmem:[#allocation7 + $0x828] sm:$0xff]
        %v685 = vld [vmem:[#allocation7 + $0x830] sm:$0xff]
        %v686 = vld [vmem:[#allocation7 + $0x838] sm:$0xff]
        %v687 = vld [vmem:[#allocation7 + $0x840] sm:$0xff]
        %v688 = vld [vmem:[#allocation7 + $0x848] sm:$0xff]
        %v689 = vld [vmem:[#allocation7 + $0x850] sm:$0xff]
        %v690 = vld [vmem:[#allocation7 + $0x858] sm:$0xff]
        %v691 = vld [vmem:[#allocation7 + $0x860] sm:$0xff]
        %v692 = vld [vmem:[#allocation7 + $0x868] sm:$0xff]
        %v693 = vld [vmem:[#allocation7 + $0x870] sm:$0xff]
        %v694 = vld [vmem:[#allocation7 + $0x878] sm:$0xff]
        %v695 = vld [vmem:[#allocation7 + $0x880] sm:$0xff]
        %v696 = vld [vmem:[#allocation7 + $0x888] sm:$0xff]
        %v697 = vld [vmem:[#allocation7 + $0x890] sm:$0xff]
        %v698 = vld [vmem:[#allocation7 + $0x898] sm:$0xff]
        %v699 = vld [vmem:[#allocation7 + $0x8a0] sm:$0xff]
        %v700 = vld [vmem:[#allocation7 + $0x8a8] sm:$0xff]
        %v701 = vld [vmem:[#allocation7 + $0x8b0] sm:$0xff]
        %v702 = vld [vmem:[#allocation7 + $0x8b8] sm:$0xff]
        %v703 = vld [vmem:[#allocation7 + $0x8c0] sm:$0xff]
        %v704 = vld [vmem:[#allocation7 + $0x8c8] sm:$0xff]
        %v705 = vld [vmem:[#allocation7 + $0x8d0] sm:$0xff]
        %v706 = vld [vmem:[#allocation7 + $0x8d8] sm:$0xff]
        %v707 = vld [vmem:[#allocation7 + $0x8e0] sm:$0xff]
        %v708 = vld [vmem:[#allocation7 + $0x8e8] sm:$0xff]
        %v709 = vld [vmem:[#allocation7 + $0x8f0] sm:$0xff]
        %v710 = vld [vmem:[#allocation7 + $0x8f8] sm:$0xff]
        %v711 = vld [vmem:[%s351] sm:$0xff]
        %v712 = vld [vmem:[%s351 + $0x8] sm:$0xff]
        %v713 = vld [vmem:[%s351 + $0x10] sm:$0xff]
        %v714 = vld [vmem:[%s351 + $0x18] sm:$0xff]
        %v715 = vld [vmem:[%s351 + $0x20] sm:$0xff]
        %v716 = vld [vmem:[%s351 + $0x28] sm:$0xff]
        %v717 = vld [vmem:[%s351 + $0x30] sm:$0xff]
        %v718 = vld [vmem:[%s351 + $0x38] sm:$0xff]
        %v719 = vld [vmem:[%s351 + $0x40] sm:$0xff]
        %v720 = vld [vmem:[%s351 + $0x48] sm:$0xff]
        %v721 = vld [vmem:[%s351 + $0x50] sm:$0xff]
        %v722 = vld [vmem:[%s351 + $0x58] sm:$0xff]
        %v723 = vld [vmem:[#allocation8] sm:$0xff]
        %v724 = vld [vmem:[#allocation8 + $0x8] sm:$0xff]
        %v725 = vld [vmem:[#allocation8 + $0x10] sm:$0xff]
        %v726 = vld [vmem:[#allocation8 + $0x18] sm:$0xff]
        %v727 = vld [vmem:[#allocation8 + $0x20] sm:$0xff]
        %v728 = vld [vmem:[#allocation8 + $0x28] sm:$0xff]
        %v729 = vld [vmem:[#allocation8 + $0x30] sm:$0xff]
        %v730 = vld [vmem:[#allocation8 + $0x38] sm:$0xff]
        %v731 = vld [vmem:[#allocation8 + $0x40] sm:$0xff]
        %v732 = vld [vmem:[#allocation8 + $0x48] sm:$0xff]
        %v733 = vld [vmem:[#allocation8 + $0x50] sm:$0xff]
        %v734 = vld [vmem:[#allocation8 + $0x58] sm:$0xff]
        %v735 = vld [vmem:[#allocation8 + $0x60] sm:$0xff]
        %v736 = vld [vmem:[#allocation8 + $0x68] sm:$0xff]
        %v737 = vld [vmem:[#allocation8 + $0x70] sm:$0xff]
        %v738 = vld [vmem:[#allocation8 + $0x78] sm:$0xff]
        %v739 = vld [vmem:[#allocation8 + $0x80] sm:$0xff]
        %v740 = vld [vmem:[#allocation8 + $0x88] sm:$0xff]
        %v741 = vld [vmem:[#allocation8 + $0x90] sm:$0xff]
        %v742 = vld [vmem:[#allocation8 + $0x98] sm:$0xff]
        %v743 = vld [vmem:[#allocation8 + $0xa0] sm:$0xff]
        %v744 = vld [vmem:[#allocation8 + $0xa8] sm:$0xff]
        %v745 = vld [vmem:[#allocation8 + $0xb0] sm:$0xff]
        %v746 = vld [vmem:[#allocation8 + $0xb8] sm:$0xff]
        %v747 = vld [vmem:[#allocation8 + $0xc0] sm:$0xff]
        %v748 = vld [vmem:[#allocation8 + $0xc8] sm:$0xff]
        %v749 = vld [vmem:[#allocation8 + $0xd0] sm:$0xff]
        %v750 = vld [vmem:[#allocation8 + $0xd8] sm:$0xff]
        %v751 = vld [vmem:[#allocation8 + $0xe0] sm:$0xff]
        %v752 = vld [vmem:[#allocation8 + $0xe8] sm:$0xff]
        %v753 = vld [vmem:[#allocation8 + $0xf0] sm:$0xff]
        %v754 = vld [vmem:[#allocation8 + $0xf8] sm:$0xff]
        %v755 = vld [vmem:[#allocation8 + $0x100] sm:$0xff]
        %v756 = vld [vmem:[#allocation8 + $0x108] sm:$0xff]
        %v757 = vld [vmem:[#allocation8 + $0x110] sm:$0xff]
        %v758 = vld [vmem:[#allocation8 + $0x118] sm:$0xff]
        %v759 = vld [vmem:[#allocation8 + $0x120] sm:$0xff]
        %v760 = vld [vmem:[#allocation8 + $0x128] sm:$0xff]
        %v761 = vld [vmem:[#allocation8 + $0x130] sm:$0xff]
        %v762 = vld [vmem:[#allocation8 + $0x138] sm:$0xff]
        %v763 = vld [vmem:[#allocation8 + $0x140] sm:$0xff]
        %v764 = vld [vmem:[#allocation8 + $0x148] sm:$0xff]
        %v765 = vld [vmem:[#allocation8 + $0x150] sm:$0xff]
        %v766 = vld [vmem:[#allocation8 + $0x158] sm:$0xff]
        %v767 = vld [vmem:[#allocation8 + $0x160] sm:$0xff]
        %v768 = vld [vmem:[#allocation8 + $0x168] sm:$0xff]
        %v769 = vld [vmem:[#allocation8 + $0x170] sm:$0xff]
        %v770 = vld [vmem:[#allocation8 + $0x178] sm:$0xff]
        %v771 = vld [vmem:[#allocation8 + $0x180] sm:$0xff]
        %v772 = vld [vmem:[#allocation8 + $0x188] sm:$0xff]
        %v773 = vld [vmem:[#allocation8 + $0x190] sm:$0xff]
        %v774 = vld [vmem:[#allocation8 + $0x198] sm:$0xff]
        %v775 = vld [vmem:[#allocation8 + $0x1a0] sm:$0xff]
        %v776 = vld [vmem:[#allocation8 + $0x1a8] sm:$0xff]
        %v777 = vld [vmem:[#allocation8 + $0x1b0] sm:$0xff]
        %v778 = vld [vmem:[#allocation8 + $0x1b8] sm:$0xff]
        %v779 = vld [vmem:[#allocation8 + $0x1c0] sm:$0xff]
        %v780 = vld [vmem:[#allocation8 + $0x1c8] sm:$0xff]
        %v781 = vld [vmem:[#allocation8 + $0x1d0] sm:$0xff]
        %v782 = vld [vmem:[#allocation8 + $0x1d8] sm:$0xff]
        %v783 = vld [vmem:[#allocation8 + $0x1e0] sm:$0xff]
        %v784 = vld [vmem:[#allocation8 + $0x1e8] sm:$0xff]
        %v785 = vld [vmem:[#allocation8 + $0x1f0] sm:$0xff]
        %v786 = vld [vmem:[#allocation8 + $0x1f8] sm:$0xff]
        %v787 = vld [vmem:[#allocation8 + $0x200] sm:$0xff]
        %v788 = vld [vmem:[#allocation8 + $0x208] sm:$0xff]
        %v789 = vld [vmem:[#allocation8 + $0x210] sm:$0xff]
        %v790 = vld [vmem:[#allocation8 + $0x218] sm:$0xff]
        %v791 = vld [vmem:[#allocation8 + $0x220] sm:$0xff]
        %v792 = vld [vmem:[#allocation8 + $0x228] sm:$0xff]
        %v793 = vld [vmem:[#allocation8 + $0x230] sm:$0xff]
        %v794 = vld [vmem:[#allocation8 + $0x238] sm:$0xff]
        %v795 = vld [vmem:[#allocation8 + $0x240] sm:$0xff]
        %v796 = vld [vmem:[#allocation8 + $0x248] sm:$0xff]
        %v797 = vld [vmem:[#allocation8 + $0x250] sm:$0xff]
        %v798 = vld [vmem:[#allocation8 + $0x258] sm:$0xff]
        %v799 = vld [vmem:[#allocation8 + $0x260] sm:$0xff]
        %v800 = vld [vmem:[#allocation8 + $0x268] sm:$0xff]
        %v801 = vld [vmem:[#allocation8 + $0x270] sm:$0xff]
        %v802 = vld [vmem:[#allocation8 + $0x278] sm:$0xff]
        %v803 = vld [vmem:[#allocation8 + $0x280] sm:$0xff]
        %v804 = vld [vmem:[#allocation8 + $0x288] sm:$0xff]
        %v805 = vld [vmem:[#allocation8 + $0x290] sm:$0xff]
        %v806 = vld [vmem:[#allocation8 + $0x298] sm:$0xff]
        %v807 = vld [vmem:[#allocation8 + $0x2a0] sm:$0xff]
        %v808 = vld [vmem:[#allocation8 + $0x2a8] sm:$0xff]
        %v809 = vld [vmem:[#allocation8 + $0x2b0] sm:$0xff]
        %v810 = vld [vmem:[#allocation8 + $0x2b8] sm:$0xff]
        %v811 = vld [vmem:[#allocation8 + $0x2c0] sm:$0xff]
        %v812 = vld [vmem:[#allocation8 + $0x2c8] sm:$0xff]
        %v813 = vld [vmem:[#allocation8 + $0x2d0] sm:$0xff]
        %v814 = vld [vmem:[#allocation8 + $0x2d8] sm:$0xff]
        %v815 = vld [vmem:[#allocation8 + $0x2e0] sm:$0xff]
        %v816 = vld [vmem:[#allocation8 + $0x2e8] sm:$0xff]
        %v817 = vld [vmem:[#allocation8 + $0x2f0] sm:$0xff]
        %v818 = vld [vmem:[#allocation8 + $0x2f8] sm:$0xff]
        %v819 = vld [vmem:[#allocation8 + $0x300] sm:$0xff]
        %v820 = vld [vmem:[#allocation8 + $0x308] sm:$0xff]
        %v821 = vld [vmem:[#allocation8 + $0x310] sm:$0xff]
        %v822 = vld [vmem:[#allocation8 + $0x318] sm:$0xff]
        %v823 = vld [vmem:[#allocation8 + $0x320] sm:$0xff]
        %v824 = vld [vmem:[#allocation8 + $0x328] sm:$0xff]
        %v825 = vld [vmem:[#allocation8 + $0x330] sm:$0xff]
        %v826 = vld [vmem:[#allocation8 + $0x338] sm:$0xff]
        %v827 = vld [vmem:[#allocation8 + $0x340] sm:$0xff]
        %v828 = vld [vmem:[#allocation8 + $0x348] sm:$0xff]
        %v829 = vld [vmem:[#allocation8 + $0x350] sm:$0xff]
        %v830 = vld [vmem:[#allocation8 + $0x358] sm:$0xff]
        %v831 = vld [vmem:[#allocation8 + $0x360] sm:$0xff]
        %v832 = vld [vmem:[#allocation8 + $0x368] sm:$0xff]
        %v833 = vld [vmem:[#allocation8 + $0x370] sm:$0xff]
        %v834 = vld [vmem:[#allocation8 + $0x378] sm:$0xff]
        %v835 = vld [vmem:[#allocation8 + $0x380] sm:$0xff]
        %v836 = vld [vmem:[#allocation8 + $0x388] sm:$0xff]
        %v837 = vld [vmem:[#allocation8 + $0x390] sm:$0xff]
        %v838 = vld [vmem:[#allocation8 + $0x398] sm:$0xff]
        %v839 = vld [vmem:[#allocation8 + $0x3a0] sm:$0xff]
        %v840 = vld [vmem:[#allocation8 + $0x3a8] sm:$0xff]
        %v841 = vld [vmem:[#allocation8 + $0x3b0] sm:$0xff]
        %v842 = vld [vmem:[#allocation8 + $0x3b8] sm:$0xff]
        %v843 = vld [vmem:[#allocation8 + $0x3c0] sm:$0xff]
        %v844 = vld [vmem:[#allocation8 + $0x3c8] sm:$0xff]
        %v845 = vld [vmem:[#allocation8 + $0x3d0] sm:$0xff]
        %v846 = vld [vmem:[#allocation8 + $0x3d8] sm:$0xff]
        %v847 = vld [vmem:[#allocation8 + $0x3e0] sm:$0xff]
        %v848 = vld [vmem:[#allocation8 + $0x3e8] sm:$0xff]
        %v849 = vld [vmem:[#allocation8 + $0x3f0] sm:$0xff]
        %v850 = vld [vmem:[#allocation8 + $0x3f8] sm:$0xff]
        %v851 = vld [vmem:[#allocation8 + $0x400] sm:$0xff]
        %v852 = vld [vmem:[#allocation8 + $0x408] sm:$0xff]
        %v853 = vld [vmem:[#allocation8 + $0x410] sm:$0xff]
        %v854 = vld [vmem:[#allocation8 + $0x418] sm:$0xff]
        %v855 = vld [vmem:[#allocation8 + $0x420] sm:$0xff]
        %v856 = vld [vmem:[#allocation8 + $0x428] sm:$0xff]
        %v857 = vld [vmem:[#allocation8 + $0x430] sm:$0xff]
        %v858 = vld [vmem:[#allocation8 + $0x438] sm:$0xff]
        %v859 = vld [vmem:[#allocation8 + $0x440] sm:$0xff]
        %v860 = vld [vmem:[#allocation8 + $0x448] sm:$0xff]
        %v861 = vld [vmem:[#allocation8 + $0x450] sm:$0xff]
        %v862 = vld [vmem:[#allocation8 + $0x458] sm:$0xff]
        %v863 = vld [vmem:[#allocation8 + $0x460] sm:$0xff]
        %v864 = vld [vmem:[#allocation8 + $0x468] sm:$0xff]
        %v865 = vld [vmem:[#allocation8 + $0x470] sm:$0xff]
        %v866 = vld [vmem:[#allocation8 + $0x478] sm:$0xff]
        %v867 = vld [vmem:[#allocation8 + $0x480] sm:$0xff]
        %v868 = vld [vmem:[#allocation8 + $0x488] sm:$0xff]
        %v869 = vld [vmem:[#allocation8 + $0x490] sm:$0xff]
        %v870 = vld [vmem:[#allocation8 + $0x498] sm:$0xff]
        %v871 = vld [vmem:[#allocation8 + $0x4a0] sm:$0xff]
        %v872 = vld [vmem:[#allocation8 + $0x4a8] sm:$0xff]
        %v873 = vld [vmem:[#allocation8 + $0x4b0] sm:$0xff]
        %v874 = vld [vmem:[#allocation8 + $0x4b8] sm:$0xff]
        %v875 = vld [vmem:[#allocation8 + $0x4c0] sm:$0xff]
        %v876 = vld [vmem:[#allocation8 + $0x4c8] sm:$0xff]
        %v877 = vld [vmem:[#allocation8 + $0x4d0] sm:$0xff]
        %v878 = vld [vmem:[#allocation8 + $0x4d8] sm:$0xff]
        %v879 = vld [vmem:[#allocation8 + $0x4e0] sm:$0xff]
        %v880 = vld [vmem:[#allocation8 + $0x4e8] sm:$0xff]
        %v881 = vld [vmem:[#allocation8 + $0x4f0] sm:$0xff]
        %v882 = vld [vmem:[#allocation8 + $0x4f8] sm:$0xff]
        %v883 = vld [vmem:[#allocation8 + $0x500] sm:$0xff]
        %v884 = vld [vmem:[#allocation8 + $0x508] sm:$0xff]
        %v885 = vld [vmem:[#allocation8 + $0x510] sm:$0xff]
        %v886 = vld [vmem:[#allocation8 + $0x518] sm:$0xff]
        %v887 = vld [vmem:[#allocation8 + $0x520] sm:$0xff]
        %v888 = vld [vmem:[#allocation8 + $0x528] sm:$0xff]
        %v889 = vld [vmem:[#allocation8 + $0x530] sm:$0xff]
        %v890 = vld [vmem:[#allocation8 + $0x538] sm:$0xff]
        %v891 = vld [vmem:[#allocation8 + $0x540] sm:$0xff]
        %v892 = vld [vmem:[#allocation8 + $0x548] sm:$0xff]
        %v893 = vld [vmem:[#allocation8 + $0x550] sm:$0xff]
        %v894 = vld [vmem:[#allocation8 + $0x558] sm:$0xff]
        %v895 = vld [vmem:[#allocation8 + $0x560] sm:$0xff]
        %v896 = vld [vmem:[#allocation8 + $0x568] sm:$0xff]
        %v897 = vld [vmem:[#allocation8 + $0x570] sm:$0xff]
        %v898 = vld [vmem:[#allocation8 + $0x578] sm:$0xff]
        %v899 = vld [vmem:[#allocation8 + $0x580] sm:$0xff]
        %v900 = vld [vmem:[#allocation8 + $0x588] sm:$0xff]
        %v901 = vld [vmem:[#allocation8 + $0x590] sm:$0xff]
        %v902 = vld [vmem:[#allocation8 + $0x598] sm:$0xff]
        %v903 = vld [vmem:[#allocation8 + $0x5a0] sm:$0xff]
        %v904 = vld [vmem:[#allocation8 + $0x5a8] sm:$0xff]
        %v905 = vld [vmem:[#allocation8 + $0x5b0] sm:$0xff]
        %v906 = vld [vmem:[#allocation8 + $0x5b8] sm:$0xff]
        %v907 = vld [vmem:[#allocation8 + $0x5c0] sm:$0xff]
        %v908 = vld [vmem:[#allocation8 + $0x5c8] sm:$0xff]
        %v909 = vld [vmem:[#allocation8 + $0x5d0] sm:$0xff]
        %v910 = vld [vmem:[#allocation8 + $0x5d8] sm:$0xff]
        %v911 = vld [vmem:[#allocation8 + $0x5e0] sm:$0xff]
        %v912 = vld [vmem:[#allocation8 + $0x5e8] sm:$0xff]
        %v913 = vld [vmem:[#allocation8 + $0x5f0] sm:$0xff]
        %v914 = vld [vmem:[#allocation8 + $0x5f8] sm:$0xff]
        %v915 = vld [vmem:[#allocation8 + $0x600] sm:$0xff]
        %v916 = vld [vmem:[#allocation8 + $0x608] sm:$0xff]
        %v917 = vld [vmem:[#allocation8 + $0x610] sm:$0xff]
        %v918 = vld [vmem:[#allocation8 + $0x618] sm:$0xff]
        %v919 = vld [vmem:[#allocation8 + $0x620] sm:$0xff]
        %v920 = vld [vmem:[#allocation8 + $0x628] sm:$0xff]
        %v921 = vld [vmem:[#allocation8 + $0x630] sm:$0xff]
        %v922 = vld [vmem:[#allocation8 + $0x638] sm:$0xff]
        %v923 = vld [vmem:[#allocation8 + $0x640] sm:$0xff]
        %v924 = vld [vmem:[#allocation8 + $0x648] sm:$0xff]
        %v925 = vld [vmem:[#allocation8 + $0x650] sm:$0xff]
        %v926 = vld [vmem:[#allocation8 + $0x658] sm:$0xff]
        %v927 = vld [vmem:[#allocation8 + $0x660] sm:$0xff]
        %v928 = vld [vmem:[#allocation8 + $0x668] sm:$0xff]
        %v929 = vld [vmem:[#allocation8 + $0x670] sm:$0xff]
        %v930 = vld [vmem:[#allocation8 + $0x678] sm:$0xff]
        %v931 = vld [vmem:[#allocation8 + $0x680] sm:$0xff]
        %v932 = vld [vmem:[#allocation8 + $0x688] sm:$0xff]
        %v933 = vld [vmem:[#allocation8 + $0x690] sm:$0xff]
        %v934 = vld [vmem:[#allocation8 + $0x698] sm:$0xff]
        %v935 = vld [vmem:[#allocation8 + $0x6a0] sm:$0xff]
        %v936 = vld [vmem:[#allocation8 + $0x6a8] sm:$0xff]
        %v937 = vld [vmem:[#allocation8 + $0x6b0] sm:$0xff]
        %v938 = vld [vmem:[#allocation8 + $0x6b8] sm:$0xff]
        %v939 = vld [vmem:[#allocation8 + $0x6c0] sm:$0xff]
        %v940 = vld [vmem:[#allocation8 + $0x6c8] sm:$0xff]
        %v941 = vld [vmem:[#allocation8 + $0x6d0] sm:$0xff]
        %v942 = vld [vmem:[#allocation8 + $0x6d8] sm:$0xff]
        %v943 = vld [vmem:[#allocation8 + $0x6e0] sm:$0xff]
        %v944 = vld [vmem:[#allocation8 + $0x6e8] sm:$0xff]
        %v945 = vld [vmem:[#allocation8 + $0x6f0] sm:$0xff]
        %v946 = vld [vmem:[#allocation8 + $0x6f8] sm:$0xff]
        %v947 = vld [vmem:[#allocation8 + $0x700] sm:$0xff]
        %v948 = vld [vmem:[#allocation8 + $0x708] sm:$0xff]
        %v949 = vld [vmem:[#allocation8 + $0x710] sm:$0xff]
        %v950 = vld [vmem:[#allocation8 + $0x718] sm:$0xff]
        %v951 = vld [vmem:[#allocation8 + $0x720] sm:$0xff]
        %v952 = vld [vmem:[#allocation8 + $0x728] sm:$0xff]
        %v953 = vld [vmem:[#allocation8 + $0x730] sm:$0xff]
        %v954 = vld [vmem:[#allocation8 + $0x738] sm:$0xff]
        %v955 = vld [vmem:[#allocation8 + $0x740] sm:$0xff]
        %v956 = vld [vmem:[#allocation8 + $0x748] sm:$0xff]
        %v957 = vld [vmem:[#allocation8 + $0x750] sm:$0xff]
        %v958 = vld [vmem:[#allocation8 + $0x758] sm:$0xff]
        %v959 = vld [vmem:[#allocation8 + $0x760] sm:$0xff]
        %v960 = vld [vmem:[#allocation8 + $0x768] sm:$0xff]
        %v961 = vld [vmem:[#allocation8 + $0x770] sm:$0xff]
        %v962 = vld [vmem:[#allocation8 + $0x778] sm:$0xff]
        %v963 = vld [vmem:[#allocation8 + $0x780] sm:$0xff]
        %v964 = vld [vmem:[#allocation8 + $0x788] sm:$0xff]
        %v965 = vld [vmem:[#allocation8 + $0x790] sm:$0xff]
        %v966 = vld [vmem:[#allocation8 + $0x798] sm:$0xff]
        %v967 = vld [vmem:[#allocation8 + $0x7a0] sm:$0xff]
        %v968 = vld [vmem:[#allocation8 + $0x7a8] sm:$0xff]
        %v969 = vld [vmem:[#allocation8 + $0x7b0] sm:$0xff]
        %v970 = vld [vmem:[#allocation8 + $0x7b8] sm:$0xff]
        %v971 = vld [vmem:[#allocation8 + $0x7c0] sm:$0xff]
        %v972 = vld [vmem:[#allocation8 + $0x7c8] sm:$0xff]
        %v973 = vld [vmem:[#allocation8 + $0x7d0] sm:$0xff]
        %v974 = vld [vmem:[#allocation8 + $0x7d8] sm:$0xff]
        %v975 = vld [vmem:[#allocation8 + $0x7e0] sm:$0xff]
        %v976 = vld [vmem:[#allocation8 + $0x7e8] sm:$0xff]
        %v977 = vld [vmem:[#allocation8 + $0x7f0] sm:$0xff]
        %v978 = vld [vmem:[#allocation8 + $0x7f8] sm:$0xff]
        %v979 = vld [vmem:[#allocation8 + $0x800] sm:$0xff]
        %v980 = vld [vmem:[#allocation8 + $0x808] sm:$0xff]
        %v981 = vld [vmem:[#allocation8 + $0x810] sm:$0xff]
        %v982 = vld [vmem:[#allocation8 + $0x818] sm:$0xff]
        %v983 = vld [vmem:[#allocation8 + $0x820] sm:$0xff]
        %v984 = vld [vmem:[#allocation8 + $0x828] sm:$0xff]
        %v985 = vld [vmem:[#allocation8 + $0x830] sm:$0xff]
        %v986 = vld [vmem:[#allocation8 + $0x838] sm:$0xff]
        %v987 = vld [vmem:[#allocation8 + $0x840] sm:$0xff]
        %v988 = vld [vmem:[#allocation8 + $0x848] sm:$0xff]
        %v989 = vld [vmem:[#allocation8 + $0x850] sm:$0xff]
        %v990 = vld [vmem:[#allocation8 + $0x858] sm:$0xff]
        %v991 = vld [vmem:[#allocation8 + $0x860] sm:$0xff]
        %v992 = vld [vmem:[#allocation8 + $0x868] sm:$0xff]
        %v993 = vld [vmem:[#allocation8 + $0x870] sm:$0xff]
        %v994 = vld [vmem:[#allocation8 + $0x878] sm:$0xff]
        %v995 = vld [vmem:[#allocation8 + $0x880] sm:$0xff]
        %v996 = vld [vmem:[#allocation8 + $0x888] sm:$0xff]
        %v997 = vld [vmem:[#allocation8 + $0x890] sm:$0xff]
        %v998 = vld [vmem:[#allocation8 + $0x898] sm:$0xff]
        %v999 = vld [vmem:[#allocation8 + $0x8a0] sm:$0xff]
        %v1000 = vld [vmem:[#allocation8 + $0x8a8] sm:$0xff]
        %v1001 = vld [vmem:[#allocation8 + $0x8b0] sm:$0xff]
        %v1002 = vld [vmem:[#allocation8 + $0x8b8] sm:$0xff]
        %v1003 = vld [vmem:[#allocation8 + $0x8c0] sm:$0xff]
        %v1004 = vld [vmem:[#allocation8 + $0x8c8] sm:$0xff]
        %v1005 = vld [vmem:[#allocation8 + $0x8d0] sm:$0xff]
        %v1006 = vld [vmem:[#allocation8 + $0x8d8] sm:$0xff]
        %v1007 = vld [vmem:[#allocation8 + $0x8e0] sm:$0xff]
        %v1008 = vld [vmem:[#allocation8 + $0x8e8] sm:$0xff]
        %v1009 = vld [vmem:[#allocation8 + $0x8f0] sm:$0xff]
        %v1010 = vld [vmem:[#allocation8 + $0x8f8] sm:$0xff]
        %v1023 = vunpack.c.l.b16 %v711
        %v1024 = vunpack.c.h.b16 %v711
        %v1025 = vunpack.c.l.b16 %v712
        %v1026 = vunpack.c.h.b16 %v712
        %v1027 = vunpack.c.l.b16 %v713
        %v1028 = vunpack.c.h.b16 %v713
        %v1029 = vunpack.c.l.b16 %v714
        %v1030 = vunpack.c.h.b16 %v714
        %v1031 = vunpack.c.l.b16 %v715
        %v1032 = vunpack.c.h.b16 %v715
        %v1033 = vunpack.c.l.b16 %v716
        %v1034 = vunpack.c.h.b16 %v716
        %v1035 = vunpack.c.l.b16 %v717
        %v1036 = vunpack.c.h.b16 %v717
        %v1037 = vunpack.c.l.b16 %v718
        %v1038 = vunpack.c.h.b16 %v718
        %v1039 = vunpack.c.l.b16 %v719
        %v1040 = vunpack.c.h.b16 %v719
        %v1041 = vunpack.c.l.b16 %v720
        %v1042 = vunpack.c.h.b16 %v720
        %v1043 = vunpack.c.l.b16 %v721
        %v1044 = vunpack.c.h.b16 %v721
        %v1045 = vunpack.c.l.b16 %v722
        %v1046 = vunpack.c.h.b16 %v722
        %v1047 = vpack.c.b16 %v1029, %v1023
        %v1048 = vpack.c.b16 %v1030, %v1024
        %v1049 = vpack.c.b16 %v1031, %v1025
        %v1050 = vpack.c.b16 %v1032, %v1026
        %v1051 = vpack.c.b16 %v1033, %v1027
        %v1052 = vpack.c.b16 %v1034, %v1028
        %v1053 = vpack.c.b16 %v1041, %v1035
        %v1054 = vpack.c.b16 %v1042, %v1036
        %v1055 = vpack.c.b16 %v1043, %v1037
        %v1056 = vpack.c.b16 %v1044, %v1038
        %v1057 = vpack.c.b16 %v1045, %v1039
        %v1058 = vpack.c.b16 %v1046, %v1040
        %v1359 = vunpack.c.l.b16 %v723
        %v1360 = vunpack.c.h.b16 %v723
        %v1361 = vunpack.c.l.b16 %v724
        %v1362 = vunpack.c.h.b16 %v724
        %v1363 = vunpack.c.l.b16 %v725
        %v1364 = vunpack.c.h.b16 %v725
        %v1365 = vunpack.c.l.b16 %v726
        %v1366 = vunpack.c.h.b16 %v726
        %v1367 = vunpack.c.l.b16 %v727
        %v1368 = vunpack.c.h.b16 %v727
        %v1369 = vunpack.c.l.b16 %v728
        %v1370 = vunpack.c.h.b16 %v728
        %v1371 = vunpack.c.l.b16 %v729
        %v1372 = vunpack.c.h.b16 %v729
        %v1373 = vunpack.c.l.b16 %v730
        %v1374 = vunpack.c.h.b16 %v730
        %v1375 = vunpack.c.l.b16 %v731
        %v1376 = vunpack.c.h.b16 %v731
        %v1377 = vunpack.c.l.b16 %v732
        %v1378 = vunpack.c.h.b16 %v732
        %v1379 = vunpack.c.l.b16 %v733
        %v1380 = vunpack.c.h.b16 %v733
        %v1381 = vunpack.c.l.b16 %v734
        %v1382 = vunpack.c.h.b16 %v734
        %v1383 = vunpack.c.l.b16 %v735
        %v1384 = vunpack.c.h.b16 %v735
        %v1385 = vunpack.c.l.b16 %v736
        %v1386 = vunpack.c.h.b16 %v736
        %v1387 = vunpack.c.l.b16 %v737
        %v1388 = vunpack.c.h.b16 %v737
        %v1389 = vunpack.c.l.b16 %v738
        %v1390 = vunpack.c.h.b16 %v738
        %v1391 = vunpack.c.l.b16 %v739
        %v1392 = vunpack.c.h.b16 %v739
        %v1393 = vunpack.c.l.b16 %v740
        %v1394 = vunpack.c.h.b16 %v740
        %v1395 = vunpack.c.l.b16 %v741
        %v1396 = vunpack.c.h.b16 %v741
        %v1397 = vunpack.c.l.b16 %v742
        %v1398 = vunpack.c.h.b16 %v742
        %v1399 = vunpack.c.l.b16 %v743
        %v1400 = vunpack.c.h.b16 %v743
        %v1401 = vunpack.c.l.b16 %v744
        %v1402 = vunpack.c.h.b16 %v744
        %v1403 = vunpack.c.l.b16 %v745
        %v1404 = vunpack.c.h.b16 %v745
        %v1405 = vunpack.c.l.b16 %v746
        %v1406 = vunpack.c.h.b16 %v746
        %v1407 = vunpack.c.l.b16 %v747
        %v1408 = vunpack.c.h.b16 %v747
        %v1409 = vunpack.c.l.b16 %v748
        %v1410 = vunpack.c.h.b16 %v748
        %v1411 = vunpack.c.l.b16 %v749
        %v1412 = vunpack.c.h.b16 %v749
        %v1413 = vunpack.c.l.b16 %v750
        %v1414 = vunpack.c.h.b16 %v750
        %v1415 = vunpack.c.l.b16 %v751
        %v1416 = vunpack.c.h.b16 %v751
        %v1417 = vunpack.c.l.b16 %v752
        %v1418 = vunpack.c.h.b16 %v752
        %v1419 = vunpack.c.l.b16 %v753
        %v1420 = vunpack.c.h.b16 %v753
        %v1421 = vunpack.c.l.b16 %v754
        %v1422 = vunpack.c.h.b16 %v754
        %v1423 = vunpack.c.l.b16 %v755
        %v1424 = vunpack.c.h.b16 %v755
        %v1425 = vunpack.c.l.b16 %v756
        %v1426 = vunpack.c.h.b16 %v756
        %v1427 = vunpack.c.l.b16 %v757
        %v1428 = vunpack.c.h.b16 %v757
        %v1429 = vunpack.c.l.b16 %v758
        %v1430 = vunpack.c.h.b16 %v758
        %v1431 = vunpack.c.l.b16 %v759
        %v1432 = vunpack.c.h.b16 %v759
        %v1433 = vunpack.c.l.b16 %v760
        %v1434 = vunpack.c.h.b16 %v760
        %v1435 = vunpack.c.l.b16 %v761
        %v1436 = vunpack.c.h.b16 %v761
        %v1437 = vunpack.c.l.b16 %v762
        %v1438 = vunpack.c.h.b16 %v762
        %v1439 = vunpack.c.l.b16 %v763
        %v1440 = vunpack.c.h.b16 %v763
        %v1441 = vunpack.c.l.b16 %v764
        %v1442 = vunpack.c.h.b16 %v764
        %v1443 = vunpack.c.l.b16 %v765
        %v1444 = vunpack.c.h.b16 %v765
        %v1445 = vunpack.c.l.b16 %v766
        %v1446 = vunpack.c.h.b16 %v766
        %v1447 = vunpack.c.l.b16 %v767
        %v1448 = vunpack.c.h.b16 %v767
        %v1449 = vunpack.c.l.b16 %v768
        %v1450 = vunpack.c.h.b16 %v768
        %v1451 = vunpack.c.l.b16 %v769
        %v1452 = vunpack.c.h.b16 %v769
        %v1453 = vunpack.c.l.b16 %v770
        %v1454 = vunpack.c.h.b16 %v770
        %v1455 = vunpack.c.l.b16 %v771
        %v1456 = vunpack.c.h.b16 %v771
        %v1457 = vunpack.c.l.b16 %v772
        %v1458 = vunpack.c.h.b16 %v772
        %v1459 = vunpack.c.l.b16 %v773
        %v1460 = vunpack.c.h.b16 %v773
        %v1461 = vunpack.c.l.b16 %v774
        %v1462 = vunpack.c.h.b16 %v774
        %v1463 = vunpack.c.l.b16 %v775
        %v1464 = vunpack.c.h.b16 %v775
        %v1465 = vunpack.c.l.b16 %v776
        %v1466 = vunpack.c.h.b16 %v776
        %v1467 = vunpack.c.l.b16 %v777
        %v1468 = vunpack.c.h.b16 %v777
        %v1469 = vunpack.c.l.b16 %v778
        %v1470 = vunpack.c.h.b16 %v778
        %v1471 = vunpack.c.l.b16 %v779
        %v1472 = vunpack.c.h.b16 %v779
        %v1473 = vunpack.c.l.b16 %v780
        %v1474 = vunpack.c.h.b16 %v780
        %v1475 = vunpack.c.l.b16 %v781
        %v1476 = vunpack.c.h.b16 %v781
        %v1477 = vunpack.c.l.b16 %v782
        %v1478 = vunpack.c.h.b16 %v782
        %v1479 = vunpack.c.l.b16 %v783
        %v1480 = vunpack.c.h.b16 %v783
        %v1481 = vunpack.c.l.b16 %v784
        %v1482 = vunpack.c.h.b16 %v784
        %v1483 = vunpack.c.l.b16 %v785
        %v1484 = vunpack.c.h.b16 %v785
        %v1485 = vunpack.c.l.b16 %v786
        %v1486 = vunpack.c.h.b16 %v786
        %v1487 = vunpack.c.l.b16 %v787
        %v1488 = vunpack.c.h.b16 %v787
        %v1489 = vunpack.c.l.b16 %v788
        %v1490 = vunpack.c.h.b16 %v788
        %v1491 = vunpack.c.l.b16 %v789
        %v1492 = vunpack.c.h.b16 %v789
        %v1493 = vunpack.c.l.b16 %v790
        %v1494 = vunpack.c.h.b16 %v790
        %v1495 = vunpack.c.l.b16 %v791
        %v1496 = vunpack.c.h.b16 %v791
        %v1497 = vunpack.c.l.b16 %v792
        %v1498 = vunpack.c.h.b16 %v792
        %v1499 = vunpack.c.l.b16 %v793
        %v1500 = vunpack.c.h.b16 %v793
        %v1501 = vunpack.c.l.b16 %v794
        %v1502 = vunpack.c.h.b16 %v794
        %v1503 = vunpack.c.l.b16 %v795
        %v1504 = vunpack.c.h.b16 %v795
        %v1505 = vunpack.c.l.b16 %v796
        %v1506 = vunpack.c.h.b16 %v796
        %v1507 = vunpack.c.l.b16 %v797
        %v1508 = vunpack.c.h.b16 %v797
        %v1509 = vunpack.c.l.b16 %v798
        %v1510 = vunpack.c.h.b16 %v798
        %v1511 = vunpack.c.l.b16 %v799
        %v1512 = vunpack.c.h.b16 %v799
        %v1513 = vunpack.c.l.b16 %v800
        %v1514 = vunpack.c.h.b16 %v800
        %v1515 = vunpack.c.l.b16 %v801
        %v1516 = vunpack.c.h.b16 %v801
        %v1517 = vunpack.c.l.b16 %v802
        %v1518 = vunpack.c.h.b16 %v802
        %v1519 = vunpack.c.l.b16 %v803
        %v1520 = vunpack.c.h.b16 %v803
        %v1521 = vunpack.c.l.b16 %v804
        %v1522 = vunpack.c.h.b16 %v804
        %v1523 = vunpack.c.l.b16 %v805
        %v1524 = vunpack.c.h.b16 %v805
        %v1525 = vunpack.c.l.b16 %v806
        %v1526 = vunpack.c.h.b16 %v806
        %v1527 = vunpack.c.l.b16 %v807
        %v1528 = vunpack.c.h.b16 %v807
        %v1529 = vunpack.c.l.b16 %v808
        %v1530 = vunpack.c.h.b16 %v808
        %v1531 = vunpack.c.l.b16 %v809
        %v1532 = vunpack.c.h.b16 %v809
        %v1533 = vunpack.c.l.b16 %v810
        %v1534 = vunpack.c.h.b16 %v810
        %v1535 = vunpack.c.l.b16 %v811
        %v1536 = vunpack.c.h.b16 %v811
        %v1537 = vunpack.c.l.b16 %v812
        %v1538 = vunpack.c.h.b16 %v812
        %v1539 = vunpack.c.l.b16 %v813
        %v1540 = vunpack.c.h.b16 %v813
        %v1541 = vunpack.c.l.b16 %v814
        %v1542 = vunpack.c.h.b16 %v814
        %v1543 = vunpack.c.l.b16 %v815
        %v1544 = vunpack.c.h.b16 %v815
        %v1545 = vunpack.c.l.b16 %v816
        %v1546 = vunpack.c.h.b16 %v816
        %v1547 = vunpack.c.l.b16 %v817
        %v1548 = vunpack.c.h.b16 %v817
        %v1549 = vunpack.c.l.b16 %v818
        %v1550 = vunpack.c.h.b16 %v818
        %v1551 = vunpack.c.l.b16 %v819
        %v1552 = vunpack.c.h.b16 %v819
        %v1553 = vunpack.c.l.b16 %v820
        %v1554 = vunpack.c.h.b16 %v820
        %v1555 = vunpack.c.l.b16 %v821
        %v1556 = vunpack.c.h.b16 %v821
        %v1557 = vunpack.c.l.b16 %v822
        %v1558 = vunpack.c.h.b16 %v822
        %v1559 = vunpack.c.l.b16 %v823
        %v1560 = vunpack.c.h.b16 %v823
        %v1561 = vunpack.c.l.b16 %v824
        %v1562 = vunpack.c.h.b16 %v824
        %v1563 = vunpack.c.l.b16 %v825
        %v1564 = vunpack.c.h.b16 %v825
        %v1565 = vunpack.c.l.b16 %v826
        %v1566 = vunpack.c.h.b16 %v826
        %v1567 = vunpack.c.l.b16 %v827
        %v1568 = vunpack.c.h.b16 %v827
        %v1569 = vunpack.c.l.b16 %v828
        %v1570 = vunpack.c.h.b16 %v828
        %v1571 = vunpack.c.l.b16 %v829
        %v1572 = vunpack.c.h.b16 %v829
        %v1573 = vunpack.c.l.b16 %v830
        %v1574 = vunpack.c.h.b16 %v830
        %v1575 = vunpack.c.l.b16 %v831
        %v1576 = vunpack.c.h.b16 %v831
        %v1577 = vunpack.c.l.b16 %v832
        %v1578 = vunpack.c.h.b16 %v832
        %v1579 = vunpack.c.l.b16 %v833
        %v1580 = vunpack.c.h.b16 %v833
        %v1581 = vunpack.c.l.b16 %v834
        %v1582 = vunpack.c.h.b16 %v834
        %v1583 = vunpack.c.l.b16 %v835
        %v1584 = vunpack.c.h.b16 %v835
        %v1585 = vunpack.c.l.b16 %v836
        %v1586 = vunpack.c.h.b16 %v836
        %v1587 = vunpack.c.l.b16 %v837
        %v1588 = vunpack.c.h.b16 %v837
        %v1589 = vunpack.c.l.b16 %v838
        %v1590 = vunpack.c.h.b16 %v838
        %v1591 = vunpack.c.l.b16 %v839
        %v1592 = vunpack.c.h.b16 %v839
        %v1593 = vunpack.c.l.b16 %v840
        %v1594 = vunpack.c.h.b16 %v840
        %v1595 = vunpack.c.l.b16 %v841
        %v1596 = vunpack.c.h.b16 %v841
        %v1597 = vunpack.c.l.b16 %v842
        %v1598 = vunpack.c.h.b16 %v842
        %v1599 = vunpack.c.l.b16 %v843
        %v1600 = vunpack.c.h.b16 %v843
        %v1601 = vunpack.c.l.b16 %v844
        %v1602 = vunpack.c.h.b16 %v844
        %v1603 = vunpack.c.l.b16 %v845
        %v1604 = vunpack.c.h.b16 %v845
        %v1605 = vunpack.c.l.b16 %v846
        %v1606 = vunpack.c.h.b16 %v846
        %v1607 = vunpack.c.l.b16 %v847
        %v1608 = vunpack.c.h.b16 %v847
        %v1609 = vunpack.c.l.b16 %v848
        %v1610 = vunpack.c.h.b16 %v848
        %v1611 = vunpack.c.l.b16 %v849
        %v1612 = vunpack.c.h.b16 %v849
        %v1613 = vunpack.c.l.b16 %v850
        %v1614 = vunpack.c.h.b16 %v850
        %v1615 = vunpack.c.l.b16 %v851
        %v1616 = vunpack.c.h.b16 %v851
        %v1617 = vunpack.c.l.b16 %v852
        %v1618 = vunpack.c.h.b16 %v852
        %v1619 = vunpack.c.l.b16 %v853
        %v1620 = vunpack.c.h.b16 %v853
        %v1621 = vunpack.c.l.b16 %v854
        %v1622 = vunpack.c.h.b16 %v854
        %v1623 = vunpack.c.l.b16 %v855
        %v1624 = vunpack.c.h.b16 %v855
        %v1625 = vunpack.c.l.b16 %v856
        %v1626 = vunpack.c.h.b16 %v856
        %v1627 = vunpack.c.l.b16 %v857
        %v1628 = vunpack.c.h.b16 %v857
        %v1629 = vunpack.c.l.b16 %v858
        %v1630 = vunpack.c.h.b16 %v858
        %v1631 = vunpack.c.l.b16 %v859
        %v1632 = vunpack.c.h.b16 %v859
        %v1633 = vunpack.c.l.b16 %v860
        %v1634 = vunpack.c.h.b16 %v860
        %v1635 = vunpack.c.l.b16 %v861
        %v1636 = vunpack.c.h.b16 %v861
        %v1637 = vunpack.c.l.b16 %v862
        %v1638 = vunpack.c.h.b16 %v862
        %v1639 = vunpack.c.l.b16 %v863
        %v1640 = vunpack.c.h.b16 %v863
        %v1641 = vunpack.c.l.b16 %v864
        %v1642 = vunpack.c.h.b16 %v864
        %v1643 = vunpack.c.l.b16 %v865
        %v1644 = vunpack.c.h.b16 %v865
        %v1645 = vunpack.c.l.b16 %v866
        %v1646 = vunpack.c.h.b16 %v866
        %v1647 = vunpack.c.l.b16 %v867
        %v1648 = vunpack.c.h.b16 %v867
        %v1649 = vunpack.c.l.b16 %v868
        %v1650 = vunpack.c.h.b16 %v868
        %v1651 = vunpack.c.l.b16 %v869
        %v1652 = vunpack.c.h.b16 %v869
        %v1653 = vunpack.c.l.b16 %v870
        %v1654 = vunpack.c.h.b16 %v870
        %v1655 = vunpack.c.l.b16 %v871
        %v1656 = vunpack.c.h.b16 %v871
        %v1657 = vunpack.c.l.b16 %v872
        %v1658 = vunpack.c.h.b16 %v872
        %v1659 = vunpack.c.l.b16 %v873
        %v1660 = vunpack.c.h.b16 %v873
        %v1661 = vunpack.c.l.b16 %v874
        %v1662 = vunpack.c.h.b16 %v874
        %v1663 = vunpack.c.l.b16 %v875
        %v1664 = vunpack.c.h.b16 %v875
        %v1665 = vunpack.c.l.b16 %v876
        %v1666 = vunpack.c.h.b16 %v876
        %v1667 = vunpack.c.l.b16 %v877
        %v1668 = vunpack.c.h.b16 %v877
        %v1669 = vunpack.c.l.b16 %v878
        %v1670 = vunpack.c.h.b16 %v878
        %v1671 = vunpack.c.l.b16 %v879
        %v1672 = vunpack.c.h.b16 %v879
        %v1673 = vunpack.c.l.b16 %v880
        %v1674 = vunpack.c.h.b16 %v880
        %v1675 = vunpack.c.l.b16 %v881
        %v1676 = vunpack.c.h.b16 %v881
        %v1677 = vunpack.c.l.b16 %v882
        %v1678 = vunpack.c.h.b16 %v882
        %v1679 = vunpack.c.l.b16 %v883
        %v1680 = vunpack.c.h.b16 %v883
        %v1681 = vunpack.c.l.b16 %v884
        %v1682 = vunpack.c.h.b16 %v884
        %v1683 = vunpack.c.l.b16 %v885
        %v1684 = vunpack.c.h.b16 %v885
        %v1685 = vunpack.c.l.b16 %v886
        %v1686 = vunpack.c.h.b16 %v886
        %v1687 = vunpack.c.l.b16 %v887
        %v1688 = vunpack.c.h.b16 %v887
        %v1689 = vunpack.c.l.b16 %v888
        %v1690 = vunpack.c.h.b16 %v888
        %v1691 = vunpack.c.l.b16 %v889
        %v1692 = vunpack.c.h.b16 %v889
        %v1693 = vunpack.c.l.b16 %v890
        %v1694 = vunpack.c.h.b16 %v890
        %v1695 = vunpack.c.l.b16 %v891
        %v1696 = vunpack.c.h.b16 %v891
        %v1697 = vunpack.c.l.b16 %v892
        %v1698 = vunpack.c.h.b16 %v892
        %v1699 = vunpack.c.l.b16 %v893
        %v1700 = vunpack.c.h.b16 %v893
        %v1701 = vunpack.c.l.b16 %v894
        %v1702 = vunpack.c.h.b16 %v894
        %v1703 = vunpack.c.l.b16 %v895
        %v1704 = vunpack.c.h.b16 %v895
        %v1705 = vunpack.c.l.b16 %v896
        %v1706 = vunpack.c.h.b16 %v896
        %v1707 = vunpack.c.l.b16 %v897
        %v1708 = vunpack.c.h.b16 %v897
        %v1709 = vunpack.c.l.b16 %v898
        %v1710 = vunpack.c.h.b16 %v898
        %v1711 = vunpack.c.l.b16 %v899
        %v1712 = vunpack.c.h.b16 %v899
        %v1713 = vunpack.c.l.b16 %v900
        %v1714 = vunpack.c.h.b16 %v900
        %v1715 = vunpack.c.l.b16 %v901
        %v1716 = vunpack.c.h.b16 %v901
        %v1717 = vunpack.c.l.b16 %v902
        %v1718 = vunpack.c.h.b16 %v902
        %v1719 = vunpack.c.l.b16 %v903
        %v1720 = vunpack.c.h.b16 %v903
        %v1721 = vunpack.c.l.b16 %v904
        %v1722 = vunpack.c.h.b16 %v904
        %v1723 = vunpack.c.l.b16 %v905
        %v1724 = vunpack.c.h.b16 %v905
        %v1725 = vunpack.c.l.b16 %v906
        %v1726 = vunpack.c.h.b16 %v906
        %v1727 = vunpack.c.l.b16 %v907
        %v1728 = vunpack.c.h.b16 %v907
        %v1729 = vunpack.c.l.b16 %v908
        %v1730 = vunpack.c.h.b16 %v908
        %v1731 = vunpack.c.l.b16 %v909
        %v1732 = vunpack.c.h.b16 %v909
        %v1733 = vunpack.c.l.b16 %v910
        %v1734 = vunpack.c.h.b16 %v910
        %v1735 = vunpack.c.l.b16 %v911
        %v1736 = vunpack.c.h.b16 %v911
        %v1737 = vunpack.c.l.b16 %v912
        %v1738 = vunpack.c.h.b16 %v912
        %v1739 = vunpack.c.l.b16 %v913
        %v1740 = vunpack.c.h.b16 %v913
        %v1741 = vunpack.c.l.b16 %v914
        %v1742 = vunpack.c.h.b16 %v914
        %v1743 = vunpack.c.l.b16 %v915
        %v1744 = vunpack.c.h.b16 %v915
        %v1745 = vunpack.c.l.b16 %v916
        %v1746 = vunpack.c.h.b16 %v916
        %v1747 = vunpack.c.l.b16 %v917
        %v1748 = vunpack.c.h.b16 %v917
        %v1749 = vunpack.c.l.b16 %v918
        %v1750 = vunpack.c.h.b16 %v918
        %v1751 = vunpack.c.l.b16 %v919
        %v1752 = vunpack.c.h.b16 %v919
        %v1753 = vunpack.c.l.b16 %v920
        %v1754 = vunpack.c.h.b16 %v920
        %v1755 = vunpack.c.l.b16 %v921
        %v1756 = vunpack.c.h.b16 %v921
        %v1757 = vunpack.c.l.b16 %v922
        %v1758 = vunpack.c.h.b16 %v922
        %v1759 = vunpack.c.l.b16 %v923
        %v1760 = vunpack.c.h.b16 %v923
        %v1761 = vunpack.c.l.b16 %v924
        %v1762 = vunpack.c.h.b16 %v924
        %v1763 = vunpack.c.l.b16 %v925
        %v1764 = vunpack.c.h.b16 %v925
        %v1765 = vunpack.c.l.b16 %v926
        %v1766 = vunpack.c.h.b16 %v926
        %v1767 = vunpack.c.l.b16 %v927
        %v1768 = vunpack.c.h.b16 %v927
        %v1769 = vunpack.c.l.b16 %v928
        %v1770 = vunpack.c.h.b16 %v928
        %v1771 = vunpack.c.l.b16 %v929
        %v1772 = vunpack.c.h.b16 %v929
        %v1773 = vunpack.c.l.b16 %v930
        %v1774 = vunpack.c.h.b16 %v930
        %v1775 = vunpack.c.l.b16 %v931
        %v1776 = vunpack.c.h.b16 %v931
        %v1777 = vunpack.c.l.b16 %v932
        %v1778 = vunpack.c.h.b16 %v932
        %v1779 = vunpack.c.l.b16 %v933
        %v1780 = vunpack.c.h.b16 %v933
        %v1781 = vunpack.c.l.b16 %v934
        %v1782 = vunpack.c.h.b16 %v934
        %v1783 = vunpack.c.l.b16 %v935
        %v1784 = vunpack.c.h.b16 %v935
        %v1785 = vunpack.c.l.b16 %v936
        %v1786 = vunpack.c.h.b16 %v936
        %v1787 = vunpack.c.l.b16 %v937
        %v1788 = vunpack.c.h.b16 %v937
        %v1789 = vunpack.c.l.b16 %v938
        %v1790 = vunpack.c.h.b16 %v938
        %v1791 = vunpack.c.l.b16 %v939
        %v1792 = vunpack.c.h.b16 %v939
        %v1793 = vunpack.c.l.b16 %v940
        %v1794 = vunpack.c.h.b16 %v940
        %v1795 = vunpack.c.l.b16 %v941
        %v1796 = vunpack.c.h.b16 %v941
        %v1797 = vunpack.c.l.b16 %v942
        %v1798 = vunpack.c.h.b16 %v942
        %v1799 = vunpack.c.l.b16 %v943
        %v1800 = vunpack.c.h.b16 %v943
        %v1801 = vunpack.c.l.b16 %v944
        %v1802 = vunpack.c.h.b16 %v944
        %v1803 = vunpack.c.l.b16 %v945
        %v1804 = vunpack.c.h.b16 %v945
        %v1805 = vunpack.c.l.b16 %v946
        %v1806 = vunpack.c.h.b16 %v946
        %v1807 = vunpack.c.l.b16 %v947
        %v1808 = vunpack.c.h.b16 %v947
        %v1809 = vunpack.c.l.b16 %v948
        %v1810 = vunpack.c.h.b16 %v948
        %v1811 = vunpack.c.l.b16 %v949
        %v1812 = vunpack.c.h.b16 %v949
        %v1813 = vunpack.c.l.b16 %v950
        %v1814 = vunpack.c.h.b16 %v950
        %v1815 = vunpack.c.l.b16 %v951
        %v1816 = vunpack.c.h.b16 %v951
        %v1817 = vunpack.c.l.b16 %v952
        %v1818 = vunpack.c.h.b16 %v952
        %v1819 = vunpack.c.l.b16 %v953
        %v1820 = vunpack.c.h.b16 %v953
        %v1821 = vunpack.c.l.b16 %v954
        %v1822 = vunpack.c.h.b16 %v954
        %v1823 = vunpack.c.l.b16 %v955
        %v1824 = vunpack.c.h.b16 %v955
        %v1825 = vunpack.c.l.b16 %v956
        %v1826 = vunpack.c.h.b16 %v956
        %v1827 = vunpack.c.l.b16 %v957
        %v1828 = vunpack.c.h.b16 %v957
        %v1829 = vunpack.c.l.b16 %v958
        %v1830 = vunpack.c.h.b16 %v958
        %v1831 = vunpack.c.l.b16 %v959
        %v1832 = vunpack.c.h.b16 %v959
        %v1833 = vunpack.c.l.b16 %v960
        %v1834 = vunpack.c.h.b16 %v960
        %v1835 = vunpack.c.l.b16 %v961
        %v1836 = vunpack.c.h.b16 %v961
        %v1837 = vunpack.c.l.b16 %v962
        %v1838 = vunpack.c.h.b16 %v962
        %v1839 = vunpack.c.l.b16 %v963
        %v1840 = vunpack.c.h.b16 %v963
        %v1841 = vunpack.c.l.b16 %v964
        %v1842 = vunpack.c.h.b16 %v964
        %v1843 = vunpack.c.l.b16 %v965
        %v1844 = vunpack.c.h.b16 %v965
        %v1845 = vunpack.c.l.b16 %v966
        %v1846 = vunpack.c.h.b16 %v966
        %v1847 = vunpack.c.l.b16 %v967
        %v1848 = vunpack.c.h.b16 %v967
        %v1849 = vunpack.c.l.b16 %v968
        %v1850 = vunpack.c.h.b16 %v968
        %v1851 = vunpack.c.l.b16 %v969
        %v1852 = vunpack.c.h.b16 %v969
        %v1853 = vunpack.c.l.b16 %v970
        %v1854 = vunpack.c.h.b16 %v970
        %v1855 = vunpack.c.l.b16 %v971
        %v1856 = vunpack.c.h.b16 %v971
        %v1857 = vunpack.c.l.b16 %v972
        %v1858 = vunpack.c.h.b16 %v972
        %v1859 = vunpack.c.l.b16 %v973
        %v1860 = vunpack.c.h.b16 %v973
        %v1861 = vunpack.c.l.b16 %v974
        %v1862 = vunpack.c.h.b16 %v974
        %v1863 = vunpack.c.l.b16 %v975
        %v1864 = vunpack.c.h.b16 %v975
        %v1865 = vunpack.c.l.b16 %v976
        %v1866 = vunpack.c.h.b16 %v976
        %v1867 = vunpack.c.l.b16 %v977
        %v1868 = vunpack.c.h.b16 %v977
        %v1869 = vunpack.c.l.b16 %v978
        %v1870 = vunpack.c.h.b16 %v978
        %v1871 = vunpack.c.l.b16 %v979
        %v1872 = vunpack.c.h.b16 %v979
        %v1873 = vunpack.c.l.b16 %v980
        %v1874 = vunpack.c.h.b16 %v980
        %v1875 = vunpack.c.l.b16 %v981
        %v1876 = vunpack.c.h.b16 %v981
        %v1877 = vunpack.c.l.b16 %v982
        %v1878 = vunpack.c.h.b16 %v982
        %v1879 = vunpack.c.l.b16 %v983
        %v1880 = vunpack.c.h.b16 %v983
        %v1881 = vunpack.c.l.b16 %v984
        %v1882 = vunpack.c.h.b16 %v984
        %v1883 = vunpack.c.l.b16 %v985
        %v1884 = vunpack.c.h.b16 %v985
        %v1885 = vunpack.c.l.b16 %v986
        %v1886 = vunpack.c.h.b16 %v986
        %v1887 = vunpack.c.l.b16 %v987
        %v1888 = vunpack.c.h.b16 %v987
        %v1889 = vunpack.c.l.b16 %v988
        %v1890 = vunpack.c.h.b16 %v988
        %v1891 = vunpack.c.l.b16 %v989
        %v1892 = vunpack.c.h.b16 %v989
        %v1893 = vunpack.c.l.b16 %v990
        %v1894 = vunpack.c.h.b16 %v990
        %v1895 = vunpack.c.l.b16 %v991
        %v1896 = vunpack.c.h.b16 %v991
        %v1897 = vunpack.c.l.b16 %v992
        %v1898 = vunpack.c.h.b16 %v992
        %v1899 = vunpack.c.l.b16 %v993
        %v1900 = vunpack.c.h.b16 %v993
        %v1901 = vunpack.c.l.b16 %v994
        %v1902 = vunpack.c.h.b16 %v994
        %v1903 = vunpack.c.l.b16 %v995
        %v1904 = vunpack.c.h.b16 %v995
        %v1905 = vunpack.c.l.b16 %v996
        %v1906 = vunpack.c.h.b16 %v996
        %v1907 = vunpack.c.l.b16 %v997
        %v1908 = vunpack.c.h.b16 %v997
        %v1909 = vunpack.c.l.b16 %v998
        %v1910 = vunpack.c.h.b16 %v998
        %v1911 = vunpack.c.l.b16 %v999
        %v1912 = vunpack.c.h.b16 %v999
        %v1913 = vunpack.c.l.b16 %v1000
        %v1914 = vunpack.c.h.b16 %v1000
        %v1915 = vunpack.c.l.b16 %v1001
        %v1916 = vunpack.c.h.b16 %v1001
        %v1917 = vunpack.c.l.b16 %v1002
        %v1918 = vunpack.c.h.b16 %v1002
        %v1919 = vunpack.c.l.b16 %v1003
        %v1920 = vunpack.c.h.b16 %v1003
        %v1921 = vunpack.c.l.b16 %v1004
        %v1922 = vunpack.c.h.b16 %v1004
        %v1923 = vunpack.c.l.b16 %v1005
        %v1924 = vunpack.c.h.b16 %v1005
        %v1925 = vunpack.c.l.b16 %v1006
        %v1926 = vunpack.c.h.b16 %v1006
        %v1927 = vunpack.c.l.b16 %v1007
        %v1928 = vunpack.c.h.b16 %v1007
        %v1929 = vunpack.c.l.b16 %v1008
        %v1930 = vunpack.c.h.b16 %v1008
        %v1931 = vunpack.c.l.b16 %v1009
        %v1932 = vunpack.c.h.b16 %v1009
        %v1933 = vunpack.c.l.b16 %v1010
        %v1934 = vunpack.c.h.b16 %v1010
        %v1935 = vpack.c.b16 %v1365, %v1359
        %v1936 = vpack.c.b16 %v1366, %v1360
        %v1937 = vpack.c.b16 %v1367, %v1361
        %v1938 = vpack.c.b16 %v1368, %v1362
        %v1939 = vpack.c.b16 %v1369, %v1363
        %v1940 = vpack.c.b16 %v1370, %v1364
        %v1941 = vpack.c.b16 %v1377, %v1371
        %v1942 = vpack.c.b16 %v1378, %v1372
        %v1943 = vpack.c.b16 %v1379, %v1373
        %v1944 = vpack.c.b16 %v1380, %v1374
        %v1945 = vpack.c.b16 %v1381, %v1375
        %v1946 = vpack.c.b16 %v1382, %v1376
        %v1947 = vpack.c.b16 %v1389, %v1383
        %v1948 = vpack.c.b16 %v1390, %v1384
        %v1949 = vpack.c.b16 %v1391, %v1385
        %v1950 = vpack.c.b16 %v1392, %v1386
        %v1951 = vpack.c.b16 %v1393, %v1387
        %v1952 = vpack.c.b16 %v1394, %v1388
        %v1953 = vpack.c.b16 %v1401, %v1395
        %v1954 = vpack.c.b16 %v1402, %v1396
        %v1955 = vpack.c.b16 %v1403, %v1397
        %v1956 = vpack.c.b16 %v1404, %v1398
        %v1957 = vpack.c.b16 %v1405, %v1399
        %v1958 = vpack.c.b16 %v1406, %v1400
        %v1959 = vpack.c.b16 %v1413, %v1407
        %v1960 = vpack.c.b16 %v1414, %v1408
        %v1961 = vpack.c.b16 %v1415, %v1409
        %v1962 = vpack.c.b16 %v1416, %v1410
        %v1963 = vpack.c.b16 %v1417, %v1411
        %v1964 = vpack.c.b16 %v1418, %v1412
        %v1965 = vpack.c.b16 %v1425, %v1419
        %v1966 = vpack.c.b16 %v1426, %v1420
        %v1967 = vpack.c.b16 %v1427, %v1421
        %v1968 = vpack.c.b16 %v1428, %v1422
        %v1969 = vpack.c.b16 %v1429, %v1423
        %v1970 = vpack.c.b16 %v1430, %v1424
        %v1971 = vpack.c.b16 %v1437, %v1431
        %v1972 = vpack.c.b16 %v1438, %v1432
        %v1973 = vpack.c.b16 %v1439, %v1433
        %v1974 = vpack.c.b16 %v1440, %v1434
        %v1975 = vpack.c.b16 %v1441, %v1435
        %v1976 = vpack.c.b16 %v1442, %v1436
        %v1977 = vpack.c.b16 %v1449, %v1443
        %v1978 = vpack.c.b16 %v1450, %v1444
        %v1979 = vpack.c.b16 %v1451, %v1445
        %v1980 = vpack.c.b16 %v1452, %v1446
        %v1981 = vpack.c.b16 %v1453, %v1447
        %v1982 = vpack.c.b16 %v1454, %v1448
        %v1983 = vpack.c.b16 %v1461, %v1455
        %v1984 = vpack.c.b16 %v1462, %v1456
        %v1985 = vpack.c.b16 %v1463, %v1457
        %v1986 = vpack.c.b16 %v1464, %v1458
        %v1987 = vpack.c.b16 %v1465, %v1459
        %v1988 = vpack.c.b16 %v1466, %v1460
        %v1989 = vpack.c.b16 %v1473, %v1467
        %v1990 = vpack.c.b16 %v1474, %v1468
        %v1991 = vpack.c.b16 %v1475, %v1469
        %v1992 = vpack.c.b16 %v1476, %v1470
        %v1993 = vpack.c.b16 %v1477, %v1471
        %v1994 = vpack.c.b16 %v1478, %v1472
        %v1995 = vpack.c.b16 %v1485, %v1479
        %v1996 = vpack.c.b16 %v1486, %v1480
        %v1997 = vpack.c.b16 %v1487, %v1481
        %v1998 = vpack.c.b16 %v1488, %v1482
        %v1999 = vpack.c.b16 %v1489, %v1483
        %v2000 = vpack.c.b16 %v1490, %v1484
        %v2001 = vpack.c.b16 %v1497, %v1491
        %v2002 = vpack.c.b16 %v1498, %v1492
        %v2003 = vpack.c.b16 %v1499, %v1493
        %v2004 = vpack.c.b16 %v1500, %v1494
        %v2005 = vpack.c.b16 %v1501, %v1495
        %v2006 = vpack.c.b16 %v1502, %v1496
        %v2007 = vpack.c.b16 %v1509, %v1503
        %v2008 = vpack.c.b16 %v1510, %v1504
        %v2009 = vpack.c.b16 %v1511, %v1505
        %v2010 = vpack.c.b16 %v1512, %v1506
        %v2011 = vpack.c.b16 %v1513, %v1507
        %v2012 = vpack.c.b16 %v1514, %v1508
        %v2013 = vpack.c.b16 %v1521, %v1515
        %v2014 = vpack.c.b16 %v1522, %v1516
        %v2015 = vpack.c.b16 %v1523, %v1517
        %v2016 = vpack.c.b16 %v1524, %v1518
        %v2017 = vpack.c.b16 %v1525, %v1519
        %v2018 = vpack.c.b16 %v1526, %v1520
        %v2019 = vpack.c.b16 %v1533, %v1527
        %v2020 = vpack.c.b16 %v1534, %v1528
        %v2021 = vpack.c.b16 %v1535, %v1529
        %v2022 = vpack.c.b16 %v1536, %v1530
        %v2023 = vpack.c.b16 %v1537, %v1531
        %v2024 = vpack.c.b16 %v1538, %v1532
        %v2025 = vpack.c.b16 %v1545, %v1539
        %v2026 = vpack.c.b16 %v1546, %v1540
        %v2027 = vpack.c.b16 %v1547, %v1541
        %v2028 = vpack.c.b16 %v1548, %v1542
        %v2029 = vpack.c.b16 %v1549, %v1543
        %v2030 = vpack.c.b16 %v1550, %v1544
        %v2031 = vpack.c.b16 %v1557, %v1551
        %v2032 = vpack.c.b16 %v1558, %v1552
        %v2033 = vpack.c.b16 %v1559, %v1553
        %v2034 = vpack.c.b16 %v1560, %v1554
        %v2035 = vpack.c.b16 %v1561, %v1555
        %v2036 = vpack.c.b16 %v1562, %v1556
        %v2037 = vpack.c.b16 %v1569, %v1563
        %v2038 = vpack.c.b16 %v1570, %v1564
        %v2039 = vpack.c.b16 %v1571, %v1565
        %v2040 = vpack.c.b16 %v1572, %v1566
        %v2041 = vpack.c.b16 %v1573, %v1567
        %v2042 = vpack.c.b16 %v1574, %v1568
        %v2043 = vpack.c.b16 %v1581, %v1575
        %v2044 = vpack.c.b16 %v1582, %v1576
        %v2045 = vpack.c.b16 %v1583, %v1577
        %v2046 = vpack.c.b16 %v1584, %v1578
        %v2047 = vpack.c.b16 %v1585, %v1579
        %v2048 = vpack.c.b16 %v1586, %v1580
        %v2049 = vpack.c.b16 %v1593, %v1587
        %v2050 = vpack.c.b16 %v1594, %v1588
        %v2051 = vpack.c.b16 %v1595, %v1589
        %v2052 = vpack.c.b16 %v1596, %v1590
        %v2053 = vpack.c.b16 %v1597, %v1591
        %v2054 = vpack.c.b16 %v1598, %v1592
        %v2055 = vpack.c.b16 %v1605, %v1599
        %v2056 = vpack.c.b16 %v1606, %v1600
        %v2057 = vpack.c.b16 %v1607, %v1601
        %v2058 = vpack.c.b16 %v1608, %v1602
        %v2059 = vpack.c.b16 %v1609, %v1603
        %v2060 = vpack.c.b16 %v1610, %v1604
        %v2061 = vpack.c.b16 %v1617, %v1611
        %v2062 = vpack.c.b16 %v1618, %v1612
        %v2063 = vpack.c.b16 %v1619, %v1613
        %v2064 = vpack.c.b16 %v1620, %v1614
        %v2065 = vpack.c.b16 %v1621, %v1615
        %v2066 = vpack.c.b16 %v1622, %v1616
        %v2067 = vpack.c.b16 %v1629, %v1623
        %v2068 = vpack.c.b16 %v1630, %v1624
        %v2069 = vpack.c.b16 %v1631, %v1625
        %v2070 = vpack.c.b16 %v1632, %v1626
        %v2071 = vpack.c.b16 %v1633, %v1627
        %v2072 = vpack.c.b16 %v1634, %v1628
        %v2073 = vpack.c.b16 %v1641, %v1635
        %v2074 = vpack.c.b16 %v1642, %v1636
        %v2075 = vpack.c.b16 %v1643, %v1637
        %v2076 = vpack.c.b16 %v1644, %v1638
        %v2077 = vpack.c.b16 %v1645, %v1639
        %v2078 = vpack.c.b16 %v1646, %v1640
        %v2079 = vpack.c.b16 %v1653, %v1647
        %v2080 = vpack.c.b16 %v1654, %v1648
        %v2081 = vpack.c.b16 %v1655, %v1649
        %v2082 = vpack.c.b16 %v1656, %v1650
        %v2083 = vpack.c.b16 %v1657, %v1651
        %v2084 = vpack.c.b16 %v1658, %v1652
        %v2085 = vpack.c.b16 %v1665, %v1659
        %v2086 = vpack.c.b16 %v1666, %v1660
        %v2087 = vpack.c.b16 %v1667, %v1661
        %v2088 = vpack.c.b16 %v1668, %v1662
        %v2089 = vpack.c.b16 %v1669, %v1663
        %v2090 = vpack.c.b16 %v1670, %v1664
        %v2091 = vpack.c.b16 %v1677, %v1671
        %v2092 = vpack.c.b16 %v1678, %v1672
        %v2093 = vpack.c.b16 %v1679, %v1673
        %v2094 = vpack.c.b16 %v1680, %v1674
        %v2095 = vpack.c.b16 %v1681, %v1675
        %v2096 = vpack.c.b16 %v1682, %v1676
        %v2097 = vpack.c.b16 %v1689, %v1683
        %v2098 = vpack.c.b16 %v1690, %v1684
        %v2099 = vpack.c.b16 %v1691, %v1685
        %v2100 = vpack.c.b16 %v1692, %v1686
        %v2101 = vpack.c.b16 %v1693, %v1687
        %v2102 = vpack.c.b16 %v1694, %v1688
        %v2103 = vpack.c.b16 %v1701, %v1695
        %v2104 = vpack.c.b16 %v1702, %v1696
        %v2105 = vpack.c.b16 %v1703, %v1697
        %v2106 = vpack.c.b16 %v1704, %v1698
        %v2107 = vpack.c.b16 %v1705, %v1699
        %v2108 = vpack.c.b16 %v1706, %v1700
        %v2109 = vpack.c.b16 %v1713, %v1707
        %v2110 = vpack.c.b16 %v1714, %v1708
        %v2111 = vpack.c.b16 %v1715, %v1709
        %v2112 = vpack.c.b16 %v1716, %v1710
        %v2113 = vpack.c.b16 %v1717, %v1711
        %v2114 = vpack.c.b16 %v1718, %v1712
        %v2115 = vpack.c.b16 %v1725, %v1719
        %v2116 = vpack.c.b16 %v1726, %v1720
        %v2117 = vpack.c.b16 %v1727, %v1721
        %v2118 = vpack.c.b16 %v1728, %v1722
        %v2119 = vpack.c.b16 %v1729, %v1723
        %v2120 = vpack.c.b16 %v1730, %v1724
        %v2121 = vpack.c.b16 %v1737, %v1731
        %v2122 = vpack.c.b16 %v1738, %v1732
        %v2123 = vpack.c.b16 %v1739, %v1733
        %v2124 = vpack.c.b16 %v1740, %v1734
        %v2125 = vpack.c.b16 %v1741, %v1735
        %v2126 = vpack.c.b16 %v1742, %v1736
        %v2127 = vpack.c.b16 %v1749, %v1743
        %v2128 = vpack.c.b16 %v1750, %v1744
        %v2129 = vpack.c.b16 %v1751, %v1745
        %v2130 = vpack.c.b16 %v1752, %v1746
        %v2131 = vpack.c.b16 %v1753, %v1747
        %v2132 = vpack.c.b16 %v1754, %v1748
        %v2133 = vpack.c.b16 %v1761, %v1755
        %v2134 = vpack.c.b16 %v1762, %v1756
        %v2135 = vpack.c.b16 %v1763, %v1757
        %v2136 = vpack.c.b16 %v1764, %v1758
        %v2137 = vpack.c.b16 %v1765, %v1759
        %v2138 = vpack.c.b16 %v1766, %v1760
        %v2139 = vpack.c.b16 %v1773, %v1767
        %v2140 = vpack.c.b16 %v1774, %v1768
        %v2141 = vpack.c.b16 %v1775, %v1769
        %v2142 = vpack.c.b16 %v1776, %v1770
        %v2143 = vpack.c.b16 %v1777, %v1771
        %v2144 = vpack.c.b16 %v1778, %v1772
        %v2145 = vpack.c.b16 %v1785, %v1779
        %v2146 = vpack.c.b16 %v1786, %v1780
        %v2147 = vpack.c.b16 %v1787, %v1781
        %v2148 = vpack.c.b16 %v1788, %v1782
        %v2149 = vpack.c.b16 %v1789, %v1783
        %v2150 = vpack.c.b16 %v1790, %v1784
        %v2151 = vpack.c.b16 %v1797, %v1791
        %v2152 = vpack.c.b16 %v1798, %v1792
        %v2153 = vpack.c.b16 %v1799, %v1793
        %v2154 = vpack.c.b16 %v1800, %v1794
        %v2155 = vpack.c.b16 %v1801, %v1795
        %v2156 = vpack.c.b16 %v1802, %v1796
        %v2157 = vpack.c.b16 %v1809, %v1803
        %v2158 = vpack.c.b16 %v1810, %v1804
        %v2159 = vpack.c.b16 %v1811, %v1805
        %v2160 = vpack.c.b16 %v1812, %v1806
        %v2161 = vpack.c.b16 %v1813, %v1807
        %v2162 = vpack.c.b16 %v1814, %v1808
        %v2163 = vpack.c.b16 %v1821, %v1815
        %v2164 = vpack.c.b16 %v1822, %v1816
        %v2165 = vpack.c.b16 %v1823, %v1817
        %v2166 = vpack.c.b16 %v1824, %v1818
        %v2167 = vpack.c.b16 %v1825, %v1819
        %v2168 = vpack.c.b16 %v1826, %v1820
        %v2169 = vpack.c.b16 %v1833, %v1827
        %v2170 = vpack.c.b16 %v1834, %v1828
        %v2171 = vpack.c.b16 %v1835, %v1829
        %v2172 = vpack.c.b16 %v1836, %v1830
        %v2173 = vpack.c.b16 %v1837, %v1831
        %v2174 = vpack.c.b16 %v1838, %v1832
        %v2175 = vpack.c.b16 %v1845, %v1839
        %v2176 = vpack.c.b16 %v1846, %v1840
        %v2177 = vpack.c.b16 %v1847, %v1841
        %v2178 = vpack.c.b16 %v1848, %v1842
        %v2179 = vpack.c.b16 %v1849, %v1843
        %v2180 = vpack.c.b16 %v1850, %v1844
        %v2181 = vpack.c.b16 %v1857, %v1851
        %v2182 = vpack.c.b16 %v1858, %v1852
        %v2183 = vpack.c.b16 %v1859, %v1853
        %v2184 = vpack.c.b16 %v1860, %v1854
        %v2185 = vpack.c.b16 %v1861, %v1855
        %v2186 = vpack.c.b16 %v1862, %v1856
        %v2187 = vpack.c.b16 %v1869, %v1863
        %v2188 = vpack.c.b16 %v1870, %v1864
        %v2189 = vpack.c.b16 %v1871, %v1865
        %v2190 = vpack.c.b16 %v1872, %v1866
        %v2191 = vpack.c.b16 %v1873, %v1867
        %v2192 = vpack.c.b16 %v1874, %v1868
        %v2193 = vpack.c.b16 %v1881, %v1875
        %v2194 = vpack.c.b16 %v1882, %v1876
        %v2195 = vpack.c.b16 %v1883, %v1877
        %v2196 = vpack.c.b16 %v1884, %v1878
        %v2197 = vpack.c.b16 %v1885, %v1879
        %v2198 = vpack.c.b16 %v1886, %v1880
        %v2199 = vpack.c.b16 %v1893, %v1887
        %v2200 = vpack.c.b16 %v1894, %v1888
        %v2201 = vpack.c.b16 %v1895, %v1889
        %v2202 = vpack.c.b16 %v1896, %v1890
        %v2203 = vpack.c.b16 %v1897, %v1891
        %v2204 = vpack.c.b16 %v1898, %v1892
        %v2205 = vpack.c.b16 %v1905, %v1899
        %v2206 = vpack.c.b16 %v1906, %v1900
        %v2207 = vpack.c.b16 %v1907, %v1901
        %v2208 = vpack.c.b16 %v1908, %v1902
        %v2209 = vpack.c.b16 %v1909, %v1903
        %v2210 = vpack.c.b16 %v1910, %v1904
        %v2211 = vpack.c.b16 %v1917, %v1911
        %v2212 = vpack.c.b16 %v1918, %v1912
        %v2213 = vpack.c.b16 %v1919, %v1913
        %v2214 = vpack.c.b16 %v1920, %v1914
        %v2215 = vpack.c.b16 %v1921, %v1915
        %v2216 = vpack.c.b16 %v1922, %v1916
        %v2217 = vpack.c.b16 %v1929, %v1923
        %v2218 = vpack.c.b16 %v1930, %v1924
        %v2219 = vpack.c.b16 %v1931, %v1925
        %v2220 = vpack.c.b16 %v1932, %v1926
        %v2221 = vpack.c.b16 %v1933, %v1927
        %v2222 = vpack.c.b16 %v1934, %v1928
        %2511 = vmatprep.subr.bf16.mxu0 %v1936
        %2512 = vmatpush1.bf16.msra.mxu0 %v1935
        %2513 = vmatprep.subr.bf16.mxu0 %v1942
        %2514 = vmatpush1.bf16.msra.mxu0 %v1941
        %2515 = vmatprep.subr.bf16.mxu0 %v1948
        %2516 = vmatpush1.bf16.msra.mxu0 %v1947
        %2517 = vmatprep.subr.bf16.mxu0 %v1954
        %2518 = vmatpush1.bf16.msra.mxu0 %v1953
        %2519 = vmatprep.subr.bf16.mxu0 %v1960
        %2520 = vmatpush1.bf16.msra.mxu0 %v1959
        %2521 = vmatprep.subr.bf16.mxu0 %v1966
        %2522 = vmatpush1.bf16.msra.mxu0 %v1965
        %2523 = vmatprep.subr.bf16.mxu0 %v1972
        %2524 = vmatpush1.bf16.msra.mxu0 %v1971
        %2525 = vmatprep.subr.bf16.mxu0 %v1978
        %2526 = vmatpush1.bf16.msra.mxu0 %v1977
        %2527 = vmatprep.subr.bf16.mxu0 %v1984
        %2528 = vmatpush1.bf16.msra.mxu0 %v1983
        %2529 = vmatprep.subr.bf16.mxu0 %v1990
        %2530 = vmatpush1.bf16.msra.mxu0 %v1989
        %2531 = vmatprep.subr.bf16.mxu0 %v1996
        %2532 = vmatpush1.bf16.msra.mxu0 %v1995
        %2533 = vmatprep.subr.bf16.mxu0 %v2002
        %2534 = vmatpush1.bf16.msra.mxu0 %v2001
        %2535 = vmatprep.subr.bf16.mxu0 %v2008
        %2536 = vmatpush1.bf16.msra.mxu0 %v2007
        %2537 = vmatprep.subr.bf16.mxu0 %v2014
        %2538 = vmatpush1.bf16.msra.mxu0 %v2013
        %2539 = vmatprep.subr.bf16.mxu0 %v2020
        %2540 = vmatpush1.bf16.msra.mxu0 %v2019
        %2541 = vmatprep.subr.bf16.mxu0 %v2026
        %2542 = vmatpush1.bf16.msra.mxu0 %v2025
        %2543 = vmatprep.mubr.bf16.mxu0 %v1048
        %2544 = vmatmul.mubr.bf16.gmra.mrb[0].mxu0 %v1047
        %v2545 = vpop.f32.mrb[0].mxu0
        %v2546 = vadd.f32 0.0, %v2545
        %v2547 = vpop.f32.mrb[0].mxu0
        %v2548 = vadd.f32 0.0, %v2547
        %v2549 = vpop.f32.mrb[0].mxu0
        %v2550 = vadd.f32 0.0, %v2549
        %v2551 = vpop.f32.mrb[0].mxu0
        %v2552 = vadd.f32 0.0, %v2551
        %2553 = vmatprep.mubr.bf16.mxu0 %v1054
        %2554 = vmatmul.mubr.bf16.gmra.mrb[0].mxu0 %v1053
        %v2555 = vpop.f32.mrb[0].mxu0
        %v2556 = vadd.f32 0.0, %v2555
        %v2557 = vpop.f32.mrb[0].mxu0
        %v2558 = vadd.f32 0.0, %v2557
        %v2559 = vpop.f32.mrb[0].mxu0
        %v2560 = vadd.f32 0.0, %v2559
        %v2561 = vpop.f32.mrb[0].mxu0
        %v2562 = vadd.f32 0.0, %v2561
        %2563 = vdwg.mxu0
        %2564 = vmatprep.subr.bf16.mxu0 %v2032
        %2565 = vmatpush1.bf16.msra.mxu0 %v2031
        %2566 = vmatprep.subr.bf16.mxu0 %v2038
        %2567 = vmatpush1.bf16.msra.mxu0 %v2037
        %2568 = vmatprep.subr.bf16.mxu0 %v2044
        %2569 = vmatpush1.bf16.msra.mxu0 %v2043
        %2570 = vmatprep.subr.bf16.mxu0 %v2050
        %2571 = vmatpush1.bf16.msra.mxu0 %v2049
        %2572 = vmatprep.subr.bf16.mxu0 %v2056
        %2573 = vmatpush1.bf16.msra.mxu0 %v2055
        %2574 = vmatprep.subr.bf16.mxu0 %v2062
        %2575 = vmatpush1.bf16.msra.mxu0 %v2061
        %2576 = vmatprep.subr.bf16.mxu0 %v2068
        %2577 = vmatpush1.bf16.msra.mxu0 %v2067
        %2578 = vmatprep.subr.bf16.mxu0 %v2074
        %2579 = vmatpush1.bf16.msra.mxu0 %v2073
        %2580 = vmatprep.subr.bf16.mxu0 %v2080
        %2581 = vmatpush1.bf16.msra.mxu0 %v2079
        %2582 = vmatprep.subr.bf16.mxu0 %v2086
        %2583 = vmatpush1.bf16.msra.mxu0 %v2085
        %2584 = vmatprep.subr.bf16.mxu0 %v2092
        %2585 = vmatpush1.bf16.msra.mxu0 %v2091
        %2586 = vmatprep.subr.bf16.mxu0 %v2098
        %2587 = vmatpush1.bf16.msra.mxu0 %v2097
        %2588 = vmatprep.subr.bf16.mxu0 %v2104
        %2589 = vmatpush1.bf16.msra.mxu0 %v2103
        %2590 = vmatprep.subr.bf16.mxu0 %v2110
        %2591 = vmatpush1.bf16.msra.mxu0 %v2109
        %2592 = vmatprep.subr.bf16.mxu0 %v2116
        %2593 = vmatpush1.bf16.msra.mxu0 %v2115
        %2594 = vmatprep.subr.bf16.mxu0 %v2122
        %2595 = vmatpush1.bf16.msra.mxu0 %v2121
        %2596 = vmatprep.mubr.bf16.mxu0 %v1050
        %2597 = vmatmul.mubr.bf16.gmra.mrb[0].mxu0 %v1049
        %v2598 = vpop.f32.mrb[0].mxu0
        %v2599 = vadd.f32 %v2546, %v2598
        %v2600 = vpop.f32.mrb[0].mxu0
        %v2601 = vadd.f32 %v2548, %v2600
        %v2602 = vpop.f32.mrb[0].mxu0
        %v2603 = vadd.f32 %v2550, %v2602
        %v2604 = vpop.f32.mrb[0].mxu0
        %v2605 = vadd.f32 %v2552, %v2604
        %2606 = vmatprep.mubr.bf16.mxu0 %v1056
        %2607 = vmatmul.mubr.bf16.gmra.mrb[0].mxu0 %v1055
        %v2608 = vpop.f32.mrb[0].mxu0
        %v2609 = vadd.f32 %v2556, %v2608
        %v2610 = vpop.f32.mrb[0].mxu0
        %v2611 = vadd.f32 %v2558, %v2610
        %v2612 = vpop.f32.mrb[0].mxu0
        %v2613 = vadd.f32 %v2560, %v2612
        %v2614 = vpop.f32.mrb[0].mxu0
        %v2615 = vadd.f32 %v2562, %v2614
        %2616 = vdwg.mxu0
        %2617 = vmatprep.subr.bf16.mxu0 %v2128
        %2618 = vmatpush1.bf16.msra.mxu0 %v2127
        %2619 = vmatprep.subr.bf16.mxu0 %v2134
        %2620 = vmatpush1.bf16.msra.mxu0 %v2133
        %2621 = vmatprep.subr.bf16.mxu0 %v2140
        %2622 = vmatpush1.bf16.msra.mxu0 %v2139
        %2623 = vmatprep.subr.bf16.mxu0 %v2146
        %2624 = vmatpush1.bf16.msra.mxu0 %v2145
        %2625 = vmatprep.subr.bf16.mxu0 %v2152
        %2626 = vmatpush1.bf16.msra.mxu0 %v2151
        %2627 = vmatprep.subr.bf16.mxu0 %v2158
        %2628 = vmatpush1.bf16.msra.mxu0 %v2157
        %2629 = vmatprep.subr.bf16.mxu0 %v2164
        %2630 = vmatpush1.bf16.msra.mxu0 %v2163
        %2631 = vmatprep.subr.bf16.mxu0 %v2170
        %2632 = vmatpush1.bf16.msra.mxu0 %v2169
        %2633 = vmatprep.subr.bf16.mxu0 %v2176
        %2634 = vmatpush1.bf16.msra.mxu0 %v2175
        %2635 = vmatprep.subr.bf16.mxu0 %v2182
        %2636 = vmatpush1.bf16.msra.mxu0 %v2181
        %2637 = vmatprep.subr.bf16.mxu0 %v2188
        %2638 = vmatpush1.bf16.msra.mxu0 %v2187
        %2639 = vmatprep.subr.bf16.mxu0 %v2194
        %2640 = vmatpush1.bf16.msra.mxu0 %v2193
        %2641 = vmatprep.subr.bf16.mxu0 %v2200
        %2642 = vmatpush1.bf16.msra.mxu0 %v2199
        %2643 = vmatprep.subr.bf16.mxu0 %v2206
        %2644 = vmatpush1.bf16.msra.mxu0 %v2205
        %2645 = vmatprep.subr.bf16.mxu0 %v2212
        %2646 = vmatpush1.bf16.msra.mxu0 %v2211
        %2647 = vmatprep.subr.bf16.mxu0 %v2218
        %2648 = vmatpush1.bf16.msra.mxu0 %v2217
        %2649 = vmatprep.mubr.bf16.mxu0 %v1052
        %2650 = vmatmul.mubr.bf16.gmra.mrb[0].mxu0 %v1051
        %v2651 = vpop.f32.mrb[0].mxu0
        %v2652 = vadd.f32 %v2599, %v2651
        %v2653 = vpop.f32.mrb[0].mxu0
        %v2654 = vadd.f32 %v2601, %v2653
        %v2655 = vpop.f32.mrb[0].mxu0
        %v2656 = vadd.f32 %v2603, %v2655
        %v2657 = vpop.f32.mrb[0].mxu0
        %v2658 = vadd.f32 %v2605, %v2657
        %2659 = vmatprep.mubr.bf16.mxu0 %v1058
        %2660 = vmatmul.mubr.bf16.gmra.mrb[0].mxu0 %v1057
        %v2661 = vpop.f32.mrb[0].mxu0
        %v2662 = vadd.f32 %v2609, %v2661
        %v2663 = vpop.f32.mrb[0].mxu0
        %v2664 = vadd.f32 %v2611, %v2663
        %v2665 = vpop.f32.mrb[0].mxu0
        %v2666 = vadd.f32 %v2613, %v2665
        %v2667 = vpop.f32.mrb[0].mxu0
        %v2668 = vadd.f32 %v2615, %v2667
        %2669 = vdwg.mxu0
        %2670 = vmatprep.subr.bf16.mxu0 %v1938
        %2671 = vmatpush1.bf16.msra.mxu0 %v1937
        %2672 = vmatprep.subr.bf16.mxu0 %v1944
        %2673 = vmatpush1.bf16.msra.mxu0 %v1943
        %2674 = vmatprep.subr.bf16.mxu0 %v1950
        %2675 = vmatpush1.bf16.msra.mxu0 %v1949
        %2676 = vmatprep.subr.bf16.mxu0 %v1956
        %2677 = vmatpush1.bf16.msra.mxu0 %v1955
        %2678 = vmatprep.subr.bf16.mxu0 %v1962
        %2679 = vmatpush1.bf16.msra.mxu0 %v1961
        %2680 = vmatprep.subr.bf16.mxu0 %v1968
        %2681 = vmatpush1.bf16.msra.mxu0 %v1967
        %2682 = vmatprep.subr.bf16.mxu0 %v1974
        %2683 = vmatpush1.bf16.msra.mxu0 %v1973
        %2684 = vmatprep.subr.bf16.mxu0 %v1980
        %2685 = vmatpush1.bf16.msra.mxu0 %v1979
        %2686 = vmatprep.subr.bf16.mxu0 %v1986
        %2687 = vmatpush1.bf16.msra.mxu0 %v1985
        %2688 = vmatprep.subr.bf16.mxu0 %v1992
        %2689 = vmatpush1.bf16.msra.mxu0 %v1991
        %2690 = vmatprep.subr.bf16.mxu0 %v1998
        %2691 = vmatpush1.bf16.msra.mxu0 %v1997
        %2692 = vmatprep.subr.bf16.mxu0 %v2004
        %2693 = vmatpush1.bf16.msra.mxu0 %v2003
        %2694 = vmatprep.subr.bf16.mxu0 %v2010
        %2695 = vmatpush1.bf16.msra.mxu0 %v2009
        %2696 = vmatprep.subr.bf16.mxu0 %v2016
        %2697 = vmatpush1.bf16.msra.mxu0 %v2015
        %2698 = vmatprep.subr.bf16.mxu0 %v2022
        %2699 = vmatpush1.bf16.msra.mxu0 %v2021
        %2700 = vmatprep.subr.bf16.mxu0 %v2028
        %2701 = vmatpush1.bf16.msra.mxu0 %v2027
        %2702 = vmatprep.mubr.bf16.mxu0 %v1048
        %2703 = vmatmul.mubr.bf16.gmra.mrb[0].mxu0 %v1047
        %v2704 = vpop.f32.mrb[0].mxu0
        %v2705 = vadd.f32 0.0, %v2704
        %v2706 = vpop.f32.mrb[0].mxu0
        %v2707 = vadd.f32 0.0, %v2706
        %v2708 = vpop.f32.mrb[0].mxu0
        %v2709 = vadd.f32 0.0, %v2708
        %v2710 = vpop.f32.mrb[0].mxu0
        %v2711 = vadd.f32 0.0, %v2710
        %2712 = vmatprep.mubr.bf16.mxu0 %v1054
        %2713 = vmatmul.mubr.bf16.gmra.mrb[0].mxu0 %v1053
        %v2714 = vpop.f32.mrb[0].mxu0
        %v2715 = vadd.f32 0.0, %v2714
        %v2716 = vpop.f32.mrb[0].mxu0
        %v2717 = vadd.f32 0.0, %v2716
        %v2718 = vpop.f32.mrb[0].mxu0
        %v2719 = vadd.f32 0.0, %v2718
        %v2720 = vpop.f32.mrb[0].mxu0
        %v2721 = vadd.f32 0.0, %v2720
        %2722 = vdwg.mxu0
        %2723 = vmatprep.subr.bf16.mxu0 %v2034
        %2724 = vmatpush1.bf16.msra.mxu0 %v2033
        %2725 = vmatprep.subr.bf16.mxu0 %v2040
        %2726 = vmatpush1.bf16.msra.mxu0 %v2039
        %2727 = vmatprep.subr.bf16.mxu0 %v2046
        %2728 = vmatpush1.bf16.msra.mxu0 %v2045
        %2729 = vmatprep.subr.bf16.mxu0 %v2052
        %2730 = vmatpush1.bf16.msra.mxu0 %v2051
        %2731 = vmatprep.subr.bf16.mxu0 %v2058
        %2732 = vmatpush1.bf16.msra.mxu0 %v2057
        %2733 = vmatprep.subr.bf16.mxu0 %v2064
        %2734 = vmatpush1.bf16.msra.mxu0 %v2063
        %2735 = vmatprep.subr.bf16.mxu0 %v2070
        %2736 = vmatpush1.bf16.msra.mxu0 %v2069
        %2737 = vmatprep.subr.bf16.mxu0 %v2076
        %2738 = vmatpush1.bf16.msra.mxu0 %v2075
        %2739 = vmatprep.subr.bf16.mxu0 %v2082
        %2740 = vmatpush1.bf16.msra.mxu0 %v2081
        %2741 = vmatprep.subr.bf16.mxu0 %v2088
        %2742 = vmatpush1.bf16.msra.mxu0 %v2087
        %2743 = vmatprep.subr.bf16.mxu0 %v2094
        %2744 = vmatpush1.bf16.msra.mxu0 %v2093
        %2745 = vmatprep.subr.bf16.mxu0 %v2100
        %2746 = vmatpush1.bf16.msra.mxu0 %v2099
        %2747 = vmatprep.subr.bf16.mxu0 %v2106
        %2748 = vmatpush1.bf16.msra.mxu0 %v2105
        %2749 = vmatprep.subr.bf16.mxu0 %v2112
        %2750 = vmatpush1.bf16.msra.mxu0 %v2111
        %2751 = vmatprep.subr.bf16.mxu0 %v2118
        %2752 = vmatpush1.bf16.msra.mxu0 %v2117
        %2753 = vmatprep.subr.bf16.mxu0 %v2124
        %2754 = vmatpush1.bf16.msra.mxu0 %v2123
        %2755 = vmatprep.mubr.bf16.mxu0 %v1050
        %2756 = vmatmul.mubr.bf16.gmra.mrb[0].mxu0 %v1049
        %v2757 = vpop.f32.mrb[0].mxu0
        %v2758 = vadd.f32 %v2705, %v2757
        %v2759 = vpop.f32.mrb[0].mxu0
        %v2760 = vadd.f32 %v2707, %v2759
        %v2761 = vpop.f32.mrb[0].mxu0
        %v2762 = vadd.f32 %v2709, %v2761
        %v2763 = vpop.f32.mrb[0].mxu0
        %v2764 = vadd.f32 %v2711, %v2763
        %2765 = vmatprep.mubr.bf16.mxu0 %v1056
        %2766 = vmatmul.mubr.bf16.gmra.mrb[0].mxu0 %v1055
        %v2767 = vpop.f32.mrb[0].mxu0
        %v2768 = vadd.f32 %v2715, %v2767
        %v2769 = vpop.f32.mrb[0].mxu0
        %v2770 = vadd.f32 %v2717, %v2769
        %v2771 = vpop.f32.mrb[0].mxu0
        %v2772 = vadd.f32 %v2719, %v2771
        %v2773 = vpop.f32.mrb[0].mxu0
        %v2774 = vadd.f32 %v2721, %v2773
        %2775 = vdwg.mxu0
        %2776 = vmatprep.subr.bf16.mxu0 %v2130
        %2777 = vmatpush1.bf16.msra.mxu0 %v2129
        %2778 = vmatprep.subr.bf16.mxu0 %v2136
        %2779 = vmatpush1.bf16.msra.mxu0 %v2135
        %2780 = vmatprep.subr.bf16.mxu0 %v2142
        %2781 = vmatpush1.bf16.msra.mxu0 %v2141
        %2782 = vmatprep.subr.bf16.mxu0 %v2148
        %2783 = vmatpush1.bf16.msra.mxu0 %v2147
        %2784 = vmatprep.subr.bf16.mxu0 %v2154
        %2785 = vmatpush1.bf16.msra.mxu0 %v2153
        %2786 = vmatprep.subr.bf16.mxu0 %v2160
        %2787 = vmatpush1.bf16.msra.mxu0 %v2159
        %2788 = vmatprep.subr.bf16.mxu0 %v2166
        %2789 = vmatpush1.bf16.msra.mxu0 %v2165
        %2790 = vmatprep.subr.bf16.mxu0 %v2172
        %2791 = vmatpush1.bf16.msra.mxu0 %v2171
        %2792 = vmatprep.subr.bf16.mxu0 %v2178
        %2793 = vmatpush1.bf16.msra.mxu0 %v2177
        %2794 = vmatprep.subr.bf16.mxu0 %v2184
        %2795 = vmatpush1.bf16.msra.mxu0 %v2183
        %2796 = vmatprep.subr.bf16.mxu0 %v2190
        %2797 = vmatpush1.bf16.msra.mxu0 %v2189
        %2798 = vmatprep.subr.bf16.mxu0 %v2196
        %2799 = vmatpush1.bf16.msra.mxu0 %v2195
        %2800 = vmatprep.subr.bf16.mxu0 %v2202
        %2801 = vmatpush1.bf16.msra.mxu0 %v2201
        %2802 = vmatprep.subr.bf16.mxu0 %v2208
        %2803 = vmatpush1.bf16.msra.mxu0 %v2207
        %2804 = vmatprep.subr.bf16.mxu0 %v2214
        %2805 = vmatpush1.bf16.msra.mxu0 %v2213
        %2806 = vmatprep.subr.bf16.mxu0 %v2220
        %2807 = vmatpush1.bf16.msra.mxu0 %v2219
        %2808 = vmatprep.mubr.bf16.mxu0 %v1052
        %2809 = vmatmul.mubr.bf16.gmra.mrb[0].mxu0 %v1051
        %v2810 = vpop.f32.mrb[0].mxu0
        %v2811 = vadd.f32 %v2758, %v2810
        %v2812 = vpop.f32.mrb[0].mxu0
        %v2813 = vadd.f32 %v2760, %v2812
        %v2814 = vpop.f32.mrb[0].mxu0
        %v2815 = vadd.f32 %v2762, %v2814
        %v2816 = vpop.f32.mrb[0].mxu0
        %v2817 = vadd.f32 %v2764, %v2816
        %2818 = vmatprep.mubr.bf16.mxu0 %v1058
        %2819 = vmatmul.mubr.bf16.gmra.mrb[0].mxu0 %v1057
        %v2820 = vpop.f32.mrb[0].mxu0
        %v2821 = vadd.f32 %v2768, %v2820
        %v2822 = vpop.f32.mrb[0].mxu0
        %v2823 = vadd.f32 %v2770, %v2822
        %v2824 = vpop.f32.mrb[0].mxu0
        %v2825 = vadd.f32 %v2772, %v2824
        %v2826 = vpop.f32.mrb[0].mxu0
        %v2827 = vadd.f32 %v2774, %v2826
        %2828 = vdwg.mxu0
        %2829 = vmatprep.subr.bf16.mxu0 %v1940
        %2830 = vmatpush1.bf16.msra.mxu0 %v1939
        %2831 = vmatprep.subr.bf16.mxu0 %v1946
        %2832 = vmatpush1.bf16.msra.mxu0 %v1945
        %2833 = vmatprep.subr.bf16.mxu0 %v1952
        %2834 = vmatpush1.bf16.msra.mxu0 %v1951
        %2835 = vmatprep.subr.bf16.mxu0 %v1958
        %2836 = vmatpush1.bf16.msra.mxu0 %v1957
        %2837 = vmatprep.subr.bf16.mxu0 %v1964
        %2838 = vmatpush1.bf16.msra.mxu0 %v1963
        %2839 = vmatprep.subr.bf16.mxu0 %v1970
        %2840 = vmatpush1.bf16.msra.mxu0 %v1969
        %2841 = vmatprep.subr.bf16.mxu0 %v1976
        %2842 = vmatpush1.bf16.msra.mxu0 %v1975
        %2843 = vmatprep.subr.bf16.mxu0 %v1982
        %2844 = vmatpush1.bf16.msra.mxu0 %v1981
        %2845 = vmatprep.subr.bf16.mxu0 %v1988
        %2846 = vmatpush1.bf16.msra.mxu0 %v1987
        %2847 = vmatprep.subr.bf16.mxu0 %v1994
        %2848 = vmatpush1.bf16.msra.mxu0 %v1993
        %2849 = vmatprep.subr.bf16.mxu0 %v2000
        %2850 = vmatpush1.bf16.msra.mxu0 %v1999
        %2851 = vmatprep.subr.bf16.mxu0 %v2006
        %2852 = vmatpush1.bf16.msra.mxu0 %v2005
        %2853 = vmatprep.subr.bf16.mxu0 %v2012
        %2854 = vmatpush1.bf16.msra.mxu0 %v2011
        %2855 = vmatprep.subr.bf16.mxu0 %v2018
        %2856 = vmatpush1.bf16.msra.mxu0 %v2017
        %2857 = vmatprep.subr.bf16.mxu0 %v2024
        %2858 = vmatpush1.bf16.msra.mxu0 %v2023
        %2859 = vmatprep.subr.bf16.mxu0 %v2030
        %2860 = vmatpush1.bf16.msra.mxu0 %v2029
        %2861 = vmatprep.mubr.bf16.mxu0 %v1048
        %2862 = vmatmul.mubr.bf16.gmra.mrb[0].mxu0 %v1047
        %v2863 = vpop.f32.mrb[0].mxu0
        %v2864 = vadd.f32 0.0, %v2863
        %v2865 = vpop.f32.mrb[0].mxu0
        %v2866 = vadd.f32 0.0, %v2865
        %v2867 = vpop.f32.mrb[0].mxu0
        %v2868 = vadd.f32 0.0, %v2867
        %v2869 = vpop.f32.mrb[0].mxu0
        %v2870 = vadd.f32 0.0, %v2869
        %2871 = vmatprep.mubr.bf16.mxu0 %v1054
        %2872 = vmatmul.mubr.bf16.gmra.mrb[0].mxu0 %v1053
        %v2873 = vpop.f32.mrb[0].mxu0
        %v2874 = vadd.f32 0.0, %v2873
        %v2875 = vpop.f32.mrb[0].mxu0
        %v2876 = vadd.f32 0.0, %v2875
        %v2877 = vpop.f32.mrb[0].mxu0
        %v2878 = vadd.f32 0.0, %v2877
        %v2879 = vpop.f32.mrb[0].mxu0
        %v2880 = vadd.f32 0.0, %v2879
        %2881 = vdwg.mxu0
        %2882 = vmatprep.subr.bf16.mxu0 %v2036
        %2883 = vmatpush1.bf16.msra.mxu0 %v2035
        %2884 = vmatprep.subr.bf16.mxu0 %v2042
        %2885 = vmatpush1.bf16.msra.mxu0 %v2041
        %2886 = vmatprep.subr.bf16.mxu0 %v2048
        %2887 = vmatpush1.bf16.msra.mxu0 %v2047
        %2888 = vmatprep.subr.bf16.mxu0 %v2054
        %2889 = vmatpush1.bf16.msra.mxu0 %v2053
        %2890 = vmatprep.subr.bf16.mxu0 %v2060
        %2891 = vmatpush1.bf16.msra.mxu0 %v2059
        %2892 = vmatprep.subr.bf16.mxu0 %v2066
        %2893 = vmatpush1.bf16.msra.mxu0 %v2065
        %2894 = vmatprep.subr.bf16.mxu0 %v2072
        %2895 = vmatpush1.bf16.msra.mxu0 %v2071
        %2896 = vmatprep.subr.bf16.mxu0 %v2078
        %2897 = vmatpush1.bf16.msra.mxu0 %v2077
        %2898 = vmatprep.subr.bf16.mxu0 %v2084
        %2899 = vmatpush1.bf16.msra.mxu0 %v2083
        %2900 = vmatprep.subr.bf16.mxu0 %v2090
        %2901 = vmatpush1.bf16.msra.mxu0 %v2089
        %2902 = vmatprep.subr.bf16.mxu0 %v2096
        %2903 = vmatpush1.bf16.msra.mxu0 %v2095
        %2904 = vmatprep.subr.bf16.mxu0 %v2102
        %2905 = vmatpush1.bf16.msra.mxu0 %v2101
        %2906 = vmatprep.subr.bf16.mxu0 %v2108
        %2907 = vmatpush1.bf16.msra.mxu0 %v2107
        %2908 = vmatprep.subr.bf16.mxu0 %v2114
        %2909 = vmatpush1.bf16.msra.mxu0 %v2113
        %2910 = vmatprep.subr.bf16.mxu0 %v2120
        %2911 = vmatpush1.bf16.msra.mxu0 %v2119
        %2912 = vmatprep.subr.bf16.mxu0 %v2126
        %2913 = vmatpush1.bf16.msra.mxu0 %v2125
        %2914 = vmatprep.mubr.bf16.mxu0 %v1050
        %2915 = vmatmul.mubr.bf16.gmra.mrb[0].mxu0 %v1049
        %v2916 = vpop.f32.mrb[0].mxu0
        %v2917 = vadd.f32 %v2864, %v2916
        %v2918 = vpop.f32.mrb[0].mxu0
        %v2919 = vadd.f32 %v2866, %v2918
        %v2920 = vpop.f32.mrb[0].mxu0
        %v2921 = vadd.f32 %v2868, %v2920
        %v2922 = vpop.f32.mrb[0].mxu0
        %v2923 = vadd.f32 %v2870, %v2922
        %2924 = vmatprep.mubr.bf16.mxu0 %v1056
        %2925 = vmatmul.mubr.bf16.gmra.mrb[0].mxu0 %v1055
        %v2926 = vpop.f32.mrb[0].mxu0
        %v2927 = vadd.f32 %v2874, %v2926
        %v2928 = vpop.f32.mrb[0].mxu0
        %v2929 = vadd.f32 %v2876, %v2928
        %v2930 = vpop.f32.mrb[0].mxu0
        %v2931 = vadd.f32 %v2878, %v2930
        %v2932 = vpop.f32.mrb[0].mxu0
        %v2933 = vadd.f32 %v2880, %v2932
        %2934 = vdwg.mxu0
        %2935 = vmatprep.subr.bf16.mxu0 %v2132
        %2936 = vmatpush1.bf16.msra.mxu0 %v2131
        %2937 = vmatprep.subr.bf16.mxu0 %v2138
        %2938 = vmatpush1.bf16.msra.mxu0 %v2137
        %2939 = vmatprep.subr.bf16.mxu0 %v2144
        %2940 = vmatpush1.bf16.msra.mxu0 %v2143
        %2941 = vmatprep.subr.bf16.mxu0 %v2150
        %2942 = vmatpush1.bf16.msra.mxu0 %v2149
        %2943 = vmatprep.subr.bf16.mxu0 %v2156
        %2944 = vmatpush1.bf16.msra.mxu0 %v2155
        %2945 = vmatprep.subr.bf16.mxu0 %v2162
        %2946 = vmatpush1.bf16.msra.mxu0 %v2161
        %2947 = vmatprep.subr.bf16.mxu0 %v2168
        %2948 = vmatpush1.bf16.msra.mxu0 %v2167
        %2949 = vmatprep.subr.bf16.mxu0 %v2174
        %2950 = vmatpush1.bf16.msra.mxu0 %v2173
        %2951 = vmatprep.subr.bf16.mxu0 %v2180
        %2952 = vmatpush1.bf16.msra.mxu0 %v2179
        %2953 = vmatprep.subr.bf16.mxu0 %v2186
        %2954 = vmatpush1.bf16.msra.mxu0 %v2185
        %2955 = vmatprep.subr.bf16.mxu0 %v2192
        %2956 = vmatpush1.bf16.msra.mxu0 %v2191
        %2957 = vmatprep.subr.bf16.mxu0 %v2198
        %2958 = vmatpush1.bf16.msra.mxu0 %v2197
        %2959 = vmatprep.subr.bf16.mxu0 %v2204
        %2960 = vmatpush1.bf16.msra.mxu0 %v2203
        %2961 = vmatprep.subr.bf16.mxu0 %v2210
        %2962 = vmatpush1.bf16.msra.mxu0 %v2209
        %2963 = vmatprep.subr.bf16.mxu0 %v2216
        %2964 = vmatpush1.bf16.msra.mxu0 %v2215
        %2965 = vmatprep.subr.bf16.mxu0 %v2222
        %2966 = vmatpush1.bf16.msra.mxu0 %v2221
        %2967 = vmatprep.mubr.bf16.mxu0 %v1052
        %2968 = vmatmul.mubr.bf16.gmra.mrb[0].mxu0 %v1051
        %v2969 = vpop.f32.mrb[0].mxu0
        %v2970 = vadd.f32 %v2917, %v2969
        %v2971 = vpop.f32.mrb[0].mxu0
        %v2972 = vadd.f32 %v2919, %v2971
        %v2973 = vpop.f32.mrb[0].mxu0
        %v2974 = vadd.f32 %v2921, %v2973
        %v2975 = vpop.f32.mrb[0].mxu0
        %v2976 = vadd.f32 %v2923, %v2975
        %2977 = vmatprep.mubr.bf16.mxu0 %v1058
        %2978 = vmatmul.mubr.bf16.gmra.mrb[0].mxu0 %v1057
        %v2979 = vpop.f32.mrb[0].mxu0
        %v2980 = vadd.f32 %v2927, %v2979
        %v2981 = vpop.f32.mrb[0].mxu0
        %v2982 = vadd.f32 %v2929, %v2981
        %v2983 = vpop.f32.mrb[0].mxu0
        %v2984 = vadd.f32 %v2931, %v2983
        %v2985 = vpop.f32.mrb[0].mxu0
        %v2986 = vadd.f32 %v2933, %v2985
        %2987 = vdwg.mxu0
        %v3000 = vunpack.c.l.b16 %v411
        %v3001 = vunpack.c.h.b16 %v411
        %v3002 = vunpack.c.l.b16 %v412
        %v3003 = vunpack.c.h.b16 %v412
        %v3004 = vunpack.c.l.b16 %v413
        %v3005 = vunpack.c.h.b16 %v413
        %v3006 = vunpack.c.l.b16 %v414
        %v3007 = vunpack.c.h.b16 %v414
        %v3008 = vunpack.c.l.b16 %v415
        %v3009 = vunpack.c.h.b16 %v415
        %v3010 = vunpack.c.l.b16 %v416
        %v3011 = vunpack.c.h.b16 %v416
        %v3012 = vunpack.c.l.b16 %v417
        %v3013 = vunpack.c.h.b16 %v417
        %v3014 = vunpack.c.l.b16 %v418
        %v3015 = vunpack.c.h.b16 %v418
        %v3016 = vunpack.c.l.b16 %v419
        %v3017 = vunpack.c.h.b16 %v419
        %v3018 = vunpack.c.l.b16 %v420
        %v3019 = vunpack.c.h.b16 %v420
        %v3020 = vunpack.c.l.b16 %v421
        %v3021 = vunpack.c.h.b16 %v421
        %v3022 = vunpack.c.l.b16 %v422
        %v3023 = vunpack.c.h.b16 %v422
        %v3024 = vpack.c.b16 %v3006, %v3000
        %v3025 = vpack.c.b16 %v3007, %v3001
        %v3026 = vpack.c.b16 %v3008, %v3002
        %v3027 = vpack.c.b16 %v3009, %v3003
        %v3028 = vpack.c.b16 %v3010, %v3004
        %v3029 = vpack.c.b16 %v3011, %v3005
        %v3030 = vpack.c.b16 %v3018, %v3012
        %v3031 = vpack.c.b16 %v3019, %v3013
        %v3032 = vpack.c.b16 %v3020, %v3014
        %v3033 = vpack.c.b16 %v3021, %v3015
        %v3034 = vpack.c.b16 %v3022, %v3016
        %v3035 = vpack.c.b16 %v3023, %v3017
        %v3336 = vunpack.c.l.b16 %v423
        %v3337 = vunpack.c.h.b16 %v423
        %v3338 = vunpack.c.l.b16 %v424
        %v3339 = vunpack.c.h.b16 %v424
        %v3340 = vunpack.c.l.b16 %v425
        %v3341 = vunpack.c.h.b16 %v425
        %v3342 = vunpack.c.l.b16 %v426
        %v3343 = vunpack.c.h.b16 %v426
        %v3344 = vunpack.c.l.b16 %v427
        %v3345 = vunpack.c.h.b16 %v427
        %v3346 = vunpack.c.l.b16 %v428
        %v3347 = vunpack.c.h.b16 %v428
        %v3348 = vunpack.c.l.b16 %v429
        %v3349 = vunpack.c.h.b16 %v429
        %v3350 = vunpack.c.l.b16 %v430
        %v3351 = vunpack.c.h.b16 %v430
        %v3352 = vunpack.c.l.b16 %v431
        %v3353 = vunpack.c.h.b16 %v431
        %v3354 = vunpack.c.l.b16 %v432
        %v3355 = vunpack.c.h.b16 %v432
        %v3356 = vunpack.c.l.b16 %v433
        %v3357 = vunpack.c.h.b16 %v433
        %v3358 = vunpack.c.l.b16 %v434
        %v3359 = vunpack.c.h.b16 %v434
        %v3360 = vunpack.c.l.b16 %v435
        %v3361 = vunpack.c.h.b16 %v435
        %v3362 = vunpack.c.l.b16 %v436
        %v3363 = vunpack.c.h.b16 %v436
        %v3364 = vunpack.c.l.b16 %v437
        %v3365 = vunpack.c.h.b16 %v437
        %v3366 = vunpack.c.l.b16 %v438
        %v3367 = vunpack.c.h.b16 %v438
        %v3368 = vunpack.c.l.b16 %v439
        %v3369 = vunpack.c.h.b16 %v439
        %v3370 = vunpack.c.l.b16 %v440
        %v3371 = vunpack.c.h.b16 %v440
        %v3372 = vunpack.c.l.b16 %v441
        %v3373 = vunpack.c.h.b16 %v441
        %v3374 = vunpack.c.l.b16 %v442
        %v3375 = vunpack.c.h.b16 %v442
        %v3376 = vunpack.c.l.b16 %v443
        %v3377 = vunpack.c.h.b16 %v443
        %v3378 = vunpack.c.l.b16 %v444
        %v3379 = vunpack.c.h.b16 %v444
        %v3380 = vunpack.c.l.b16 %v445
        %v3381 = vunpack.c.h.b16 %v445
        %v3382 = vunpack.c.l.b16 %v446
        %v3383 = vunpack.c.h.b16 %v446
        %v3384 = vunpack.c.l.b16 %v447
        %v3385 = vunpack.c.h.b16 %v447
        %v3386 = vunpack.c.l.b16 %v448
        %v3387 = vunpack.c.h.b16 %v448
        %v3388 = vunpack.c.l.b16 %v449
        %v3389 = vunpack.c.h.b16 %v449
        %v3390 = vunpack.c.l.b16 %v450
        %v3391 = vunpack.c.h.b16 %v450
        %v3392 = vunpack.c.l.b16 %v451
        %v3393 = vunpack.c.h.b16 %v451
        %v3394 = vunpack.c.l.b16 %v452
        %v3395 = vunpack.c.h.b16 %v452
        %v3396 = vunpack.c.l.b16 %v453
        %v3397 = vunpack.c.h.b16 %v453
        %v3398 = vunpack.c.l.b16 %v454
        %v3399 = vunpack.c.h.b16 %v454
        %v3400 = vunpack.c.l.b16 %v455
        %v3401 = vunpack.c.h.b16 %v455
        %v3402 = vunpack.c.l.b16 %v456
        %v3403 = vunpack.c.h.b16 %v456
        %v3404 = vunpack.c.l.b16 %v457
        %v3405 = vunpack.c.h.b16 %v457
        %v3406 = vunpack.c.l.b16 %v458
        %v3407 = vunpack.c.h.b16 %v458
        %v3408 = vunpack.c.l.b16 %v459
        %v3409 = vunpack.c.h.b16 %v459
        %v3410 = vunpack.c.l.b16 %v460
        %v3411 = vunpack.c.h.b16 %v460
        %v3412 = vunpack.c.l.b16 %v461
        %v3413 = vunpack.c.h.b16 %v461
        %v3414 = vunpack.c.l.b16 %v462
        %v3415 = vunpack.c.h.b16 %v462
        %v3416 = vunpack.c.l.b16 %v463
        %v3417 = vunpack.c.h.b16 %v463
        %v3418 = vunpack.c.l.b16 %v464
        %v3419 = vunpack.c.h.b16 %v464
        %v3420 = vunpack.c.l.b16 %v465
        %v3421 = vunpack.c.h.b16 %v465
        %v3422 = vunpack.c.l.b16 %v466
        %v3423 = vunpack.c.h.b16 %v466
        %v3424 = vunpack.c.l.b16 %v467
        %v3425 = vunpack.c.h.b16 %v467
        %v3426 = vunpack.c.l.b16 %v468
        %v3427 = vunpack.c.h.b16 %v468
        %v3428 = vunpack.c.l.b16 %v469
        %v3429 = vunpack.c.h.b16 %v469
        %v3430 = vunpack.c.l.b16 %v470
        %v3431 = vunpack.c.h.b16 %v470
        %v3432 = vunpack.c.l.b16 %v471
        %v3433 = vunpack.c.h.b16 %v471
        %v3434 = vunpack.c.l.b16 %v472
        %v3435 = vunpack.c.h.b16 %v472
        %v3436 = vunpack.c.l.b16 %v473
        %v3437 = vunpack.c.h.b16 %v473
        %v3438 = vunpack.c.l.b16 %v474
        %v3439 = vunpack.c.h.b16 %v474
        %v3440 = vunpack.c.l.b16 %v475
        %v3441 = vunpack.c.h.b16 %v475
        %v3442 = vunpack.c.l.b16 %v476
        %v3443 = vunpack.c.h.b16 %v476
        %v3444 = vunpack.c.l.b16 %v477
        %v3445 = vunpack.c.h.b16 %v477
        %v3446 = vunpack.c.l.b16 %v478
        %v3447 = vunpack.c.h.b16 %v478
        %v3448 = vunpack.c.l.b16 %v479
        %v3449 = vunpack.c.h.b16 %v479
        %v3450 = vunpack.c.l.b16 %v480
        %v3451 = vunpack.c.h.b16 %v480
        %v3452 = vunpack.c.l.b16 %v481
        %v3453 = vunpack.c.h.b16 %v481
        %v3454 = vunpack.c.l.b16 %v482
        %v3455 = vunpack.c.h.b16 %v482
        %v3456 = vunpack.c.l.b16 %v483
        %v3457 = vunpack.c.h.b16 %v483
        %v3458 = vunpack.c.l.b16 %v484
        %v3459 = vunpack.c.h.b16 %v484
        %v3460 = vunpack.c.l.b16 %v485
        %v3461 = vunpack.c.h.b16 %v485
        %v3462 = vunpack.c.l.b16 %v486
        %v3463 = vunpack.c.h.b16 %v486
        %v3464 = vunpack.c.l.b16 %v487
        %v3465 = vunpack.c.h.b16 %v487
        %v3466 = vunpack.c.l.b16 %v488
        %v3467 = vunpack.c.h.b16 %v488
        %v3468 = vunpack.c.l.b16 %v489
        %v3469 = vunpack.c.h.b16 %v489
        %v3470 = vunpack.c.l.b16 %v490
        %v3471 = vunpack.c.h.b16 %v490
        %v3472 = vunpack.c.l.b16 %v491
        %v3473 = vunpack.c.h.b16 %v491
        %v3474 = vunpack.c.l.b16 %v492
        %v3475 = vunpack.c.h.b16 %v492
        %v3476 = vunpack.c.l.b16 %v493
        %v3477 = vunpack.c.h.b16 %v493
        %v3478 = vunpack.c.l.b16 %v494
        %v3479 = vunpack.c.h.b16 %v494
        %v3480 = vunpack.c.l.b16 %v495
        %v3481 = vunpack.c.h.b16 %v495
        %v3482 = vunpack.c.l.b16 %v496
        %v3483 = vunpack.c.h.b16 %v496
        %v3484 = vunpack.c.l.b16 %v497
        %v3485 = vunpack.c.h.b16 %v497
        %v3486 = vunpack.c.l.b16 %v498
        %v3487 = vunpack.c.h.b16 %v498
        %v3488 = vunpack.c.l.b16 %v499
        %v3489 = vunpack.c.h.b16 %v499
        %v3490 = vunpack.c.l.b16 %v500
        %v3491 = vunpack.c.h.b16 %v500
        %v3492 = vunpack.c.l.b16 %v501
        %v3493 = vunpack.c.h.b16 %v501
        %v3494 = vunpack.c.l.b16 %v502
        %v3495 = vunpack.c.h.b16 %v502
        %v3496 = vunpack.c.l.b16 %v503
        %v3497 = vunpack.c.h.b16 %v503
        %v3498 = vunpack.c.l.b16 %v504
        %v3499 = vunpack.c.h.b16 %v504
        %v3500 = vunpack.c.l.b16 %v505
        %v3501 = vunpack.c.h.b16 %v505
        %v3502 = vunpack.c.l.b16 %v506
        %v3503 = vunpack.c.h.b16 %v506
        %v3504 = vunpack.c.l.b16 %v507
        %v3505 = vunpack.c.h.b16 %v507
        %v3506 = vunpack.c.l.b16 %v508
        %v3507 = vunpack.c.h.b16 %v508
        %v3508 = vunpack.c.l.b16 %v509
        %v3509 = vunpack.c.h.b16 %v509
        %v3510 = vunpack.c.l.b16 %v510
        %v3511 = vunpack.c.h.b16 %v510
        %v3512 = vunpack.c.l.b16 %v511
        %v3513 = vunpack.c.h.b16 %v511
        %v3514 = vunpack.c.l.b16 %v512
        %v3515 = vunpack.c.h.b16 %v512
        %v3516 = vunpack.c.l.b16 %v513
        %v3517 = vunpack.c.h.b16 %v513
        %v3518 = vunpack.c.l.b16 %v514
        %v3519 = vunpack.c.h.b16 %v514
        %v3520 = vunpack.c.l.b16 %v515
        %v3521 = vunpack.c.h.b16 %v515
        %v3522 = vunpack.c.l.b16 %v516
        %v3523 = vunpack.c.h.b16 %v516
        %v3524 = vunpack.c.l.b16 %v517
        %v3525 = vunpack.c.h.b16 %v517
        %v3526 = vunpack.c.l.b16 %v518
        %v3527 = vunpack.c.h.b16 %v518
        %v3528 = vunpack.c.l.b16 %v519
        %v3529 = vunpack.c.h.b16 %v519
        %v3530 = vunpack.c.l.b16 %v520
        %v3531 = vunpack.c.h.b16 %v520
        %v3532 = vunpack.c.l.b16 %v521
        %v3533 = vunpack.c.h.b16 %v521
        %v3534 = vunpack.c.l.b16 %v522
        %v3535 = vunpack.c.h.b16 %v522
        %v3536 = vunpack.c.l.b16 %v523
        %v3537 = vunpack.c.h.b16 %v523
        %v3538 = vunpack.c.l.b16 %v524
        %v3539 = vunpack.c.h.b16 %v524
        %v3540 = vunpack.c.l.b16 %v525
        %v3541 = vunpack.c.h.b16 %v525
        %v3542 = vunpack.c.l.b16 %v526
        %v3543 = vunpack.c.h.b16 %v526
        %v3544 = vunpack.c.l.b16 %v527
        %v3545 = vunpack.c.h.b16 %v527
        %v3546 = vunpack.c.l.b16 %v528
        %v3547 = vunpack.c.h.b16 %v528
        %v3548 = vunpack.c.l.b16 %v529
        %v3549 = vunpack.c.h.b16 %v529
        %v3550 = vunpack.c.l.b16 %v530
        %v3551 = vunpack.c.h.b16 %v530
        %v3552 = vunpack.c.l.b16 %v531
        %v3553 = vunpack.c.h.b16 %v531
        %v3554 = vunpack.c.l.b16 %v532
        %v3555 = vunpack.c.h.b16 %v532
        %v3556 = vunpack.c.l.b16 %v533
        %v3557 = vunpack.c.h.b16 %v533
        %v3558 = vunpack.c.l.b16 %v534
        %v3559 = vunpack.c.h.b16 %v534
        %v3560 = vunpack.c.l.b16 %v535
        %v3561 = vunpack.c.h.b16 %v535
        %v3562 = vunpack.c.l.b16 %v536
        %v3563 = vunpack.c.h.b16 %v536
        %v3564 = vunpack.c.l.b16 %v537
        %v3565 = vunpack.c.h.b16 %v537
        %v3566 = vunpack.c.l.b16 %v538
        %v3567 = vunpack.c.h.b16 %v538
        %v3568 = vunpack.c.l.b16 %v539
        %v3569 = vunpack.c.h.b16 %v539
        %v3570 = vunpack.c.l.b16 %v540
        %v3571 = vunpack.c.h.b16 %v540
        %v3572 = vunpack.c.l.b16 %v541
        %v3573 = vunpack.c.h.b16 %v541
        %v3574 = vunpack.c.l.b16 %v542
        %v3575 = vunpack.c.h.b16 %v542
        %v3576 = vunpack.c.l.b16 %v543
        %v3577 = vunpack.c.h.b16 %v543
        %v3578 = vunpack.c.l.b16 %v544
        %v3579 = vunpack.c.h.b16 %v544
        %v3580 = vunpack.c.l.b16 %v545
        %v3581 = vunpack.c.h.b16 %v545
        %v3582 = vunpack.c.l.b16 %v546
        %v3583 = vunpack.c.h.b16 %v546
        %v3584 = vunpack.c.l.b16 %v547
        %v3585 = vunpack.c.h.b16 %v547
        %v3586 = vunpack.c.l.b16 %v548
        %v3587 = vunpack.c.h.b16 %v548
        %v3588 = vunpack.c.l.b16 %v549
        %v3589 = vunpack.c.h.b16 %v549
        %v3590 = vunpack.c.l.b16 %v550
        %v3591 = vunpack.c.h.b16 %v550
        %v3592 = vunpack.c.l.b16 %v551
        %v3593 = vunpack.c.h.b16 %v551
        %v3594 = vunpack.c.l.b16 %v552
        %v3595 = vunpack.c.h.b16 %v552
        %v3596 = vunpack.c.l.b16 %v553
        %v3597 = vunpack.c.h.b16 %v553
        %v3598 = vunpack.c.l.b16 %v554
        %v3599 = vunpack.c.h.b16 %v554
        %v3600 = vunpack.c.l.b16 %v555
        %v3601 = vunpack.c.h.b16 %v555
        %v3602 = vunpack.c.l.b16 %v556
        %v3603 = vunpack.c.h.b16 %v556
        %v3604 = vunpack.c.l.b16 %v557
        %v3605 = vunpack.c.h.b16 %v557
        %v3606 = vunpack.c.l.b16 %v558
        %v3607 = vunpack.c.h.b16 %v558
        %v3608 = vunpack.c.l.b16 %v559
        %v3609 = vunpack.c.h.b16 %v559
        %v3610 = vunpack.c.l.b16 %v560
        %v3611 = vunpack.c.h.b16 %v560
        %v3612 = vunpack.c.l.b16 %v561
        %v3613 = vunpack.c.h.b16 %v561
        %v3614 = vunpack.c.l.b16 %v562
        %v3615 = vunpack.c.h.b16 %v562
        %v3616 = vunpack.c.l.b16 %v563
        %v3617 = vunpack.c.h.b16 %v563
        %v3618 = vunpack.c.l.b16 %v564
        %v3619 = vunpack.c.h.b16 %v564
        %v3620 = vunpack.c.l.b16 %v565
        %v3621 = vunpack.c.h.b16 %v565
        %v3622 = vunpack.c.l.b16 %v566
        %v3623 = vunpack.c.h.b16 %v566
        %v3624 = vunpack.c.l.b16 %v567
        %v3625 = vunpack.c.h.b16 %v567
        %v3626 = vunpack.c.l.b16 %v568
        %v3627 = vunpack.c.h.b16 %v568
        %v3628 = vunpack.c.l.b16 %v569
        %v3629 = vunpack.c.h.b16 %v569
        %v3630 = vunpack.c.l.b16 %v570
        %v3631 = vunpack.c.h.b16 %v570
        %v3632 = vunpack.c.l.b16 %v571
        %v3633 = vunpack.c.h.b16 %v571
        %v3634 = vunpack.c.l.b16 %v572
        %v3635 = vunpack.c.h.b16 %v572
        %v3636 = vunpack.c.l.b16 %v573
        %v3637 = vunpack.c.h.b16 %v573
        %v3638 = vunpack.c.l.b16 %v574
        %v3639 = vunpack.c.h.b16 %v574
        %v3640 = vunpack.c.l.b16 %v575
        %v3641 = vunpack.c.h.b16 %v575
        %v3642 = vunpack.c.l.b16 %v576
        %v3643 = vunpack.c.h.b16 %v576
        %v3644 = vunpack.c.l.b16 %v577
        %v3645 = vunpack.c.h.b16 %v577
        %v3646 = vunpack.c.l.b16 %v578
        %v3647 = vunpack.c.h.b16 %v578
        %v3648 = vunpack.c.l.b16 %v579
        %v3649 = vunpack.c.h.b16 %v579
        %v3650 = vunpack.c.l.b16 %v580
        %v3651 = vunpack.c.h.b16 %v580
        %v3652 = vunpack.c.l.b16 %v581
        %v3653 = vunpack.c.h.b16 %v581
        %v3654 = vunpack.c.l.b16 %v582
        %v3655 = vunpack.c.h.b16 %v582
        %v3656 = vunpack.c.l.b16 %v583
        %v3657 = vunpack.c.h.b16 %v583
        %v3658 = vunpack.c.l.b16 %v584
        %v3659 = vunpack.c.h.b16 %v584
        %v3660 = vunpack.c.l.b16 %v585
        %v3661 = vunpack.c.h.b16 %v585
        %v3662 = vunpack.c.l.b16 %v586
        %v3663 = vunpack.c.h.b16 %v586
        %v3664 = vunpack.c.l.b16 %v587
        %v3665 = vunpack.c.h.b16 %v587
        %v3666 = vunpack.c.l.b16 %v588
        %v3667 = vunpack.c.h.b16 %v588
        %v3668 = vunpack.c.l.b16 %v589
        %v3669 = vunpack.c.h.b16 %v589
        %v3670 = vunpack.c.l.b16 %v590
        %v3671 = vunpack.c.h.b16 %v590
        %v3672 = vunpack.c.l.b16 %v591
        %v3673 = vunpack.c.h.b16 %v591
        %v3674 = vunpack.c.l.b16 %v592
        %v3675 = vunpack.c.h.b16 %v592
        %v3676 = vunpack.c.l.b16 %v593
        %v3677 = vunpack.c.h.b16 %v593
        %v3678 = vunpack.c.l.b16 %v594
        %v3679 = vunpack.c.h.b16 %v594
        %v3680 = vunpack.c.l.b16 %v595
        %v3681 = vunpack.c.h.b16 %v595
        %v3682 = vunpack.c.l.b16 %v596
        %v3683 = vunpack.c.h.b16 %v596
        %v3684 = vunpack.c.l.b16 %v597
        %v3685 = vunpack.c.h.b16 %v597
        %v3686 = vunpack.c.l.b16 %v598
        %v3687 = vunpack.c.h.b16 %v598
        %v3688 = vunpack.c.l.b16 %v599
        %v3689 = vunpack.c.h.b16 %v599
        %v3690 = vunpack.c.l.b16 %v600
        %v3691 = vunpack.c.h.b16 %v600
        %v3692 = vunpack.c.l.b16 %v601
        %v3693 = vunpack.c.h.b16 %v601
        %v3694 = vunpack.c.l.b16 %v602
        %v3695 = vunpack.c.h.b16 %v602
        %v3696 = vunpack.c.l.b16 %v603
        %v3697 = vunpack.c.h.b16 %v603
        %v3698 = vunpack.c.l.b16 %v604
        %v3699 = vunpack.c.h.b16 %v604
        %v3700 = vunpack.c.l.b16 %v605
        %v3701 = vunpack.c.h.b16 %v605
        %v3702 = vunpack.c.l.b16 %v606
        %v3703 = vunpack.c.h.b16 %v606
        %v3704 = vunpack.c.l.b16 %v607
        %v3705 = vunpack.c.h.b16 %v607
        %v3706 = vunpack.c.l.b16 %v608
        %v3707 = vunpack.c.h.b16 %v608
        %v3708 = vunpack.c.l.b16 %v609
        %v3709 = vunpack.c.h.b16 %v609
        %v3710 = vunpack.c.l.b16 %v610
        %v3711 = vunpack.c.h.b16 %v610
        %v3712 = vunpack.c.l.b16 %v611
        %v3713 = vunpack.c.h.b16 %v611
        %v3714 = vunpack.c.l.b16 %v612
        %v3715 = vunpack.c.h.b16 %v612
        %v3716 = vunpack.c.l.b16 %v613
        %v3717 = vunpack.c.h.b16 %v613
        %v3718 = vunpack.c.l.b16 %v614
        %v3719 = vunpack.c.h.b16 %v614
        %v3720 = vunpack.c.l.b16 %v615
        %v3721 = vunpack.c.h.b16 %v615
        %v3722 = vunpack.c.l.b16 %v616
        %v3723 = vunpack.c.h.b16 %v616
        %v3724 = vunpack.c.l.b16 %v617
        %v3725 = vunpack.c.h.b16 %v617
        %v3726 = vunpack.c.l.b16 %v618
        %v3727 = vunpack.c.h.b16 %v618
        %v3728 = vunpack.c.l.b16 %v619
        %v3729 = vunpack.c.h.b16 %v619
        %v3730 = vunpack.c.l.b16 %v620
        %v3731 = vunpack.c.h.b16 %v620
        %v3732 = vunpack.c.l.b16 %v621
        %v3733 = vunpack.c.h.b16 %v621
        %v3734 = vunpack.c.l.b16 %v622
        %v3735 = vunpack.c.h.b16 %v622
        %v3736 = vunpack.c.l.b16 %v623
        %v3737 = vunpack.c.h.b16 %v623
        %v3738 = vunpack.c.l.b16 %v624
        %v3739 = vunpack.c.h.b16 %v624
        %v3740 = vunpack.c.l.b16 %v625
        %v3741 = vunpack.c.h.b16 %v625
        %v3742 = vunpack.c.l.b16 %v626
        %v3743 = vunpack.c.h.b16 %v626
        %v3744 = vunpack.c.l.b16 %v627
        %v3745 = vunpack.c.h.b16 %v627
        %v3746 = vunpack.c.l.b16 %v628
        %v3747 = vunpack.c.h.b16 %v628
        %v3748 = vunpack.c.l.b16 %v629
        %v3749 = vunpack.c.h.b16 %v629
        %v3750 = vunpack.c.l.b16 %v630
        %v3751 = vunpack.c.h.b16 %v630
        %v3752 = vunpack.c.l.b16 %v631
        %v3753 = vunpack.c.h.b16 %v631
        %v3754 = vunpack.c.l.b16 %v632
        %v3755 = vunpack.c.h.b16 %v632
        %v3756 = vunpack.c.l.b16 %v633
        %v3757 = vunpack.c.h.b16 %v633
        %v3758 = vunpack.c.l.b16 %v634
        %v3759 = vunpack.c.h.b16 %v634
        %v3760 = vunpack.c.l.b16 %v635
        %v3761 = vunpack.c.h.b16 %v635
        %v3762 = vunpack.c.l.b16 %v636
        %v3763 = vunpack.c.h.b16 %v636
        %v3764 = vunpack.c.l.b16 %v637
        %v3765 = vunpack.c.h.b16 %v637
        %v3766 = vunpack.c.l.b16 %v638
        %v3767 = vunpack.c.h.b16 %v638
        %v3768 = vunpack.c.l.b16 %v639
        %v3769 = vunpack.c.h.b16 %v639
        %v3770 = vunpack.c.l.b16 %v640
        %v3771 = vunpack.c.h.b16 %v640
        %v3772 = vunpack.c.l.b16 %v641
        %v3773 = vunpack.c.h.b16 %v641
        %v3774 = vunpack.c.l.b16 %v642
        %v3775 = vunpack.c.h.b16 %v642
        %v3776 = vunpack.c.l.b16 %v643
        %v3777 = vunpack.c.h.b16 %v643
        %v3778 = vunpack.c.l.b16 %v644
        %v3779 = vunpack.c.h.b16 %v644
        %v3780 = vunpack.c.l.b16 %v645
        %v3781 = vunpack.c.h.b16 %v645
        %v3782 = vunpack.c.l.b16 %v646
        %v3783 = vunpack.c.h.b16 %v646
        %v3784 = vunpack.c.l.b16 %v647
        %v3785 = vunpack.c.h.b16 %v647
        %v3786 = vunpack.c.l.b16 %v648
        %v3787 = vunpack.c.h.b16 %v648
        %v3788 = vunpack.c.l.b16 %v649
        %v3789 = vunpack.c.h.b16 %v649
        %v3790 = vunpack.c.l.b16 %v650
        %v3791 = vunpack.c.h.b16 %v650
        %v3792 = vunpack.c.l.b16 %v651
        %v3793 = vunpack.c.h.b16 %v651
        %v3794 = vunpack.c.l.b16 %v652
        %v3795 = vunpack.c.h.b16 %v652
        %v3796 = vunpack.c.l.b16 %v653
        %v3797 = vunpack.c.h.b16 %v653
        %v3798 = vunpack.c.l.b16 %v654
        %v3799 = vunpack.c.h.b16 %v654
        %v3800 = vunpack.c.l.b16 %v655
        %v3801 = vunpack.c.h.b16 %v655
        %v3802 = vunpack.c.l.b16 %v656
        %v3803 = vunpack.c.h.b16 %v656
        %v3804 = vunpack.c.l.b16 %v657
        %v3805 = vunpack.c.h.b16 %v657
        %v3806 = vunpack.c.l.b16 %v658
        %v3807 = vunpack.c.h.b16 %v658
        %v3808 = vunpack.c.l.b16 %v659
        %v3809 = vunpack.c.h.b16 %v659
        %v3810 = vunpack.c.l.b16 %v660
        %v3811 = vunpack.c.h.b16 %v660
        %v3812 = vunpack.c.l.b16 %v661
        %v3813 = vunpack.c.h.b16 %v661
        %v3814 = vunpack.c.l.b16 %v662
        %v3815 = vunpack.c.h.b16 %v662
        %v3816 = vunpack.c.l.b16 %v663
        %v3817 = vunpack.c.h.b16 %v663
        %v3818 = vunpack.c.l.b16 %v664
        %v3819 = vunpack.c.h.b16 %v664
        %v3820 = vunpack.c.l.b16 %v665
        %v3821 = vunpack.c.h.b16 %v665
        %v3822 = vunpack.c.l.b16 %v666
        %v3823 = vunpack.c.h.b16 %v666
        %v3824 = vunpack.c.l.b16 %v667
        %v3825 = vunpack.c.h.b16 %v667
        %v3826 = vunpack.c.l.b16 %v668
        %v3827 = vunpack.c.h.b16 %v668
        %v3828 = vunpack.c.l.b16 %v669
        %v3829 = vunpack.c.h.b16 %v669
        %v3830 = vunpack.c.l.b16 %v670
        %v3831 = vunpack.c.h.b16 %v670
        %v3832 = vunpack.c.l.b16 %v671
        %v3833 = vunpack.c.h.b16 %v671
        %v3834 = vunpack.c.l.b16 %v672
        %v3835 = vunpack.c.h.b16 %v672
        %v3836 = vunpack.c.l.b16 %v673
        %v3837 = vunpack.c.h.b16 %v673
        %v3838 = vunpack.c.l.b16 %v674
        %v3839 = vunpack.c.h.b16 %v674
        %v3840 = vunpack.c.l.b16 %v675
        %v3841 = vunpack.c.h.b16 %v675
        %v3842 = vunpack.c.l.b16 %v676
        %v3843 = vunpack.c.h.b16 %v676
        %v3844 = vunpack.c.l.b16 %v677
        %v3845 = vunpack.c.h.b16 %v677
        %v3846 = vunpack.c.l.b16 %v678
        %v3847 = vunpack.c.h.b16 %v678
        %v3848 = vunpack.c.l.b16 %v679
        %v3849 = vunpack.c.h.b16 %v679
        %v3850 = vunpack.c.l.b16 %v680
        %v3851 = vunpack.c.h.b16 %v680
        %v3852 = vunpack.c.l.b16 %v681
        %v3853 = vunpack.c.h.b16 %v681
        %v3854 = vunpack.c.l.b16 %v682
        %v3855 = vunpack.c.h.b16 %v682
        %v3856 = vunpack.c.l.b16 %v683
        %v3857 = vunpack.c.h.b16 %v683
        %v3858 = vunpack.c.l.b16 %v684
        %v3859 = vunpack.c.h.b16 %v684
        %v3860 = vunpack.c.l.b16 %v685
        %v3861 = vunpack.c.h.b16 %v685
        %v3862 = vunpack.c.l.b16 %v686
        %v3863 = vunpack.c.h.b16 %v686
        %v3864 = vunpack.c.l.b16 %v687
        %v3865 = vunpack.c.h.b16 %v687
        %v3866 = vunpack.c.l.b16 %v688
        %v3867 = vunpack.c.h.b16 %v688
        %v3868 = vunpack.c.l.b16 %v689
        %v3869 = vunpack.c.h.b16 %v689
        %v3870 = vunpack.c.l.b16 %v690
        %v3871 = vunpack.c.h.b16 %v690
        %v3872 = vunpack.c.l.b16 %v691
        %v3873 = vunpack.c.h.b16 %v691
        %v3874 = vunpack.c.l.b16 %v692
        %v3875 = vunpack.c.h.b16 %v692
        %v3876 = vunpack.c.l.b16 %v693
        %v3877 = vunpack.c.h.b16 %v693
        %v3878 = vunpack.c.l.b16 %v694
        %v3879 = vunpack.c.h.b16 %v694
        %v3880 = vunpack.c.l.b16 %v695
        %v3881 = vunpack.c.h.b16 %v695
        %v3882 = vunpack.c.l.b16 %v696
        %v3883 = vunpack.c.h.b16 %v696
        %v3884 = vunpack.c.l.b16 %v697
        %v3885 = vunpack.c.h.b16 %v697
        %v3886 = vunpack.c.l.b16 %v698
        %v3887 = vunpack.c.h.b16 %v698
        %v3888 = vunpack.c.l.b16 %v699
        %v3889 = vunpack.c.h.b16 %v699
        %v3890 = vunpack.c.l.b16 %v700
        %v3891 = vunpack.c.h.b16 %v700
        %v3892 = vunpack.c.l.b16 %v701
        %v3893 = vunpack.c.h.b16 %v701
        %v3894 = vunpack.c.l.b16 %v702
        %v3895 = vunpack.c.h.b16 %v702
        %v3896 = vunpack.c.l.b16 %v703
        %v3897 = vunpack.c.h.b16 %v703
        %v3898 = vunpack.c.l.b16 %v704
        %v3899 = vunpack.c.h.b16 %v704
        %v3900 = vunpack.c.l.b16 %v705
        %v3901 = vunpack.c.h.b16 %v705
        %v3902 = vunpack.c.l.b16 %v706
        %v3903 = vunpack.c.h.b16 %v706
        %v3904 = vunpack.c.l.b16 %v707
        %v3905 = vunpack.c.h.b16 %v707
        %v3906 = vunpack.c.l.b16 %v708
        %v3907 = vunpack.c.h.b16 %v708
        %v3908 = vunpack.c.l.b16 %v709
        %v3909 = vunpack.c.h.b16 %v709
        %v3910 = vunpack.c.l.b16 %v710
        %v3911 = vunpack.c.h.b16 %v710
        %v3912 = vpack.c.b16 %v3342, %v3336
        %v3913 = vpack.c.b16 %v3343, %v3337
        %v3914 = vpack.c.b16 %v3344, %v3338
        %v3915 = vpack.c.b16 %v3345, %v3339
        %v3916 = vpack.c.b16 %v3346, %v3340
        %v3917 = vpack.c.b16 %v3347, %v3341
        %v3918 = vpack.c.b16 %v3354, %v3348
        %v3919 = vpack.c.b16 %v3355, %v3349
        %v3920 = vpack.c.b16 %v3356, %v3350
        %v3921 = vpack.c.b16 %v3357, %v3351
        %v3922 = vpack.c.b16 %v3358, %v3352
        %v3923 = vpack.c.b16 %v3359, %v3353
        %v3924 = vpack.c.b16 %v3366, %v3360
        %v3925 = vpack.c.b16 %v3367, %v3361
        %v3926 = vpack.c.b16 %v3368, %v3362
        %v3927 = vpack.c.b16 %v3369, %v3363
        %v3928 = vpack.c.b16 %v3370, %v3364
        %v3929 = vpack.c.b16 %v3371, %v3365
        %v3930 = vpack.c.b16 %v3378, %v3372
        %v3931 = vpack.c.b16 %v3379, %v3373
        %v3932 = vpack.c.b16 %v3380, %v3374
        %v3933 = vpack.c.b16 %v3381, %v3375
        %v3934 = vpack.c.b16 %v3382, %v3376
        %v3935 = vpack.c.b16 %v3383, %v3377
        %v3936 = vpack.c.b16 %v3390, %v3384
        %v3937 = vpack.c.b16 %v3391, %v3385
        %v3938 = vpack.c.b16 %v3392, %v3386
        %v3939 = vpack.c.b16 %v3393, %v3387
        %v3940 = vpack.c.b16 %v3394, %v3388
        %v3941 = vpack.c.b16 %v3395, %v3389
        %v3942 = vpack.c.b16 %v3402, %v3396
        %v3943 = vpack.c.b16 %v3403, %v3397
        %v3944 = vpack.c.b16 %v3404, %v3398
        %v3945 = vpack.c.b16 %v3405, %v3399
        %v3946 = vpack.c.b16 %v3406, %v3400
        %v3947 = vpack.c.b16 %v3407, %v3401
        %v3948 = vpack.c.b16 %v3414, %v3408
        %v3949 = vpack.c.b16 %v3415, %v3409
        %v3950 = vpack.c.b16 %v3416, %v3410
        %v3951 = vpack.c.b16 %v3417, %v3411
        %v3952 = vpack.c.b16 %v3418, %v3412
        %v3953 = vpack.c.b16 %v3419, %v3413
        %v3954 = vpack.c.b16 %v3426, %v3420
        %v3955 = vpack.c.b16 %v3427, %v3421
        %v3956 = vpack.c.b16 %v3428, %v3422
        %v3957 = vpack.c.b16 %v3429, %v3423
        %v3958 = vpack.c.b16 %v3430, %v3424
        %v3959 = vpack.c.b16 %v3431, %v3425
        %v3960 = vpack.c.b16 %v3438, %v3432
        %v3961 = vpack.c.b16 %v3439, %v3433
        %v3962 = vpack.c.b16 %v3440, %v3434
        %v3963 = vpack.c.b16 %v3441, %v3435
        %v3964 = vpack.c.b16 %v3442, %v3436
        %v3965 = vpack.c.b16 %v3443, %v3437
        %v3966 = vpack.c.b16 %v3450, %v3444
        %v3967 = vpack.c.b16 %v3451, %v3445
        %v3968 = vpack.c.b16 %v3452, %v3446
        %v3969 = vpack.c.b16 %v3453, %v3447
        %v3970 = vpack.c.b16 %v3454, %v3448
        %v3971 = vpack.c.b16 %v3455, %v3449
        %v3972 = vpack.c.b16 %v3462, %v3456
        %v3973 = vpack.c.b16 %v3463, %v3457
        %v3974 = vpack.c.b16 %v3464, %v3458
        %v3975 = vpack.c.b16 %v3465, %v3459
        %v3976 = vpack.c.b16 %v3466, %v3460
        %v3977 = vpack.c.b16 %v3467, %v3461
        %v3978 = vpack.c.b16 %v3474, %v3468
        %v3979 = vpack.c.b16 %v3475, %v3469
        %v3980 = vpack.c.b16 %v3476, %v3470
        %v3981 = vpack.c.b16 %v3477, %v3471
        %v3982 = vpack.c.b16 %v3478, %v3472
        %v3983 = vpack.c.b16 %v3479, %v3473
        %v3984 = vpack.c.b16 %v3486, %v3480
        %v3985 = vpack.c.b16 %v3487, %v3481
        %v3986 = vpack.c.b16 %v3488, %v3482
        %v3987 = vpack.c.b16 %v3489, %v3483
        %v3988 = vpack.c.b16 %v3490, %v3484
        %v3989 = vpack.c.b16 %v3491, %v3485
        %v3990 = vpack.c.b16 %v3498, %v3492
        %v3991 = vpack.c.b16 %v3499, %v3493
        %v3992 = vpack.c.b16 %v3500, %v3494
        %v3993 = vpack.c.b16 %v3501, %v3495
        %v3994 = vpack.c.b16 %v3502, %v3496
        %v3995 = vpack.c.b16 %v3503, %v3497
        %v3996 = vpack.c.b16 %v3510, %v3504
        %v3997 = vpack.c.b16 %v3511, %v3505
        %v3998 = vpack.c.b16 %v3512, %v3506
        %v3999 = vpack.c.b16 %v3513, %v3507
        %v4000 = vpack.c.b16 %v3514, %v3508
        %v4001 = vpack.c.b16 %v3515, %v3509
        %v4002 = vpack.c.b16 %v3522, %v3516
        %v4003 = vpack.c.b16 %v3523, %v3517
        %v4004 = vpack.c.b16 %v3524, %v3518
        %v4005 = vpack.c.b16 %v3525, %v3519
        %v4006 = vpack.c.b16 %v3526, %v3520
        %v4007 = vpack.c.b16 %v3527, %v3521
        %v4008 = vpack.c.b16 %v3534, %v3528
        %v4009 = vpack.c.b16 %v3535, %v3529
        %v4010 = vpack.c.b16 %v3536, %v3530
        %v4011 = vpack.c.b16 %v3537, %v3531
        %v4012 = vpack.c.b16 %v3538, %v3532
        %v4013 = vpack.c.b16 %v3539, %v3533
        %v4014 = vpack.c.b16 %v3546, %v3540
        %v4015 = vpack.c.b16 %v3547, %v3541
        %v4016 = vpack.c.b16 %v3548, %v3542
        %v4017 = vpack.c.b16 %v3549, %v3543
        %v4018 = vpack.c.b16 %v3550, %v3544
        %v4019 = vpack.c.b16 %v3551, %v3545
        %v4020 = vpack.c.b16 %v3558, %v3552
        %v4021 = vpack.c.b16 %v3559, %v3553
        %v4022 = vpack.c.b16 %v3560, %v3554
        %v4023 = vpack.c.b16 %v3561, %v3555
        %v4024 = vpack.c.b16 %v3562, %v3556
        %v4025 = vpack.c.b16 %v3563, %v3557
        %v4026 = vpack.c.b16 %v3570, %v3564
        %v4027 = vpack.c.b16 %v3571, %v3565
        %v4028 = vpack.c.b16 %v3572, %v3566
        %v4029 = vpack.c.b16 %v3573, %v3567
        %v4030 = vpack.c.b16 %v3574, %v3568
        %v4031 = vpack.c.b16 %v3575, %v3569
        %v4032 = vpack.c.b16 %v3582, %v3576
        %v4033 = vpack.c.b16 %v3583, %v3577
        %v4034 = vpack.c.b16 %v3584, %v3578
        %v4035 = vpack.c.b16 %v3585, %v3579
        %v4036 = vpack.c.b16 %v3586, %v3580
        %v4037 = vpack.c.b16 %v3587, %v3581
        %v4038 = vpack.c.b16 %v3594, %v3588
        %v4039 = vpack.c.b16 %v3595, %v3589
        %v4040 = vpack.c.b16 %v3596, %v3590
        %v4041 = vpack.c.b16 %v3597, %v3591
        %v4042 = vpack.c.b16 %v3598, %v3592
        %v4043 = vpack.c.b16 %v3599, %v3593
        %v4044 = vpack.c.b16 %v3606, %v3600
        %v4045 = vpack.c.b16 %v3607, %v3601
        %v4046 = vpack.c.b16 %v3608, %v3602
        %v4047 = vpack.c.b16 %v3609, %v3603
        %v4048 = vpack.c.b16 %v3610, %v3604
        %v4049 = vpack.c.b16 %v3611, %v3605
        %v4050 = vpack.c.b16 %v3618, %v3612
        %v4051 = vpack.c.b16 %v3619, %v3613
        %v4052 = vpack.c.b16 %v3620, %v3614
        %v4053 = vpack.c.b16 %v3621, %v3615
        %v4054 = vpack.c.b16 %v3622, %v3616
        %v4055 = vpack.c.b16 %v3623, %v3617
        %v4056 = vpack.c.b16 %v3630, %v3624
        %v4057 = vpack.c.b16 %v3631, %v3625
        %v4058 = vpack.c.b16 %v3632, %v3626
        %v4059 = vpack.c.b16 %v3633, %v3627
        %v4060 = vpack.c.b16 %v3634, %v3628
        %v4061 = vpack.c.b16 %v3635, %v3629
        %v4062 = vpack.c.b16 %v3642, %v3636
        %v4063 = vpack.c.b16 %v3643, %v3637
        %v4064 = vpack.c.b16 %v3644, %v3638
        %v4065 = vpack.c.b16 %v3645, %v3639
        %v4066 = vpack.c.b16 %v3646, %v3640
        %v4067 = vpack.c.b16 %v3647, %v3641
        %v4068 = vpack.c.b16 %v3654, %v3648
        %v4069 = vpack.c.b16 %v3655, %v3649
        %v4070 = vpack.c.b16 %v3656, %v3650
        %v4071 = vpack.c.b16 %v3657, %v3651
        %v4072 = vpack.c.b16 %v3658, %v3652
        %v4073 = vpack.c.b16 %v3659, %v3653
        %v4074 = vpack.c.b16 %v3666, %v3660
        %v4075 = vpack.c.b16 %v3667, %v3661
        %v4076 = vpack.c.b16 %v3668, %v3662
        %v4077 = vpack.c.b16 %v3669, %v3663
        %v4078 = vpack.c.b16 %v3670, %v3664
        %v4079 = vpack.c.b16 %v3671, %v3665
        %v4080 = vpack.c.b16 %v3678, %v3672
        %v4081 = vpack.c.b16 %v3679, %v3673
        %v4082 = vpack.c.b16 %v3680, %v3674
        %v4083 = vpack.c.b16 %v3681, %v3675
        %v4084 = vpack.c.b16 %v3682, %v3676
        %v4085 = vpack.c.b16 %v3683, %v3677
        %v4086 = vpack.c.b16 %v3690, %v3684
        %v4087 = vpack.c.b16 %v3691, %v3685
        %v4088 = vpack.c.b16 %v3692, %v3686
        %v4089 = vpack.c.b16 %v3693, %v3687
        %v4090 = vpack.c.b16 %v3694, %v3688
        %v4091 = vpack.c.b16 %v3695, %v3689
        %v4092 = vpack.c.b16 %v3702, %v3696
        %v4093 = vpack.c.b16 %v3703, %v3697
        %v4094 = vpack.c.b16 %v3704, %v3698
        %v4095 = vpack.c.b16 %v3705, %v3699
        %v4096 = vpack.c.b16 %v3706, %v3700
        %v4097 = vpack.c.b16 %v3707, %v3701
        %v4098 = vpack.c.b16 %v3714, %v3708
        %v4099 = vpack.c.b16 %v3715, %v3709
        %v4100 = vpack.c.b16 %v3716, %v3710
        %v4101 = vpack.c.b16 %v3717, %v3711
        %v4102 = vpack.c.b16 %v3718, %v3712
        %v4103 = vpack.c.b16 %v3719, %v3713
        %v4104 = vpack.c.b16 %v3726, %v3720
        %v4105 = vpack.c.b16 %v3727, %v3721
        %v4106 = vpack.c.b16 %v3728, %v3722
        %v4107 = vpack.c.b16 %v3729, %v3723
        %v4108 = vpack.c.b16 %v3730, %v3724
        %v4109 = vpack.c.b16 %v3731, %v3725
        %v4110 = vpack.c.b16 %v3738, %v3732
        %v4111 = vpack.c.b16 %v3739, %v3733
        %v4112 = vpack.c.b16 %v3740, %v3734
        %v4113 = vpack.c.b16 %v3741, %v3735
        %v4114 = vpack.c.b16 %v3742, %v3736
        %v4115 = vpack.c.b16 %v3743, %v3737
        %v4116 = vpack.c.b16 %v3750, %v3744
        %v4117 = vpack.c.b16 %v3751, %v3745
        %v4118 = vpack.c.b16 %v3752, %v3746
        %v4119 = vpack.c.b16 %v3753, %v3747
        %v4120 = vpack.c.b16 %v3754, %v3748
        %v4121 = vpack.c.b16 %v3755, %v3749
        %v4122 = vpack.c.b16 %v3762, %v3756
        %v4123 = vpack.c.b16 %v3763, %v3757
        %v4124 = vpack.c.b16 %v3764, %v3758
        %v4125 = vpack.c.b16 %v3765, %v3759
        %v4126 = vpack.c.b16 %v3766, %v3760
        %v4127 = vpack.c.b16 %v3767, %v3761
        %v4128 = vpack.c.b16 %v3774, %v3768
        %v4129 = vpack.c.b16 %v3775, %v3769
        %v4130 = vpack.c.b16 %v3776, %v3770
        %v4131 = vpack.c.b16 %v3777, %v3771
        %v4132 = vpack.c.b16 %v3778, %v3772
        %v4133 = vpack.c.b16 %v3779, %v3773
        %v4134 = vpack.c.b16 %v3786, %v3780
        %v4135 = vpack.c.b16 %v3787, %v3781
        %v4136 = vpack.c.b16 %v3788, %v3782
        %v4137 = vpack.c.b16 %v3789, %v3783
        %v4138 = vpack.c.b16 %v3790, %v3784
        %v4139 = vpack.c.b16 %v3791, %v3785
        %v4140 = vpack.c.b16 %v3798, %v3792
        %v4141 = vpack.c.b16 %v3799, %v3793
        %v4142 = vpack.c.b16 %v3800, %v3794
        %v4143 = vpack.c.b16 %v3801, %v3795
        %v4144 = vpack.c.b16 %v3802, %v3796
        %v4145 = vpack.c.b16 %v3803, %v3797
        %v4146 = vpack.c.b16 %v3810, %v3804
        %v4147 = vpack.c.b16 %v3811, %v3805
        %v4148 = vpack.c.b16 %v3812, %v3806
        %v4149 = vpack.c.b16 %v3813, %v3807
        %v4150 = vpack.c.b16 %v3814, %v3808
        %v4151 = vpack.c.b16 %v3815, %v3809
        %v4152 = vpack.c.b16 %v3822, %v3816
        %v4153 = vpack.c.b16 %v3823, %v3817
        %v4154 = vpack.c.b16 %v3824, %v3818
        %v4155 = vpack.c.b16 %v3825, %v3819
        %v4156 = vpack.c.b16 %v3826, %v3820
        %v4157 = vpack.c.b16 %v3827, %v3821
        %v4158 = vpack.c.b16 %v3834, %v3828
        %v4159 = vpack.c.b16 %v3835, %v3829
        %v4160 = vpack.c.b16 %v3836, %v3830
        %v4161 = vpack.c.b16 %v3837, %v3831
        %v4162 = vpack.c.b16 %v3838, %v3832
        %v4163 = vpack.c.b16 %v3839, %v3833
        %v4164 = vpack.c.b16 %v3846, %v3840
        %v4165 = vpack.c.b16 %v3847, %v3841
        %v4166 = vpack.c.b16 %v3848, %v3842
        %v4167 = vpack.c.b16 %v3849, %v3843
        %v4168 = vpack.c.b16 %v3850, %v3844
        %v4169 = vpack.c.b16 %v3851, %v3845
        %v4170 = vpack.c.b16 %v3858, %v3852
        %v4171 = vpack.c.b16 %v3859, %v3853
        %v4172 = vpack.c.b16 %v3860, %v3854
        %v4173 = vpack.c.b16 %v3861, %v3855
        %v4174 = vpack.c.b16 %v3862, %v3856
        %v4175 = vpack.c.b16 %v3863, %v3857
        %v4176 = vpack.c.b16 %v3870, %v3864
        %v4177 = vpack.c.b16 %v3871, %v3865
        %v4178 = vpack.c.b16 %v3872, %v3866
        %v4179 = vpack.c.b16 %v3873, %v3867
        %v4180 = vpack.c.b16 %v3874, %v3868
        %v4181 = vpack.c.b16 %v3875, %v3869
        %v4182 = vpack.c.b16 %v3882, %v3876
        %v4183 = vpack.c.b16 %v3883, %v3877
        %v4184 = vpack.c.b16 %v3884, %v3878
        %v4185 = vpack.c.b16 %v3885, %v3879
        %v4186 = vpack.c.b16 %v3886, %v3880
        %v4187 = vpack.c.b16 %v3887, %v3881
        %v4188 = vpack.c.b16 %v3894, %v3888
        %v4189 = vpack.c.b16 %v3895, %v3889
        %v4190 = vpack.c.b16 %v3896, %v3890
        %v4191 = vpack.c.b16 %v3897, %v3891
        %v4192 = vpack.c.b16 %v3898, %v3892
        %v4193 = vpack.c.b16 %v3899, %v3893
        %v4194 = vpack.c.b16 %v3906, %v3900
        %v4195 = vpack.c.b16 %v3907, %v3901
        %v4196 = vpack.c.b16 %v3908, %v3902
        %v4197 = vpack.c.b16 %v3909, %v3903
        %v4198 = vpack.c.b16 %v3910, %v3904
        %v4199 = vpack.c.b16 %v3911, %v3905
        %4488 = vmatprep.subr.bf16.mxu0 %v3913
        %4489 = vmatpush1.bf16.msra.mxu0 %v3912
        %4490 = vmatprep.subr.bf16.mxu0 %v3919
        %4491 = vmatpush1.bf16.msra.mxu0 %v3918
        %4492 = vmatprep.subr.bf16.mxu0 %v3925
        %4493 = vmatpush1.bf16.msra.mxu0 %v3924
        %4494 = vmatprep.subr.bf16.mxu0 %v3931
        %4495 = vmatpush1.bf16.msra.mxu0 %v3930
        %4496 = vmatprep.subr.bf16.mxu0 %v3937
        %4497 = vmatpush1.bf16.msra.mxu0 %v3936
        %4498 = vmatprep.subr.bf16.mxu0 %v3943
        %4499 = vmatpush1.bf16.msra.mxu0 %v3942
        %4500 = vmatprep.subr.bf16.mxu0 %v3949
        %4501 = vmatpush1.bf16.msra.mxu0 %v3948
        %4502 = vmatprep.subr.bf16.mxu0 %v3955
        %4503 = vmatpush1.bf16.msra.mxu0 %v3954
        %4504 = vmatprep.subr.bf16.mxu0 %v3961
        %4505 = vmatpush1.bf16.msra.mxu0 %v3960
        %4506 = vmatprep.subr.bf16.mxu0 %v3967
        %4507 = vmatpush1.bf16.msra.mxu0 %v3966
        %4508 = vmatprep.subr.bf16.mxu0 %v3973
        %4509 = vmatpush1.bf16.msra.mxu0 %v3972
        %4510 = vmatprep.subr.bf16.mxu0 %v3979
        %4511 = vmatpush1.bf16.msra.mxu0 %v3978
        %4512 = vmatprep.subr.bf16.mxu0 %v3985
        %4513 = vmatpush1.bf16.msra.mxu0 %v3984
        %4514 = vmatprep.subr.bf16.mxu0 %v3991
        %4515 = vmatpush1.bf16.msra.mxu0 %v3990
        %4516 = vmatprep.subr.bf16.mxu0 %v3997
        %4517 = vmatpush1.bf16.msra.mxu0 %v3996
        %4518 = vmatprep.subr.bf16.mxu0 %v4003
        %4519 = vmatpush1.bf16.msra.mxu0 %v4002
        %4520 = vmatprep.mubr.bf16.mxu0 %v3025
        %4521 = vmatmul.mubr.bf16.gmra.mrb[0].mxu0 %v3024
        %v4522 = vpop.f32.mrb[0].mxu0
        %v4523 = vadd.f32 %v2652, %v4522
        %v4524 = vpop.f32.mrb[0].mxu0
        %v4525 = vadd.f32 %v2654, %v4524
        %v4526 = vpop.f32.mrb[0].mxu0
        %v4527 = vadd.f32 %v2656, %v4526
        %v4528 = vpop.f32.mrb[0].mxu0
        %v4529 = vadd.f32 %v2658, %v4528
        %4530 = vmatprep.mubr.bf16.mxu0 %v3031
        %4531 = vmatmul.mubr.bf16.gmra.mrb[0].mxu0 %v3030
        %v4532 = vpop.f32.mrb[0].mxu0
        %v4533 = vadd.f32 %v2662, %v4532
        %v4534 = vpop.f32.mrb[0].mxu0
        %v4535 = vadd.f32 %v2664, %v4534
        %v4536 = vpop.f32.mrb[0].mxu0
        %v4537 = vadd.f32 %v2666, %v4536
        %v4538 = vpop.f32.mrb[0].mxu0
        %v4539 = vadd.f32 %v2668, %v4538
        %4540 = vdwg.mxu0
        %4541 = vmatprep.subr.bf16.mxu0 %v4009
        %4542 = vmatpush1.bf16.msra.mxu0 %v4008
        %4543 = vmatprep.subr.bf16.mxu0 %v4015
        %4544 = vmatpush1.bf16.msra.mxu0 %v4014
        %4545 = vmatprep.subr.bf16.mxu0 %v4021
        %4546 = vmatpush1.bf16.msra.mxu0 %v4020
        %4547 = vmatprep.subr.bf16.mxu0 %v4027
        %4548 = vmatpush1.bf16.msra.mxu0 %v4026
        %4549 = vmatprep.subr.bf16.mxu0 %v4033
        %4550 = vmatpush1.bf16.msra.mxu0 %v4032
        %4551 = vmatprep.subr.bf16.mxu0 %v4039
        %4552 = vmatpush1.bf16.msra.mxu0 %v4038
        %4553 = vmatprep.subr.bf16.mxu0 %v4045
        %4554 = vmatpush1.bf16.msra.mxu0 %v4044
        %4555 = vmatprep.subr.bf16.mxu0 %v4051
        %4556 = vmatpush1.bf16.msra.mxu0 %v4050
        %4557 = vmatprep.subr.bf16.mxu0 %v4057
        %4558 = vmatpush1.bf16.msra.mxu0 %v4056
        %4559 = vmatprep.subr.bf16.mxu0 %v4063
        %4560 = vmatpush1.bf16.msra.mxu0 %v4062
        %4561 = vmatprep.subr.bf16.mxu0 %v4069
        %4562 = vmatpush1.bf16.msra.mxu0 %v4068
        %4563 = vmatprep.subr.bf16.mxu0 %v4075
        %4564 = vmatpush1.bf16.msra.mxu0 %v4074
        %4565 = vmatprep.subr.bf16.mxu0 %v4081
        %4566 = vmatpush1.bf16.msra.mxu0 %v4080
        %4567 = vmatprep.subr.bf16.mxu0 %v4087
        %4568 = vmatpush1.bf16.msra.mxu0 %v4086
        %4569 = vmatprep.subr.bf16.mxu0 %v4093
        %4570 = vmatpush1.bf16.msra.mxu0 %v4092
        %4571 = vmatprep.subr.bf16.mxu0 %v4099
        %4572 = vmatpush1.bf16.msra.mxu0 %v4098
        %4573 = vmatprep.mubr.bf16.mxu0 %v3027
        %4574 = vmatmul.mubr.bf16.gmra.mrb[0].mxu0 %v3026
        %v4575 = vpop.f32.mrb[0].mxu0
        %v4576 = vadd.f32 %v4523, %v4575
        %v4577 = vpop.f32.mrb[0].mxu0
        %v4578 = vadd.f32 %v4525, %v4577
        %v4579 = vpop.f32.mrb[0].mxu0
        %v4580 = vadd.f32 %v4527, %v4579
        %v4581 = vpop.f32.mrb[0].mxu0
        %v4582 = vadd.f32 %v4529, %v4581
        %4583 = vmatprep.mubr.bf16.mxu0 %v3033
        %4584 = vmatmul.mubr.bf16.gmra.mrb[0].mxu0 %v3032
        %v4585 = vpop.f32.mrb[0].mxu0
        %v4586 = vadd.f32 %v4533, %v4585
        %v4587 = vpop.f32.mrb[0].mxu0
        %v4588 = vadd.f32 %v4535, %v4587
        %v4589 = vpop.f32.mrb[0].mxu0
        %v4590 = vadd.f32 %v4537, %v4589
        %v4591 = vpop.f32.mrb[0].mxu0
        %v4592 = vadd.f32 %v4539, %v4591
        %4593 = vdwg.mxu0
        %4594 = vmatprep.subr.bf16.mxu0 %v4105
        %4595 = vmatpush1.bf16.msra.mxu0 %v4104
        %4596 = vmatprep.subr.bf16.mxu0 %v4111
        %4597 = vmatpush1.bf16.msra.mxu0 %v4110
        %4598 = vmatprep.subr.bf16.mxu0 %v4117
        %4599 = vmatpush1.bf16.msra.mxu0 %v4116
        %4600 = vmatprep.subr.bf16.mxu0 %v4123
        %4601 = vmatpush1.bf16.msra.mxu0 %v4122
        %4602 = vmatprep.subr.bf16.mxu0 %v4129
        %4603 = vmatpush1.bf16.msra.mxu0 %v4128
        %4604 = vmatprep.subr.bf16.mxu0 %v4135
        %4605 = vmatpush1.bf16.msra.mxu0 %v4134
        %4606 = vmatprep.subr.bf16.mxu0 %v4141
        %4607 = vmatpush1.bf16.msra.mxu0 %v4140
        %4608 = vmatprep.subr.bf16.mxu0 %v4147
        %4609 = vmatpush1.bf16.msra.mxu0 %v4146
        %4610 = vmatprep.subr.bf16.mxu0 %v4153
        %4611 = vmatpush1.bf16.msra.mxu0 %v4152
        %4612 = vmatprep.subr.bf16.mxu0 %v4159
        %4613 = vmatpush1.bf16.msra.mxu0 %v4158
        %4614 = vmatprep.subr.bf16.mxu0 %v4165
        %4615 = vmatpush1.bf16.msra.mxu0 %v4164
        %4616 = vmatprep.subr.bf16.mxu0 %v4171
        %4617 = vmatpush1.bf16.msra.mxu0 %v4170
        %4618 = vmatprep.subr.bf16.mxu0 %v4177
        %4619 = vmatpush1.bf16.msra.mxu0 %v4176
        %4620 = vmatprep.subr.bf16.mxu0 %v4183
        %4621 = vmatpush1.bf16.msra.mxu0 %v4182
        %4622 = vmatprep.subr.bf16.mxu0 %v4189
        %4623 = vmatpush1.bf16.msra.mxu0 %v4188
        %4624 = vmatprep.subr.bf16.mxu0 %v4195
        %4625 = vmatpush1.bf16.msra.mxu0 %v4194
        %4626 = vmatprep.mubr.bf16.mxu0 %v3029
        %4627 = vmatmul.mubr.bf16.gmra.mrb[0].mxu0 %v3028
        %v4628 = vpop.f32.mrb[0].mxu0
        %v4629 = vadd.f32 %v4576, %v4628
        %v4630 = vpop.f32.mrb[0].mxu0
        %v4631 = vadd.f32 %v4578, %v4630
        %v4632 = vpop.f32.mrb[0].mxu0
        %v4633 = vadd.f32 %v4580, %v4632
        %v4634 = vpop.f32.mrb[0].mxu0
        %v4635 = vadd.f32 %v4582, %v4634
        %4636 = vmatprep.mubr.bf16.mxu0 %v3035
        %4637 = vmatmul.mubr.bf16.gmra.mrb[0].mxu0 %v3034
        %v4638 = vpop.f32.mrb[0].mxu0
        %v4639 = vadd.f32 %v4586, %v4638
        %v4640 = vpop.f32.mrb[0].mxu0
        %v4641 = vadd.f32 %v4588, %v4640
        %v4642 = vpop.f32.mrb[0].mxu0
        %v4643 = vadd.f32 %v4590, %v4642
        %v4644 = vpop.f32.mrb[0].mxu0
        %v4645 = vadd.f32 %v4592, %v4644
        %4646 = vdwg.mxu0
        %4647 = vmatprep.subr.bf16.mxu0 %v3915
        %4648 = vmatpush1.bf16.msra.mxu0 %v3914
        %4649 = vmatprep.subr.bf16.mxu0 %v3921
        %4650 = vmatpush1.bf16.msra.mxu0 %v3920
        %4651 = vmatprep.subr.bf16.mxu0 %v3927
        %4652 = vmatpush1.bf16.msra.mxu0 %v3926
        %4653 = vmatprep.subr.bf16.mxu0 %v3933
        %4654 = vmatpush1.bf16.msra.mxu0 %v3932
        %4655 = vmatprep.subr.bf16.mxu0 %v3939
        %4656 = vmatpush1.bf16.msra.mxu0 %v3938
        %4657 = vmatprep.subr.bf16.mxu0 %v3945
        %4658 = vmatpush1.bf16.msra.mxu0 %v3944
        %4659 = vmatprep.subr.bf16.mxu0 %v3951
        %4660 = vmatpush1.bf16.msra.mxu0 %v3950
        %4661 = vmatprep.subr.bf16.mxu0 %v3957
        %4662 = vmatpush1.bf16.msra.mxu0 %v3956
        %4663 = vmatprep.subr.bf16.mxu0 %v3963
        %4664 = vmatpush1.bf16.msra.mxu0 %v3962
        %4665 = vmatprep.subr.bf16.mxu0 %v3969
        %4666 = vmatpush1.bf16.msra.mxu0 %v3968
        %4667 = vmatprep.subr.bf16.mxu0 %v3975
        %4668 = vmatpush1.bf16.msra.mxu0 %v3974
        %4669 = vmatprep.subr.bf16.mxu0 %v3981
        %4670 = vmatpush1.bf16.msra.mxu0 %v3980
        %4671 = vmatprep.subr.bf16.mxu0 %v3987
        %4672 = vmatpush1.bf16.msra.mxu0 %v3986
        %4673 = vmatprep.subr.bf16.mxu0 %v3993
        %4674 = vmatpush1.bf16.msra.mxu0 %v3992
        %4675 = vmatprep.subr.bf16.mxu0 %v3999
        %4676 = vmatpush1.bf16.msra.mxu0 %v3998
        %4677 = vmatprep.subr.bf16.mxu0 %v4005
        %4678 = vmatpush1.bf16.msra.mxu0 %v4004
        %4679 = vmatprep.mubr.bf16.mxu0 %v3025
        %4680 = vmatmul.mubr.bf16.gmra.mrb[0].mxu0 %v3024
        %v4681 = vpop.f32.mrb[0].mxu0
        %v4682 = vadd.f32 %v2811, %v4681
        %v4683 = vpop.f32.mrb[0].mxu0
        %v4684 = vadd.f32 %v2813, %v4683
        %v4685 = vpop.f32.mrb[0].mxu0
        %v4686 = vadd.f32 %v2815, %v4685
        %v4687 = vpop.f32.mrb[0].mxu0
        %v4688 = vadd.f32 %v2817, %v4687
        %4689 = vmatprep.mubr.bf16.mxu0 %v3031
        %4690 = vmatmul.mubr.bf16.gmra.mrb[0].mxu0 %v3030
        %v4691 = vpop.f32.mrb[0].mxu0
        %v4692 = vadd.f32 %v2821, %v4691
        %v4693 = vpop.f32.mrb[0].mxu0
        %v4694 = vadd.f32 %v2823, %v4693
        %v4695 = vpop.f32.mrb[0].mxu0
        %v4696 = vadd.f32 %v2825, %v4695
        %v4697 = vpop.f32.mrb[0].mxu0
        %v4698 = vadd.f32 %v2827, %v4697
        %4699 = vdwg.mxu0
        %4700 = vmatprep.subr.bf16.mxu0 %v4011
        %4701 = vmatpush1.bf16.msra.mxu0 %v4010
        %4702 = vmatprep.subr.bf16.mxu0 %v4017
        %4703 = vmatpush1.bf16.msra.mxu0 %v4016
        %4704 = vmatprep.subr.bf16.mxu0 %v4023
        %4705 = vmatpush1.bf16.msra.mxu0 %v4022
        %4706 = vmatprep.subr.bf16.mxu0 %v4029
        %4707 = vmatpush1.bf16.msra.mxu0 %v4028
        %4708 = vmatprep.subr.bf16.mxu0 %v4035
        %4709 = vmatpush1.bf16.msra.mxu0 %v4034
        %4710 = vmatprep.subr.bf16.mxu0 %v4041
        %4711 = vmatpush1.bf16.msra.mxu0 %v4040
        %4712 = vmatprep.subr.bf16.mxu0 %v4047
        %4713 = vmatpush1.bf16.msra.mxu0 %v4046
        %4714 = vmatprep.subr.bf16.mxu0 %v4053
        %4715 = vmatpush1.bf16.msra.mxu0 %v4052
        %4716 = vmatprep.subr.bf16.mxu0 %v4059
        %4717 = vmatpush1.bf16.msra.mxu0 %v4058
        %4718 = vmatprep.subr.bf16.mxu0 %v4065
        %4719 = vmatpush1.bf16.msra.mxu0 %v4064
        %4720 = vmatprep.subr.bf16.mxu0 %v4071
        %4721 = vmatpush1.bf16.msra.mxu0 %v4070
        %4722 = vmatprep.subr.bf16.mxu0 %v4077
        %4723 = vmatpush1.bf16.msra.mxu0 %v4076
        %4724 = vmatprep.subr.bf16.mxu0 %v4083
        %4725 = vmatpush1.bf16.msra.mxu0 %v4082
        %4726 = vmatprep.subr.bf16.mxu0 %v4089
        %4727 = vmatpush1.bf16.msra.mxu0 %v4088
        %4728 = vmatprep.subr.bf16.mxu0 %v4095
        %4729 = vmatpush1.bf16.msra.mxu0 %v4094
        %4730 = vmatprep.subr.bf16.mxu0 %v4101
        %4731 = vmatpush1.bf16.msra.mxu0 %v4100
        %4732 = vmatprep.mubr.bf16.mxu0 %v3027
        %4733 = vmatmul.mubr.bf16.gmra.mrb[0].mxu0 %v3026
        %v4734 = vpop.f32.mrb[0].mxu0
        %v4735 = vadd.f32 %v4682, %v4734
        %v4736 = vpop.f32.mrb[0].mxu0
        %v4737 = vadd.f32 %v4684, %v4736
        %v4738 = vpop.f32.mrb[0].mxu0
        %v4739 = vadd.f32 %v4686, %v4738
        %v4740 = vpop.f32.mrb[0].mxu0
        %v4741 = vadd.f32 %v4688, %v4740
        %4742 = vmatprep.mubr.bf16.mxu0 %v3033
        %4743 = vmatmul.mubr.bf16.gmra.mrb[0].mxu0 %v3032
        %v4744 = vpop.f32.mrb[0].mxu0
        %v4745 = vadd.f32 %v4692, %v4744
        %v4746 = vpop.f32.mrb[0].mxu0
        %v4747 = vadd.f32 %v4694, %v4746
        %v4748 = vpop.f32.mrb[0].mxu0
        %v4749 = vadd.f32 %v4696, %v4748
        %v4750 = vpop.f32.mrb[0].mxu0
        %v4751 = vadd.f32 %v4698, %v4750
        %4752 = vdwg.mxu0
        %4753 = vmatprep.subr.bf16.mxu0 %v4107
        %4754 = vmatpush1.bf16.msra.mxu0 %v4106
        %4755 = vmatprep.subr.bf16.mxu0 %v4113
        %4756 = vmatpush1.bf16.msra.mxu0 %v4112
        %4757 = vmatprep.subr.bf16.mxu0 %v4119
        %4758 = vmatpush1.bf16.msra.mxu0 %v4118
        %4759 = vmatprep.subr.bf16.mxu0 %v4125
        %4760 = vmatpush1.bf16.msra.mxu0 %v4124
        %4761 = vmatprep.subr.bf16.mxu0 %v4131
        %4762 = vmatpush1.bf16.msra.mxu0 %v4130
        %4763 = vmatprep.subr.bf16.mxu0 %v4137
        %4764 = vmatpush1.bf16.msra.mxu0 %v4136
        %4765 = vmatprep.subr.bf16.mxu0 %v4143
        %4766 = vmatpush1.bf16.msra.mxu0 %v4142
        %4767 = vmatprep.subr.bf16.mxu0 %v4149
        %4768 = vmatpush1.bf16.msra.mxu0 %v4148
        %4769 = vmatprep.subr.bf16.mxu0 %v4155
        %4770 = vmatpush1.bf16.msra.mxu0 %v4154
        %4771 = vmatprep.subr.bf16.mxu0 %v4161
        %4772 = vmatpush1.bf16.msra.mxu0 %v4160
        %4773 = vmatprep.subr.bf16.mxu0 %v4167
        %4774 = vmatpush1.bf16.msra.mxu0 %v4166
        %4775 = vmatprep.subr.bf16.mxu0 %v4173
        %4776 = vmatpush1.bf16.msra.mxu0 %v4172
        %4777 = vmatprep.subr.bf16.mxu0 %v4179
        %4778 = vmatpush1.bf16.msra.mxu0 %v4178
        %4779 = vmatprep.subr.bf16.mxu0 %v4185
        %4780 = vmatpush1.bf16.msra.mxu0 %v4184
        %4781 = vmatprep.subr.bf16.mxu0 %v4191
        %4782 = vmatpush1.bf16.msra.mxu0 %v4190
        %4783 = vmatprep.subr.bf16.mxu0 %v4197
        %4784 = vmatpush1.bf16.msra.mxu0 %v4196
        %4785 = vmatprep.mubr.bf16.mxu0 %v3029
        %4786 = vmatmul.mubr.bf16.gmra.mrb[0].mxu0 %v3028
        %v4787 = vpop.f32.mrb[0].mxu0
        %v4788 = vadd.f32 %v4735, %v4787
        %v4789 = vpop.f32.mrb[0].mxu0
        %v4790 = vadd.f32 %v4737, %v4789
        %v4791 = vpop.f32.mrb[0].mxu0
        %v4792 = vadd.f32 %v4739, %v4791
        %v4793 = vpop.f32.mrb[0].mxu0
        %v4794 = vadd.f32 %v4741, %v4793
        %4795 = vmatprep.mubr.bf16.mxu0 %v3035
        %4796 = vmatmul.mubr.bf16.gmra.mrb[0].mxu0 %v3034
        %v4797 = vpop.f32.mrb[0].mxu0
        %v4798 = vadd.f32 %v4745, %v4797
        %v4799 = vpop.f32.mrb[0].mxu0
        %v4800 = vadd.f32 %v4747, %v4799
        %v4801 = vpop.f32.mrb[0].mxu0
        %v4802 = vadd.f32 %v4749, %v4801
        %v4803 = vpop.f32.mrb[0].mxu0
        %v4804 = vadd.f32 %v4751, %v4803
        %4805 = vdwg.mxu0
        %4806 = vmatprep.subr.bf16.mxu0 %v3917
        %4807 = vmatpush1.bf16.msra.mxu0 %v3916
        %4808 = vmatprep.subr.bf16.mxu0 %v3923
        %4809 = vmatpush1.bf16.msra.mxu0 %v3922
        %4810 = vmatprep.subr.bf16.mxu0 %v3929
        %4811 = vmatpush1.bf16.msra.mxu0 %v3928
        %4812 = vmatprep.subr.bf16.mxu0 %v3935
        %4813 = vmatpush1.bf16.msra.mxu0 %v3934
        %4814 = vmatprep.subr.bf16.mxu0 %v3941
        %4815 = vmatpush1.bf16.msra.mxu0 %v3940
        %4816 = vmatprep.subr.bf16.mxu0 %v3947
        %4817 = vmatpush1.bf16.msra.mxu0 %v3946
        %4818 = vmatprep.subr.bf16.mxu0 %v3953
        %4819 = vmatpush1.bf16.msra.mxu0 %v3952
        %4820 = vmatprep.subr.bf16.mxu0 %v3959
        %4821 = vmatpush1.bf16.msra.mxu0 %v3958
        %4822 = vmatprep.subr.bf16.mxu0 %v3965
        %4823 = vmatpush1.bf16.msra.mxu0 %v3964
        %4824 = vmatprep.subr.bf16.mxu0 %v3971
        %4825 = vmatpush1.bf16.msra.mxu0 %v3970
        %4826 = vmatprep.subr.bf16.mxu0 %v3977
        %4827 = vmatpush1.bf16.msra.mxu0 %v3976
        %4828 = vmatprep.subr.bf16.mxu0 %v3983
        %4829 = vmatpush1.bf16.msra.mxu0 %v3982
        %4830 = vmatprep.subr.bf16.mxu0 %v3989
        %4831 = vmatpush1.bf16.msra.mxu0 %v3988
        %4832 = vmatprep.subr.bf16.mxu0 %v3995
        %4833 = vmatpush1.bf16.msra.mxu0 %v3994
        %4834 = vmatprep.subr.bf16.mxu0 %v4001
        %4835 = vmatpush1.bf16.msra.mxu0 %v4000
        %4836 = vmatprep.subr.bf16.mxu0 %v4007
        %4837 = vmatpush1.bf16.msra.mxu0 %v4006
        %4838 = vmatprep.mubr.bf16.mxu0 %v3025
        %4839 = vmatmul.mubr.bf16.gmra.mrb[0].mxu0 %v3024
        %v4840 = vpop.f32.mrb[0].mxu0
        %v4841 = vadd.f32 %v2970, %v4840
        %v4842 = vpop.f32.mrb[0].mxu0
        %v4843 = vadd.f32 %v2972, %v4842
        %v4844 = vpop.f32.mrb[0].mxu0
        %v4845 = vadd.f32 %v2974, %v4844
        %v4846 = vpop.f32.mrb[0].mxu0
        %v4847 = vadd.f32 %v2976, %v4846
        %4848 = vmatprep.mubr.bf16.mxu0 %v3031
        %4849 = vmatmul.mubr.bf16.gmra.mrb[0].mxu0 %v3030
        %v4850 = vpop.f32.mrb[0].mxu0
        %v4851 = vadd.f32 %v2980, %v4850
        %v4852 = vpop.f32.mrb[0].mxu0
        %v4853 = vadd.f32 %v2982, %v4852
        %v4854 = vpop.f32.mrb[0].mxu0
        %v4855 = vadd.f32 %v2984, %v4854
        %v4856 = vpop.f32.mrb[0].mxu0
        %v4857 = vadd.f32 %v2986, %v4856
        %4858 = vdwg.mxu0
        %4859 = vmatprep.subr.bf16.mxu0 %v4013
        %4860 = vmatpush1.bf16.msra.mxu0 %v4012
        %4861 = vmatprep.subr.bf16.mxu0 %v4019
        %4862 = vmatpush1.bf16.msra.mxu0 %v4018
        %4863 = vmatprep.subr.bf16.mxu0 %v4025
        %4864 = vmatpush1.bf16.msra.mxu0 %v4024
        %4865 = vmatprep.subr.bf16.mxu0 %v4031
        %4866 = vmatpush1.bf16.msra.mxu0 %v4030
        %4867 = vmatprep.subr.bf16.mxu0 %v4037
        %4868 = vmatpush1.bf16.msra.mxu0 %v4036
        %4869 = vmatprep.subr.bf16.mxu0 %v4043
        %4870 = vmatpush1.bf16.msra.mxu0 %v4042
        %4871 = vmatprep.subr.bf16.mxu0 %v4049
        %4872 = vmatpush1.bf16.msra.mxu0 %v4048
        %4873 = vmatprep.subr.bf16.mxu0 %v4055
        %4874 = vmatpush1.bf16.msra.mxu0 %v4054
        %4875 = vmatprep.subr.bf16.mxu0 %v4061
        %4876 = vmatpush1.bf16.msra.mxu0 %v4060
        %4877 = vmatprep.subr.bf16.mxu0 %v4067
        %4878 = vmatpush1.bf16.msra.mxu0 %v4066
        %4879 = vmatprep.subr.bf16.mxu0 %v4073
        %4880 = vmatpush1.bf16.msra.mxu0 %v4072
        %4881 = vmatprep.subr.bf16.mxu0 %v4079
        %4882 = vmatpush1.bf16.msra.mxu0 %v4078
        %4883 = vmatprep.subr.bf16.mxu0 %v4085
        %4884 = vmatpush1.bf16.msra.mxu0 %v4084
        %4885 = vmatprep.subr.bf16.mxu0 %v4091
        %4886 = vmatpush1.bf16.msra.mxu0 %v4090
        %4887 = vmatprep.subr.bf16.mxu0 %v4097
        %4888 = vmatpush1.bf16.msra.mxu0 %v4096
        %4889 = vmatprep.subr.bf16.mxu0 %v4103
        %4890 = vmatpush1.bf16.msra.mxu0 %v4102
        %4891 = vmatprep.mubr.bf16.mxu0 %v3027
        %4892 = vmatmul.mubr.bf16.gmra.mrb[0].mxu0 %v3026
        %v4893 = vpop.f32.mrb[0].mxu0
        %v4894 = vadd.f32 %v4841, %v4893
        %v4895 = vpop.f32.mrb[0].mxu0
        %v4896 = vadd.f32 %v4843, %v4895
        %v4897 = vpop.f32.mrb[0].mxu0
        %v4898 = vadd.f32 %v4845, %v4897
        %v4899 = vpop.f32.mrb[0].mxu0
        %v4900 = vadd.f32 %v4847, %v4899
        %4901 = vmatprep.mubr.bf16.mxu0 %v3033
        %4902 = vmatmul.mubr.bf16.gmra.mrb[0].mxu0 %v3032
        %v4903 = vpop.f32.mrb[0].mxu0
        %v4904 = vadd.f32 %v4851, %v4903
        %v4905 = vpop.f32.mrb[0].mxu0
        %v4906 = vadd.f32 %v4853, %v4905
        %v4907 = vpop.f32.mrb[0].mxu0
        %v4908 = vadd.f32 %v4855, %v4907
        %v4909 = vpop.f32.mrb[0].mxu0
        %v4910 = vadd.f32 %v4857, %v4909
        %4911 = vdwg.mxu0
        %4912 = vmatprep.subr.bf16.mxu0 %v4109
        %4913 = vmatpush1.bf16.msra.mxu0 %v4108
        %4914 = vmatprep.subr.bf16.mxu0 %v4115
        %4915 = vmatpush1.bf16.msra.mxu0 %v4114
        %4916 = vmatprep.subr.bf16.mxu0 %v4121
        %4917 = vmatpush1.bf16.msra.mxu0 %v4120
        %4918 = vmatprep.subr.bf16.mxu0 %v4127
        %4919 = vmatpush1.bf16.msra.mxu0 %v4126
        %4920 = vmatprep.subr.bf16.mxu0 %v4133
        %4921 = vmatpush1.bf16.msra.mxu0 %v4132
        %4922 = vmatprep.subr.bf16.mxu0 %v4139
        %4923 = vmatpush1.bf16.msra.mxu0 %v4138
        %4924 = vmatprep.subr.bf16.mxu0 %v4145
        %4925 = vmatpush1.bf16.msra.mxu0 %v4144
        %4926 = vmatprep.subr.bf16.mxu0 %v4151
        %4927 = vmatpush1.bf16.msra.mxu0 %v4150
        %4928 = vmatprep.subr.bf16.mxu0 %v4157
        %4929 = vmatpush1.bf16.msra.mxu0 %v4156
        %4930 = vmatprep.subr.bf16.mxu0 %v4163
        %4931 = vmatpush1.bf16.msra.mxu0 %v4162
        %4932 = vmatprep.subr.bf16.mxu0 %v4169
        %4933 = vmatpush1.bf16.msra.mxu0 %v4168
        %4934 = vmatprep.subr.bf16.mxu0 %v4175
        %4935 = vmatpush1.bf16.msra.mxu0 %v4174
        %4936 = vmatprep.subr.bf16.mxu0 %v4181
        %4937 = vmatpush1.bf16.msra.mxu0 %v4180
        %4938 = vmatprep.subr.bf16.mxu0 %v4187
        %4939 = vmatpush1.bf16.msra.mxu0 %v4186
        %4940 = vmatprep.subr.bf16.mxu0 %v4193
        %4941 = vmatpush1.bf16.msra.mxu0 %v4192
        %4942 = vmatprep.subr.bf16.mxu0 %v4199
        %4943 = vmatpush1.bf16.msra.mxu0 %v4198
        %4944 = vmatprep.mubr.bf16.mxu0 %v3029
        %4945 = vmatmul.mubr.bf16.gmra.mrb[0].mxu0 %v3028
        %v4946 = vpop.f32.mrb[0].mxu0
        %v4947 = vadd.f32 %v4894, %v4946
        %v4948 = vpop.f32.mrb[0].mxu0
        %v4949 = vadd.f32 %v4896, %v4948
        %v4950 = vpop.f32.mrb[0].mxu0
        %v4951 = vadd.f32 %v4898, %v4950
        %v4952 = vpop.f32.mrb[0].mxu0
        %v4953 = vadd.f32 %v4900, %v4952
        %4954 = vmatprep.mubr.bf16.mxu0 %v3035
        %4955 = vmatmul.mubr.bf16.gmra.mrb[0].mxu0 %v3034
        %v4956 = vpop.f32.mrb[0].mxu0
        %v4957 = vadd.f32 %v4904, %v4956
        %v4958 = vpop.f32.mrb[0].mxu0
        %v4959 = vadd.f32 %v4906, %v4958
        %v4960 = vpop.f32.mrb[0].mxu0
        %v4961 = vadd.f32 %v4908, %v4960
        %v4962 = vpop.f32.mrb[0].mxu0
        %v4963 = vadd.f32 %v4910, %v4962
        %4964 = vdwg.mxu0
        %v4965 = vld [vmem:[#allocation10] sm:$0x3f]
        %v4967 = vlaneseq
        %v4968 = vshrl.u32 %v4967, 7
        %v4969 = vsub.s32 0, %v4968
        %v4970 = vrot.slane %v4965, %v4969
        %v4971 = vlaneseq
        %v4972 = vshrl.u32 %v4971, 7
        %v4973 = vsub.s32 1, %v4972
        %v4974 = vrot.slane %v4965, %v4973
        %v4975 = vlaneseq
        %v4976 = vshrl.u32 %v4975, 7
        %v4977 = vsub.s32 2, %v4976
        %v4978 = vrot.slane %v4965, %v4977
        %v4979 = vlaneseq
        %v4980 = vshrl.u32 %v4979, 7
        %v4981 = vsub.s32 3, %v4980
        %v4982 = vrot.slane %v4965, %v4981
        %v4983 = vlaneseq
        %v4984 = vshrl.u32 %v4983, 7
        %v4985 = vsub.s32 4, %v4984
        %v4986 = vrot.slane %v4965, %v4985
        %v4987 = vlaneseq
        %v4988 = vshrl.u32 %v4987, 7
        %v4989 = vsub.s32 5, %v4988
        %v4990 = vrot.slane %v4965, %v4989
        %v4997 = vadd.f32 %v4629, %v4970
        %v4998 = vadd.f32 %v4631, %v4974
        %v4999 = vadd.f32 %v4788, %v4978
        %v5000 = vadd.f32 %v4790, %v4982
        %v5001 = vadd.f32 %v4947, %v4986
        %v5002 = vadd.f32 %v4949, %v4990
        %v5003 = vadd.f32 %v4633, %v4970
        %v5004 = vadd.f32 %v4635, %v4974
        %v5005 = vadd.f32 %v4792, %v4978
        %v5006 = vadd.f32 %v4794, %v4982
        %v5007 = vadd.f32 %v4951, %v4986
        %v5008 = vadd.f32 %v4953, %v4990
        %v5009 = vadd.f32 %v4639, %v4970
        %v5010 = vadd.f32 %v4641, %v4974
        %v5011 = vadd.f32 %v4798, %v4978
        %v5012 = vadd.f32 %v4800, %v4982
        %v5013 = vadd.f32 %v4957, %v4986
        %v5014 = vadd.f32 %v4959, %v4990
        %v5015 = vadd.f32 %v4643, %v4970
        %v5016 = vadd.f32 %v4645, %v4974
        %v5017 = vadd.f32 %v4802, %v4978
        %v5018 = vadd.f32 %v4804, %v4982
        %v5019 = vadd.f32 %v4961, %v4986
        %v5020 = vadd.f32 %v4963, %v4990
        %v5021 = vmax.f32 %v4997, 0.0
        %v5022 = vmax.f32 %v4998, 0.0
        %v5023 = vmax.f32 %v4999, 0.0
        %v5024 = vmax.f32 %v5000, 0.0
        %v5025 = vmax.f32 %v5001, 0.0
        %v5026 = vmax.f32 %v5002, 0.0
        %v5027 = vmax.f32 %v5003, 0.0
        %v5028 = vmax.f32 %v5004, 0.0
        %v5029 = vmax.f32 %v5005, 0.0
        %v5030 = vmax.f32 %v5006, 0.0
        %v5031 = vmax.f32 %v5007, 0.0
        %v5032 = vmax.f32 %v5008, 0.0
        %v5033 = vmax.f32 %v5009, 0.0
        %v5034 = vmax.f32 %v5010, 0.0
        %v5035 = vmax.f32 %v5011, 0.0
        %v5036 = vmax.f32 %v5012, 0.0
        %v5037 = vmax.f32 %v5013, 0.0
        %v5038 = vmax.f32 %v5014, 0.0
        %v5039 = vmax.f32 %v5015, 0.0
        %v5040 = vmax.f32 %v5016, 0.0
        %v5041 = vmax.f32 %v5017, 0.0
        %v5042 = vmax.f32 %v5018, 0.0
        %v5043 = vmax.f32 %v5019, 0.0
        %v5044 = vmax.f32 %v5020, 0.0
        %v5045 = vpack.c.bf16 %v5027, %v5021
        %v5046 = vpack.c.bf16 %v5028, %v5022
        %v5047 = vpack.c.bf16 %v5029, %v5023
        %v5048 = vpack.c.bf16 %v5030, %v5024
        %v5049 = vpack.c.bf16 %v5031, %v5025
        %v5050 = vpack.c.bf16 %v5032, %v5026
        %v5051 = vpack.c.bf16 %v5039, %v5033
        %v5052 = vpack.c.bf16 %v5040, %v5034
        %v5053 = vpack.c.bf16 %v5041, %v5035
        %v5054 = vpack.c.bf16 %v5042, %v5036
        %v5055 = vpack.c.bf16 %v5043, %v5037
        %v5056 = vpack.c.bf16 %v5044, %v5038
        %v5057 = vld [vmem:[#allocation11] sm:$0xf]
        %v5058 = vld [vmem:[#allocation11 + $0x4] sm:$0xf]
        %v5059 = vld [vmem:[#allocation11 + $0x8] sm:$0xf]
        %v5060 = vld [vmem:[#allocation11 + $0xc] sm:$0xf]
        %v5061 = vld [vmem:[#allocation11 + $0x10] sm:$0xf]
        %v5062 = vld [vmem:[#allocation11 + $0x14] sm:$0xf]
        %v5063 = vld [vmem:[#allocation11 + $0x18] sm:$0xf]
        %v5064 = vld [vmem:[#allocation11 + $0x1c] sm:$0xf]
        %v5065 = vld [vmem:[#allocation11 + $0x20] sm:$0xf]
        %v5066 = vld [vmem:[#allocation11 + $0x24] sm:$0xf]
        %v5067 = vld [vmem:[#allocation11 + $0x28] sm:$0xf]
        %v5068 = vld [vmem:[#allocation11 + $0x2c] sm:$0xf]
        %v5069 = vld [vmem:[#allocation11 + $0x30] sm:$0xf]
        %v5070 = vld [vmem:[#allocation11 + $0x34] sm:$0xf]
        %v5071 = vld [vmem:[#allocation11 + $0x38] sm:$0xf]
        %v5072 = vld [vmem:[#allocation11 + $0x3c] sm:$0xf]
        %v5073 = vld [vmem:[#allocation11 + $0x40] sm:$0xf]
        %v5074 = vld [vmem:[#allocation11 + $0x44] sm:$0xf]
        %v5075 = vld [vmem:[#allocation11 + $0x48] sm:$0xf]
        %v5076 = vld [vmem:[#allocation11 + $0x4c] sm:$0xf]
        %v5077 = vld [vmem:[#allocation11 + $0x50] sm:$0xf]
        %v5078 = vld [vmem:[#allocation11 + $0x54] sm:$0xf]
        %v5079 = vld [vmem:[#allocation11 + $0x58] sm:$0xf]
        %v5080 = vld [vmem:[#allocation11 + $0x5c] sm:$0xf]
        %v5081 = vld [vmem:[#allocation11 + $0x60] sm:$0xf]
        %v5082 = vld [vmem:[#allocation11 + $0x64] sm:$0xf]
        %v5083 = vld [vmem:[#allocation11 + $0x68] sm:$0xf]
        %v5084 = vld [vmem:[#allocation11 + $0x6c] sm:$0xf]
        %v5085 = vld [vmem:[#allocation11 + $0x70] sm:$0xf]
        %v5086 = vld [vmem:[#allocation11 + $0x74] sm:$0xf]
        %v5087 = vld [vmem:[#allocation11 + $0x78] sm:$0xf]
        %v5088 = vld [vmem:[#allocation11 + $0x7c] sm:$0xf]
        %v5089 = vld [vmem:[#allocation11 + $0x80] sm:$0xf]
        %v5090 = vld [vmem:[#allocation11 + $0x84] sm:$0xf]
        %v5091 = vld [vmem:[#allocation11 + $0x88] sm:$0xf]
        %v5092 = vld [vmem:[#allocation11 + $0x8c] sm:$0xf]
        %v5093 = vld [vmem:[#allocation11 + $0x90] sm:$0xf]
        %v5094 = vld [vmem:[#allocation11 + $0x94] sm:$0xf]
        %v5095 = vld [vmem:[#allocation11 + $0x98] sm:$0xf]
        %v5096 = vld [vmem:[#allocation11 + $0x9c] sm:$0xf]
        %v5097 = vld [vmem:[#allocation11 + $0xa0] sm:$0xf]
        %v5098 = vld [vmem:[#allocation11 + $0xa4] sm:$0xf]
        %v5099 = vld [vmem:[#allocation11 + $0xa8] sm:$0xf]
        %v5100 = vld [vmem:[#allocation11 + $0xac] sm:$0xf]
        %v5101 = vld [vmem:[#allocation11 + $0xb0] sm:$0xf]
        %v5102 = vld [vmem:[#allocation11 + $0xb4] sm:$0xf]
        %v5103 = vld [vmem:[#allocation11 + $0xb8] sm:$0xf]
        %v5104 = vld [vmem:[#allocation11 + $0xbc] sm:$0xf]
        %v5105 = vld [vmem:[#allocation11 + $0xc0] sm:$0xf]
        %v5106 = vld [vmem:[#allocation11 + $0xc4] sm:$0xf]
        %v5107 = vld [vmem:[#allocation11 + $0xc8] sm:$0xf]
        %v5108 = vld [vmem:[#allocation11 + $0xcc] sm:$0xf]
        %v5109 = vld [vmem:[#allocation11 + $0xd0] sm:$0xf]
        %v5110 = vld [vmem:[#allocation11 + $0xd4] sm:$0xf]
        %v5111 = vld [vmem:[#allocation11 + $0xd8] sm:$0xf]
        %v5112 = vld [vmem:[#allocation11 + $0xdc] sm:$0xf]
        %v5113 = vld [vmem:[#allocation11 + $0xe0] sm:$0xf]
        %v5114 = vld [vmem:[#allocation11 + $0xe4] sm:$0xf]
        %v5115 = vld [vmem:[#allocation11 + $0xe8] sm:$0xf]
        %v5116 = vld [vmem:[#allocation11 + $0xec] sm:$0xf]
        %v5117 = vld [vmem:[#allocation11 + $0xf0] sm:$0xf]
        %v5118 = vld [vmem:[#allocation11 + $0xf4] sm:$0xf]
        %v5119 = vld [vmem:[#allocation11 + $0xf8] sm:$0xf]
        %v5120 = vld [vmem:[#allocation11 + $0xfc] sm:$0xf]
        %v5121 = vld [vmem:[#allocation11 + $0x100] sm:$0xf]
        %v5122 = vld [vmem:[#allocation11 + $0x104] sm:$0xf]
        %v5123 = vld [vmem:[#allocation11 + $0x108] sm:$0xf]
        %v5124 = vld [vmem:[#allocation11 + $0x10c] sm:$0xf]
        %v5125 = vld [vmem:[#allocation11 + $0x110] sm:$0xf]
        %v5126 = vld [vmem:[#allocation11 + $0x114] sm:$0xf]
        %v5127 = vld [vmem:[#allocation11 + $0x118] sm:$0xf]
        %v5128 = vld [vmem:[#allocation11 + $0x11c] sm:$0xf]
        %v5129 = vld [vmem:[#allocation11 + $0x120] sm:$0xf]
        %v5130 = vld [vmem:[#allocation11 + $0x124] sm:$0xf]
        %v5131 = vld [vmem:[#allocation11 + $0x128] sm:$0xf]
        %v5132 = vld [vmem:[#allocation11 + $0x12c] sm:$0xf]
        %v5133 = vld [vmem:[#allocation11 + $0x130] sm:$0xf]
        %v5134 = vld [vmem:[#allocation11 + $0x134] sm:$0xf]
        %v5135 = vld [vmem:[#allocation11 + $0x138] sm:$0xf]
        %v5136 = vld [vmem:[#allocation11 + $0x13c] sm:$0xf]
        %v5137 = vld [vmem:[#allocation11 + $0x140] sm:$0xf]
        %v5138 = vld [vmem:[#allocation11 + $0x144] sm:$0xf]
        %v5139 = vld [vmem:[#allocation11 + $0x148] sm:$0xf]
        %v5140 = vld [vmem:[#allocation11 + $0x14c] sm:$0xf]
        %v5141 = vld [vmem:[#allocation11 + $0x150] sm:$0xf]
        %v5142 = vld [vmem:[#allocation11 + $0x154] sm:$0xf]
        %v5143 = vld [vmem:[#allocation11 + $0x158] sm:$0xf]
        %v5144 = vld [vmem:[#allocation11 + $0x15c] sm:$0xf]
        %v5145 = vld [vmem:[#allocation11 + $0x160] sm:$0xf]
        %v5146 = vld [vmem:[#allocation11 + $0x164] sm:$0xf]
        %v5147 = vld [vmem:[#allocation11 + $0x168] sm:$0xf]
        %v5148 = vld [vmem:[#allocation11 + $0x16c] sm:$0xf]
        %v5149 = vld [vmem:[#allocation11 + $0x170] sm:$0xf]
        %v5150 = vld [vmem:[#allocation11 + $0x174] sm:$0xf]
        %v5151 = vld [vmem:[#allocation11 + $0x178] sm:$0xf]
        %v5152 = vld [vmem:[#allocation11 + $0x17c] sm:$0xf]
        %v5153 = vld [vmem:[#allocation13] sm:$0x1]
        %v5155 = vlaneseq
        %v5156 = vshrl.u32 %v5155, 7
        %v5157 = vsub.s32 0, %v5156
        %v5158 = vrot.slane %v5153, %v5157
        %v5256 = vunpack.c.l.b16 %v5057
        %v5257 = vunpack.c.l.b16 %v5058
        %v5258 = vunpack.c.l.b16 %v5059
        %v5259 = vunpack.c.l.b16 %v5060
        %v5260 = vunpack.c.l.b16 %v5061
        %v5261 = vunpack.c.l.b16 %v5062
        %v5262 = vunpack.c.l.b16 %v5063
        %v5263 = vunpack.c.l.b16 %v5064
        %v5264 = vunpack.c.l.b16 %v5065
        %v5265 = vunpack.c.l.b16 %v5066
        %v5266 = vunpack.c.l.b16 %v5067
        %v5267 = vunpack.c.l.b16 %v5068
        %v5268 = vunpack.c.l.b16 %v5069
        %v5269 = vunpack.c.l.b16 %v5070
        %v5270 = vunpack.c.l.b16 %v5071
        %v5271 = vunpack.c.l.b16 %v5072
        %v5272 = vunpack.c.l.b16 %v5073
        %v5273 = vunpack.c.l.b16 %v5074
        %v5274 = vunpack.c.l.b16 %v5075
        %v5275 = vunpack.c.l.b16 %v5076
        %v5276 = vunpack.c.l.b16 %v5077
        %v5277 = vunpack.c.l.b16 %v5078
        %v5278 = vunpack.c.l.b16 %v5079
        %v5279 = vunpack.c.l.b16 %v5080
        %v5280 = vunpack.c.l.b16 %v5081
        %v5281 = vunpack.c.l.b16 %v5082
        %v5282 = vunpack.c.l.b16 %v5083
        %v5283 = vunpack.c.l.b16 %v5084
        %v5284 = vunpack.c.l.b16 %v5085
        %v5285 = vunpack.c.l.b16 %v5086
        %v5286 = vunpack.c.l.b16 %v5087
        %v5287 = vunpack.c.l.b16 %v5088
        %v5288 = vunpack.c.l.b16 %v5089
        %v5289 = vunpack.c.l.b16 %v5090
        %v5290 = vunpack.c.l.b16 %v5091
        %v5291 = vunpack.c.l.b16 %v5092
        %v5292 = vunpack.c.l.b16 %v5093
        %v5293 = vunpack.c.l.b16 %v5094
        %v5294 = vunpack.c.l.b16 %v5095
        %v5295 = vunpack.c.l.b16 %v5096
        %v5296 = vunpack.c.l.b16 %v5097
        %v5297 = vunpack.c.l.b16 %v5098
        %v5298 = vunpack.c.l.b16 %v5099
        %v5299 = vunpack.c.l.b16 %v5100
        %v5300 = vunpack.c.l.b16 %v5101
        %v5301 = vunpack.c.l.b16 %v5102
        %v5302 = vunpack.c.l.b16 %v5103
        %v5303 = vunpack.c.l.b16 %v5104
        %v5304 = vunpack.c.l.b16 %v5105
        %v5305 = vunpack.c.l.b16 %v5106
        %v5306 = vunpack.c.l.b16 %v5107
        %v5307 = vunpack.c.l.b16 %v5108
        %v5308 = vunpack.c.l.b16 %v5109
        %v5309 = vunpack.c.l.b16 %v5110
        %v5310 = vunpack.c.l.b16 %v5111
        %v5311 = vunpack.c.l.b16 %v5112
        %v5312 = vunpack.c.l.b16 %v5113
        %v5313 = vunpack.c.l.b16 %v5114
        %v5314 = vunpack.c.l.b16 %v5115
        %v5315 = vunpack.c.l.b16 %v5116
        %v5316 = vunpack.c.l.b16 %v5117
        %v5317 = vunpack.c.l.b16 %v5118
        %v5318 = vunpack.c.l.b16 %v5119
        %v5319 = vunpack.c.l.b16 %v5120
        %v5320 = vunpack.c.l.b16 %v5121
        %v5321 = vunpack.c.l.b16 %v5122
        %v5322 = vunpack.c.l.b16 %v5123
        %v5323 = vunpack.c.l.b16 %v5124
        %v5324 = vunpack.c.l.b16 %v5125
        %v5325 = vunpack.c.l.b16 %v5126
        %v5326 = vunpack.c.l.b16 %v5127
        %v5327 = vunpack.c.l.b16 %v5128
        %v5328 = vunpack.c.l.b16 %v5129
        %v5329 = vunpack.c.l.b16 %v5130
        %v5330 = vunpack.c.l.b16 %v5131
        %v5331 = vunpack.c.l.b16 %v5132
        %v5332 = vunpack.c.l.b16 %v5133
        %v5333 = vunpack.c.l.b16 %v5134
        %v5334 = vunpack.c.l.b16 %v5135
        %v5335 = vunpack.c.l.b16 %v5136
        %v5336 = vunpack.c.l.b16 %v5137
        %v5337 = vunpack.c.l.b16 %v5138
        %v5338 = vunpack.c.l.b16 %v5139
        %v5339 = vunpack.c.l.b16 %v5140
        %v5340 = vunpack.c.l.b16 %v5141
        %v5341 = vunpack.c.l.b16 %v5142
        %v5342 = vunpack.c.l.b16 %v5143
        %v5343 = vunpack.c.l.b16 %v5144
        %v5344 = vunpack.c.l.b16 %v5145
        %v5345 = vunpack.c.l.b16 %v5146
        %v5346 = vunpack.c.l.b16 %v5147
        %v5347 = vunpack.c.l.b16 %v5148
        %v5348 = vunpack.c.l.b16 %v5149
        %v5349 = vunpack.c.l.b16 %v5150
        %v5350 = vunpack.c.l.b16 %v5151
        %v5351 = vunpack.c.l.b16 %v5152
        %v5352 = vpack.c.b16 %v5257, %v5256
        %v5353 = vpack.c.b16 %v5259, %v5258
        %v5354 = vpack.c.b16 %v5261, %v5260
        %v5355 = vpack.c.b16 %v5263, %v5262
        %v5356 = vpack.c.b16 %v5265, %v5264
        %v5357 = vpack.c.b16 %v5267, %v5266
        %v5358 = vpack.c.b16 %v5269, %v5268
        %v5359 = vpack.c.b16 %v5271, %v5270
        %v5360 = vpack.c.b16 %v5273, %v5272
        %v5361 = vpack.c.b16 %v5275, %v5274
        %v5362 = vpack.c.b16 %v5277, %v5276
        %v5363 = vpack.c.b16 %v5279, %v5278
        %v5364 = vpack.c.b16 %v5281, %v5280
        %v5365 = vpack.c.b16 %v5283, %v5282
        %v5366 = vpack.c.b16 %v5285, %v5284
        %v5367 = vpack.c.b16 %v5287, %v5286
        %v5368 = vpack.c.b16 %v5289, %v5288
        %v5369 = vpack.c.b16 %v5291, %v5290
        %v5370 = vpack.c.b16 %v5293, %v5292
        %v5371 = vpack.c.b16 %v5295, %v5294
        %v5372 = vpack.c.b16 %v5297, %v5296
        %v5373 = vpack.c.b16 %v5299, %v5298
        %v5374 = vpack.c.b16 %v5301, %v5300
        %v5375 = vpack.c.b16 %v5303, %v5302
        %v5376 = vpack.c.b16 %v5305, %v5304
        %v5377 = vpack.c.b16 %v5307, %v5306
        %v5378 = vpack.c.b16 %v5309, %v5308
        %v5379 = vpack.c.b16 %v5311, %v5310
        %v5380 = vpack.c.b16 %v5313, %v5312
        %v5381 = vpack.c.b16 %v5315, %v5314
        %v5382 = vpack.c.b16 %v5317, %v5316
        %v5383 = vpack.c.b16 %v5319, %v5318
        %v5384 = vpack.c.b16 %v5321, %v5320
        %v5385 = vpack.c.b16 %v5323, %v5322
        %v5386 = vpack.c.b16 %v5325, %v5324
        %v5387 = vpack.c.b16 %v5327, %v5326
        %v5388 = vpack.c.b16 %v5329, %v5328
        %v5389 = vpack.c.b16 %v5331, %v5330
        %v5390 = vpack.c.b16 %v5333, %v5332
        %v5391 = vpack.c.b16 %v5335, %v5334
        %v5392 = vpack.c.b16 %v5337, %v5336
        %v5393 = vpack.c.b16 %v5339, %v5338
        %v5394 = vpack.c.b16 %v5341, %v5340
        %v5395 = vpack.c.b16 %v5343, %v5342
        %v5396 = vpack.c.b16 %v5345, %v5344
        %v5397 = vpack.c.b16 %v5347, %v5346
        %v5398 = vpack.c.b16 %v5349, %v5348
        %v5399 = vpack.c.b16 %v5351, %v5350
        %5448 = vmatprep.subr.bf16.mxu0 0
        %5449 = vmatpush1.bf16.msra.mxu0 %v5352
        %5450 = vmatprep.subr.bf16.mxu0 0
        %5451 = vmatpush1.bf16.msra.mxu0 %v5353
        %5452 = vmatprep.subr.bf16.mxu0 0
        %5453 = vmatpush1.bf16.msra.mxu0 %v5354
        %5454 = vmatprep.subr.bf16.mxu0 0
        %5455 = vmatpush1.bf16.msra.mxu0 %v5355
        %5456 = vmatprep.subr.bf16.mxu0 0
        %5457 = vmatpush1.bf16.msra.mxu0 %v5356
        %5458 = vmatprep.subr.bf16.mxu0 0
        %5459 = vmatpush1.bf16.msra.mxu0 %v5357
        %5460 = vmatprep.subr.bf16.mxu0 0
        %5461 = vmatpush1.bf16.msra.mxu0 %v5358
        %5462 = vmatprep.subr.bf16.mxu0 0
        %5463 = vmatpush1.bf16.msra.mxu0 %v5359
        %5464 = vmatprep.subr.bf16.mxu0 0
        %5465 = vmatpush1.bf16.msra.mxu0 %v5360
        %5466 = vmatprep.subr.bf16.mxu0 0
        %5467 = vmatpush1.bf16.msra.mxu0 %v5361
        %5468 = vmatprep.subr.bf16.mxu0 0
        %5469 = vmatpush1.bf16.msra.mxu0 %v5362
        %5470 = vmatprep.subr.bf16.mxu0 0
        %5471 = vmatpush1.bf16.msra.mxu0 %v5363
        %5472 = vmatprep.subr.bf16.mxu0 0
        %5473 = vmatpush1.bf16.msra.mxu0 %v5364
        %5474 = vmatprep.subr.bf16.mxu0 0
        %5475 = vmatpush1.bf16.msra.mxu0 %v5365
        %5476 = vmatprep.subr.bf16.mxu0 0
        %5477 = vmatpush1.bf16.msra.mxu0 %v5366
        %5478 = vmatprep.subr.bf16.mxu0 0
        %5479 = vmatpush1.bf16.msra.mxu0 %v5367
        %5480 = vmatprep.mubr.bf16.mxu0 %v5046
        %5481 = vmatmul.mubr.bf16.gmra.mrb[0].mxu0 %v5045
        %v5482 = vpop.f32.mrb[0].mxu0
        %v5483 = vadd.f32 %v5158, %v5482
        %v5484 = vpop.f32.mrb[0].mxu0
        %v5485 = vpop.f32.mrb[0].mxu0
        %v5486 = vadd.f32 %v5158, %v5485
        %v5487 = vpop.f32.mrb[0].mxu0
        %5488 = vmatprep.mubr.bf16.mxu0 %v5052
        %5489 = vmatmul.mubr.bf16.gmra.mrb[0].mxu0 %v5051
        %v5490 = vpop.f32.mrb[0].mxu0
        %v5491 = vadd.f32 %v5158, %v5490
        %v5492 = vpop.f32.mrb[0].mxu0
        %v5493 = vpop.f32.mrb[0].mxu0
        %v5494 = vadd.f32 %v5158, %v5493
        %v5495 = vpop.f32.mrb[0].mxu0
        %5496 = vdwg.mxu0
        %5497 = vmatprep.subr.bf16.mxu0 0
        %5498 = vmatpush1.bf16.msra.mxu0 %v5368
        %5499 = vmatprep.subr.bf16.mxu0 0
        %5500 = vmatpush1.bf16.msra.mxu0 %v5369
        %5501 = vmatprep.subr.bf16.mxu0 0
        %5502 = vmatpush1.bf16.msra.mxu0 %v5370
        %5503 = vmatprep.subr.bf16.mxu0 0
        %5504 = vmatpush1.bf16.msra.mxu0 %v5371
        %5505 = vmatprep.subr.bf16.mxu0 0
        %5506 = vmatpush1.bf16.msra.mxu0 %v5372
        %5507 = vmatprep.subr.bf16.mxu0 0
        %5508 = vmatpush1.bf16.msra.mxu0 %v5373
        %5509 = vmatprep.subr.bf16.mxu0 0
        %5510 = vmatpush1.bf16.msra.mxu0 %v5374
        %5511 = vmatprep.subr.bf16.mxu0 0
        %5512 = vmatpush1.bf16.msra.mxu0 %v5375
        %5513 = vmatprep.subr.bf16.mxu0 0
        %5514 = vmatpush1.bf16.msra.mxu0 %v5376
        %5515 = vmatprep.subr.bf16.mxu0 0
        %5516 = vmatpush1.bf16.msra.mxu0 %v5377
        %5517 = vmatprep.subr.bf16.mxu0 0
        %5518 = vmatpush1.bf16.msra.mxu0 %v5378
        %5519 = vmatprep.subr.bf16.mxu0 0
        %5520 = vmatpush1.bf16.msra.mxu0 %v5379
        %5521 = vmatprep.subr.bf16.mxu0 0
        %5522 = vmatpush1.bf16.msra.mxu0 %v5380
        %5523 = vmatprep.subr.bf16.mxu0 0
        %5524 = vmatpush1.bf16.msra.mxu0 %v5381
        %5525 = vmatprep.subr.bf16.mxu0 0
        %5526 = vmatpush1.bf16.msra.mxu0 %v5382
        %5527 = vmatprep.subr.bf16.mxu0 0
        %5528 = vmatpush1.bf16.msra.mxu0 %v5383
        %5529 = vmatprep.mubr.bf16.mxu0 %v5048
        %5530 = vmatmul.mubr.bf16.gmra.mrb[0].mxu0 %v5047
        %v5531 = vpop.f32.mrb[0].mxu0
        %v5532 = vadd.f32 %v5483, %v5531
        %v5533 = vpop.f32.mrb[0].mxu0
        %v5534 = vpop.f32.mrb[0].mxu0
        %v5535 = vadd.f32 %v5486, %v5534
        %v5536 = vpop.f32.mrb[0].mxu0
        %5537 = vmatprep.mubr.bf16.mxu0 %v5054
        %5538 = vmatmul.mubr.bf16.gmra.mrb[0].mxu0 %v5053
        %v5539 = vpop.f32.mrb[0].mxu0
        %v5540 = vadd.f32 %v5491, %v5539
        %v5541 = vpop.f32.mrb[0].mxu0
        %v5542 = vpop.f32.mrb[0].mxu0
        %v5543 = vadd.f32 %v5494, %v5542
        %v5544 = vpop.f32.mrb[0].mxu0
        %5545 = vdwg.mxu0
        %5546 = vmatprep.subr.bf16.mxu0 0
        %5547 = vmatpush1.bf16.msra.mxu0 %v5384
        %5548 = vmatprep.subr.bf16.mxu0 0
        %5549 = vmatpush1.bf16.msra.mxu0 %v5385
        %5550 = vmatprep.subr.bf16.mxu0 0
        %5551 = vmatpush1.bf16.msra.mxu0 %v5386
        %5552 = vmatprep.subr.bf16.mxu0 0
        %5553 = vmatpush1.bf16.msra.mxu0 %v5387
        %5554 = vmatprep.subr.bf16.mxu0 0
        %5555 = vmatpush1.bf16.msra.mxu0 %v5388
        %5556 = vmatprep.subr.bf16.mxu0 0
        %5557 = vmatpush1.bf16.msra.mxu0 %v5389
        %5558 = vmatprep.subr.bf16.mxu0 0
        %5559 = vmatpush1.bf16.msra.mxu0 %v5390
        %5560 = vmatprep.subr.bf16.mxu0 0
        %5561 = vmatpush1.bf16.msra.mxu0 %v5391
        %5562 = vmatprep.subr.bf16.mxu0 0
        %5563 = vmatpush1.bf16.msra.mxu0 %v5392
        %5564 = vmatprep.subr.bf16.mxu0 0
        %5565 = vmatpush1.bf16.msra.mxu0 %v5393
        %5566 = vmatprep.subr.bf16.mxu0 0
        %5567 = vmatpush1.bf16.msra.mxu0 %v5394
        %5568 = vmatprep.subr.bf16.mxu0 0
        %5569 = vmatpush1.bf16.msra.mxu0 %v5395
        %5570 = vmatprep.subr.bf16.mxu0 0
        %5571 = vmatpush1.bf16.msra.mxu0 %v5396
        %5572 = vmatprep.subr.bf16.mxu0 0
        %5573 = vmatpush1.bf16.msra.mxu0 %v5397
        %5574 = vmatprep.subr.bf16.mxu0 0
        %5575 = vmatpush1.bf16.msra.mxu0 %v5398
        %5576 = vmatprep.subr.bf16.mxu0 0
        %5577 = vmatpush1.bf16.msra.mxu0 %v5399
        %5578 = vmatprep.mubr.bf16.mxu0 %v5050
        %5579 = vmatmul.mubr.bf16.gmra.mrb[0].mxu0 %v5049
        %v5580 = vpop.f32.mrb[0].mxu0
        %v5581 = vadd.f32 %v5532, %v5580
        %v5582 = vpop.f32.mrb[0].mxu0
        %v5583 = vpop.f32.mrb[0].mxu0
        %v5584 = vadd.f32 %v5535, %v5583
        %v5585 = vpop.f32.mrb[0].mxu0
        %5586 = vmatprep.mubr.bf16.mxu0 %v5056
        %5587 = vmatmul.mubr.bf16.gmra.mrb[0].mxu0 %v5055
        %v5588 = vpop.f32.mrb[0].mxu0
        %v5589 = vadd.f32 %v5540, %v5588
        %v5590 = vpop.f32.mrb[0].mxu0
        %v5591 = vpop.f32.mrb[0].mxu0
        %v5592 = vadd.f32 %v5543, %v5591
        %v5593 = vpop.f32.mrb[0].mxu0
        %5594 = vdwg.mxu0
        %v5595 = vpack.c.bf16 %v5584, %v5581
        %v5596 = vpack.c.bf16 %v5592, %v5589
        %v5599 = vunpack.c.l.b16 %v5595
        %v5600 = vunpack.c.h.b16 %v5595
        %v5601 = vunpack.c.l.b16 %v5596
        %v5602 = vunpack.c.h.b16 %v5596
        %v5603 = vpack.c.b16 %v5599, %v5599
        %v5604 = vpack.c.b16 %v5600, %v5600
        %v5605 = vpack.c.b16 %v5601, %v5601
        %v5606 = vpack.c.b16 %v5602, %v5602
        %5611 = vst [vmem:[%s406] sm:$0xf] %v5603
        %5612 = vst [vmem:[%s406 + $0x4] sm:$0xf] %v5604
        %5613 = vst [vmem:[%s406 + $0x8] sm:$0xf] %v5605
        %5614 = vst [vmem:[%s406 + $0xc] sm:$0xf] %v5606
        %s5615 = sand.u32 %s194, 1
        %s5616 = scalar_lea.sflag [#allocation4], %s5615
        %s5617 = sand.u32 %s194, 1
        %s5618 = smul.addr %s5617, 16
        %s5619 = scalar_lea.vmem [#allocation14], %s5618
        // Predicated region
        $region77: #{tpu_custom_call.1} parent=47 // pred_check
          %p5620 = pneg %p204
        $region78: #{tpu_custom_call.1} parent=47 // pred_check_branch
          %5622 = sbr.rel (%p5620) target = $region80
        $region79: #{tpu_custom_call.1} parent=47 // pred_region
          %s5623 = smul.u32 4, %s29
          %s5625 = ssub.s32 256, 256
          %5626 = vsyncadd %s5616, %s5625
          %s5627 = smul.addr %s5623, 64
          %s5628 = scalar_lea.hbm %s7, %s5627
          %s5629 = sshll.u32 %s5619, 4
          %s5630 = int_to_ptr.vmem [resolvable:$true] %s5629
          %5635 = dma.vmem_to_hbm [thread:$0]  %s5630, 256, %s5628, %s5616, 64, 64, 4
        $region80: #{tpu_custom_call.1} parent=47 // pred_fallthru
          _
      $region48: #{tpu_custom_call.1} parent=5 // pred_fallthru
        _
      %p5636 = scmp.le.s32.totalorder 2, %s24
      // Predicated region
      $region81: #{tpu_custom_call.1} parent=5 // pred_check
        %p5637 = pneg %p5636
      $region82: #{tpu_custom_call.1} parent=5 // pred_check_branch
        %5639 = sbr.rel (%p5637) target = $region84
      $region83: #{tpu_custom_call.1} parent=5 // pred_region
        %s5640 = ssub.s32 %s24, 2
        // Predicated region
        $region85: #{tpu_custom_call.1} parent=83 // pred_check
          %p5641 = pneg %p210
        $region86: #{tpu_custom_call.1} parent=83 // pred_check_branch
          %5643 = sbr.rel (%p5641) target = $region88
        $region87: #{tpu_custom_call.1} parent=83 // pred_region
          %s5644 = sand.u32 %s195, 1
          %s5645 = scalar_lea.sflag [#allocation4], %s5644
          %s5646 = sand.u32 %s195, 1
          %s5647 = smul.addr %s5646, 16
          %s5648 = scalar_lea.vmem [#allocation14], %s5647
          %5649 = dma.done %s5645, 256
        $region88: #{tpu_custom_call.1} parent=83 // pred_fallthru
          _
      $region84: #{tpu_custom_call.1} parent=5 // pred_fallthru
        _
    $region6: #{tpu_custom_call.1} parent=1 // loop_footer
      %s28 = sadd.s32 1, %s24
    $region7: #{tpu_custom_call.1} parent=1 // loop_footer_branch
      %23 = sbr.rel target = $region3
    $region8: #{tpu_custom_call.1} parent=1 // loop_exit
      _
    %5650 = vsyncpa [#allocation3], 1
    %s5651 = scalar_lea.sflag [#allocation3], 1
    %5652 = vsyncpa %s5651, 1
    %5653 = vsyncpa [#allocation6], 1
    %s5654 = scalar_lea.sflag [#allocation6], 1
    %5655 = vsyncpa %s5654, 1
    %5656 = vsyncpa [#allocation9], 1
    %5657 = vsyncpa [#allocation12], 1
    %5658 = vsyncpa [#allocation4], 1
    %s5659 = scalar_lea.sflag [#allocation4], 1
    %5660 = vsyncpa %s5659, 1

// kernel: tpu_custom_call.1
$region0: #{tpu_custom_call.1}
  #allocation0 [shape = 'u32[]', space=smem, size = 0x4, offset = 0x4, fixed_abs, tag = 'smem constant byte address 0x4 - core index']
  #allocation1 [shape = 'u32[144,128]{1,0:T(1,128)}', space=vmem, size = 0x12000, scoped, tag = 'internal scratch']
  %s0 = inlined_call_operand.hbm [shape: bf16[64,768], index: 0, kind: input, shape index: {}]
  %s1 = inlined_call_operand.hbm [shape: bf16[64,768], index: 1, kind: input, shape index: {}]
  %s2 = inlined_call_operand.hbm [shape: bf16[768,768], index: 2, kind: input, shape index: {}]
  %s3 = inlined_call_operand.hbm [shape: bf16[768,768], index: 3, kind: input, shape index: {}]
  %s4 = inlined_call_operand.hbm [shape: f32[1,768], index: 4, kind: input, shape index: {}]
  %s5 = inlined_call_operand.hbm [shape: bf16[768,128], index: 5, kind: input, shape index: {}]
  %s6 = inlined_call_operand.hbm [shape: f32[1,128], index: 6, kind: input, shape index: {}]
  %s7 = inlined_call_operand.hbm [shape: bf16[64,128], index: 7, kind: output, shape index: {}]
  %s8 = sld [smem:[#allocation0]]
  $region89: #{tpu_custom_call.1} parent=0
    _
  %s10 = ssub.s32 1, %s8
  %s11 = scalar_select 0, %s10, %s8
  $region1: #{tpu_custom_call.1} parent=0
    #allocation2 [shape = 'u8[98304]{0}', space=vmem, size = 0x18000, scoped, tag = 'input window, operand 0']
    #allocation3 [shape = 's32[2]{0}', space=sflag, size = 0x8, scoped, tag = 'scoped memory for tpu_custom_call.1']
    #allocation4 [shape = 's32[2]{0}', space=sflag, size = 0x8, scoped, tag = 'scoped memory for tpu_custom_call.1']
    #allocation5 [shape = 'u8[98304]{0}', space=vmem, size = 0x18000, scoped, tag = 'input window, operand 1']
    #allocation6 [shape = 's32[2]{0}', space=sflag, size = 0x8, scoped, tag = 'scoped memory for tpu_custom_call.1']
    #allocation7 [shape = 'u8[1179648]{0}', space=vmem, size = 0x120000, scoped, tag = 'input window, operand 2, single buffered']
    #allocation8 [shape = 'u8[1179648]{0}', space=vmem, size = 0x120000, scoped, tag = 'input window, operand 3, single buffered']
    #allocation9 [shape = 's32[1]{0}', space=sflag, size = 0x4, scoped, tag = 'scoped memory for tpu_custom_call.1']
    #allocation10 [shape = 'u8[3072]{0}', space=vmem, size = 0xc00, scoped, tag = 'input window, operand 4, single buffered']
    #allocation11 [shape = 'u8[196608]{0}', space=vmem, size = 0x30000, scoped, tag = 'input window, operand 5, single buffered']
    #allocation12 [shape = 's32[1]{0}', space=sflag, size = 0x4, scoped, tag = 'scoped memory for tpu_custom_call.1']
    #allocation13 [shape = 'u8[512]{0}', space=vmem, size = 0x400, scoped, tag = 'input window, operand 6, single buffered']
    #allocation14 [shape = 'u8[16384]{0}', space=vmem, size = 0x4000, scoped, tag = 'output window, operand 0']
    %12 = vsyncpa [#allocation3], 0
    %s13 = scalar_lea.sflag [#allocation3], 1
    %14 = vsyncpa %s13, 0
    %15 = vsyncpa [#allocation6], 0
    %s16 = scalar_lea.sflag [#allocation6], 1
    %17 = vsyncpa %s16, 0
    %18 = vsyncpa [#allocation9], 0
    %19 = vsyncpa [#allocation12], 0
    %20 = vsyncpa [#allocation4], 0
    %s21 = scalar_lea.sflag [#allocation4], 1
    %22 = vsyncpa %s21, 0
    loop: start=0, step=1, limit=4
    $region2: #{tpu_custom_call.1} parent=1 // loop_pre_header
      _
    $region3: #{tpu_custom_call.1} parent=1 // loop_header
      %s24 = sphi 0, %s28
      %p25 = scmp.ge.s32.totalorder %s24, 4
      %s34 = sphi 0, %s36
      %s37 = sphi 0, %s34
      %s38 = sphi 0, %s37
      %s54 = sphi 0, %s38
      %s60 = sphi 0, %s62
      %s63 = sphi 0, %s60
      %s64 = sphi 0, %s63
      %s80 = sphi 0, %s64
      %s84 = sphi 0, %s84
      %s86 = sphi 0, %s84
      %s87 = sphi 0, %s86
      %s101 = sphi 0, %s87
      %s105 = sphi 0, %s105
      %s107 = sphi 0, %s105
      %s108 = sphi 0, %s107
      %s122 = sphi 0, %s108
      %s126 = sphi 0, %s126
      %s128 = sphi 0, %s126
      %s129 = sphi 0, %s128
      %s143 = sphi 0, %s129
      %s147 = sphi 0, %s147
      %s149 = sphi 0, %s147
      %s150 = sphi 0, %s149
      %s164 = sphi 0, %s150
      %s168 = sphi 0, %s168
      %s170 = sphi 0, %s168
      %s171 = sphi 0, %s170
      %s185 = sphi 0, %s171
      %s191 = sphi 0, %s193
      %s194 = sphi 0, %s191
      %s195 = sphi 0, %s194
      %s211 = sphi 0, %s195
    $region4: #{tpu_custom_call.1} parent=1 // loop_header_branch
      %27 = sbr.rel (%p25) target = $region8
    $region5: #{tpu_custom_call.1} parent=1 // loop_body
      %s29 = ssub.s32 %s24, 1
      %s30 = ssub.s32 %s24, 2
      %s31 = sadd.s32 %s24, 1
      %s32 = ssub.s32 %s24, %s31
      %p33 = scmp.eq.s32.totalorder %s32, 0
      %s35 = sadd.s32 %s34, 1
      %s36 = scalar_select %p33, %s34, %s35
      %p39 = pneg %p33
      %p40 = scmp.eq.s32.totalorder %s24, 1
      %p41 = por %p39, %p40
      %p42 = scmp.ne.s32.totalorder %s34, %s37
      %p43 = scmp.eq.s32.totalorder %s24, 0
      %p44 = por %p42, %p43
      %p45 = scmp.ne.s32.totalorder %s34, %s37
      %p46 = scmp.eq.s32.totalorder %s29, 1
      %p47 = por %p45, %p46
      %p48 = scmp.ne.s32.totalorder %s37, %s38
      %p49 = scmp.eq.s32.totalorder %s29, 0
      %p50 = por %p48, %p49
      %p51 = scmp.ne.s32.totalorder %s37, %s38
      %p52 = scmp.eq.s32.totalorder %s30, 1
      %p53 = por %p51, %p52
      %p55 = scmp.ne.s32.totalorder %s38, %s54
      %p56 = scmp.eq.s32.totalorder %s30, 0
      %p57 = por %p55, %p56
      %s58 = ssub.s32 %s24, %s31
      %p59 = scmp.eq.s32.totalorder %s58, 0
      %s61 = sadd.s32 %s60, 1
      %s62 = scalar_select %p59, %s60, %s61
      %p65 = pneg %p59
      %p66 = scmp.eq.s32.totalorder %s24, 1
      %p67 = por %p65, %p66
      %p68 = scmp.ne.s32.totalorder %s60, %s63
      %p69 = scmp.eq.s32.totalorder %s24, 0
      %p70 = por %p68, %p69
      %p71 = scmp.ne.s32.totalorder %s60, %s63
      %p72 = scmp.eq.s32.totalorder %s29, 1
      %p73 = por %p71, %p72
      %p74 = scmp.ne.s32.totalorder %s63, %s64
      %p75 = scmp.eq.s32.totalorder %s29, 0
      %p76 = por %p74, %p75
      %p77 = scmp.ne.s32.totalorder %s63, %s64
      %p78 = scmp.eq.s32.totalorder %s30, 1
      %p79 = por %p77, %p78
      %p81 = scmp.ne.s32.totalorder %s64, %s80
      %p82 = scmp.eq.s32.totalorder %s30, 0
      %p83 = por %p81, %p82
      %s85 = sadd.s32 %s84, 1
      %p88 = scmp.eq.s32.totalorder %s24, 1
      %p89 = scmp.ne.s32.totalorder %s84, %s86
      %p90 = scmp.eq.s32.totalorder %s24, 0
      %p91 = por %p89, %p90
      %p92 = scmp.ne.s32.totalorder %s84, %s86
      %p93 = scmp.eq.s32.totalorder %s29, 1
      %p94 = por %p92, %p93
      %p95 = scmp.ne.s32.totalorder %s86, %s87
      %p96 = scmp.eq.s32.totalorder %s29, 0
      %p97 = por %p95, %p96
      %p98 = scmp.ne.s32.totalorder %s86, %s87
      %p99 = scmp.eq.s32.totalorder %s30, 1
      %p100 = por %p98, %p99
      %p102 = scmp.ne.s32.totalorder %s87, %s101
      %p103 = scmp.eq.s32.totalorder %s30, 0
      %p104 = por %p102, %p103
      %s106 = sadd.s32 %s105, 1
      %p109 = scmp.eq.s32.totalorder %s24, 1
      %p110 = scmp.ne.s32.totalorder %s105, %s107
      %p111 = scmp.eq.s32.totalorder %s24, 0
      %p112 = por %p110, %p111
      %p113 = scmp.ne.s32.totalorder %s105, %s107
      %p114 = scmp.eq.s32.totalorder %s29, 1
      %p115 = por %p113, %p114
      %p116 = scmp.ne.s32.totalorder %s107, %s108
      %p117 = scmp.eq.s32.totalorder %s29, 0
      %p118 = por %p116, %p117
      %p119 = scmp.ne.s32.totalorder %s107, %s108
      %p120 = scmp.eq.s32.totalorder %s30, 1
      %p121 = por %p119, %p120
      %p123 = scmp.ne.s32.totalorder %s108, %s122
      %p124 = scmp.eq.s32.totalorder %s30, 0
      %p125 = por %p123, %p124
      %s127 = sadd.s32 %s126, 1
      %p130 = scmp.eq.s32.totalorder %s24, 1
      %p131 = scmp.ne.s32.totalorder %s126, %s128
      %p132 = scmp.eq.s32.totalorder %s24, 0
      %p133 = por %p131, %p132
      %p134 = scmp.ne.s32.totalorder %s126, %s128
      %p135 = scmp.eq.s32.totalorder %s29, 1
      %p136 = por %p134, %p135
      %p137 = scmp.ne.s32.totalorder %s128, %s129
      %p138 = scmp.eq.s32.totalorder %s29, 0
      %p139 = por %p137, %p138
      %p140 = scmp.ne.s32.totalorder %s128, %s129
      %p141 = scmp.eq.s32.totalorder %s30, 1
      %p142 = por %p140, %p141
      %p144 = scmp.ne.s32.totalorder %s129, %s143
      %p145 = scmp.eq.s32.totalorder %s30, 0
      %p146 = por %p144, %p145
      %s148 = sadd.s32 %s147, 1
      %p151 = scmp.eq.s32.totalorder %s24, 1
      %p152 = scmp.ne.s32.totalorder %s147, %s149
      %p153 = scmp.eq.s32.totalorder %s24, 0
      %p154 = por %p152, %p153
      %p155 = scmp.ne.s32.totalorder %s147, %s149
      %p156 = scmp.eq.s32.totalorder %s29, 1
      %p157 = por %p155, %p156
      %p158 = scmp.ne.s32.totalorder %s149, %s150
      %p159 = scmp.eq.s32.totalorder %s29, 0
      %p160 = por %p158, %p159
      %p161 = scmp.ne.s32.totalorder %s149, %s150
      %p162 = scmp.eq.s32.totalorder %s30, 1
      %p163 = por %p161, %p162
      %p165 = scmp.ne.s32.totalorder %s150, %s164
      %p166 = scmp.eq.s32.totalorder %s30, 0
      %p167 = por %p165, %p166
      %s169 = sadd.s32 %s168, 1
      %p172 = scmp.eq.s32.totalorder %s24, 1
      %p173 = scmp.ne.s32.totalorder %s168, %s170
      %p174 = scmp.eq.s32.totalorder %s24, 0
      %p175 = por %p173, %p174
      %p176 = scmp.ne.s32.totalorder %s168, %s170
      %p177 = scmp.eq.s32.totalorder %s29, 1
      %p178 = por %p176, %p177
      %p179 = scmp.ne.s32.totalorder %s170, %s171
      %p180 = scmp.eq.s32.totalorder %s29, 0
      %p181 = por %p179, %p180
      %p182 = scmp.ne.s32.totalorder %s170, %s171
      %p183 = scmp.eq.s32.totalorder %s30, 1
      %p184 = por %p182, %p183
      %p186 = scmp.ne.s32.totalorder %s171, %s185
      %p187 = scmp.eq.s32.totalorder %s30, 0
      %p188 = por %p186, %p187
      %s189 = ssub.s32 %s24, %s31
      %p190 = scmp.eq.s32.totalorder %s189, 0
      %s192 = sadd.s32 %s191, 1
      %s193 = scalar_select %p190, %s191, %s192
      %p196 = pneg %p190
      %p197 = scmp.eq.s32.totalorder %s24, 1
      %p198 = por %p196, %p197
      %p199 = scmp.ne.s32.totalorder %s191, %s194
      %p200 = scmp.eq.s32.totalorder %s24, 0
      %p201 = por %p199, %p200
      %p202 = scmp.ne.s32.totalorder %s191, %s194
      %p203 = scmp.eq.s32.totalorder %s29, 1
      %p204 = por %p202, %p203
      %p205 = scmp.ne.s32.totalorder %s194, %s195
      %p206 = scmp.eq.s32.totalorder %s29, 0
      %p207 = por %p205, %p206
      %p208 = scmp.ne.s32.totalorder %s194, %s195
      %p209 = scmp.eq.s32.totalorder %s30, 1
      %p210 = por %p208, %p209
      %p212 = scmp.ne.s32.totalorder %s195, %s211
      %p213 = scmp.eq.s32.totalorder %s30, 0
      %p214 = por %p212, %p213
      %p215 = scmp.le.s32.totalorder 1, %s24
      %p216 = scmp.lt.s32.totalorder %s24, 3
      %p217 = pnand %p215, %p216
      %p218 = pneg %p217
      // Predicated region
      $region9: #{tpu_custom_call.1} parent=5 // pred_check
        _
      $region10: #{tpu_custom_call.1} parent=5 // pred_check_branch
        %220 = sbr.rel (%p217) target = $region12
      $region11: #{tpu_custom_call.1} parent=5 // pred_region
        %s221 = ssub.s32 %s24, 1
        // Predicated region
        $region13: #{tpu_custom_call.1} parent=11 // pred_check
          %p222 = pneg %p97
        $region14: #{tpu_custom_call.1} parent=11 // pred_check_branch
          %224 = sbr.rel (%p222) target = $region16
        $region15: #{tpu_custom_call.1} parent=11 // pred_region
          %s226 = ssub.s32 36864, 36864
          %227 = vsyncadd [#allocation6], %s226
          %s228 = sshll.u32 [#allocation7], 4
          %s229 = int_to_ptr.vmem [resolvable:$true] %s228
          %234 = dma.hbm_to_vmem [thread:$0]  %s2, 36864, %s229, [#allocation6], 384, 384, 24
        $region16: #{tpu_custom_call.1} parent=11 // pred_fallthru
          _
        // Predicated region
        $region17: #{tpu_custom_call.1} parent=11 // pred_check
          %p235 = pneg %p118
        $region18: #{tpu_custom_call.1} parent=11 // pred_check_branch
          %237 = sbr.rel (%p235) target = $region20
        $region19: #{tpu_custom_call.1} parent=11 // pred_region
          %s239 = ssub.s32 36864, 36864
          %240 = vsyncadd [#allocation9], %s239
          %s241 = sshll.u32 [#allocation8], 4
          %s242 = int_to_ptr.vmem [resolvable:$true] %s241
          %247 = dma.hbm_to_vmem [thread:$0]  %s3, 36864, %s242, [#allocation9], 384, 384, 24
        $region20: #{tpu_custom_call.1} parent=11 // pred_fallthru
          _
        // Predicated region
        $region21: #{tpu_custom_call.1} parent=11 // pred_check
          %p248 = pneg %p139
        $region22: #{tpu_custom_call.1} parent=11 // pred_check_branch
          %250 = sbr.rel (%p248) target = $region24
        $region23: #{tpu_custom_call.1} parent=11 // pred_region
          %s252 = ssub.s32 96, 96
          %253 = vsyncadd [#allocation9], %s252
          %s255 = sshll.u32 [#allocation10], 4
          %s256 = int_to_ptr.vmem [resolvable:$true] %s255
          %258 = dma.hbm_to_vmem [thread:$0]  %s4, 96, %s256, [#allocation9]
        $region24: #{tpu_custom_call.1} parent=11 // pred_fallthru
          _
        // Predicated region
        $region25: #{tpu_custom_call.1} parent=11 // pred_check
          %p259 = pneg %p160
        $region26: #{tpu_custom_call.1} parent=11 // pred_check_branch
          %261 = sbr.rel (%p259) target = $region28
        $region27: #{tpu_custom_call.1} parent=11 // pred_region
          %s263 = ssub.s32 6144, 6144
          %264 = vsyncadd [#allocation12], %s263
          %s265 = sshll.u32 [#allocation11], 4
          %s266 = int_to_ptr.vmem [resolvable:$true] %s265
          %271 = dma.hbm_to_vmem [thread:$0]  %s5, 6144, %s266, [#allocation12], 64, 64, 4
        $region28: #{tpu_custom_call.1} parent=11 // pred_fallthru
          _
        // Predicated region
        $region29: #{tpu_custom_call.1} parent=11 // pred_check
          %p272 = pneg %p181
        $region30: #{tpu_custom_call.1} parent=11 // pred_check_branch
          %274 = sbr.rel (%p272) target = $region32
        $region31: #{tpu_custom_call.1} parent=11 // pred_region
          %s276 = ssub.s32 16, 16
          %277 = vsyncadd [#allocation12], %s276
          %s279 = sshll.u32 [#allocation13], 4
          %s280 = int_to_ptr.vmem [resolvable:$true] %s279
          %282 = dma.hbm_to_vmem [thread:$0]  %s6, 16, %s280, [#allocation12]
        $region32: #{tpu_custom_call.1} parent=11 // pred_fallthru
          _
      $region12: #{tpu_custom_call.1} parent=5 // pred_fallthru
        _
      %p283 = scmp.lt.s32.totalorder %s24, 2
      // Predicated region
      $region33: #{tpu_custom_call.1} parent=5 // pred_check
        %p284 = pneg %p283
      $region34: #{tpu_custom_call.1} parent=5 // pred_check_branch
        %286 = sbr.rel (%p284) target = $region36
      $region35: #{tpu_custom_call.1} parent=5 // pred_region
        // Predicated region
        $region37: #{tpu_custom_call.1} parent=35 // pred_check
          %p287 = pneg %p44
        $region38: #{tpu_custom_call.1} parent=35 // pred_check_branch
          %289 = sbr.rel (%p287) target = $region40
        $region39: #{tpu_custom_call.1} parent=35 // pred_region
          %s290 = sand.u32 %s34, 1
          %s291 = scalar_lea.sflag [#allocation3], %s290
          %s292 = sand.u32 %s34, 1
          %s293 = smul.addr %s292, 96
          %s294 = scalar_lea.vmem [#allocation2], %s293
          %s295 = smul.u32 4, %s24
          %s297 = ssub.s32 1536, 1536
          %298 = vsyncadd %s291, %s297
          %s299 = smul.addr %s295, 6
          %s300 = smul.addr %s299, 64
          %s301 = scalar_lea.hbm %s0, %s300
          %s302 = sshll.u32 %s294, 4
          %s303 = int_to_ptr.vmem [resolvable:$true] %s302
          %308 = dma.hbm_to_vmem [thread:$0]  %s301, 1536, %s303, %s291, 384, 384, 24
        $region40: #{tpu_custom_call.1} parent=35 // pred_fallthru
          _
        // Predicated region
        $region41: #{tpu_custom_call.1} parent=35 // pred_check
          %p309 = pneg %p70
        $region42: #{tpu_custom_call.1} parent=35 // pred_check_branch
          %311 = sbr.rel (%p309) target = $region44
        $region43: #{tpu_custom_call.1} parent=35 // pred_region
          %s312 = sand.u32 %s24, 1
          %s313 = scalar_lea.sflag [#allocation6], %s312
          %s314 = sand.u32 %s60, 1
          %s315 = smul.addr %s314, 96
          %s316 = scalar_lea.vmem [#allocation5], %s315
          %s317 = smul.u32 4, %s24
          %s319 = ssub.s32 1536, 1536
          %320 = vsyncadd %s313, %s319
          %s321 = smul.addr %s317, 6
          %s322 = smul.addr %s321, 64
          %s323 = scalar_lea.hbm %s1, %s322
          %s324 = sshll.u32 %s316, 4
          %s325 = int_to_ptr.vmem [resolvable:$true] %s324
          %330 = dma.hbm_to_vmem [thread:$0]  %s323, 1536, %s325, %s313, 384, 384, 24
        $region44: #{tpu_custom_call.1} parent=35 // pred_fallthru
          _
      $region36: #{tpu_custom_call.1} parent=5 // pred_fallthru
        _
      %p331 = scmp.le.s32.totalorder 1, %s24
      %p332 = scmp.lt.s32.totalorder %s24, 3
      %p333 = pnand %p331, %p332
      %p334 = pneg %p333
      // Predicated region
      $region45: #{tpu_custom_call.1} parent=5 // pred_check
        _
      $region46: #{tpu_custom_call.1} parent=5 // pred_check_branch
        %336 = sbr.rel (%p333) target = $region48
      $region47: #{tpu_custom_call.1} parent=5 // pred_region
        %s337 = ssub.s32 %s24, 1
        %s338 = sand.u32 %s37, 1
        %s339 = scalar_lea.sflag [#allocation3], %s338
        %s340 = sand.u32 %s37, 1
        %s341 = smul.addr %s340, 96
        %s342 = scalar_lea.vmem [#allocation2], %s341
        // Predicated region
        $region49: #{tpu_custom_call.1} parent=47 // pred_check
          %p343 = pneg %p50
        $region50: #{tpu_custom_call.1} parent=47 // pred_check_branch
          %345 = sbr.rel (%p343) target = $region52
        $region51: #{tpu_custom_call.1} parent=47 // pred_region
          %346 = dma.done %s339, 1536
        $region52: #{tpu_custom_call.1} parent=47 // pred_fallthru
          _
        %s347 = sand.u32 %s29, 1
        %s348 = scalar_lea.sflag [#allocation6], %s347
        %s349 = sand.u32 %s63, 1
        %s350 = smul.addr %s349, 96
        %s351 = scalar_lea.vmem [#allocation5], %s350
        // Predicated region
        $region53: #{tpu_custom_call.1} parent=47 // pred_check
          %p352 = pneg %p76
        $region54: #{tpu_custom_call.1} parent=47 // pred_check_branch
          %354 = sbr.rel (%p352) target = $region56
        $region55: #{tpu_custom_call.1} parent=47 // pred_region
          %355 = dma.done %s348, 1536
        $region56: #{tpu_custom_call.1} parent=47 // pred_fallthru
          _
        // Predicated region
        $region57: #{tpu_custom_call.1} parent=47 // pred_check
          %p356 = pneg %p97
        $region58: #{tpu_custom_call.1} parent=47 // pred_check_branch
          %358 = sbr.rel (%p356) target = $region60
        $region59: #{tpu_custom_call.1} parent=47 // pred_region
          %359 = dma.done [#allocation6], 36864
        $region60: #{tpu_custom_call.1} parent=47 // pred_fallthru
          _
        // Predicated region
        $region61: #{tpu_custom_call.1} parent=47 // pred_check
          %p360 = pneg %p118
        $region62: #{tpu_custom_call.1} parent=47 // pred_check_branch
          %362 = sbr.rel (%p360) target = $region64
        $region63: #{tpu_custom_call.1} parent=47 // pred_region
          %363 = dma.done [#allocation9], 36864
        $region64: #{tpu_custom_call.1} parent=47 // pred_fallthru
          _
        // Predicated region
        $region65: #{tpu_custom_call.1} parent=47 // pred_check
          %p364 = pneg %p139
        $region66: #{tpu_custom_call.1} parent=47 // pred_check_branch
          %366 = sbr.rel (%p364) target = $region68
        $region67: #{tpu_custom_call.1} parent=47 // pred_region
          %367 = dma.done [#allocation9], 96
        $region68: #{tpu_custom_call.1} parent=47 // pred_fallthru
          _
        // Predicated region
        $region69: #{tpu_custom_call.1} parent=47 // pred_check
          %p368 = pneg %p160
        $region70: #{tpu_custom_call.1} parent=47 // pred_check_branch
          %370 = sbr.rel (%p368) target = $region72
        $region71: #{tpu_custom_call.1} parent=47 // pred_region
          %371 = dma.done [#allocation12], 6144
        $region72: #{tpu_custom_call.1} parent=47 // pred_fallthru
          _
        // Predicated region
        $region73: #{tpu_custom_call.1} parent=47 // pred_check
          %p372 = pneg %p181
        $region74: #{tpu_custom_call.1} parent=47 // pred_check_branch
          %374 = sbr.rel (%p372) target = $region76
        $region75: #{tpu_custom_call.1} parent=47 // pred_region
          %375 = dma.done [#allocation12], 16
        $region76: #{tpu_custom_call.1} parent=47 // pred_fallthru
          _
        %s376 = sand.u32 %s37, 1
        %s377 = scalar_lea.sflag [#allocation3], %s376
        %s378 = sand.u32 %s37, 1
        %s379 = smul.addr %s378, 96
        %s380 = scalar_lea.vmem [#allocation2], %s379
        %p381 = pneg %p50
        %p382 = pneg %p47
        %s383 = sand.u32 %s29, 1
        %s384 = scalar_lea.sflag [#allocation6], %s383
        %s385 = sand.u32 %s63, 1
        %s386 = smul.addr %s385, 96
        %s387 = scalar_lea.vmem [#allocation5], %s386
        %p388 = pneg %p76
        %p389 = pneg %p73
        %p390 = pneg %p97
        %p391 = pneg %p94
        %p392 = pneg %p118
        %p393 = pneg %p115
        %p394 = pneg %p139
        %p395 = pneg %p136
        %p396 = pneg %p160
        %p397 = pneg %p157
        %p398 = pneg %p181
        %p399 = pneg %p178
        %p400 = pneg %p207
        %p401 = pneg %p204
        %s402 = sand.u32 %s194, 1
        %s403 = scalar_lea.sflag [#allocation4], %s402
        %s404 = sand.u32 %s194, 1
        %s405 = smul.addr %s404, 16
        %s406 = scalar_lea.vmem [#allocation14], %s405
        %s407 = smul.u32 4, %s29
        %s408 = smul.u32 4, %s29
        %s409 = smul.u32 4, %s29
        %v411 = vld [vmem:[%s342] sm:$0xff]
        %v412 = vld [vmem:[%s342 + $0x8] sm:$0xff]
        %v413 = vld [vmem:[%s342 + $0x10] sm:$0xff]
        %v414 = vld [vmem:[%s342 + $0x18] sm:$0xff]
        %v415 = vld [vmem:[%s342 + $0x20] sm:$0xff]
        %v416 = vld [vmem:[%s342 + $0x28] sm:$0xff]
        %v417 = vld [vmem:[%s342 + $0x30] sm:$0xff]
        %v418 = vld [vmem:[%s342 + $0x38] sm:$0xff]
        %v419 = vld [vmem:[%s342 + $0x40] sm:$0xff]
        %v420 = vld [vmem:[%s342 + $0x48] sm:$0xff]
        %v421 = vld [vmem:[%s342 + $0x50] sm:$0xff]
        %v422 = vld [vmem:[%s342 + $0x58] sm:$0xff]
        %v423 = vld [vmem:[#allocation7] sm:$0xff]
        %v424 = vld [vmem:[#allocation7 + $0x8] sm:$0xff]
        %v425 = vld [vmem:[#allocation7 + $0x10] sm:$0xff]
        %v426 = vld [vmem:[#allocation7 + $0x18] sm:$0xff]
        %v427 = vld [vmem:[#allocation7 + $0x20] sm:$0xff]
        %v428 = vld [vmem:[#allocation7 + $0x28] sm:$0xff]
        %v429 = vld [vmem:[#allocation7 + $0x30] sm:$0xff]
        %v430 = vld [vmem:[#allocation7 + $0x38] sm:$0xff]
        %v431 = vld [vmem:[#allocation7 + $0x40] sm:$0xff]
        %v432 = vld [vmem:[#allocation7 + $0x48] sm:$0xff]
        %v433 = vld [vmem:[#allocation7 + $0x50] sm:$0xff]
        %v434 = vld [vmem:[#allocation7 + $0x58] sm:$0xff]
        %v435 = vld [vmem:[#allocation7 + $0x60] sm:$0xff]
        %v436 = vld [vmem:[#allocation7 + $0x68] sm:$0xff]
        %v437 = vld [vmem:[#allocation7 + $0x70] sm:$0xff]
        %v438 = vld [vmem:[#allocation7 + $0x78] sm:$0xff]
        %v439 = vld [vmem:[#allocation7 + $0x80] sm:$0xff]
        %v440 = vld [vmem:[#allocation7 + $0x88] sm:$0xff]
        %v441 = vld [vmem:[#allocation7 + $0x90] sm:$0xff]
        %v442 = vld [vmem:[#allocation7 + $0x98] sm:$0xff]
        %v443 = vld [vmem:[#allocation7 + $0xa0] sm:$0xff]
        %v444 = vld [vmem:[#allocation7 + $0xa8] sm:$0xff]
        %v445 = vld [vmem:[#allocation7 + $0xb0] sm:$0xff]
        %v446 = vld [vmem:[#allocation7 + $0xb8] sm:$0xff]
        %v447 = vld [vmem:[#allocation7 + $0xc0] sm:$0xff]
        %v448 = vld [vmem:[#allocation7 + $0xc8] sm:$0xff]
        %v449 = vld [vmem:[#allocation7 + $0xd0] sm:$0xff]
        %v450 = vld [vmem:[#allocation7 + $0xd8] sm:$0xff]
        %v451 = vld [vmem:[#allocation7 + $0xe0] sm:$0xff]
        %v452 = vld [vmem:[#allocation7 + $0xe8] sm:$0xff]
        %v453 = vld [vmem:[#allocation7 + $0xf0] sm:$0xff]
        %v454 = vld [vmem:[#allocation7 + $0xf8] sm:$0xff]
        %v455 = vld [vmem:[#allocation7 + $0x100] sm:$0xff]
        %v456 = vld [vmem:[#allocation7 + $0x108] sm:$0xff]
        %v457 = vld [vmem:[#allocation7 + $0x110] sm:$0xff]
        %v458 = vld [vmem:[#allocation7 + $0x118] sm:$0xff]
        %v459 = vld [vmem:[#allocation7 + $0x120] sm:$0xff]
        %v460 = vld [vmem:[#allocation7 + $0x128] sm:$0xff]
        %v461 = vld [vmem:[#allocation7 + $0x130] sm:$0xff]
        %v462 = vld [vmem:[#allocation7 + $0x138] sm:$0xff]
        %v463 = vld [vmem:[#allocation7 + $0x140] sm:$0xff]
        %v464 = vld [vmem:[#allocation7 + $0x148] sm:$0xff]
        %v465 = vld [vmem:[#allocation7 + $0x150] sm:$0xff]
        %v466 = vld [vmem:[#allocation7 + $0x158] sm:$0xff]
        %v467 = vld [vmem:[#allocation7 + $0x160] sm:$0xff]
        %v468 = vld [vmem:[#allocation7 + $0x168] sm:$0xff]
        %v469 = vld [vmem:[#allocation7 + $0x170] sm:$0xff]
        %v470 = vld [vmem:[#allocation7 + $0x178] sm:$0xff]
        %v471 = vld [vmem:[#allocation7 + $0x180] sm:$0xff]
        %v472 = vld [vmem:[#allocation7 + $0x188] sm:$0xff]
        %v473 = vld [vmem:[#allocation7 + $0x190] sm:$0xff]
        %v474 = vld [vmem:[#allocation7 + $0x198] sm:$0xff]
        %v475 = vld [vmem:[#allocation7 + $0x1a0] sm:$0xff]
        %v476 = vld [vmem:[#allocation7 + $0x1a8] sm:$0xff]
        %v477 = vld [vmem:[#allocation7 + $0x1b0] sm:$0xff]
        %v478 = vld [vmem:[#allocation7 + $0x1b8] sm:$0xff]
        %v479 = vld [vmem:[#allocation7 + $0x1c0] sm:$0xff]
        %v480 = vld [vmem:[#allocation7 + $0x1c8] sm:$0xff]
        %v481 = vld [vmem:[#allocation7 + $0x1d0] sm:$0xff]
        %v482 = vld [vmem:[#allocation7 + $0x1d8] sm:$0xff]
        %v483 = vld [vmem:[#allocation7 + $0x1e0] sm:$0xff]
        %v484 = vld [vmem:[#allocation7 + $0x1e8] sm:$0xff]
        %v485 = vld [vmem:[#allocation7 + $0x1f0] sm:$0xff]
        %v486 = vld [vmem:[#allocation7 + $0x1f8] sm:$0xff]
        %v487 = vld [vmem:[#allocation7 + $0x200] sm:$0xff]
        %v488 = vld [vmem:[#allocation7 + $0x208] sm:$0xff]
        %v489 = vld [vmem:[#allocation7 + $0x210] sm:$0xff]
        %v490 = vld [vmem:[#allocation7 + $0x218] sm:$0xff]
        %v491 = vld [vmem:[#allocation7 + $0x220] sm:$0xff]
        %v492 = vld [vmem:[#allocation7 + $0x228] sm:$0xff]
        %v493 = vld [vmem:[#allocation7 + $0x230] sm:$0xff]
        %v494 = vld [vmem:[#allocation7 + $0x238] sm:$0xff]
        %v495 = vld [vmem:[#allocation7 + $0x240] sm:$0xff]
        %v496 = vld [vmem:[#allocation7 + $0x248] sm:$0xff]
        %v497 = vld [vmem:[#allocation7 + $0x250] sm:$0xff]
        %v498 = vld [vmem:[#allocation7 + $0x258] sm:$0xff]
        %v499 = vld [vmem:[#allocation7 + $0x260] sm:$0xff]
        %v500 = vld [vmem:[#allocation7 + $0x268] sm:$0xff]
        %v501 = vld [vmem:[#allocation7 + $0x270] sm:$0xff]
        %v502 = vld [vmem:[#allocation7 + $0x278] sm:$0xff]
        %v503 = vld [vmem:[#allocation7 + $0x280] sm:$0xff]
        %v504 = vld [vmem:[#allocation7 + $0x288] sm:$0xff]
        %v505 = vld [vmem:[#allocation7 + $0x290] sm:$0xff]
        %v506 = vld [vmem:[#allocation7 + $0x298] sm:$0xff]
        %v507 = vld [vmem:[#allocation7 + $0x2a0] sm:$0xff]
        %v508 = vld [vmem:[#allocation7 + $0x2a8] sm:$0xff]
        %v509 = vld [vmem:[#allocation7 + $0x2b0] sm:$0xff]
        %v510 = vld [vmem:[#allocation7 + $0x2b8] sm:$0xff]
        %v511 = vld [vmem:[#allocation7 + $0x2c0] sm:$0xff]
        %v512 = vld [vmem:[#allocation7 + $0x2c8] sm:$0xff]
        %v513 = vld [vmem:[#allocation7 + $0x2d0] sm:$0xff]
        %v514 = vld [vmem:[#allocation7 + $0x2d8] sm:$0xff]
        %v515 = vld [vmem:[#allocation7 + $0x2e0] sm:$0xff]
        %v516 = vld [vmem:[#allocation7 + $0x2e8] sm:$0xff]
        %v517 = vld [vmem:[#allocation7 + $0x2f0] sm:$0xff]
        %v518 = vld [vmem:[#allocation7 + $0x2f8] sm:$0xff]
        %v519 = vld [vmem:[#allocation7 + $0x300] sm:$0xff]
        %v520 = vld [vmem:[#allocation7 + $0x308] sm:$0xff]
        %v521 = vld [vmem:[#allocation7 + $0x310] sm:$0xff]
        %v522 = vld [vmem:[#allocation7 + $0x318] sm:$0xff]
        %v523 = vld [vmem:[#allocation7 + $0x320] sm:$0xff]
        %v524 = vld [vmem:[#allocation7 + $0x328] sm:$0xff]
        %v525 = vld [vmem:[#allocation7 + $0x330] sm:$0xff]
        %v526 = vld [vmem:[#allocation7 + $0x338] sm:$0xff]
        %v527 = vld [vmem:[#allocation7 + $0x340] sm:$0xff]
        %v528 = vld [vmem:[#allocation7 + $0x348] sm:$0xff]
        %v529 = vld [vmem:[#allocation7 + $0x350] sm:$0xff]
        %v530 = vld [vmem:[#allocation7 + $0x358] sm:$0xff]
        %v531 = vld [vmem:[#allocation7 + $0x360] sm:$0xff]
        %v532 = vld [vmem:[#allocation7 + $0x368] sm:$0xff]
        %v533 = vld [vmem:[#allocation7 + $0x370] sm:$0xff]
        %v534 = vld [vmem:[#allocation7 + $0x378] sm:$0xff]
        %v535 = vld [vmem:[#allocation7 + $0x380] sm:$0xff]
        %v536 = vld [vmem:[#allocation7 + $0x388] sm:$0xff]
        %v537 = vld [vmem:[#allocation7 + $0x390] sm:$0xff]
        %v538 = vld [vmem:[#allocation7 + $0x398] sm:$0xff]
        %v539 = vld [vmem:[#allocation7 + $0x3a0] sm:$0xff]
        %v540 = vld [vmem:[#allocation7 + $0x3a8] sm:$0xff]
        %v541 = vld [vmem:[#allocation7 + $0x3b0] sm:$0xff]
        %v542 = vld [vmem:[#allocation7 + $0x3b8] sm:$0xff]
        %v543 = vld [vmem:[#allocation7 + $0x3c0] sm:$0xff]
        %v544 = vld [vmem:[#allocation7 + $0x3c8] sm:$0xff]
        %v545 = vld [vmem:[#allocation7 + $0x3d0] sm:$0xff]
        %v546 = vld [vmem:[#allocation7 + $0x3d8] sm:$0xff]
        %v547 = vld [vmem:[#allocation7 + $0x3e0] sm:$0xff]
        %v548 = vld [vmem:[#allocation7 + $0x3e8] sm:$0xff]
        %v549 = vld [vmem:[#allocation7 + $0x3f0] sm:$0xff]
        %v550 = vld [vmem:[#allocation7 + $0x3f8] sm:$0xff]
        %v551 = vld [vmem:[#allocation7 + $0x400] sm:$0xff]
        %v552 = vld [vmem:[#allocation7 + $0x408] sm:$0xff]
        %v553 = vld [vmem:[#allocation7 + $0x410] sm:$0xff]
        %v554 = vld [vmem:[#allocation7 + $0x418] sm:$0xff]
        %v555 = vld [vmem:[#allocation7 + $0x420] sm:$0xff]
        %v556 = vld [vmem:[#allocation7 + $0x428] sm:$0xff]
        %v557 = vld [vmem:[#allocation7 + $0x430] sm:$0xff]
        %v558 = vld [vmem:[#allocation7 + $0x438] sm:$0xff]
        %v559 = vld [vmem:[#allocation7 + $0x440] sm:$0xff]
        %v560 = vld [vmem:[#allocation7 + $0x448] sm:$0xff]
        %v561 = vld [vmem:[#allocation7 + $0x450] sm:$0xff]
        %v562 = vld [vmem:[#allocation7 + $0x458] sm:$0xff]
        %v563 = vld [vmem:[#allocation7 + $0x460] sm:$0xff]
        %v564 = vld [vmem:[#allocation7 + $0x468] sm:$0xff]
        %v565 = vld [vmem:[#allocation7 + $0x470] sm:$0xff]
        %v566 = vld [vmem:[#allocation7 + $0x478] sm:$0xff]
        %v567 = vld [vmem:[#allocation7 + $0x480] sm:$0xff]
        %v568 = vld [vmem:[#allocation7 + $0x488] sm:$0xff]
        %v569 = vld [vmem:[#allocation7 + $0x490] sm:$0xff]
        %v570 = vld [vmem:[#allocation7 + $0x498] sm:$0xff]
        %v571 = vld [vmem:[#allocation7 + $0x4a0] sm:$0xff]
        %v572 = vld [vmem:[#allocation7 + $0x4a8] sm:$0xff]
        %v573 = vld [vmem:[#allocation7 + $0x4b0] sm:$0xff]
        %v574 = vld [vmem:[#allocation7 + $0x4b8] sm:$0xff]
        %v575 = vld [vmem:[#allocation7 + $0x4c0] sm:$0xff]
        %v576 = vld [vmem:[#allocation7 + $0x4c8] sm:$0xff]
        %v577 = vld [vmem:[#allocation7 + $0x4d0] sm:$0xff]
        %v578 = vld [vmem:[#allocation7 + $0x4d8] sm:$0xff]
        %v579 = vld [vmem:[#allocation7 + $0x4e0] sm:$0xff]
        %v580 = vld [vmem:[#allocation7 + $0x4e8] sm:$0xff]
        %v581 = vld [vmem:[#allocation7 + $0x4f0] sm:$0xff]
        %v582 = vld [vmem:[#allocation7 + $0x4f8] sm:$0xff]
        %v583 = vld [vmem:[#allocation7 + $0x500] sm:$0xff]
        %v584 = vld [vmem:[#allocation7 + $0x508] sm:$0xff]
        %v585 = vld [vmem:[#allocation7 + $0x510] sm:$0xff]
        %v586 = vld [vmem:[#allocation7 + $0x518] sm:$0xff]
        %v587 = vld [vmem:[#allocation7 + $0x520] sm:$0xff]
        %v588 = vld [vmem:[#allocation7 + $0x528] sm:$0xff]
        %v589 = vld [vmem:[#allocation7 + $0x530] sm:$0xff]
        %v590 = vld [vmem:[#allocation7 + $0x538] sm:$0xff]
        %v591 = vld [vmem:[#allocation7 + $0x540] sm:$0xff]
        %v592 = vld [vmem:[#allocation7 + $0x548] sm:$0xff]
        %v593 = vld [vmem:[#allocation7 + $0x550] sm:$0xff]
        %v594 = vld [vmem:[#allocation7 + $0x558] sm:$0xff]
        %v595 = vld [vmem:[#allocation7 + $0x560] sm:$0xff]
        %v596 = vld [vmem:[#allocation7 + $0x568] sm:$0xff]
        %v597 = vld [vmem:[#allocation7 + $0x570] sm:$0xff]
        %v598 = vld [vmem:[#allocation7 + $0x578] sm:$0xff]
        %v599 = vld [vmem:[#allocation7 + $0x580] sm:$0xff]
        %v600 = vld [vmem:[#allocation7 + $0x588] sm:$0xff]
        %v601 = vld [vmem:[#allocation7 + $0x590] sm:$0xff]
        %v602 = vld [vmem:[#allocation7 + $0x598] sm:$0xff]
        %v603 = vld [vmem:[#allocation7 + $0x5a0] sm:$0xff]
        %v604 = vld [vmem:[#allocation7 + $0x5a8] sm:$0xff]
        %v605 = vld [vmem:[#allocation7 + $0x5b0] sm:$0xff]
        %v606 = vld [vmem:[#allocation7 + $0x5b8] sm:$0xff]
        %v607 = vld [vmem:[#allocation7 + $0x5c0] sm:$0xff]
        %v608 = vld [vmem:[#allocation7 + $0x5c8] sm:$0xff]
        %v609 = vld [vmem:[#allocation7 + $0x5d0] sm:$0xff]
        %v610 = vld [vmem:[#allocation7 + $0x5d8] sm:$0xff]
        %v611 = vld [vmem:[#allocation7 + $0x5e0] sm:$0xff]
        %v612 = vld [vmem:[#allocation7 + $0x5e8] sm:$0xff]
        %v613 = vld [vmem:[#allocation7 + $0x5f0] sm:$0xff]
        %v614 = vld [vmem:[#allocation7 + $0x5f8] sm:$0xff]
        %v615 = vld [vmem:[#allocation7 + $0x600] sm:$0xff]
        %v616 = vld [vmem:[#allocation7 + $0x608] sm:$0xff]
        %v617 = vld [vmem:[#allocation7 + $0x610] sm:$0xff]
        %v618 = vld [vmem:[#allocation7 + $0x618] sm:$0xff]
        %v619 = vld [vmem:[#allocation7 + $0x620] sm:$0xff]
        %v620 = vld [vmem:[#allocation7 + $0x628] sm:$0xff]
        %v621 = vld [vmem:[#allocation7 + $0x630] sm:$0xff]
        %v622 = vld [vmem:[#allocation7 + $0x638] sm:$0xff]
        %v623 = vld [vmem:[#allocation7 + $0x640] sm:$0xff]
        %v624 = vld [vmem:[#allocation7 + $0x648] sm:$0xff]
        %v625 = vld [vmem:[#allocation7 + $0x650] sm:$0xff]
        %v626 = vld [vmem:[#allocation7 + $0x658] sm:$0xff]
        %v627 = vld [vmem:[#allocation7 + $0x660] sm:$0xff]
        %v628 = vld [vmem:[#allocation7 + $0x668] sm:$0xff]
        %v629 = vld [vmem:[#allocation7 + $0x670] sm:$0xff]
        %v630 = vld [vmem:[#allocation7 + $0x678] sm:$0xff]
        %v631 = vld [vmem:[#allocation7 + $0x680] sm:$0xff]
        %v632 = vld [vmem:[#allocation7 + $0x688] sm:$0xff]
        %v633 = vld [vmem:[#allocation7 + $0x690] sm:$0xff]
        %v634 = vld [vmem:[#allocation7 + $0x698] sm:$0xff]
        %v635 = vld [vmem:[#allocation7 + $0x6a0] sm:$0xff]
        %v636 = vld [vmem:[#allocation7 + $0x6a8] sm:$0xff]
        %v637 = vld [vmem:[#allocation7 + $0x6b0] sm:$0xff]
        %v638 = vld [vmem:[#allocation7 + $0x6b8] sm:$0xff]
        %v639 = vld [vmem:[#allocation7 + $0x6c0] sm:$0xff]
        %v640 = vld [vmem:[#allocation7 + $0x6c8] sm:$0xff]
        %v641 = vld [vmem:[#allocation7 + $0x6d0] sm:$0xff]
        %v642 = vld [vmem:[#allocation7 + $0x6d8] sm:$0xff]
        %v643 = vld [vmem:[#allocation7 + $0x6e0] sm:$0xff]
        %v644 = vld [vmem:[#allocation7 + $0x6e8] sm:$0xff]
        %v645 = vld [vmem:[#allocation7 + $0x6f0] sm:$0xff]
        %v646 = vld [vmem:[#allocation7 + $0x6f8] sm:$0xff]
        %v647 = vld [vmem:[#allocation7 + $0x700] sm:$0xff]
        %v648 = vld [vmem:[#allocation7 + $0x708] sm:$0xff]
        %v649 = vld [vmem:[#allocation7 + $0x710] sm:$0xff]
        %v650 = vld [vmem:[#allocation7 + $0x718] sm:$0xff]
        %v651 = vld [vmem:[#allocation7 + $0x720] sm:$0xff]
        %v652 = vld [vmem:[#allocation7 + $0x728] sm:$0xff]
        %v653 = vld [vmem:[#allocation7 + $0x730] sm:$0xff]
        %v654 = vld [vmem:[#allocation7 + $0x738] sm:$0xff]
        %v655 = vld [vmem:[#allocation7 + $0x740] sm:$0xff]
        %v656 = vld [vmem:[#allocation7 + $0x748] sm:$0xff]
        %v657 = vld [vmem:[#allocation7 + $0x750] sm:$0xff]
        %v658 = vld [vmem:[#allocation7 + $0x758] sm:$0xff]
        %v659 = vld [vmem:[#allocation7 + $0x760] sm:$0xff]
        %v660 = vld [vmem:[#allocation7 + $0x768] sm:$0xff]
        %v661 = vld [vmem:[#allocation7 + $0x770] sm:$0xff]
        %v662 = vld [vmem:[#allocation7 + $0x778] sm:$0xff]
        %v663 = vld [vmem:[#allocation7 + $0x780] sm:$0xff]
        %v664 = vld [vmem:[#allocation7 + $0x788] sm:$0xff]
        %v665 = vld [vmem:[#allocation7 + $0x790] sm:$0xff]
        %v666 = vld [vmem:[#allocation7 + $0x798] sm:$0xff]
        %v667 = vld [vmem:[#allocation7 + $0x7a0] sm:$0xff]
        %v668 = vld [vmem:[#allocation7 + $0x7a8] sm:$0xff]
        %v669 = vld [vmem:[#allocation7 + $0x7b0] sm:$0xff]
        %v670 = vld [vmem:[#allocation7 + $0x7b8] sm:$0xff]
        %v671 = vld [vmem:[#allocation7 + $0x7c0] sm:$0xff]
        %v672 = vld [vmem:[#allocation7 + $0x7c8] sm:$0xff]
        %v673 = vld [vmem:[#allocation7 + $0x7d0] sm:$0xff]
        %v674 = vld [vmem:[#allocation7 + $0x7d8] sm:$0xff]
        %v675 = vld [vmem:[#allocation7 + $0x7e0] sm:$0xff]
        %v676 = vld [vmem:[#allocation7 + $0x7e8] sm:$0xff]
        %v677 = vld [vmem:[#allocation7 + $0x7f0] sm:$0xff]
        %v678 = vld [vmem:[#allocation7 + $0x7f8] sm:$0xff]
        %v679 = vld [vmem:[#allocation7 + $0x800] sm:$0xff]
        %v680 = vld [vmem:[#allocation7 + $0x808] sm:$0xff]
        %v681 = vld [vmem:[#allocation7 + $0x810] sm:$0xff]
        %v682 = vld [vmem:[#allocation7 + $0x818] sm:$0xff]
        %v683 = vld [vmem:[#allocation7 + $0x820] sm:$0xff]
        %v684 = vld [vmem:[#allocation7 + $0x828] sm:$0xff]
        %v685 = vld [vmem:[#allocation7 + $0x830] sm:$0xff]
        %v686 = vld [vmem:[#allocation7 + $0x838] sm:$0xff]
        %v687 = vld [vmem:[#allocation7 + $0x840] sm:$0xff]
        %v688 = vld [vmem:[#allocation7 + $0x848] sm:$0xff]
        %v689 = vld [vmem:[#allocation7 + $0x850] sm:$0xff]
        %v690 = vld [vmem:[#allocation7 + $0x858] sm:$0xff]
        %v691 = vld [vmem:[#allocation7 + $0x860] sm:$0xff]
        %v692 = vld [vmem:[#allocation7 + $0x868] sm:$0xff]
        %v693 = vld [vmem:[#allocation7 + $0x870] sm:$0xff]
        %v694 = vld [vmem:[#allocation7 + $0x878] sm:$0xff]
        %v695 = vld [vmem:[#allocation7 + $0x880] sm:$0xff]
        %v696 = vld [vmem:[#allocation7 + $0x888] sm:$0xff]
        %v697 = vld [vmem:[#allocation7 + $0x890] sm:$0xff]
        %v698 = vld [vmem:[#allocation7 + $0x898] sm:$0xff]
        %v699 = vld [vmem:[#allocation7 + $0x8a0] sm:$0xff]
        %v700 = vld [vmem:[#allocation7 + $0x8a8] sm:$0xff]
        %v701 = vld [vmem:[#allocation7 + $0x8b0] sm:$0xff]
        %v702 = vld [vmem:[#allocation7 + $0x8b8] sm:$0xff]
        %v703 = vld [vmem:[#allocation7 + $0x8c0] sm:$0xff]
        %v704 = vld [vmem:[#allocation7 + $0x8c8] sm:$0xff]
        %v705 = vld [vmem:[#allocation7 + $0x8d0] sm:$0xff]
        %v706 = vld [vmem:[#allocation7 + $0x8d8] sm:$0xff]
        %v707 = vld [vmem:[#allocation7 + $0x8e0] sm:$0xff]
        %v708 = vld [vmem:[#allocation7 + $0x8e8] sm:$0xff]
        %v709 = vld [vmem:[#allocation7 + $0x8f0] sm:$0xff]
        %v710 = vld [vmem:[#allocation7 + $0x8f8] sm:$0xff]
        %v711 = vld [vmem:[%s351] sm:$0xff]
        %v712 = vld [vmem:[%s351 + $0x8] sm:$0xff]
        %v713 = vld [vmem:[%s351 + $0x10] sm:$0xff]
        %v714 = vld [vmem:[%s351 + $0x18] sm:$0xff]
        %v715 = vld [vmem:[%s351 + $0x20] sm:$0xff]
        %v716 = vld [vmem:[%s351 + $0x28] sm:$0xff]
        %v717 = vld [vmem:[%s351 + $0x30] sm:$0xff]
        %v718 = vld [vmem:[%s351 + $0x38] sm:$0xff]
        %v719 = vld [vmem:[%s351 + $0x40] sm:$0xff]
        %v720 = vld [vmem:[%s351 + $0x48] sm:$0xff]
        %v721 = vld [vmem:[%s351 + $0x50] sm:$0xff]
        %v722 = vld [vmem:[%s351 + $0x58] sm:$0xff]
        %v723 = vld [vmem:[#allocation8] sm:$0xff]
        %v724 = vld [vmem:[#allocation8 + $0x8] sm:$0xff]
        %v725 = vld [vmem:[#allocation8 + $0x10] sm:$0xff]
        %v726 = vld [vmem:[#allocation8 + $0x18] sm:$0xff]
        %v727 = vld [vmem:[#allocation8 + $0x20] sm:$0xff]
        %v728 = vld [vmem:[#allocation8 + $0x28] sm:$0xff]
        %v729 = vld [vmem:[#allocation8 + $0x30] sm:$0xff]
        %v730 = vld [vmem:[#allocation8 + $0x38] sm:$0xff]
        %v731 = vld [vmem:[#allocation8 + $0x40] sm:$0xff]
        %v732 = vld [vmem:[#allocation8 + $0x48] sm:$0xff]
        %v733 = vld [vmem:[#allocation8 + $0x50] sm:$0xff]
        %v734 = vld [vmem:[#allocation8 + $0x58] sm:$0xff]
        %v735 = vld [vmem:[#allocation8 + $0x60] sm:$0xff]
        %v736 = vld [vmem:[#allocation8 + $0x68] sm:$0xff]
        %v737 = vld [vmem:[#allocation8 + $0x70] sm:$0xff]
        %v738 = vld [vmem:[#allocation8 + $0x78] sm:$0xff]
        %v739 = vld [vmem:[#allocation8 + $0x80] sm:$0xff]
        %v740 = vld [vmem:[#allocation8 + $0x88] sm:$0xff]
        %v741 = vld [vmem:[#allocation8 + $0x90] sm:$0xff]
        %v742 = vld [vmem:[#allocation8 + $0x98] sm:$0xff]
        %v743 = vld [vmem:[#allocation8 + $0xa0] sm:$0xff]
        %v744 = vld [vmem:[#allocation8 + $0xa8] sm:$0xff]
        %v745 = vld [vmem:[#allocation8 + $0xb0] sm:$0xff]
        %v746 = vld [vmem:[#allocation8 + $0xb8] sm:$0xff]
        %v747 = vld [vmem:[#allocation8 + $0xc0] sm:$0xff]
        %v748 = vld [vmem:[#allocation8 + $0xc8] sm:$0xff]
        %v749 = vld [vmem:[#allocation8 + $0xd0] sm:$0xff]
        %v750 = vld [vmem:[#allocation8 + $0xd8] sm:$0xff]
        %v751 = vld [vmem:[#allocation8 + $0xe0] sm:$0xff]
        %v752 = vld [vmem:[#allocation8 + $0xe8] sm:$0xff]
        %v753 = vld [vmem:[#allocation8 + $0xf0] sm:$0xff]
        %v754 = vld [vmem:[#allocation8 + $0xf8] sm:$0xff]
        %v755 = vld [vmem:[#allocation8 + $0x100] sm:$0xff]
        %v756 = vld [vmem:[#allocation8 + $0x108] sm:$0xff]
        %v757 = vld [vmem:[#allocation8 + $0x110] sm:$0xff]
        %v758 = vld [vmem:[#allocation8 + $0x118] sm:$0xff]
        %v759 = vld [vmem:[#allocation8 + $0x120] sm:$0xff]
        %v760 = vld [vmem:[#allocation8 + $0x128] sm:$0xff]
        %v761 = vld [vmem:[#allocation8 + $0x130] sm:$0xff]
        %v762 = vld [vmem:[#allocation8 + $0x138] sm:$0xff]
        %v763 = vld [vmem:[#allocation8 + $0x140] sm:$0xff]
        %v764 = vld [vmem:[#allocation8 + $0x148] sm:$0xff]
        %v765 = vld [vmem:[#allocation8 + $0x150] sm:$0xff]
        %v766 = vld [vmem:[#allocation8 + $0x158] sm:$0xff]
        %v767 = vld [vmem:[#allocation8 + $0x160] sm:$0xff]
        %v768 = vld [vmem:[#allocation8 + $0x168] sm:$0xff]
        %v769 = vld [vmem:[#allocation8 + $0x170] sm:$0xff]
        %v770 = vld [vmem:[#allocation8 + $0x178] sm:$0xff]
        %v771 = vld [vmem:[#allocation8 + $0x180] sm:$0xff]
        %v772 = vld [vmem:[#allocation8 + $0x188] sm:$0xff]
        %v773 = vld [vmem:[#allocation8 + $0x190] sm:$0xff]
        %v774 = vld [vmem:[#allocation8 + $0x198] sm:$0xff]
        %v775 = vld [vmem:[#allocation8 + $0x1a0] sm:$0xff]
        %v776 = vld [vmem:[#allocation8 + $0x1a8] sm:$0xff]
        %v777 = vld [vmem:[#allocation8 + $0x1b0] sm:$0xff]
        %v778 = vld [vmem:[#allocation8 + $0x1b8] sm:$0xff]
        %v779 = vld [vmem:[#allocation8 + $0x1c0] sm:$0xff]
        %v780 = vld [vmem:[#allocation8 + $0x1c8] sm:$0xff]
        %v781 = vld [vmem:[#allocation8 + $0x1d0] sm:$0xff]
        %v782 = vld [vmem:[#allocation8 + $0x1d8] sm:$0xff]
        %v783 = vld [vmem:[#allocation8 + $0x1e0] sm:$0xff]
        %v784 = vld [vmem:[#allocation8 + $0x1e8] sm:$0xff]
        %v785 = vld [vmem:[#allocation8 + $0x1f0] sm:$0xff]
        %v786 = vld [vmem:[#allocation8 + $0x1f8] sm:$0xff]
        %v787 = vld [vmem:[#allocation8 + $0x200] sm:$0xff]
        %v788 = vld [vmem:[#allocation8 + $0x208] sm:$0xff]
        %v789 = vld [vmem:[#allocation8 + $0x210] sm:$0xff]
        %v790 = vld [vmem:[#allocation8 + $0x218] sm:$0xff]
        %v791 = vld [vmem:[#allocation8 + $0x220] sm:$0xff]
        %v792 = vld [vmem:[#allocation8 + $0x228] sm:$0xff]
        %v793 = vld [vmem:[#allocation8 + $0x230] sm:$0xff]
        %v794 = vld [vmem:[#allocation8 + $0x238] sm:$0xff]
        %v795 = vld [vmem:[#allocation8 + $0x240] sm:$0xff]
        %v796 = vld [vmem:[#allocation8 + $0x248] sm:$0xff]
        %v797 = vld [vmem:[#allocation8 + $0x250] sm:$0xff]
        %v798 = vld [vmem:[#allocation8 + $0x258] sm:$0xff]
        %v799 = vld [vmem:[#allocation8 + $0x260] sm:$0xff]
        %v800 = vld [vmem:[#allocation8 + $0x268] sm:$0xff]
        %v801 = vld [vmem:[#allocation8 + $0x270] sm:$0xff]
        %v802 = vld [vmem:[#allocation8 + $0x278] sm:$0xff]
        %v803 = vld [vmem:[#allocation8 + $0x280] sm:$0xff]
        %v804 = vld [vmem:[#allocation8 + $0x288] sm:$0xff]
        %v805 = vld [vmem:[#allocation8 + $0x290] sm:$0xff]
        %v806 = vld [vmem:[#allocation8 + $0x298] sm:$0xff]
        %v807 = vld [vmem:[#allocation8 + $0x2a0] sm:$0xff]
        %v808 = vld [vmem:[#allocation8 + $0x2a8] sm:$0xff]
        %v809 = vld [vmem:[#allocation8 + $0x2b0] sm:$0xff]
        %v810 = vld [vmem:[#allocation8 + $0x2b8] sm:$0xff]
        %v811 = vld [vmem:[#allocation8 + $0x2c0] sm:$0xff]
        %v812 = vld [vmem:[#allocation8 + $0x2c8] sm:$0xff]
        %v813 = vld [vmem:[#allocation8 + $0x2d0] sm:$0xff]
        %v814 = vld [vmem:[#allocation8 + $0x2d8] sm:$0xff]
        %v815 = vld [vmem:[#allocation8 + $0x2e0] sm:$0xff]
        %v816 = vld [vmem:[#allocation8 + $0x2e8] sm:$0xff]
        %v817 = vld [vmem:[#allocation8 + $0x2f0] sm:$0xff]
        %v818 = vld [vmem:[#allocation8 + $0x2f8] sm:$0xff]
        %v819 = vld [vmem:[#allocation8 + $0x300] sm:$0xff]
        %v820 = vld [vmem:[#allocation8 + $0x308] sm:$0xff]
        %v821 = vld [vmem:[#allocation8 + $0x310] sm:$0xff]
        %v822 = vld [vmem:[#allocation8 + $0x318] sm:$0xff]
        %v823 = vld [vmem:[#allocation8 + $0x320] sm:$0xff]
        %v824 = vld [vmem:[#allocation8 + $0x328] sm:$0xff]
        %v825 = vld [vmem:[#allocation8 + $0x330] sm:$0xff]
        %v826 = vld [vmem:[#allocation8 + $0x338] sm:$0xff]
        %v827 = vld [vmem:[#allocation8 + $0x340] sm:$0xff]
        %v828 = vld [vmem:[#allocation8 + $0x348] sm:$0xff]
        %v829 = vld [vmem:[#allocation8 + $0x350] sm:$0xff]
        %v830 = vld [vmem:[#allocation8 + $0x358] sm:$0xff]
        %v831 = vld [vmem:[#allocation8 + $0x360] sm:$0xff]
        %v832 = vld [vmem:[#allocation8 + $0x368] sm:$0xff]
        %v833 = vld [vmem:[#allocation8 + $0x370] sm:$0xff]
        %v834 = vld [vmem:[#allocation8 + $0x378] sm:$0xff]
        %v835 = vld [vmem:[#allocation8 + $0x380] sm:$0xff]
        %v836 = vld [vmem:[#allocation8 + $0x388] sm:$0xff]
        %v837 = vld [vmem:[#allocation8 + $0x390] sm:$0xff]
        %v838 = vld [vmem:[#allocation8 + $0x398] sm:$0xff]
        %v839 = vld [vmem:[#allocation8 + $0x3a0] sm:$0xff]
        %v840 = vld [vmem:[#allocation8 + $0x3a8] sm:$0xff]
        %v841 = vld [vmem:[#allocation8 + $0x3b0] sm:$0xff]
        %v842 = vld [vmem:[#allocation8 + $0x3b8] sm:$0xff]
        %v843 = vld [vmem:[#allocation8 + $0x3c0] sm:$0xff]
        %v844 = vld [vmem:[#allocation8 + $0x3c8] sm:$0xff]
        %v845 = vld [vmem:[#allocation8 + $0x3d0] sm:$0xff]
        %v846 = vld [vmem:[#allocation8 + $0x3d8] sm:$0xff]
        %v847 = vld [vmem:[#allocation8 + $0x3e0] sm:$0xff]
        %v848 = vld [vmem:[#allocation8 + $0x3e8] sm:$0xff]
        %v849 = vld [vmem:[#allocation8 + $0x3f0] sm:$0xff]
        %v850 = vld [vmem:[#allocation8 + $0x3f8] sm:$0xff]
        %v851 = vld [vmem:[#allocation8 + $0x400] sm:$0xff]
        %v852 = vld [vmem:[#allocation8 + $0x408] sm:$0xff]
        %v853 = vld [vmem:[#allocation8 + $0x410] sm:$0xff]
        %v854 = vld [vmem:[#allocation8 + $0x418] sm:$0xff]
        %v855 = vld [vmem:[#allocation8 + $0x420] sm:$0xff]
        %v856 = vld [vmem:[#allocation8 + $0x428] sm:$0xff]
        %v857 = vld [vmem:[#allocation8 + $0x430] sm:$0xff]
        %v858 = vld [vmem:[#allocation8 + $0x438] sm:$0xff]
        %v859 = vld [vmem:[#allocation8 + $0x440] sm:$0xff]
        %v860 = vld [vmem:[#allocation8 + $0x448] sm:$0xff]
        %v861 = vld [vmem:[#allocation8 + $0x450] sm:$0xff]
        %v862 = vld [vmem:[#allocation8 + $0x458] sm:$0xff]
        %v863 = vld [vmem:[#allocation8 + $0x460] sm:$0xff]
        %v864 = vld [vmem:[#allocation8 + $0x468] sm:$0xff]
        %v865 = vld [vmem:[#allocation8 + $0x470] sm:$0xff]
        %v866 = vld [vmem:[#allocation8 + $0x478] sm:$0xff]
        %v867 = vld [vmem:[#allocation8 + $0x480] sm:$0xff]
        %v868 = vld [vmem:[#allocation8 + $0x488] sm:$0xff]
        %v869 = vld [vmem:[#allocation8 + $0x490] sm:$0xff]
        %v870 = vld [vmem:[#allocation8 + $0x498] sm:$0xff]
        %v871 = vld [vmem:[#allocation8 + $0x4a0] sm:$0xff]
        %v872 = vld [vmem:[#allocation8 + $0x4a8] sm:$0xff]
        %v873 = vld [vmem:[#allocation8 + $0x4b0] sm:$0xff]
        %v874 = vld [vmem:[#allocation8 + $0x4b8] sm:$0xff]
        %v875 = vld [vmem:[#allocation8 + $0x4c0] sm:$0xff]
        %v876 = vld [vmem:[#allocation8 + $0x4c8] sm:$0xff]
        %v877 = vld [vmem:[#allocation8 + $0x4d0] sm:$0xff]
        %v878 = vld [vmem:[#allocation8 + $0x4d8] sm:$0xff]
        %v879 = vld [vmem:[#allocation8 + $0x4e0] sm:$0xff]
        %v880 = vld [vmem:[#allocation8 + $0x4e8] sm:$0xff]
        %v881 = vld [vmem:[#allocation8 + $0x4f0] sm:$0xff]
        %v882 = vld [vmem:[#allocation8 + $0x4f8] sm:$0xff]
        %v883 = vld [vmem:[#allocation8 + $0x500] sm:$0xff]
        %v884 = vld [vmem:[#allocation8 + $0x508] sm:$0xff]
        %v885 = vld [vmem:[#allocation8 + $0x510] sm:$0xff]
        %v886 = vld [vmem:[#allocation8 + $0x518] sm:$0xff]
        %v887 = vld [vmem:[#allocation8 + $0x520] sm:$0xff]
        %v888 = vld [vmem:[#allocation8 + $0x528] sm:$0xff]
        %v889 = vld [vmem:[#allocation8 + $0x530] sm:$0xff]
        %v890 = vld [vmem:[#allocation8 + $0x538] sm:$0xff]
        %v891 = vld [vmem:[#allocation8 + $0x540] sm:$0xff]
        %v892 = vld [vmem:[#allocation8 + $0x548] sm:$0xff]
        %v893 = vld [vmem:[#allocation8 + $0x550] sm:$0xff]
        %v894 = vld [vmem:[#allocation8 + $0x558] sm:$0xff]
        %v895 = vld [vmem:[#allocation8 + $0x560] sm:$0xff]
        %v896 = vld [vmem:[#allocation8 + $0x568] sm:$0xff]
        %v897 = vld [vmem:[#allocation8 + $0x570] sm:$0xff]
        %v898 = vld [vmem:[#allocation8 + $0x578] sm:$0xff]
        %v899 = vld [vmem:[#allocation8 + $0x580] sm:$0xff]
        %v900 = vld [vmem:[#allocation8 + $0x588] sm:$0xff]
        %v901 = vld [vmem:[#allocation8 + $0x590] sm:$0xff]
        %v902 = vld [vmem:[#allocation8 + $0x598] sm:$0xff]
        %v903 = vld [vmem:[#allocation8 + $0x5a0] sm:$0xff]
        %v904 = vld [vmem:[#allocation8 + $0x5a8] sm:$0xff]
        %v905 = vld [vmem:[#allocation8 + $0x5b0] sm:$0xff]
        %v906 = vld [vmem:[#allocation8 + $0x5b8] sm:$0xff]
        %v907 = vld [vmem:[#allocation8 + $0x5c0] sm:$0xff]
        %v908 = vld [vmem:[#allocation8 + $0x5c8] sm:$0xff]
        %v909 = vld [vmem:[#allocation8 + $0x5d0] sm:$0xff]
        %v910 = vld [vmem:[#allocation8 + $0x5d8] sm:$0xff]
        %v911 = vld [vmem:[#allocation8 + $0x5e0] sm:$0xff]
        %v912 = vld [vmem:[#allocation8 + $0x5e8] sm:$0xff]
        %v913 = vld [vmem:[#allocation8 + $0x5f0] sm:$0xff]
        %v914 = vld [vmem:[#allocation8 + $0x5f8] sm:$0xff]
        %v915 = vld [vmem:[#allocation8 + $0x600] sm:$0xff]
        %v916 = vld [vmem:[#allocation8 + $0x608] sm:$0xff]
        %v917 = vld [vmem:[#allocation8 + $0x610] sm:$0xff]
        %v918 = vld [vmem:[#allocation8 + $0x618] sm:$0xff]
        %v919 = vld [vmem:[#allocation8 + $0x620] sm:$0xff]
        %v920 = vld [vmem:[#allocation8 + $0x628] sm:$0xff]
        %v921 = vld [vmem:[#allocation8 + $0x630] sm:$0xff]
        %v922 = vld [vmem:[#allocation8 + $0x638] sm:$0xff]
        %v923 = vld [vmem:[#allocation8 + $0x640] sm:$0xff]
        %v924 = vld [vmem:[#allocation8 + $0x648] sm:$0xff]
        %v925 = vld [vmem:[#allocation8 + $0x650] sm:$0xff]
        %v926 = vld [vmem:[#allocation8 + $0x658] sm:$0xff]
        %v927 = vld [vmem:[#allocation8 + $0x660] sm:$0xff]
        %v928 = vld [vmem:[#allocation8 + $0x668] sm:$0xff]
        %v929 = vld [vmem:[#allocation8 + $0x670] sm:$0xff]
        %v930 = vld [vmem:[#allocation8 + $0x678] sm:$0xff]
        %v931 = vld [vmem:[#allocation8 + $0x680] sm:$0xff]
        %v932 = vld [vmem:[#allocation8 + $0x688] sm:$0xff]
        %v933 = vld [vmem:[#allocation8 + $0x690] sm:$0xff]
        %v934 = vld [vmem:[#allocation8 + $0x698] sm:$0xff]
        %v935 = vld [vmem:[#allocation8 + $0x6a0] sm:$0xff]
        %v936 = vld [vmem:[#allocation8 + $0x6a8] sm:$0xff]
        %v937 = vld [vmem:[#allocation8 + $0x6b0] sm:$0xff]
        %v938 = vld [vmem:[#allocation8 + $0x6b8] sm:$0xff]
        %v939 = vld [vmem:[#allocation8 + $0x6c0] sm:$0xff]
        %v940 = vld [vmem:[#allocation8 + $0x6c8] sm:$0xff]
        %v941 = vld [vmem:[#allocation8 + $0x6d0] sm:$0xff]
        %v942 = vld [vmem:[#allocation8 + $0x6d8] sm:$0xff]
        %v943 = vld [vmem:[#allocation8 + $0x6e0] sm:$0xff]
        %v944 = vld [vmem:[#allocation8 + $0x6e8] sm:$0xff]
        %v945 = vld [vmem:[#allocation8 + $0x6f0] sm:$0xff]
        %v946 = vld [vmem:[#allocation8 + $0x6f8] sm:$0xff]
        %v947 = vld [vmem:[#allocation8 + $0x700] sm:$0xff]
        %v948 = vld [vmem:[#allocation8 + $0x708] sm:$0xff]
        %v949 = vld [vmem:[#allocation8 + $0x710] sm:$0xff]
        %v950 = vld [vmem:[#allocation8 + $0x718] sm:$0xff]
        %v951 = vld [vmem:[#allocation8 + $0x720] sm:$0xff]
        %v952 = vld [vmem:[#allocation8 + $0x728] sm:$0xff]
        %v953 = vld [vmem:[#allocation8 + $0x730] sm:$0xff]
        %v954 = vld [vmem:[#allocation8 + $0x738] sm:$0xff]
        %v955 = vld [vmem:[#allocation8 + $0x740] sm:$0xff]
        %v956 = vld [vmem:[#allocation8 + $0x748] sm:$0xff]
        %v957 = vld [vmem:[#allocation8 + $0x750] sm:$0xff]
        %v958 = vld [vmem:[#allocation8 + $0x758] sm:$0xff]
        %v959 = vld [vmem:[#allocation8 + $0x760] sm:$0xff]
        %v960 = vld [vmem:[#allocation8 + $0x768] sm:$0xff]
        %v961 = vld [vmem:[#allocation8 + $0x770] sm:$0xff]
        %v962 = vld [vmem:[#allocation8 + $0x778] sm:$0xff]
        %v963 = vld [vmem:[#allocation8 + $0x780] sm:$0xff]
        %v964 = vld [vmem:[#allocation8 + $0x788] sm:$0xff]
        %v965 = vld [vmem:[#allocation8 + $0x790] sm:$0xff]
        %v966 = vld [vmem:[#allocation8 + $0x798] sm:$0xff]
        %v967 = vld [vmem:[#allocation8 + $0x7a0] sm:$0xff]
        %v968 = vld [vmem:[#allocation8 + $0x7a8] sm:$0xff]
        %v969 = vld [vmem:[#allocation8 + $0x7b0] sm:$0xff]
        %v970 = vld [vmem:[#allocation8 + $0x7b8] sm:$0xff]
        %v971 = vld [vmem:[#allocation8 + $0x7c0] sm:$0xff]
        %v972 = vld [vmem:[#allocation8 + $0x7c8] sm:$0xff]
        %v973 = vld [vmem:[#allocation8 + $0x7d0] sm:$0xff]
        %v974 = vld [vmem:[#allocation8 + $0x7d8] sm:$0xff]
        %v975 = vld [vmem:[#allocation8 + $0x7e0] sm:$0xff]
        %v976 = vld [vmem:[#allocation8 + $0x7e8] sm:$0xff]
        %v977 = vld [vmem:[#allocation8 + $0x7f0] sm:$0xff]
        %v978 = vld [vmem:[#allocation8 + $0x7f8] sm:$0xff]
        %v979 = vld [vmem:[#allocation8 + $0x800] sm:$0xff]
        %v980 = vld [vmem:[#allocation8 + $0x808] sm:$0xff]
        %v981 = vld [vmem:[#allocation8 + $0x810] sm:$0xff]
        %v982 = vld [vmem:[#allocation8 + $0x818] sm:$0xff]
        %v983 = vld [vmem:[#allocation8 + $0x820] sm:$0xff]
        %v984 = vld [vmem:[#allocation8 + $0x828] sm:$0xff]
        %v985 = vld [vmem:[#allocation8 + $0x830] sm:$0xff]
        %v986 = vld [vmem:[#allocation8 + $0x838] sm:$0xff]
        %v987 = vld [vmem:[#allocation8 + $0x840] sm:$0xff]
        %v988 = vld [vmem:[#allocation8 + $0x848] sm:$0xff]
        %v989 = vld [vmem:[#allocation8 + $0x850] sm:$0xff]
        %v990 = vld [vmem:[#allocation8 + $0x858] sm:$0xff]
        %v991 = vld [vmem:[#allocation8 + $0x860] sm:$0xff]
        %v992 = vld [vmem:[#allocation8 + $0x868] sm:$0xff]
        %v993 = vld [vmem:[#allocation8 + $0x870] sm:$0xff]
        %v994 = vld [vmem:[#allocation8 + $0x878] sm:$0xff]
        %v995 = vld [vmem:[#allocation8 + $0x880] sm:$0xff]
        %v996 = vld [vmem:[#allocation8 + $0x888] sm:$0xff]
        %v997 = vld [vmem:[#allocation8 + $0x890] sm:$0xff]
        %v998 = vld [vmem:[#allocation8 + $0x898] sm:$0xff]
        %v999 = vld [vmem:[#allocation8 + $0x8a0] sm:$0xff]
        %v1000 = vld [vmem:[#allocation8 + $0x8a8] sm:$0xff]
        %v1001 = vld [vmem:[#allocation8 + $0x8b0] sm:$0xff]
        %v1002 = vld [vmem:[#allocation8 + $0x8b8] sm:$0xff]
        %v1003 = vld [vmem:[#allocation8 + $0x8c0] sm:$0xff]
        %v1004 = vld [vmem:[#allocation8 + $0x8c8] sm:$0xff]
        %v1005 = vld [vmem:[#allocation8 + $0x8d0] sm:$0xff]
        %v1006 = vld [vmem:[#allocation8 + $0x8d8] sm:$0xff]
        %v1007 = vld [vmem:[#allocation8 + $0x8e0] sm:$0xff]
        %v1008 = vld [vmem:[#allocation8 + $0x8e8] sm:$0xff]
        %v1009 = vld [vmem:[#allocation8 + $0x8f0] sm:$0xff]
        %v1010 = vld [vmem:[#allocation8 + $0x8f8] sm:$0xff]
        %v1023 = vunpack.c.l.b16 %v711
        %v1024 = vunpack.c.h.b16 %v711
        %v1025 = vunpack.c.l.b16 %v712
        %v1026 = vunpack.c.h.b16 %v712
        %v1027 = vunpack.c.l.b16 %v713
        %v1028 = vunpack.c.h.b16 %v713
        %v1029 = vunpack.c.l.b16 %v714
        %v1030 = vunpack.c.h.b16 %v714
        %v1031 = vunpack.c.l.b16 %v715
        %v1032 = vunpack.c.h.b16 %v715
        %v1033 = vunpack.c.l.b16 %v716
        %v1034 = vunpack.c.h.b16 %v716
        %v1035 = vunpack.c.l.b16 %v717
        %v1036 = vunpack.c.h.b16 %v717
        %v1037 = vunpack.c.l.b16 %v718
        %v1038 = vunpack.c.h.b16 %v718
        %v1039 = vunpack.c.l.b16 %v719
        %v1040 = vunpack.c.h.b16 %v719
        %v1041 = vunpack.c.l.b16 %v720
        %v1042 = vunpack.c.h.b16 %v720
        %v1043 = vunpack.c.l.b16 %v721
        %v1044 = vunpack.c.h.b16 %v721
        %v1045 = vunpack.c.l.b16 %v722
        %v1046 = vunpack.c.h.b16 %v722
        %v1047 = vpack.c.b16 %v1029, %v1023
        %v1048 = vpack.c.b16 %v1030, %v1024
        %v1049 = vpack.c.b16 %v1031, %v1025
        %v1050 = vpack.c.b16 %v1032, %v1026
        %v1051 = vpack.c.b16 %v1033, %v1027
        %v1052 = vpack.c.b16 %v1034, %v1028
        %v1053 = vpack.c.b16 %v1041, %v1035
        %v1054 = vpack.c.b16 %v1042, %v1036
        %v1055 = vpack.c.b16 %v1043, %v1037
        %v1056 = vpack.c.b16 %v1044, %v1038
        %v1057 = vpack.c.b16 %v1045, %v1039
        %v1058 = vpack.c.b16 %v1046, %v1040
        %v1359 = vunpack.c.l.b16 %v723
        %v1360 = vunpack.c.h.b16 %v723
        %v1361 = vunpack.c.l.b16 %v724
        %v1362 = vunpack.c.h.b16 %v724
        %v1363 = vunpack.c.l.b16 %v725
        %v1364 = vunpack.c.h.b16 %v725
        %v1365 = vunpack.c.l.b16 %v726
        %v1366 = vunpack.c.h.b16 %v726
        %v1367 = vunpack.c.l.b16 %v727
        %v1368 = vunpack.c.h.b16 %v727
        %v1369 = vunpack.c.l.b16 %v728
        %v1370 = vunpack.c.h.b16 %v728
        %v1371 = vunpack.c.l.b16 %v729
        %v1372 = vunpack.c.h.b16 %v729
        %v1373 = vunpack.c.l.b16 %v730
        %v1374 = vunpack.c.h.b16 %v730
        %v1375 = vunpack.c.l.b16 %v731
        %v1376 = vunpack.c.h.b16 %v731
        %v1377 = vunpack.c.l.b16 %v732
        %v1378 = vunpack.c.h.b16 %v732
        %v1379 = vunpack.c.l.b16 %v733
        %v1380 = vunpack.c.h.b16 %v733
        %v1381 = vunpack.c.l.b16 %v734
        %v1382 = vunpack.c.h.b16 %v734
        %v1383 = vunpack.c.l.b16 %v735
        %v1384 = vunpack.c.h.b16 %v735
        %v1385 = vunpack.c.l.b16 %v736
        %v1386 = vunpack.c.h.b16 %v736
        %v1387 = vunpack.c.l.b16 %v737
        %v1388 = vunpack.c.h.b16 %v737
        %v1389 = vunpack.c.l.b16 %v738
        %v1390 = vunpack.c.h.b16 %v738
        %v1391 = vunpack.c.l.b16 %v739
        %v1392 = vunpack.c.h.b16 %v739
        %v1393 = vunpack.c.l.b16 %v740
        %v1394 = vunpack.c.h.b16 %v740
        %v1395 = vunpack.c.l.b16 %v741
        %v1396 = vunpack.c.h.b16 %v741
        %v1397 = vunpack.c.l.b16 %v742
        %v1398 = vunpack.c.h.b16 %v742
        %v1399 = vunpack.c.l.b16 %v743
        %v1400 = vunpack.c.h.b16 %v743
        %v1401 = vunpack.c.l.b16 %v744
        %v1402 = vunpack.c.h.b16 %v744
        %v1403 = vunpack.c.l.b16 %v745
        %v1404 = vunpack.c.h.b16 %v745
        %v1405 = vunpack.c.l.b16 %v746
        %v1406 = vunpack.c.h.b16 %v746
        %v1407 = vunpack.c.l.b16 %v747
        %v1408 = vunpack.c.h.b16 %v747
        %v1409 = vunpack.c.l.b16 %v748
        %v1410 = vunpack.c.h.b16 %v748
        %v1411 = vunpack.c.l.b16 %v749
        %v1412 = vunpack.c.h.b16 %v749
        %v1413 = vunpack.c.l.b16 %v750
        %v1414 = vunpack.c.h.b16 %v750
        %v1415 = vunpack.c.l.b16 %v751
        %v1416 = vunpack.c.h.b16 %v751
        %v1417 = vunpack.c.l.b16 %v752
        %v1418 = vunpack.c.h.b16 %v752
        %v1419 = vunpack.c.l.b16 %v753
        %v1420 = vunpack.c.h.b16 %v753
        %v1421 = vunpack.c.l.b16 %v754
        %v1422 = vunpack.c.h.b16 %v754
        %v1423 = vunpack.c.l.b16 %v755
        %v1424 = vunpack.c.h.b16 %v755
        %v1425 = vunpack.c.l.b16 %v756
        %v1426 = vunpack.c.h.b16 %v756
        %v1427 = vunpack.c.l.b16 %v757
        %v1428 = vunpack.c.h.b16 %v757
        %v1429 = vunpack.c.l.b16 %v758
        %v1430 = vunpack.c.h.b16 %v758
        %v1431 = vunpack.c.l.b16 %v759
        %v1432 = vunpack.c.h.b16 %v759
        %v1433 = vunpack.c.l.b16 %v760
        %v1434 = vunpack.c.h.b16 %v760
        %v1435 = vunpack.c.l.b16 %v761
        %v1436 = vunpack.c.h.b16 %v761
        %v1437 = vunpack.c.l.b16 %v762
        %v1438 = vunpack.c.h.b16 %v762
        %v1439 = vunpack.c.l.b16 %v763
        %v1440 = vunpack.c.h.b16 %v763
        %v1441 = vunpack.c.l.b16 %v764
        %v1442 = vunpack.c.h.b16 %v764
        %v1443 = vunpack.c.l.b16 %v765
        %v1444 = vunpack.c.h.b16 %v765
        %v1445 = vunpack.c.l.b16 %v766
        %v1446 = vunpack.c.h.b16 %v766
        %v1447 = vunpack.c.l.b16 %v767
        %v1448 = vunpack.c.h.b16 %v767
        %v1449 = vunpack.c.l.b16 %v768
        %v1450 = vunpack.c.h.b16 %v768
        %v1451 = vunpack.c.l.b16 %v769
        %v1452 = vunpack.c.h.b16 %v769
        %v1453 = vunpack.c.l.b16 %v770
        %v1454 = vunpack.c.h.b16 %v770
        %v1455 = vunpack.c.l.b16 %v771
        %v1456 = vunpack.c.h.b16 %v771
        %v1457 = vunpack.c.l.b16 %v772
        %v1458 = vunpack.c.h.b16 %v772
        %v1459 = vunpack.c.l.b16 %v773
        %v1460 = vunpack.c.h.b16 %v773
        %v1461 = vunpack.c.l.b16 %v774
        %v1462 = vunpack.c.h.b16 %v774
        %v1463 = vunpack.c.l.b16 %v775
        %v1464 = vunpack.c.h.b16 %v775
        %v1465 = vunpack.c.l.b16 %v776
        %v1466 = vunpack.c.h.b16 %v776
        %v1467 = vunpack.c.l.b16 %v777
        %v1468 = vunpack.c.h.b16 %v777
        %v1469 = vunpack.c.l.b16 %v778
        %v1470 = vunpack.c.h.b16 %v778
        %v1471 = vunpack.c.l.b16 %v779
        %v1472 = vunpack.c.h.b16 %v779
        %v1473 = vunpack.c.l.b16 %v780
        %v1474 = vunpack.c.h.b16 %v780
        %v1475 = vunpack.c.l.b16 %v781
        %v1476 = vunpack.c.h.b16 %v781
        %v1477 = vunpack.c.l.b16 %v782
        %v1478 = vunpack.c.h.b16 %v782
        %v1479 = vunpack.c.l.b16 %v783
        %v1480 = vunpack.c.h.b16 %v783
        %v1481 = vunpack.c.l.b16 %v784
        %v1482 = vunpack.c.h.b16 %v784
        %v1483 = vunpack.c.l.b16 %v785
        %v1484 = vunpack.c.h.b16 %v785
        %v1485 = vunpack.c.l.b16 %v786
        %v1486 = vunpack.c.h.b16 %v786
        %v1487 = vunpack.c.l.b16 %v787
        %v1488 = vunpack.c.h.b16 %v787
        %v1489 = vunpack.c.l.b16 %v788
        %v1490 = vunpack.c.h.b16 %v788
        %v1491 = vunpack.c.l.b16 %v789
        %v1492 = vunpack.c.h.b16 %v789
        %v1493 = vunpack.c.l.b16 %v790
        %v1494 = vunpack.c.h.b16 %v790
        %v1495 = vunpack.c.l.b16 %v791
        %v1496 = vunpack.c.h.b16 %v791
        %v1497 = vunpack.c.l.b16 %v792
        %v1498 = vunpack.c.h.b16 %v792
        %v1499 = vunpack.c.l.b16 %v793
        %v1500 = vunpack.c.h.b16 %v793
        %v1501 = vunpack.c.l.b16 %v794
        %v1502 = vunpack.c.h.b16 %v794
        %v1503 = vunpack.c.l.b16 %v795
        %v1504 = vunpack.c.h.b16 %v795
        %v1505 = vunpack.c.l.b16 %v796
        %v1506 = vunpack.c.h.b16 %v796
        %v1507 = vunpack.c.l.b16 %v797
        %v1508 = vunpack.c.h.b16 %v797
        %v1509 = vunpack.c.l.b16 %v798
        %v1510 = vunpack.c.h.b16 %v798
        %v1511 = vunpack.c.l.b16 %v799
        %v1512 = vunpack.c.h.b16 %v799
        %v1513 = vunpack.c.l.b16 %v800
        %v1514 = vunpack.c.h.b16 %v800
        %v1515 = vunpack.c.l.b16 %v801
        %v1516 = vunpack.c.h.b16 %v801
        %v1517 = vunpack.c.l.b16 %v802
        %v1518 = vunpack.c.h.b16 %v802
        %v1519 = vunpack.c.l.b16 %v803
        %v1520 = vunpack.c.h.b16 %v803
        %v1521 = vunpack.c.l.b16 %v804
        %v1522 = vunpack.c.h.b16 %v804
        %v1523 = vunpack.c.l.b16 %v805
        %v1524 = vunpack.c.h.b16 %v805
        %v1525 = vunpack.c.l.b16 %v806
        %v1526 = vunpack.c.h.b16 %v806
        %v1527 = vunpack.c.l.b16 %v807
        %v1528 = vunpack.c.h.b16 %v807
        %v1529 = vunpack.c.l.b16 %v808
        %v1530 = vunpack.c.h.b16 %v808
        %v1531 = vunpack.c.l.b16 %v809
        %v1532 = vunpack.c.h.b16 %v809
        %v1533 = vunpack.c.l.b16 %v810
        %v1534 = vunpack.c.h.b16 %v810
        %v1535 = vunpack.c.l.b16 %v811
        %v1536 = vunpack.c.h.b16 %v811
        %v1537 = vunpack.c.l.b16 %v812
        %v1538 = vunpack.c.h.b16 %v812
        %v1539 = vunpack.c.l.b16 %v813
        %v1540 = vunpack.c.h.b16 %v813
        %v1541 = vunpack.c.l.b16 %v814
        %v1542 = vunpack.c.h.b16 %v814
        %v1543 = vunpack.c.l.b16 %v815
        %v1544 = vunpack.c.h.b16 %v815
        %v1545 = vunpack.c.l.b16 %v816
        %v1546 = vunpack.c.h.b16 %v816
        %v1547 = vunpack.c.l.b16 %v817
        %v1548 = vunpack.c.h.b16 %v817
        %v1549 = vunpack.c.l.b16 %v818
        %v1550 = vunpack.c.h.b16 %v818
        %v1551 = vunpack.c.l.b16 %v819
        %v1552 = vunpack.c.h.b16 %v819
        %v1553 = vunpack.c.l.b16 %v820
        %v1554 = vunpack.c.h.b16 %v820
        %v1555 = vunpack.c.l.b16 %v821
        %v1556 = vunpack.c.h.b16 %v821
        %v1557 = vunpack.c.l.b16 %v822
        %v1558 = vunpack.c.h.b16 %v822
        %v1559 = vunpack.c.l.b16 %v823
        %v1560 = vunpack.c.h.b16 %v823
        %v1561 = vunpack.c.l.b16 %v824
        %v1562 = vunpack.c.h.b16 %v824
        %v1563 = vunpack.c.l.b16 %v825
        %v1564 = vunpack.c.h.b16 %v825
        %v1565 = vunpack.c.l.b16 %v826
        %v1566 = vunpack.c.h.b16 %v826
        %v1567 = vunpack.c.l.b16 %v827
        %v1568 = vunpack.c.h.b16 %v827
        %v1569 = vunpack.c.l.b16 %v828
        %v1570 = vunpack.c.h.b16 %v828
        %v1571 = vunpack.c.l.b16 %v829
        %v1572 = vunpack.c.h.b16 %v829
        %v1573 = vunpack.c.l.b16 %v830
        %v1574 = vunpack.c.h.b16 %v830
        %v1575 = vunpack.c.l.b16 %v831
        %v1576 = vunpack.c.h.b16 %v831
        %v1577 = vunpack.c.l.b16 %v832
        %v1578 = vunpack.c.h.b16 %v832
        %v1579 = vunpack.c.l.b16 %v833
        %v1580 = vunpack.c.h.b16 %v833
        %v1581 = vunpack.c.l.b16 %v834
        %v1582 = vunpack.c.h.b16 %v834
        %v1583 = vunpack.c.l.b16 %v835
        %v1584 = vunpack.c.h.b16 %v835
        %v1585 = vunpack.c.l.b16 %v836
        %v1586 = vunpack.c.h.b16 %v836
        %v1587 = vunpack.c.l.b16 %v837
        %v1588 = vunpack.c.h.b16 %v837
        %v1589 = vunpack.c.l.b16 %v838
        %v1590 = vunpack.c.h.b16 %v838
        %v1591 = vunpack.c.l.b16 %v839
        %v1592 = vunpack.c.h.b16 %v839
        %v1593 = vunpack.c.l.b16 %v840
        %v1594 = vunpack.c.h.b16 %v840
        %v1595 = vunpack.c.l.b16 %v841
        %v1596 = vunpack.c.h.b16 %v841
        %v1597 = vunpack.c.l.b16 %v842
        %v1598 = vunpack.c.h.b16 %v842
        %v1599 = vunpack.c.l.b16 %v843
        %v1600 = vunpack.c.h.b16 %v843
        %v1601 = vunpack.c.l.b16 %v844
        %v1602 = vunpack.c.h.b16 %v844
        %v1603 = vunpack.c.l.b16 %v845
        %v1604 = vunpack.c.h.b16 %v845
        %v1605 = vunpack.c.l.b16 %v846
        %v1606 = vunpack.c.h.b16 %v846
        %v1607 = vunpack.c.l.b16 %v847
        %v1608 = vunpack.c.h.b16 %v847
        %v1609 = vunpack.c.l.b16 %v848
        %v1610 = vunpack.c.h.b16 %v848
        %v1611 = vunpack.c.l.b16 %v849
        %v1612 = vunpack.c.h.b16 %v849
        %v1613 = vunpack.c.l.b16 %v850
        %v1614 = vunpack.c.h.b16 %v850
        %v1615 = vunpack.c.l.b16 %v851
        %v1616 = vunpack.c.h.b16 %v851
        %v1617 = vunpack.c.l.b16 %v852
        %v1618 = vunpack.c.h.b16 %v852
        %v1619 = vunpack.c.l.b16 %v853
        %v1620 = vunpack.c.h.b16 %v853
        %v1621 = vunpack.c.l.b16 %v854
        %v1622 = vunpack.c.h.b16 %v854
        %v1623 = vunpack.c.l.b16 %v855
        %v1624 = vunpack.c.h.b16 %v855
        %v1625 = vunpack.c.l.b16 %v856
        %v1626 = vunpack.c.h.b16 %v856
        %v1627 = vunpack.c.l.b16 %v857
        %v1628 = vunpack.c.h.b16 %v857
        %v1629 = vunpack.c.l.b16 %v858
        %v1630 = vunpack.c.h.b16 %v858
        %v1631 = vunpack.c.l.b16 %v859
        %v1632 = vunpack.c.h.b16 %v859
        %v1633 = vunpack.c.l.b16 %v860
        %v1634 = vunpack.c.h.b16 %v860
        %v1635 = vunpack.c.l.b16 %v861
        %v1636 = vunpack.c.h.b16 %v861
        %v1637 = vunpack.c.l.b16 %v862
        %v1638 = vunpack.c.h.b16 %v862
        %v1639 = vunpack.c.l.b16 %v863
        %v1640 = vunpack.c.h.b16 %v863
        %v1641 = vunpack.c.l.b16 %v864
        %v1642 = vunpack.c.h.b16 %v864
        %v1643 = vunpack.c.l.b16 %v865
        %v1644 = vunpack.c.h.b16 %v865
        %v1645 = vunpack.c.l.b16 %v866
        %v1646 = vunpack.c.h.b16 %v866
        %v1647 = vunpack.c.l.b16 %v867
        %v1648 = vunpack.c.h.b16 %v867
        %v1649 = vunpack.c.l.b16 %v868
        %v1650 = vunpack.c.h.b16 %v868
        %v1651 = vunpack.c.l.b16 %v869
        %v1652 = vunpack.c.h.b16 %v869
        %v1653 = vunpack.c.l.b16 %v870
        %v1654 = vunpack.c.h.b16 %v870
        %v1655 = vunpack.c.l.b16 %v871
        %v1656 = vunpack.c.h.b16 %v871
        %v1657 = vunpack.c.l.b16 %v872
        %v1658 = vunpack.c.h.b16 %v872
        %v1659 = vunpack.c.l.b16 %v873
        %v1660 = vunpack.c.h.b16 %v873
        %v1661 = vunpack.c.l.b16 %v874
        %v1662 = vunpack.c.h.b16 %v874
        %v1663 = vunpack.c.l.b16 %v875
        %v1664 = vunpack.c.h.b16 %v875
        %v1665 = vunpack.c.l.b16 %v876
        %v1666 = vunpack.c.h.b16 %v876
        %v1667 = vunpack.c.l.b16 %v877
        %v1668 = vunpack.c.h.b16 %v877
        %v1669 = vunpack.c.l.b16 %v878
        %v1670 = vunpack.c.h.b16 %v878
        %v1671 = vunpack.c.l.b16 %v879
        %v1672 = vunpack.c.h.b16 %v879
        %v1673 = vunpack.c.l.b16 %v880
        %v1674 = vunpack.c.h.b16 %v880
        %v1675 = vunpack.c.l.b16 %v881
        %v1676 = vunpack.c.h.b16 %v881
        %v1677 = vunpack.c.l.b16 %v882
        %v1678 = vunpack.c.h.b16 %v882
        %v1679 = vunpack.c.l.b16 %v883
        %v1680 = vunpack.c.h.b16 %v883
        %v1681 = vunpack.c.l.b16 %v884
        %v1682 = vunpack.c.h.b16 %v884
        %v1683 = vunpack.c.l.b16 %v885
        %v1684 = vunpack.c.h.b16 %v885
        %v1685 = vunpack.c.l.b16 %v886
        %v1686 = vunpack.c.h.b16 %v886
        %v1687 = vunpack.c.l.b16 %v887
        %v1688 = vunpack.c.h.b16 %v887
        %v1689 = vunpack.c.l.b16 %v888
        %v1690 = vunpack.c.h.b16 %v888
        %v1691 = vunpack.c.l.b16 %v889
        %v1692 = vunpack.c.h.b16 %v889
        %v1693 = vunpack.c.l.b16 %v890
        %v1694 = vunpack.c.h.b16 %v890
        %v1695 = vunpack.c.l.b16 %v891
        %v1696 = vunpack.c.h.b16 %v891
        %v1697 = vunpack.c.l.b16 %v892
        %v1698 = vunpack.c.h.b16 %v892
        %v1699 = vunpack.c.l.b16 %v893
        %v1700 = vunpack.c.h.b16 %v893
        %v1701 = vunpack.c.l.b16 %v894
        %v1702 = vunpack.c.h.b16 %v894
        %v1703 = vunpack.c.l.b16 %v895
        %v1704 = vunpack.c.h.b16 %v895
        %v1705 = vunpack.c.l.b16 %v896
        %v1706 = vunpack.c.h.b16 %v896
        %v1707 = vunpack.c.l.b16 %v897
        %v1708 = vunpack.c.h.b16 %v897
        %v1709 = vunpack.c.l.b16 %v898
        %v1710 = vunpack.c.h.b16 %v898
        %v1711 = vunpack.c.l.b16 %v899
        %v1712 = vunpack.c.h.b16 %v899
        %v1713 = vunpack.c.l.b16 %v900
        %v1714 = vunpack.c.h.b16 %v900
        %v1715 = vunpack.c.l.b16 %v901
        %v1716 = vunpack.c.h.b16 %v901
        %v1717 = vunpack.c.l.b16 %v902
        %v1718 = vunpack.c.h.b16 %v902
        %v1719 = vunpack.c.l.b16 %v903
        %v1720 = vunpack.c.h.b16 %v903
        %v1721 = vunpack.c.l.b16 %v904
        %v1722 = vunpack.c.h.b16 %v904
        %v1723 = vunpack.c.l.b16 %v905
        %v1724 = vunpack.c.h.b16 %v905
        %v1725 = vunpack.c.l.b16 %v906
        %v1726 = vunpack.c.h.b16 %v906
        %v1727 = vunpack.c.l.b16 %v907
        %v1728 = vunpack.c.h.b16 %v907
        %v1729 = vunpack.c.l.b16 %v908
        %v1730 = vunpack.c.h.b16 %v908
        %v1731 = vunpack.c.l.b16 %v909
        %v1732 = vunpack.c.h.b16 %v909
        %v1733 = vunpack.c.l.b16 %v910
        %v1734 = vunpack.c.h.b16 %v910
        %v1735 = vunpack.c.l.b16 %v911
        %v1736 = vunpack.c.h.b16 %v911
        %v1737 = vunpack.c.l.b16 %v912
        %v1738 = vunpack.c.h.b16 %v912
        %v1739 = vunpack.c.l.b16 %v913
        %v1740 = vunpack.c.h.b16 %v913
        %v1741 = vunpack.c.l.b16 %v914
        %v1742 = vunpack.c.h.b16 %v914
        %v1743 = vunpack.c.l.b16 %v915
        %v1744 = vunpack.c.h.b16 %v915
        %v1745 = vunpack.c.l.b16 %v916
        %v1746 = vunpack.c.h.b16 %v916
        %v1747 = vunpack.c.l.b16 %v917
        %v1748 = vunpack.c.h.b16 %v917
        %v1749 = vunpack.c.l.b16 %v918
        %v1750 = vunpack.c.h.b16 %v918
        %v1751 = vunpack.c.l.b16 %v919
        %v1752 = vunpack.c.h.b16 %v919
        %v1753 = vunpack.c.l.b16 %v920
        %v1754 = vunpack.c.h.b16 %v920
        %v1755 = vunpack.c.l.b16 %v921
        %v1756 = vunpack.c.h.b16 %v921
        %v1757 = vunpack.c.l.b16 %v922
        %v1758 = vunpack.c.h.b16 %v922
        %v1759 = vunpack.c.l.b16 %v923
        %v1760 = vunpack.c.h.b16 %v923
        %v1761 = vunpack.c.l.b16 %v924
        %v1762 = vunpack.c.h.b16 %v924
        %v1763 = vunpack.c.l.b16 %v925
        %v1764 = vunpack.c.h.b16 %v925
        %v1765 = vunpack.c.l.b16 %v926
        %v1766 = vunpack.c.h.b16 %v926
        %v1767 = vunpack.c.l.b16 %v927
        %v1768 = vunpack.c.h.b16 %v927
        %v1769 = vunpack.c.l.b16 %v928
        %v1770 = vunpack.c.h.b16 %v928
        %v1771 = vunpack.c.l.b16 %v929
        %v1772 = vunpack.c.h.b16 %v929
        %v1773 = vunpack.c.l.b16 %v930
        %v1774 = vunpack.c.h.b16 %v930
        %v1775 = vunpack.c.l.b16 %v931
        %v1776 = vunpack.c.h.b16 %v931
        %v1777 = vunpack.c.l.b16 %v932
        %v1778 = vunpack.c.h.b16 %v932
        %v1779 = vunpack.c.l.b16 %v933
        %v1780 = vunpack.c.h.b16 %v933
        %v1781 = vunpack.c.l.b16 %v934
        %v1782 = vunpack.c.h.b16 %v934
        %v1783 = vunpack.c.l.b16 %v935
        %v1784 = vunpack.c.h.b16 %v935
        %v1785 = vunpack.c.l.b16 %v936
        %v1786 = vunpack.c.h.b16 %v936
        %v1787 = vunpack.c.l.b16 %v937
        %v1788 = vunpack.c.h.b16 %v937
        %v1789 = vunpack.c.l.b16 %v938
        %v1790 = vunpack.c.h.b16 %v938
        %v1791 = vunpack.c.l.b16 %v939
        %v1792 = vunpack.c.h.b16 %v939
        %v1793 = vunpack.c.l.b16 %v940
        %v1794 = vunpack.c.h.b16 %v940
        %v1795 = vunpack.c.l.b16 %v941
        %v1796 = vunpack.c.h.b16 %v941
        %v1797 = vunpack.c.l.b16 %v942
        %v1798 = vunpack.c.h.b16 %v942
        %v1799 = vunpack.c.l.b16 %v943
        %v1800 = vunpack.c.h.b16 %v943
        %v1801 = vunpack.c.l.b16 %v944
        %v1802 = vunpack.c.h.b16 %v944
        %v1803 = vunpack.c.l.b16 %v945
        %v1804 = vunpack.c.h.b16 %v945
        %v1805 = vunpack.c.l.b16 %v946
        %v1806 = vunpack.c.h.b16 %v946
        %v1807 = vunpack.c.l.b16 %v947
        %v1808 = vunpack.c.h.b16 %v947
        %v1809 = vunpack.c.l.b16 %v948
        %v1810 = vunpack.c.h.b16 %v948
        %v1811 = vunpack.c.l.b16 %v949
        %v1812 = vunpack.c.h.b16 %v949
        %v1813 = vunpack.c.l.b16 %v950
        %v1814 = vunpack.c.h.b16 %v950
        %v1815 = vunpack.c.l.b16 %v951
        %v1816 = vunpack.c.h.b16 %v951
        %v1817 = vunpack.c.l.b16 %v952
        %v1818 = vunpack.c.h.b16 %v952
        %v1819 = vunpack.c.l.b16 %v953
        %v1820 = vunpack.c.h.b16 %v953
        %v1821 = vunpack.c.l.b16 %v954
        %v1822 = vunpack.c.h.b16 %v954
        %v1823 = vunpack.c.l.b16 %v955
        %v1824 = vunpack.c.h.b16 %v955
        %v1825 = vunpack.c.l.b16 %v956
        %v1826 = vunpack.c.h.b16 %v956
        %v1827 = vunpack.c.l.b16 %v957
        %v1828 = vunpack.c.h.b16 %v957
        %v1829 = vunpack.c.l.b16 %v958
        %v1830 = vunpack.c.h.b16 %v958
        %v1831 = vunpack.c.l.b16 %v959
        %v1832 = vunpack.c.h.b16 %v959
        %v1833 = vunpack.c.l.b16 %v960
        %v1834 = vunpack.c.h.b16 %v960
        %v1835 = vunpack.c.l.b16 %v961
        %v1836 = vunpack.c.h.b16 %v961
        %v1837 = vunpack.c.l.b16 %v962
        %v1838 = vunpack.c.h.b16 %v962
        %v1839 = vunpack.c.l.b16 %v963
        %v1840 = vunpack.c.h.b16 %v963
        %v1841 = vunpack.c.l.b16 %v964
        %v1842 = vunpack.c.h.b16 %v964
        %v1843 = vunpack.c.l.b16 %v965
        %v1844 = vunpack.c.h.b16 %v965
        %v1845 = vunpack.c.l.b16 %v966
        %v1846 = vunpack.c.h.b16 %v966
        %v1847 = vunpack.c.l.b16 %v967
        %v1848 = vunpack.c.h.b16 %v967
        %v1849 = vunpack.c.l.b16 %v968
        %v1850 = vunpack.c.h.b16 %v968
        %v1851 = vunpack.c.l.b16 %v969
        %v1852 = vunpack.c.h.b16 %v969
        %v1853 = vunpack.c.l.b16 %v970
        %v1854 = vunpack.c.h.b16 %v970
        %v1855 = vunpack.c.l.b16 %v971
        %v1856 = vunpack.c.h.b16 %v971
        %v1857 = vunpack.c.l.b16 %v972
        %v1858 = vunpack.c.h.b16 %v972
        %v1859 = vunpack.c.l.b16 %v973
        %v1860 = vunpack.c.h.b16 %v973
        %v1861 = vunpack.c.l.b16 %v974
        %v1862 = vunpack.c.h.b16 %v974
        %v1863 = vunpack.c.l.b16 %v975
        %v1864 = vunpack.c.h.b16 %v975
        %v1865 = vunpack.c.l.b16 %v976
        %v1866 = vunpack.c.h.b16 %v976
        %v1867 = vunpack.c.l.b16 %v977
        %v1868 = vunpack.c.h.b16 %v977
        %v1869 = vunpack.c.l.b16 %v978
        %v1870 = vunpack.c.h.b16 %v978
        %v1871 = vunpack.c.l.b16 %v979
        %v1872 = vunpack.c.h.b16 %v979
        %v1873 = vunpack.c.l.b16 %v980
        %v1874 = vunpack.c.h.b16 %v980
        %v1875 = vunpack.c.l.b16 %v981
        %v1876 = vunpack.c.h.b16 %v981
        %v1877 = vunpack.c.l.b16 %v982
        %v1878 = vunpack.c.h.b16 %v982
        %v1879 = vunpack.c.l.b16 %v983
        %v1880 = vunpack.c.h.b16 %v983
        %v1881 = vunpack.c.l.b16 %v984
        %v1882 = vunpack.c.h.b16 %v984
        %v1883 = vunpack.c.l.b16 %v985
        %v1884 = vunpack.c.h.b16 %v985
        %v1885 = vunpack.c.l.b16 %v986
        %v1886 = vunpack.c.h.b16 %v986
        %v1887 = vunpack.c.l.b16 %v987
        %v1888 = vunpack.c.h.b16 %v987
        %v1889 = vunpack.c.l.b16 %v988
        %v1890 = vunpack.c.h.b16 %v988
        %v1891 = vunpack.c.l.b16 %v989
        %v1892 = vunpack.c.h.b16 %v989
        %v1893 = vunpack.c.l.b16 %v990
        %v1894 = vunpack.c.h.b16 %v990
        %v1895 = vunpack.c.l.b16 %v991
        %v1896 = vunpack.c.h.b16 %v991
        %v1897 = vunpack.c.l.b16 %v992
        %v1898 = vunpack.c.h.b16 %v992
        %v1899 = vunpack.c.l.b16 %v993
        %v1900 = vunpack.c.h.b16 %v993
        %v1901 = vunpack.c.l.b16 %v994
        %v1902 = vunpack.c.h.b16 %v994
        %v1903 = vunpack.c.l.b16 %v995
        %v1904 = vunpack.c.h.b16 %v995
        %v1905 = vunpack.c.l.b16 %v996
        %v1906 = vunpack.c.h.b16 %v996
        %v1907 = vunpack.c.l.b16 %v997
        %v1908 = vunpack.c.h.b16 %v997
        %v1909 = vunpack.c.l.b16 %v998
        %v1910 = vunpack.c.h.b16 %v998
        %v1911 = vunpack.c.l.b16 %v999
        %v1912 = vunpack.c.h.b16 %v999
        %v1913 = vunpack.c.l.b16 %v1000
        %v1914 = vunpack.c.h.b16 %v1000
        %v1915 = vunpack.c.l.b16 %v1001
        %v1916 = vunpack.c.h.b16 %v1001
        %v1917 = vunpack.c.l.b16 %v1002
        %v1918 = vunpack.c.h.b16 %v1002
        %v1919 = vunpack.c.l.b16 %v1003
        %v1920 = vunpack.c.h.b16 %v1003
        %v1921 = vunpack.c.l.b16 %v1004
        %v1922 = vunpack.c.h.b16 %v1004
        %v1923 = vunpack.c.l.b16 %v1005
        %v1924 = vunpack.c.h.b16 %v1005
        %v1925 = vunpack.c.l.b16 %v1006
        %v1926 = vunpack.c.h.b16 %v1006
        %v1927 = vunpack.c.l.b16 %v1007
        %v1928 = vunpack.c.h.b16 %v1007
        %v1929 = vunpack.c.l.b16 %v1008
        %v1930 = vunpack.c.h.b16 %v1008
        %v1931 = vunpack.c.l.b16 %v1009
        %v1932 = vunpack.c.h.b16 %v1009
        %v1933 = vunpack.c.l.b16 %v1010
        %v1934 = vunpack.c.h.b16 %v1010
        %v1935 = vpack.c.b16 %v1365, %v1359
        %v1936 = vpack.c.b16 %v1366, %v1360
        %v1937 = vpack.c.b16 %v1367, %v1361
        %v1938 = vpack.c.b16 %v1368, %v1362
        %v1939 = vpack.c.b16 %v1369, %v1363
        %v1940 = vpack.c.b16 %v1370, %v1364
        %v1941 = vpack.c.b16 %v1377, %v1371
        %v1942 = vpack.c.b16 %v1378, %v1372
        %v1943 = vpack.c.b16 %v1379, %v1373
        %v1944 = vpack.c.b16 %v1380, %v1374
        %v1945 = vpack.c.b16 %v1381, %v1375
        %v1946 = vpack.c.b16 %v1382, %v1376
        %v1947 = vpack.c.b16 %v1389, %v1383
        %v1948 = vpack.c.b16 %v1390, %v1384
        %v1949 = vpack.c.b16 %v1391, %v1385
        %v1950 = vpack.c.b16 %v1392, %v1386
        %v1951 = vpack.c.b16 %v1393, %v1387
        %v1952 = vpack.c.b16 %v1394, %v1388
        %v1953 = vpack.c.b16 %v1401, %v1395
        %v1954 = vpack.c.b16 %v1402, %v1396
        %v1955 = vpack.c.b16 %v1403, %v1397
        %v1956 = vpack.c.b16 %v1404, %v1398
        %v1957 = vpack.c.b16 %v1405, %v1399
        %v1958 = vpack.c.b16 %v1406, %v1400
        %v1959 = vpack.c.b16 %v1413, %v1407
        %v1960 = vpack.c.b16 %v1414, %v1408
        %v1961 = vpack.c.b16 %v1415, %v1409
        %v1962 = vpack.c.b16 %v1416, %v1410
        %v1963 = vpack.c.b16 %v1417, %v1411
        %v1964 = vpack.c.b16 %v1418, %v1412
        %v1965 = vpack.c.b16 %v1425, %v1419
        %v1966 = vpack.c.b16 %v1426, %v1420
        %v1967 = vpack.c.b16 %v1427, %v1421
        %v1968 = vpack.c.b16 %v1428, %v1422
        %v1969 = vpack.c.b16 %v1429, %v1423
        %v1970 = vpack.c.b16 %v1430, %v1424
        %v1971 = vpack.c.b16 %v1437, %v1431
        %v1972 = vpack.c.b16 %v1438, %v1432
        %v1973 = vpack.c.b16 %v1439, %v1433
        %v1974 = vpack.c.b16 %v1440, %v1434
        %v1975 = vpack.c.b16 %v1441, %v1435
        %v1976 = vpack.c.b16 %v1442, %v1436
        %v1977 = vpack.c.b16 %v1449, %v1443
        %v1978 = vpack.c.b16 %v1450, %v1444
        %v1979 = vpack.c.b16 %v1451, %v1445
        %v1980 = vpack.c.b16 %v1452, %v1446
        %v1981 = vpack.c.b16 %v1453, %v1447
        %v1982 = vpack.c.b16 %v1454, %v1448
        %v1983 = vpack.c.b16 %v1461, %v1455
        %v1984 = vpack.c.b16 %v1462, %v1456
        %v1985 = vpack.c.b16 %v1463, %v1457
        %v1986 = vpack.c.b16 %v1464, %v1458
        %v1987 = vpack.c.b16 %v1465, %v1459
        %v1988 = vpack.c.b16 %v1466, %v1460
        %v1989 = vpack.c.b16 %v1473, %v1467
        %v1990 = vpack.c.b16 %v1474, %v1468
        %v1991 = vpack.c.b16 %v1475, %v1469
        %v1992 = vpack.c.b16 %v1476, %v1470
        %v1993 = vpack.c.b16 %v1477, %v1471
        %v1994 = vpack.c.b16 %v1478, %v1472
        %v1995 = vpack.c.b16 %v1485, %v1479
        %v1996 = vpack.c.b16 %v1486, %v1480
        %v1997 = vpack.c.b16 %v1487, %v1481
        %v1998 = vpack.c.b16 %v1488, %v1482
        %v1999 = vpack.c.b16 %v1489, %v1483
        %v2000 = vpack.c.b16 %v1490, %v1484
        %v2001 = vpack.c.b16 %v1497, %v1491
        %v2002 = vpack.c.b16 %v1498, %v1492
        %v2003 = vpack.c.b16 %v1499, %v1493
        %v2004 = vpack.c.b16 %v1500, %v1494
        %v2005 = vpack.c.b16 %v1501, %v1495
        %v2006 = vpack.c.b16 %v1502, %v1496
        %v2007 = vpack.c.b16 %v1509, %v1503
        %v2008 = vpack.c.b16 %v1510, %v1504
        %v2009 = vpack.c.b16 %v1511, %v1505
        %v2010 = vpack.c.b16 %v1512, %v1506
        %v2011 = vpack.c.b16 %v1513, %v1507
        %v2012 = vpack.c.b16 %v1514, %v1508
        %v2013 = vpack.c.b16 %v1521, %v1515
        %v2014 = vpack.c.b16 %v1522, %v1516
        %v2015 = vpack.c.b16 %v1523, %v1517
        %v2016 = vpack.c.b16 %v1524, %v1518
        %v2017 = vpack.c.b16 %v1525, %v1519
        %v2018 = vpack.c.b16 %v1526, %v1520
        %v2019 = vpack.c.b16 %v1533, %v1527
        %v2020 = vpack.c.b16 %v1534, %v1528
        %v2021 = vpack.c.b16 %v1535, %v1529
        %v2022 = vpack.c.b16 %v1536, %v1530
        %v2023 = vpack.c.b16 %v1537, %v1531
        %v2024 = vpack.c.b16 %v1538, %v1532
        %v2025 = vpack.c.b16 %v1545, %v1539
        %v2026 = vpack.c.b16 %v1546, %v1540
        %v2027 = vpack.c.b16 %v1547, %v1541
        %v2028 = vpack.c.b16 %v1548, %v1542
        %v2029 = vpack.c.b16 %v1549, %v1543
        %v2030 = vpack.c.b16 %v1550, %v1544
        %v2031 = vpack.c.b16 %v1557, %v1551
        %v2032 = vpack.c.b16 %v1558, %v1552
        %v2033 = vpack.c.b16 %v1559, %v1553
        %v2034 = vpack.c.b16 %v1560, %v1554
        %v2035 = vpack.c.b16 %v1561, %v1555
        %v2036 = vpack.c.b16 %v1562, %v1556
        %v2037 = vpack.c.b16 %v1569, %v1563
        %v2038 = vpack.c.b16 %v1570, %v1564
        %v2039 = vpack.c.b16 %v1571, %v1565
        %v2040 = vpack.c.b16 %v1572, %v1566
        %v2041 = vpack.c.b16 %v1573, %v1567
        %v2042 = vpack.c.b16 %v1574, %v1568
        %v2043 = vpack.c.b16 %v1581, %v1575
        %v2044 = vpack.c.b16 %v1582, %v1576
        %v2045 = vpack.c.b16 %v1583, %v1577
        %v2046 = vpack.c.b16 %v1584, %v1578
        %v2047 = vpack.c.b16 %v1585, %v1579
        %v2048 = vpack.c.b16 %v1586, %v1580
        %v2049 = vpack.c.b16 %v1593, %v1587
        %v2050 = vpack.c.b16 %v1594, %v1588
        %v2051 = vpack.c.b16 %v1595, %v1589
        %v2052 = vpack.c.b16 %v1596, %v1590
        %v2053 = vpack.c.b16 %v1597, %v1591
        %v2054 = vpack.c.b16 %v1598, %v1592
        %v2055 = vpack.c.b16 %v1605, %v1599
        %v2056 = vpack.c.b16 %v1606, %v1600
        %v2057 = vpack.c.b16 %v1607, %v1601
        %v2058 = vpack.c.b16 %v1608, %v1602
        %v2059 = vpack.c.b16 %v1609, %v1603
        %v2060 = vpack.c.b16 %v1610, %v1604
        %v2061 = vpack.c.b16 %v1617, %v1611
        %v2062 = vpack.c.b16 %v1618, %v1612
        %v2063 = vpack.c.b16 %v1619, %v1613
        %v2064 = vpack.c.b16 %v1620, %v1614
        %v2065 = vpack.c.b16 %v1621, %v1615
        %v2066 = vpack.c.b16 %v1622, %v1616
        %v2067 = vpack.c.b16 %v1629, %v1623
        %v2068 = vpack.c.b16 %v1630, %v1624
        %v2069 = vpack.c.b16 %v1631, %v1625
        %v2070 = vpack.c.b16 %v1632, %v1626
        %v2071 = vpack.c.b16 %v1633, %v1627
        %v2072 = vpack.c.b16 %v1634, %v1628
        %v2073 = vpack.c.b16 %v1641, %v1635
        %v2074 = vpack.c.b16 %v1642, %v1636
        %v2075 = vpack.c.b16 %v1643, %v1637
        %v2076 = vpack.c.b16 %v1644, %v1638
        %v2077 = vpack.c.b16 %v1645, %v1639
        %v2078 = vpack.c.b16 %v1646, %v1640
        %v2079 = vpack.c.b16 %v1653, %v1647
        %v2080 = vpack.c.b16 %v1654, %v1648
        %v2081 = vpack.c.b16 %v1655, %v1649
        %v2082 = vpack.c.b16 %v1656, %v1650
        %v2083 = vpack.c.b16 %v1657, %v1651
        %v2084 = vpack.c.b16 %v1658, %v1652
        %v2085 = vpack.c.b16 %v1665, %v1659
        %v2086 = vpack.c.b16 %v1666, %v1660
        %v2087 = vpack.c.b16 %v1667, %v1661
        %v2088 = vpack.c.b16 %v1668, %v1662
        %v2089 = vpack.c.b16 %v1669, %v1663
        %v2090 = vpack.c.b16 %v1670, %v1664
        %v2091 = vpack.c.b16 %v1677, %v1671
        %v2092 = vpack.c.b16 %v1678, %v1672
        %v2093 = vpack.c.b16 %v1679, %v1673
        %v2094 = vpack.c.b16 %v1680, %v1674
        %v2095 = vpack.c.b16 %v1681, %v1675
        %v2096 = vpack.c.b16 %v1682, %v1676
        %v2097 = vpack.c.b16 %v1689, %v1683
        %v2098 = vpack.c.b16 %v1690, %v1684
        %v2099 = vpack.c.b16 %v1691, %v1685
        %v2100 = vpack.c.b16 %v1692, %v1686
        %v2101 = vpack.c.b16 %v1693, %v1687
        %v2102 = vpack.c.b16 %v1694, %v1688
        %v2103 = vpack.c.b16 %v1701, %v1695
        %v2104 = vpack.c.b16 %v1702, %v1696
        %v2105 = vpack.c.b16 %v1703, %v1697
        %v2106 = vpack.c.b16 %v1704, %v1698
        %v2107 = vpack.c.b16 %v1705, %v1699
        %v2108 = vpack.c.b16 %v1706, %v1700
        %v2109 = vpack.c.b16 %v1713, %v1707
        %v2110 = vpack.c.b16 %v1714, %v1708
        %v2111 = vpack.c.b16 %v1715, %v1709
        %v2112 = vpack.c.b16 %v1716, %v1710
        %v2113 = vpack.c.b16 %v1717, %v1711
        %v2114 = vpack.c.b16 %v1718, %v1712
        %v2115 = vpack.c.b16 %v1725, %v1719
        %v2116 = vpack.c.b16 %v1726, %v1720
        %v2117 = vpack.c.b16 %v1727, %v1721
        %v2118 = vpack.c.b16 %v1728, %v1722
        %v2119 = vpack.c.b16 %v1729, %v1723
        %v2120 = vpack.c.b16 %v1730, %v1724
        %v2121 = vpack.c.b16 %v1737, %v1731
        %v2122 = vpack.c.b16 %v1738, %v1732
        %v2123 = vpack.c.b16 %v1739, %v1733
        %v2124 = vpack.c.b16 %v1740, %v1734
        %v2125 = vpack.c.b16 %v1741, %v1735
        %v2126 = vpack.c.b16 %v1742, %v1736
        %v2127 = vpack.c.b16 %v1749, %v1743
        %v2128 = vpack.c.b16 %v1750, %v1744
        %v2129 = vpack.c.b16 %v1751, %v1745
        %v2130 = vpack.c.b16 %v1752, %v1746
        %v2131 = vpack.c.b16 %v1753, %v1747
        %v2132 = vpack.c.b16 %v1754, %v1748
        %v2133 = vpack.c.b16 %v1761, %v1755
        %v2134 = vpack.c.b16 %v1762, %v1756
        %v2135 = vpack.c.b16 %v1763, %v1757
        %v2136 = vpack.c.b16 %v1764, %v1758
        %v2137 = vpack.c.b16 %v1765, %v1759
        %v2138 = vpack.c.b16 %v1766, %v1760
        %v2139 = vpack.c.b16 %v1773, %v1767
        %v2140 = vpack.c.b16 %v1774, %v1768
        %v2141 = vpack.c.b16 %v1775, %v1769
        %v2142 = vpack.c.b16 %v1776, %v1770
        %v2143 = vpack.c.b16 %v1777, %v1771
        %v2144 = vpack.c.b16 %v1778, %v1772
        %v2145 = vpack.c.b16 %v1785, %v1779
        %v2146 = vpack.c.b16 %v1786, %v1780
        %v2147 = vpack.c.b16 %v1787, %v1781
        %v2148 = vpack.c.b16 %v1788, %v1782
        %v2149 = vpack.c.b16 %v1789, %v1783
        %v2150 = vpack.c.b16 %v1790, %v1784
        %v2151 = vpack.c.b16 %v1797, %v1791
        %v2152 = vpack.c.b16 %v1798, %v1792
        %v2153 = vpack.c.b16 %v1799, %v1793
        %v2154 = vpack.c.b16 %v1800, %v1794
        %v2155 = vpack.c.b16 %v1801, %v1795
        %v2156 = vpack.c.b16 %v1802, %v1796
        %v2157 = vpack.c.b16 %v1809, %v1803
        %v2158 = vpack.c.b16 %v1810, %v1804
        %v2159 = vpack.c.b16 %v1811, %v1805
        %v2160 = vpack.c.b16 %v1812, %v1806
        %v2161 = vpack.c.b16 %v1813, %v1807
        %v2162 = vpack.c.b16 %v1814, %v1808
        %v2163 = vpack.c.b16 %v1821, %v1815
        %v2164 = vpack.c.b16 %v1822, %v1816
        %v2165 = vpack.c.b16 %v1823, %v1817
        %v2166 = vpack.c.b16 %v1824, %v1818
        %v2167 = vpack.c.b16 %v1825, %v1819
        %v2168 = vpack.c.b16 %v1826, %v1820
        %v2169 = vpack.c.b16 %v1833, %v1827
        %v2170 = vpack.c.b16 %v1834, %v1828
        %v2171 = vpack.c.b16 %v1835, %v1829
        %v2172 = vpack.c.b16 %v1836, %v1830
        %v2173 = vpack.c.b16 %v1837, %v1831
        %v2174 = vpack.c.b16 %v1838, %v1832
        %v2175 = vpack.c.b16 %v1845, %v1839
        %v2176 = vpack.c.b16 %v1846, %v1840
        %v2177 = vpack.c.b16 %v1847, %v1841
        %v2178 = vpack.c.b16 %v1848, %v1842
        %v2179 = vpack.c.b16 %v1849, %v1843
        %v2180 = vpack.c.b16 %v1850, %v1844
        %v2181 = vpack.c.b16 %v1857, %v1851
        %v2182 = vpack.c.b16 %v1858, %v1852
        %v2183 = vpack.c.b16 %v1859, %v1853
        %v2184 = vpack.c.b16 %v1860, %v1854
        %v2185 = vpack.c.b16 %v1861, %v1855
        %v2186 = vpack.c.b16 %v1862, %v1856
        %v2187 = vpack.c.b16 %v1869, %v1863
        %v2188 = vpack.c.b16 %v1870, %v1864
        %v2189 = vpack.c.b16 %v1871, %v1865
        %v2190 = vpack.c.b16 %v1872, %v1866
        %v2191 = vpack.c.b16 %v1873, %v1867
        %v2192 = vpack.c.b16 %v1874, %v1868
        %v2193 = vpack.c.b16 %v1881, %v1875
        %v2194 = vpack.c.b16 %v1882, %v1876
        %v2195 = vpack.c.b16 %v1883, %v1877
        %v2196 = vpack.c.b16 %v1884, %v1878
        %v2197 = vpack.c.b16 %v1885, %v1879
        %v2198 = vpack.c.b16 %v1886, %v1880
        %v2199 = vpack.c.b16 %v1893, %v1887
        %v2200 = vpack.c.b16 %v1894, %v1888
        %v2201 = vpack.c.b16 %v1895, %v1889
        %v2202 = vpack.c.b16 %v1896, %v1890
        %v2203 = vpack.c.b16 %v1897, %v1891
        %v2204 = vpack.c.b16 %v1898, %v1892
        %v2205 = vpack.c.b16 %v1905, %v1899
        %v2206 = vpack.c.b16 %v1906, %v1900
        %v2207 = vpack.c.b16 %v1907, %v1901
        %v2208 = vpack.c.b16 %v1908, %v1902
        %v2209 = vpack.c.b16 %v1909, %v1903
        %v2210 = vpack.c.b16 %v1910, %v1904
        %v2211 = vpack.c.b16 %v1917, %v1911
        %v2212 = vpack.c.b16 %v1918, %v1912
        %v2213 = vpack.c.b16 %v1919, %v1913
        %v2214 = vpack.c.b16 %v1920, %v1914
        %v2215 = vpack.c.b16 %v1921, %v1915
        %v2216 = vpack.c.b16 %v1922, %v1916
        %v2217 = vpack.c.b16 %v1929, %v1923
        %v2218 = vpack.c.b16 %v1930, %v1924
        %v2219 = vpack.c.b16 %v1931, %v1925
        %v2220 = vpack.c.b16 %v1932, %v1926
        %v2221 = vpack.c.b16 %v1933, %v1927
        %v2222 = vpack.c.b16 %v1934, %v1928
        %2511 = vmatprep.subr.bf16.mxu0 %v1936
        %2512 = vmatpush1.bf16.msra.mxu0 %v1935
        %2513 = vmatprep.subr.bf16.mxu0 %v1942
        %2514 = vmatpush1.bf16.msra.mxu0 %v1941
        %2515 = vmatprep.subr.bf16.mxu0 %v1948
        %2516 = vmatpush1.bf16.msra.mxu0 %v1947
        %2517 = vmatprep.subr.bf16.mxu0 %v1954
        %2518 = vmatpush1.bf16.msra.mxu0 %v1953
        %2519 = vmatprep.subr.bf16.mxu0 %v1960
        %2520 = vmatpush1.bf16.msra.mxu0 %v1959
        %2521 = vmatprep.subr.bf16.mxu0 %v1966
        %2522 = vmatpush1.bf16.msra.mxu0 %v1965
        %2523 = vmatprep.subr.bf16.mxu0 %v1972
        %2524 = vmatpush1.bf16.msra.mxu0 %v1971
        %2525 = vmatprep.subr.bf16.mxu0 %v1978
        %2526 = vmatpush1.bf16.msra.mxu0 %v1977
        %2527 = vmatprep.subr.bf16.mxu0 %v1984
        %2528 = vmatpush1.bf16.msra.mxu0 %v1983
        %2529 = vmatprep.subr.bf16.mxu0 %v1990
        %2530 = vmatpush1.bf16.msra.mxu0 %v1989
        %2531 = vmatprep.subr.bf16.mxu0 %v1996
        %2532 = vmatpush1.bf16.msra.mxu0 %v1995
        %2533 = vmatprep.subr.bf16.mxu0 %v2002
        %2534 = vmatpush1.bf16.msra.mxu0 %v2001
        %2535 = vmatprep.subr.bf16.mxu0 %v2008
        %2536 = vmatpush1.bf16.msra.mxu0 %v2007
        %2537 = vmatprep.subr.bf16.mxu0 %v2014
        %2538 = vmatpush1.bf16.msra.mxu0 %v2013
        %2539 = vmatprep.subr.bf16.mxu0 %v2020
        %2540 = vmatpush1.bf16.msra.mxu0 %v2019
        %2541 = vmatprep.subr.bf16.mxu0 %v2026
        %2542 = vmatpush1.bf16.msra.mxu0 %v2025
        %2543 = vmatprep.mubr.bf16.mxu0 %v1048
        %2544 = vmatmul.mubr.bf16.gmra.mrb[0].mxu0 %v1047
        %v2545 = vpop.f32.mrb[0].mxu0
        %v2546 = vadd.f32 0.0, %v2545
        %v2547 = vpop.f32.mrb[0].mxu0
        %v2548 = vadd.f32 0.0, %v2547
        %v2549 = vpop.f32.mrb[0].mxu0
        %v2550 = vadd.f32 0.0, %v2549
        %v2551 = vpop.f32.mrb[0].mxu0
        %v2552 = vadd.f32 0.0, %v2551
        %2553 = vmatprep.mubr.bf16.mxu0 %v1054
        %2554 = vmatmul.mubr.bf16.gmra.mrb[0].mxu0 %v1053
        %v2555 = vpop.f32.mrb[0].mxu0
        %v2556 = vadd.f32 0.0, %v2555
        %v2557 = vpop.f32.mrb[0].mxu0
        %v2558 = vadd.f32 0.0, %v2557
        %v2559 = vpop.f32.mrb[0].mxu0
        %v2560 = vadd.f32 0.0, %v2559
        %v2561 = vpop.f32.mrb[0].mxu0
        %v2562 = vadd.f32 0.0, %v2561
        %2563 = vdwg.mxu0
        %2564 = vmatprep.subr.bf16.mxu0 %v2032
        %2565 = vmatpush1.bf16.msra.mxu0 %v2031
        %2566 = vmatprep.subr.bf16.mxu0 %v2038
        %2567 = vmatpush1.bf16.msra.mxu0 %v2037
        %2568 = vmatprep.subr.bf16.mxu0 %v2044
        %2569 = vmatpush1.bf16.msra.mxu0 %v2043
        %2570 = vmatprep.subr.bf16.mxu0 %v2050
        %2571 = vmatpush1.bf16.msra.mxu0 %v2049
        %2572 = vmatprep.subr.bf16.mxu0 %v2056
        %2573 = vmatpush1.bf16.msra.mxu0 %v2055
        %2574 = vmatprep.subr.bf16.mxu0 %v2062
        %2575 = vmatpush1.bf16.msra.mxu0 %v2061
        %2576 = vmatprep.subr.bf16.mxu0 %v2068
        %2577 = vmatpush1.bf16.msra.mxu0 %v2067
        %2578 = vmatprep.subr.bf16.mxu0 %v2074
        %2579 = vmatpush1.bf16.msra.mxu0 %v2073
        %2580 = vmatprep.subr.bf16.mxu0 %v2080
        %2581 = vmatpush1.bf16.msra.mxu0 %v2079
        %2582 = vmatprep.subr.bf16.mxu0 %v2086
        %2583 = vmatpush1.bf16.msra.mxu0 %v2085
        %2584 = vmatprep.subr.bf16.mxu0 %v2092
        %2585 = vmatpush1.bf16.msra.mxu0 %v2091
        %2586 = vmatprep.subr.bf16.mxu0 %v2098
        %2587 = vmatpush1.bf16.msra.mxu0 %v2097
        %2588 = vmatprep.subr.bf16.mxu0 %v2104
        %2589 = vmatpush1.bf16.msra.mxu0 %v2103
        %2590 = vmatprep.subr.bf16.mxu0 %v2110
        %2591 = vmatpush1.bf16.msra.mxu0 %v2109
        %2592 = vmatprep.subr.bf16.mxu0 %v2116
        %2593 = vmatpush1.bf16.msra.mxu0 %v2115
        %2594 = vmatprep.subr.bf16.mxu0 %v2122
        %2595 = vmatpush1.bf16.msra.mxu0 %v2121
        %2596 = vmatprep.mubr.bf16.mxu0 %v1050
        %2597 = vmatmul.mubr.bf16.gmra.mrb[0].mxu0 %v1049
        %v2598 = vpop.f32.mrb[0].mxu0
        %v2599 = vadd.f32 %v2546, %v2598
        %v2600 = vpop.f32.mrb[0].mxu0
        %v2601 = vadd.f32 %v2548, %v2600
        %v2602 = vpop.f32.mrb[0].mxu0
        %v2603 = vadd.f32 %v2550, %v2602
        %v2604 = vpop.f32.mrb[0].mxu0
        %v2605 = vadd.f32 %v2552, %v2604
        %2606 = vmatprep.mubr.bf16.mxu0 %v1056
        %2607 = vmatmul.mubr.bf16.gmra.mrb[0].mxu0 %v1055
        %v2608 = vpop.f32.mrb[0].mxu0
        %v2609 = vadd.f32 %v2556, %v2608
        %v2610 = vpop.f32.mrb[0].mxu0
        %v2611 = vadd.f32 %v2558, %v2610
        %v2612 = vpop.f32.mrb[0].mxu0
        %v2613 = vadd.f32 %v2560, %v2612
        %v2614 = vpop.f32.mrb[0].mxu0
        %v2615 = vadd.f32 %v2562, %v2614
        %2616 = vdwg.mxu0
        %2617 = vmatprep.subr.bf16.mxu0 %v2128
        %2618 = vmatpush1.bf16.msra.mxu0 %v2127
        %2619 = vmatprep.subr.bf16.mxu0 %v2134
        %2620 = vmatpush1.bf16.msra.mxu0 %v2133
        %2621 = vmatprep.subr.bf16.mxu0 %v2140
        %2622 = vmatpush1.bf16.msra.mxu0 %v2139
        %2623 = vmatprep.subr.bf16.mxu0 %v2146
        %2624 = vmatpush1.bf16.msra.mxu0 %v2145
        %2625 = vmatprep.subr.bf16.mxu0 %v2152
        %2626 = vmatpush1.bf16.msra.mxu0 %v2151
        %2627 = vmatprep.subr.bf16.mxu0 %v2158
        %2628 = vmatpush1.bf16.msra.mxu0 %v2157
        %2629 = vmatprep.subr.bf16.mxu0 %v2164
        %2630 = vmatpush1.bf16.msra.mxu0 %v2163
        %2631 = vmatprep.subr.bf16.mxu0 %v2170
        %2632 = vmatpush1.bf16.msra.mxu0 %v2169
        %2633 = vmatprep.subr.bf16.mxu0 %v2176
        %2634 = vmatpush1.bf16.msra.mxu0 %v2175
        %2635 = vmatprep.subr.bf16.mxu0 %v2182
        %2636 = vmatpush1.bf16.msra.mxu0 %v2181
        %2637 = vmatprep.subr.bf16.mxu0 %v2188
        %2638 = vmatpush1.bf16.msra.mxu0 %v2187
        %2639 = vmatprep.subr.bf16.mxu0 %v2194
        %2640 = vmatpush1.bf16.msra.mxu0 %v2193
        %2641 = vmatprep.subr.bf16.mxu0 %v2200
        %2642 = vmatpush1.bf16.msra.mxu0 %v2199
        %2643 = vmatprep.subr.bf16.mxu0 %v2206
        %2644 = vmatpush1.bf16.msra.mxu0 %v2205
        %2645 = vmatprep.subr.bf16.mxu0 %v2212
        %2646 = vmatpush1.bf16.msra.mxu0 %v2211
        %2647 = vmatprep.subr.bf16.mxu0 %v2218
        %2648 = vmatpush1.bf16.msra.mxu0 %v2217
        %2649 = vmatprep.mubr.bf16.mxu0 %v1052
        %2650 = vmatmul.mubr.bf16.gmra.mrb[0].mxu0 %v1051
        %v2651 = vpop.f32.mrb[0].mxu0
        %v2652 = vadd.f32 %v2599, %v2651
        %v2653 = vpop.f32.mrb[0].mxu0
        %v2654 = vadd.f32 %v2601, %v2653
        %v2655 = vpop.f32.mrb[0].mxu0
        %v2656 = vadd.f32 %v2603, %v2655
        %v2657 = vpop.f32.mrb[0].mxu0
        %v2658 = vadd.f32 %v2605, %v2657
        %2659 = vmatprep.mubr.bf16.mxu0 %v1058
        %2660 = vmatmul.mubr.bf16.gmra.mrb[0].mxu0 %v1057
        %v2661 = vpop.f32.mrb[0].mxu0
        %v2662 = vadd.f32 %v2609, %v2661
        %v2663 = vpop.f32.mrb[0].mxu0
        %v2664 = vadd.f32 %v2611, %v2663
        %v2665 = vpop.f32.mrb[0].mxu0
        %v2666 = vadd.f32 %v2613, %v2665
        %v2667 = vpop.f32.mrb[0].mxu0
        %v2668 = vadd.f32 %v2615, %v2667
        %2669 = vdwg.mxu0
        %2670 = vmatprep.subr.bf16.mxu0 %v1938
        %2671 = vmatpush1.bf16.msra.mxu0 %v1937
        %2672 = vmatprep.subr.bf16.mxu0 %v1944
        %2673 = vmatpush1.bf16.msra.mxu0 %v1943
        %2674 = vmatprep.subr.bf16.mxu0 %v1950
        %2675 = vmatpush1.bf16.msra.mxu0 %v1949
        %2676 = vmatprep.subr.bf16.mxu0 %v1956
        %2677 = vmatpush1.bf16.msra.mxu0 %v1955
        %2678 = vmatprep.subr.bf16.mxu0 %v1962
        %2679 = vmatpush1.bf16.msra.mxu0 %v1961
        %2680 = vmatprep.subr.bf16.mxu0 %v1968
        %2681 = vmatpush1.bf16.msra.mxu0 %v1967
        %2682 = vmatprep.subr.bf16.mxu0 %v1974
        %2683 = vmatpush1.bf16.msra.mxu0 %v1973
        %2684 = vmatprep.subr.bf16.mxu0 %v1980
        %2685 = vmatpush1.bf16.msra.mxu0 %v1979
        %2686 = vmatprep.subr.bf16.mxu0 %v1986
        %2687 = vmatpush1.bf16.msra.mxu0 %v1985
        %2688 = vmatprep.subr.bf16.mxu0 %v1992
        %2689 = vmatpush1.bf16.msra.mxu0 %v1991
        %2690 = vmatprep.subr.bf16.mxu0 %v1998
        %2691 = vmatpush1.bf16.msra.mxu0 %v1997
        %2692 = vmatprep.subr.bf16.mxu0 %v2004
        %2693 = vmatpush1.bf16.msra.mxu0 %v2003
        %2694 = vmatprep.subr.bf16.mxu0 %v2010
        %2695 = vmatpush1.bf16.msra.mxu0 %v2009
        %2696 = vmatprep.subr.bf16.mxu0 %v2016
        %2697 = vmatpush1.bf16.msra.mxu0 %v2015
        %2698 = vmatprep.subr.bf16.mxu0 %v2022
        %2699 = vmatpush1.bf16.msra.mxu0 %v2021
        %2700 = vmatprep.subr.bf16.mxu0 %v2028
        %2701 = vmatpush1.bf16.msra.mxu0 %v2027
        %2702 = vmatprep.mubr.bf16.mxu0 %v1048
        %2703 = vmatmul.mubr.bf16.gmra.mrb[0].mxu0 %v1047
        %v2704 = vpop.f32.mrb[0].mxu0
        %v2705 = vadd.f32 0.0, %v2704
        %v2706 = vpop.f32.mrb[0].mxu0
        %v2707 = vadd.f32 0.0, %v2706
        %v2708 = vpop.f32.mrb[0].mxu0
        %v2709 = vadd.f32 0.0, %v2708
        %v2710 = vpop.f32.mrb[0].mxu0
        %v2711 = vadd.f32 0.0, %v2710
        %2712 = vmatprep.mubr.bf16.mxu0 %v1054
        %2713 = vmatmul.mubr.bf16.gmra.mrb[0].mxu0 %v1053
        %v2714 = vpop.f32.mrb[0].mxu0
        %v2715 = vadd.f32 0.0, %v2714
        %v2716 = vpop.f32.mrb[0].mxu0
        %v2717 = vadd.f32 0.0, %v2716
        %v2718 = vpop.f32.mrb[0].mxu0
        %v2719 = vadd.f32 0.0, %v2718
        %v2720 = vpop.f32.mrb[0].mxu0
        %v2721 = vadd.f32 0.0, %v2720
        %2722 = vdwg.mxu0
        %2723 = vmatprep.subr.bf16.mxu0 %v2034
        %2724 = vmatpush1.bf16.msra.mxu0 %v2033
        %2725 = vmatprep.subr.bf16.mxu0 %v2040
        %2726 = vmatpush1.bf16.msra.mxu0 %v2039
        %2727 = vmatprep.subr.bf16.mxu0 %v2046
        %2728 = vmatpush1.bf16.msra.mxu0 %v2045
        %2729 = vmatprep.subr.bf16.mxu0 %v2052
        %2730 = vmatpush1.bf16.msra.mxu0 %v2051
        %2731 = vmatprep.subr.bf16.mxu0 %v2058
        %2732 = vmatpush1.bf16.msra.mxu0 %v2057
        %2733 = vmatprep.subr.bf16.mxu0 %v2064
        %2734 = vmatpush1.bf16.msra.mxu0 %v2063
        %2735 = vmatprep.subr.bf16.mxu0 %v2070
        %2736 = vmatpush1.bf16.msra.mxu0 %v2069
        %2737 = vmatprep.subr.bf16.mxu0 %v2076
        %2738 = vmatpush1.bf16.msra.mxu0 %v2075
        %2739 = vmatprep.subr.bf16.mxu0 %v2082
        %2740 = vmatpush1.bf16.msra.mxu0 %v2081
        %2741 = vmatprep.subr.bf16.mxu0 %v2088
        %2742 = vmatpush1.bf16.msra.mxu0 %v2087
        %2743 = vmatprep.subr.bf16.mxu0 %v2094
        %2744 = vmatpush1.bf16.msra.mxu0 %v2093
        %2745 = vmatprep.subr.bf16.mxu0 %v2100
        %2746 = vmatpush1.bf16.msra.mxu0 %v2099
        %2747 = vmatprep.subr.bf16.mxu0 %v2106
        %2748 = vmatpush1.bf16.msra.mxu0 %v2105
        %2749 = vmatprep.subr.bf16.mxu0 %v2112
        %2750 = vmatpush1.bf16.msra.mxu0 %v2111
        %2751 = vmatprep.subr.bf16.mxu0 %v2118
        %2752 = vmatpush1.bf16.msra.mxu0 %v2117
        %2753 = vmatprep.subr.bf16.mxu0 %v2124
        %2754 = vmatpush1.bf16.msra.mxu0 %v2123
        %2755 = vmatprep.mubr.bf16.mxu0 %v1050
        %2756 = vmatmul.mubr.bf16.gmra.mrb[0].mxu0 %v1049
        %v2757 = vpop.f32.mrb[0].mxu0
        %v2758 = vadd.f32 %v2705, %v2757
        %v2759 = vpop.f32.mrb[0].mxu0
        %v2760 = vadd.f32 %v2707, %v2759
        %v2761 = vpop.f32.mrb[0].mxu0
        %v2762 = vadd.f32 %v2709, %v2761
        %v2763 = vpop.f32.mrb[0].mxu0
        %v2764 = vadd.f32 %v2711, %v2763
        %2765 = vmatprep.mubr.bf16.mxu0 %v1056
        %2766 = vmatmul.mubr.bf16.gmra.mrb[0].mxu0 %v1055
        %v2767 = vpop.f32.mrb[0].mxu0
        %v2768 = vadd.f32 %v2715, %v2767
        %v2769 = vpop.f32.mrb[0].mxu0
        %v2770 = vadd.f32 %v2717, %v2769
        %v2771 = vpop.f32.mrb[0].mxu0
        %v2772 = vadd.f32 %v2719, %v2771
        %v2773 = vpop.f32.mrb[0].mxu0
        %v2774 = vadd.f32 %v2721, %v2773
        %2775 = vdwg.mxu0
        %2776 = vmatprep.subr.bf16.mxu0 %v2130
        %2777 = vmatpush1.bf16.msra.mxu0 %v2129
        %2778 = vmatprep.subr.bf16.mxu0 %v2136
        %2779 = vmatpush1.bf16.msra.mxu0 %v2135
        %2780 = vmatprep.subr.bf16.mxu0 %v2142
        %2781 = vmatpush1.bf16.msra.mxu0 %v2141
        %2782 = vmatprep.subr.bf16.mxu0 %v2148
        %2783 = vmatpush1.bf16.msra.mxu0 %v2147
        %2784 = vmatprep.subr.bf16.mxu0 %v2154
        %2785 = vmatpush1.bf16.msra.mxu0 %v2153
        %2786 = vmatprep.subr.bf16.mxu0 %v2160
        %2787 = vmatpush1.bf16.msra.mxu0 %v2159
        %2788 = vmatprep.subr.bf16.mxu0 %v2166
        %2789 = vmatpush1.bf16.msra.mxu0 %v2165
        %2790 = vmatprep.subr.bf16.mxu0 %v2172
        %2791 = vmatpush1.bf16.msra.mxu0 %v2171
        %2792 = vmatprep.subr.bf16.mxu0 %v2178
        %2793 = vmatpush1.bf16.msra.mxu0 %v2177
        %2794 = vmatprep.subr.bf16.mxu0 %v2184
        %2795 = vmatpush1.bf16.msra.mxu0 %v2183
        %2796 = vmatprep.subr.bf16.mxu0 %v2190
        %2797 = vmatpush1.bf16.msra.mxu0 %v2189
        %2798 = vmatprep.subr.bf16.mxu0 %v2196
        %2799 = vmatpush1.bf16.msra.mxu0 %v2195
        %2800 = vmatprep.subr.bf16.mxu0 %v2202
        %2801 = vmatpush1.bf16.msra.mxu0 %v2201
        %2802 = vmatprep.subr.bf16.mxu0 %v2208
        %2803 = vmatpush1.bf16.msra.mxu0 %v2207
        %2804 = vmatprep.subr.bf16.mxu0 %v2214
        %2805 = vmatpush1.bf16.msra.mxu0 %v2213
        %2806 = vmatprep.subr.bf16.mxu0 %v2220
        %2807 = vmatpush1.bf16.msra.mxu0 %v2219
        %2808 = vmatprep.mubr.bf16.mxu0 %v1052
        %2809 = vmatmul.mubr.bf16.gmra.mrb[0].mxu0 %v1051
        %v2810 = vpop.f32.mrb[0].mxu0
        %v2811 = vadd.f32 %v2758, %v2810
        %v2812 = vpop.f32.mrb[0].mxu0
        %v2813 = vadd.f32 %v2760, %v2812
        %v2814 = vpop.f32.mrb[0].mxu0
        %v2815 = vadd.f32 %v2762, %v2814
        %v2816 = vpop.f32.mrb[0].mxu0
        %v2817 = vadd.f32 %v2764, %v2816
        %2818 = vmatprep.mubr.bf16.mxu0 %v1058
        %2819 = vmatmul.mubr.bf16.gmra.mrb[0].mxu0 %v1057
        %v2820 = vpop.f32.mrb[0].mxu0
        %v2821 = vadd.f32 %v2768, %v2820
        %v2822 = vpop.f32.mrb[0].mxu0
        %v2823 = vadd.f32 %v2770, %v2822
        %v2824 = vpop.f32.mrb[0].mxu0
        %v2825 = vadd.f32 %v2772, %v2824
        %v2826 = vpop.f32.mrb[0].mxu0
        %v2827 = vadd.f32 %v2774, %v2826
        %2828 = vdwg.mxu0
        %2829 = vmatprep.subr.bf16.mxu0 %v1940
        %2830 = vmatpush1.bf16.msra.mxu0 %v1939
        %2831 = vmatprep.subr.bf16.mxu0 %v1946
        %2832 = vmatpush1.bf16.msra.mxu0 %v1945
        %2833 = vmatprep.subr.bf16.mxu0 %v1952
        %2834 = vmatpush1.bf16.msra.mxu0 %v1951
        %2835 = vmatprep.subr.bf16.mxu0 %v1958
        %2836 = vmatpush1.bf16.msra.mxu0 %v1957
        %2837 = vmatprep.subr.bf16.mxu0 %v1964
        %2838 = vmatpush1.bf16.msra.mxu0 %v1963
        %2839 = vmatprep.subr.bf16.mxu0 %v1970
        %2840 = vmatpush1.bf16.msra.mxu0 %v1969
        %2841 = vmatprep.subr.bf16.mxu0 %v1976
        %2842 = vmatpush1.bf16.msra.mxu0 %v1975
        %2843 = vmatprep.subr.bf16.mxu0 %v1982
        %2844 = vmatpush1.bf16.msra.mxu0 %v1981
        %2845 = vmatprep.subr.bf16.mxu0 %v1988
        %2846 = vmatpush1.bf16.msra.mxu0 %v1987
        %2847 = vmatprep.subr.bf16.mxu0 %v1994
        %2848 = vmatpush1.bf16.msra.mxu0 %v1993
        %2849 = vmatprep.subr.bf16.mxu0 %v2000
        %2850 = vmatpush1.bf16.msra.mxu0 %v1999
        %2851 = vmatprep.subr.bf16.mxu0 %v2006
        %2852 = vmatpush1.bf16.msra.mxu0 %v2005
        %2853 = vmatprep.subr.bf16.mxu0 %v2012
        %2854 = vmatpush1.bf16.msra.mxu0 %v2011
        %2855 = vmatprep.subr.bf16.mxu0 %v2018
        %2856 = vmatpush1.bf16.msra.mxu0 %v2017
        %2857 = vmatprep.subr.bf16.mxu0 %v2024
        %2858 = vmatpush1.bf16.msra.mxu0 %v2023
        %2859 = vmatprep.subr.bf16.mxu0 %v2030
        %2860 = vmatpush1.bf16.msra.mxu0 %v2029
        %2861 = vmatprep.mubr.bf16.mxu0 %v1048
        %2862 = vmatmul.mubr.bf16.gmra.mrb[0].mxu0 %v1047
        %v2863 = vpop.f32.mrb[0].mxu0
        %v2864 = vadd.f32 0.0, %v2863
        %v2865 = vpop.f32.mrb[0].mxu0
        %v2866 = vadd.f32 0.0, %v2865
        %v2867 = vpop.f32.mrb[0].mxu0
        %v2868 = vadd.f32 0.0, %v2867
        %v2869 = vpop.f32.mrb[0].mxu0
        %v2870 = vadd.f32 0.0, %v2869
        %2871 = vmatprep.mubr.bf16.mxu0 %v1054
        %2872 = vmatmul.mubr.bf16.gmra.mrb[0].mxu0 %v1053
        %v2873 = vpop.f32.mrb[0].mxu0
        %v2874 = vadd.f32 0.0, %v2873
        %v2875 = vpop.f32.mrb[0].mxu0
        %v2876 = vadd.f32 0.0, %v2875
        %v2877 = vpop.f32.mrb[0].mxu0
        %v2878 = vadd.f32 0.0, %v2877
        %v2879 = vpop.f32.mrb[0].mxu0
        %v2880 = vadd.f32 0.0, %v2879
        %2881 = vdwg.mxu0
        %2882 = vmatprep.subr.bf16.mxu0 %v2036
        %2883 = vmatpush1.bf16.msra.mxu0 %v2035
        %2884 = vmatprep.subr.bf16.mxu0 %v2042
        %2885 = vmatpush1.bf16.msra.mxu0 %v2041
        %2886 = vmatprep.subr.bf16.mxu0 %v2048
        %2887 = vmatpush1.bf16.msra.mxu0 %v2047
        %2888 = vmatprep.subr.bf16.mxu0 %v2054
        %2889 = vmatpush1.bf16.msra.mxu0 %v2053
        %2890 = vmatprep.subr.bf16.mxu0 %v2060
        %2891 = vmatpush1.bf16.msra.mxu0 %v2059
        %2892 = vmatprep.subr.bf16.mxu0 %v2066
        %2893 = vmatpush1.bf16.msra.mxu0 %v2065
        %2894 = vmatprep.subr.bf16.mxu0 %v2072
        %2895 = vmatpush1.bf16.msra.mxu0 %v2071
        %2896 = vmatprep.subr.bf16.mxu0 %v2078
        %2897 = vmatpush1.bf16.msra.mxu0 %v2077
        %2898 = vmatprep.subr.bf16.mxu0 %v2084
        %2899 = vmatpush1.bf16.msra.mxu0 %v2083
        %2900 = vmatprep.subr.bf16.mxu0 %v2090
        %2901 = vmatpush1.bf16.msra.mxu0 %v2089
        %2902 = vmatprep.subr.bf16.mxu0 %v2096
        %2903 = vmatpush1.bf16.msra.mxu0 %v2095
        %2904 = vmatprep.subr.bf16.mxu0 %v2102
        %2905 = vmatpush1.bf16.msra.mxu0 %v2101
        %2906 = vmatprep.subr.bf16.mxu0 %v2108
        %2907 = vmatpush1.bf16.msra.mxu0 %v2107
        %2908 = vmatprep.subr.bf16.mxu0 %v2114
        %2909 = vmatpush1.bf16.msra.mxu0 %v2113
        %2910 = vmatprep.subr.bf16.mxu0 %v2120
        %2911 = vmatpush1.bf16.msra.mxu0 %v2119
        %2912 = vmatprep.subr.bf16.mxu0 %v2126
        %2913 = vmatpush1.bf16.msra.mxu0 %v2125
        %2914 = vmatprep.mubr.bf16.mxu0 %v1050
        %2915 = vmatmul.mubr.bf16.gmra.mrb[0].mxu0 %v1049
        %v2916 = vpop.f32.mrb[0].mxu0
        %v2917 = vadd.f32 %v2864, %v2916
        %v2918 = vpop.f32.mrb[0].mxu0
        %v2919 = vadd.f32 %v2866, %v2918
        %v2920 = vpop.f32.mrb[0].mxu0
        %v2921 = vadd.f32 %v2868, %v2920
        %v2922 = vpop.f32.mrb[0].mxu0
        %v2923 = vadd.f32 %v2870, %v2922
        %2924 = vmatprep.mubr.bf16.mxu0 %v1056
        %2925 = vmatmul.mubr.bf16.gmra.mrb[0].mxu0 %v1055
        %v2926 = vpop.f32.mrb[0].mxu0
        %v2927 = vadd.f32 %v2874, %v2926
        %v2928 = vpop.f32.mrb[0].mxu0
        %v2929 = vadd.f32 %v2876, %v2928
        %v2930 = vpop.f32.mrb[0].mxu0
        %v2931 = vadd.f32 %v2878, %v2930
        %v2932 = vpop.f32.mrb[0].mxu0
        %v2933 = vadd.f32 %v2880, %v2932
        %2934 = vdwg.mxu0
        %2935 = vmatprep.subr.bf16.mxu0 %v2132
        %2936 = vmatpush1.bf16.msra.mxu0 %v2131
        %2937 = vmatprep.subr.bf16.mxu0 %v2138
        %2938 = vmatpush1.bf16.msra.mxu0 %v2137
        %2939 = vmatprep.subr.bf16.mxu0 %v2144
        %2940 = vmatpush1.bf16.msra.mxu0 %v2143
        %2941 = vmatprep.subr.bf16.mxu0 %v2150
        %2942 = vmatpush1.bf16.msra.mxu0 %v2149
        %2943 = vmatprep.subr.bf16.mxu0 %v2156
        %2944 = vmatpush1.bf16.msra.mxu0 %v2155
        %2945 = vmatprep.subr.bf16.mxu0 %v2162
        %2946 = vmatpush1.bf16.msra.mxu0 %v2161
        %2947 = vmatprep.subr.bf16.mxu0 %v2168
        %2948 = vmatpush1.bf16.msra.mxu0 %v2167
        %2949 = vmatprep.subr.bf16.mxu0 %v2174
        %2950 = vmatpush1.bf16.msra.mxu0 %v2173
        %2951 = vmatprep.subr.bf16.mxu0 %v2180
        %2952 = vmatpush1.bf16.msra.mxu0 %v2179
        %2953 = vmatprep.subr.bf16.mxu0 %v2186
        %2954 = vmatpush1.bf16.msra.mxu0 %v2185
        %2955 = vmatprep.subr.bf16.mxu0 %v2192
        %2956 = vmatpush1.bf16.msra.mxu0 %v2191
        %2957 = vmatprep.subr.bf16.mxu0 %v2198
        %2958 = vmatpush1.bf16.msra.mxu0 %v2197
        %2959 = vmatprep.subr.bf16.mxu0 %v2204
        %2960 = vmatpush1.bf16.msra.mxu0 %v2203
        %2961 = vmatprep.subr.bf16.mxu0 %v2210
        %2962 = vmatpush1.bf16.msra.mxu0 %v2209
        %2963 = vmatprep.subr.bf16.mxu0 %v2216
        %2964 = vmatpush1.bf16.msra.mxu0 %v2215
        %2965 = vmatprep.subr.bf16.mxu0 %v2222
        %2966 = vmatpush1.bf16.msra.mxu0 %v2221
        %2967 = vmatprep.mubr.bf16.mxu0 %v1052
        %2968 = vmatmul.mubr.bf16.gmra.mrb[0].mxu0 %v1051
        %v2969 = vpop.f32.mrb[0].mxu0
        %v2970 = vadd.f32 %v2917, %v2969
        %v2971 = vpop.f32.mrb[0].mxu0
        %v2972 = vadd.f32 %v2919, %v2971
        %v2973 = vpop.f32.mrb[0].mxu0
        %v2974 = vadd.f32 %v2921, %v2973
        %v2975 = vpop.f32.mrb[0].mxu0
        %v2976 = vadd.f32 %v2923, %v2975
        %2977 = vmatprep.mubr.bf16.mxu0 %v1058
        %2978 = vmatmul.mubr.bf16.gmra.mrb[0].mxu0 %v1057
        %v2979 = vpop.f32.mrb[0].mxu0
        %v2980 = vadd.f32 %v2927, %v2979
        %v2981 = vpop.f32.mrb[0].mxu0
        %v2982 = vadd.f32 %v2929, %v2981
        %v2983 = vpop.f32.mrb[0].mxu0
        %v2984 = vadd.f32 %v2931, %v2983
        %v2985 = vpop.f32.mrb[0].mxu0
        %v2986 = vadd.f32 %v2933, %v2985
        %2987 = vdwg.mxu0
        %v3000 = vunpack.c.l.b16 %v411
        %v3001 = vunpack.c.h.b16 %v411
        %v3002 = vunpack.c.l.b16 %v412
        %v3003 = vunpack.c.h.b16 %v412
        %v3004 = vunpack.c.l.b16 %v413
        %v3005 = vunpack.c.h.b16 %v413
        %v3006 = vunpack.c.l.b16 %v414
        %v3007 = vunpack.c.h.b16 %v414
        %v3008 = vunpack.c.l.b16 %v415
        %v3009 = vunpack.c.h.b16 %v415
        %v3010 = vunpack.c.l.b16 %v416
        %v3011 = vunpack.c.h.b16 %v416
        %v3012 = vunpack.c.l.b16 %v417
        %v3013 = vunpack.c.h.b16 %v417
        %v3014 = vunpack.c.l.b16 %v418
        %v3015 = vunpack.c.h.b16 %v418
        %v3016 = vunpack.c.l.b16 %v419
        %v3017 = vunpack.c.h.b16 %v419
        %v3018 = vunpack.c.l.b16 %v420
        %v3019 = vunpack.c.h.b16 %v420
        %v3020 = vunpack.c.l.b16 %v421
        %v3021 = vunpack.c.h.b16 %v421
        %v3022 = vunpack.c.l.b16 %v422
        %v3023 = vunpack.c.h.b16 %v422
        %v3024 = vpack.c.b16 %v3006, %v3000
        %v3025 = vpack.c.b16 %v3007, %v3001
        %v3026 = vpack.c.b16 %v3008, %v3002
        %v3027 = vpack.c.b16 %v3009, %v3003
        %v3028 = vpack.c.b16 %v3010, %v3004
        %v3029 = vpack.c.b16 %v3011, %v3005
        %v3030 = vpack.c.b16 %v3018, %v3012
        %v3031 = vpack.c.b16 %v3019, %v3013
        %v3032 = vpack.c.b16 %v3020, %v3014
        %v3033 = vpack.c.b16 %v3021, %v3015
        %v3034 = vpack.c.b16 %v3022, %v3016
        %v3035 = vpack.c.b16 %v3023, %v3017
        %v3336 = vunpack.c.l.b16 %v423
        %v3337 = vunpack.c.h.b16 %v423
        %v3338 = vunpack.c.l.b16 %v424
        %v3339 = vunpack.c.h.b16 %v424
        %v3340 = vunpack.c.l.b16 %v425
        %v3341 = vunpack.c.h.b16 %v425
        %v3342 = vunpack.c.l.b16 %v426
        %v3343 = vunpack.c.h.b16 %v426
        %v3344 = vunpack.c.l.b16 %v427
        %v3345 = vunpack.c.h.b16 %v427
        %v3346 = vunpack.c.l.b16 %v428
        %v3347 = vunpack.c.h.b16 %v428
        %v3348 = vunpack.c.l.b16 %v429
        %v3349 = vunpack.c.h.b16 %v429
        %v3350 = vunpack.c.l.b16 %v430
        %v3351 = vunpack.c.h.b16 %v430
        %v3352 = vunpack.c.l.b16 %v431
        %v3353 = vunpack.c.h.b16 %v431
        %v3354 = vunpack.c.l.b16 %v432
        %v3355 = vunpack.c.h.b16 %v432
        %v3356 = vunpack.c.l.b16 %v433
        %v3357 = vunpack.c.h.b16 %v433
        %v3358 = vunpack.c.l.b16 %v434
        %v3359 = vunpack.c.h.b16 %v434
        %v3360 = vunpack.c.l.b16 %v435
        %v3361 = vunpack.c.h.b16 %v435
        %v3362 = vunpack.c.l.b16 %v436
        %v3363 = vunpack.c.h.b16 %v436
        %v3364 = vunpack.c.l.b16 %v437
        %v3365 = vunpack.c.h.b16 %v437
        %v3366 = vunpack.c.l.b16 %v438
        %v3367 = vunpack.c.h.b16 %v438
        %v3368 = vunpack.c.l.b16 %v439
        %v3369 = vunpack.c.h.b16 %v439
        %v3370 = vunpack.c.l.b16 %v440
        %v3371 = vunpack.c.h.b16 %v440
        %v3372 = vunpack.c.l.b16 %v441
        %v3373 = vunpack.c.h.b16 %v441
        %v3374 = vunpack.c.l.b16 %v442
        %v3375 = vunpack.c.h.b16 %v442
        %v3376 = vunpack.c.l.b16 %v443
        %v3377 = vunpack.c.h.b16 %v443
        %v3378 = vunpack.c.l.b16 %v444
        %v3379 = vunpack.c.h.b16 %v444
        %v3380 = vunpack.c.l.b16 %v445
        %v3381 = vunpack.c.h.b16 %v445
        %v3382 = vunpack.c.l.b16 %v446
        %v3383 = vunpack.c.h.b16 %v446
        %v3384 = vunpack.c.l.b16 %v447
        %v3385 = vunpack.c.h.b16 %v447
        %v3386 = vunpack.c.l.b16 %v448
        %v3387 = vunpack.c.h.b16 %v448
        %v3388 = vunpack.c.l.b16 %v449
        %v3389 = vunpack.c.h.b16 %v449
        %v3390 = vunpack.c.l.b16 %v450
        %v3391 = vunpack.c.h.b16 %v450
        %v3392 = vunpack.c.l.b16 %v451
        %v3393 = vunpack.c.h.b16 %v451
        %v3394 = vunpack.c.l.b16 %v452
        %v3395 = vunpack.c.h.b16 %v452
        %v3396 = vunpack.c.l.b16 %v453
        %v3397 = vunpack.c.h.b16 %v453
        %v3398 = vunpack.c.l.b16 %v454
        %v3399 = vunpack.c.h.b16 %v454
        %v3400 = vunpack.c.l.b16 %v455
        %v3401 = vunpack.c.h.b16 %v455
        %v3402 = vunpack.c.l.b16 %v456
        %v3403 = vunpack.c.h.b16 %v456
        %v3404 = vunpack.c.l.b16 %v457
        %v3405 = vunpack.c.h.b16 %v457
        %v3406 = vunpack.c.l.b16 %v458
        %v3407 = vunpack.c.h.b16 %v458
        %v3408 = vunpack.c.l.b16 %v459
        %v3409 = vunpack.c.h.b16 %v459
        %v3410 = vunpack.c.l.b16 %v460
        %v3411 = vunpack.c.h.b16 %v460
        %v3412 = vunpack.c.l.b16 %v461
        %v3413 = vunpack.c.h.b16 %v461
        %v3414 = vunpack.c.l.b16 %v462
        %v3415 = vunpack.c.h.b16 %v462
        %v3416 = vunpack.c.l.b16 %v463
        %v3417 = vunpack.c.h.b16 %v463
        %v3418 = vunpack.c.l.b16 %v464
        %v3419 = vunpack.c.h.b16 %v464
        %v3420 = vunpack.c.l.b16 %v465
        %v3421 = vunpack.c.h.b16 %v465
        %v3422 = vunpack.c.l.b16 %v466
        %v3423 = vunpack.c.h.b16 %v466
        %v3424 = vunpack.c.l.b16 %v467
        %v3425 = vunpack.c.h.b16 %v467
        %v3426 = vunpack.c.l.b16 %v468
        %v3427 = vunpack.c.h.b16 %v468
        %v3428 = vunpack.c.l.b16 %v469
        %v3429 = vunpack.c.h.b16 %v469
        %v3430 = vunpack.c.l.b16 %v470
        %v3431 = vunpack.c.h.b16 %v470
        %v3432 = vunpack.c.l.b16 %v471
        %v3433 = vunpack.c.h.b16 %v471
        %v3434 = vunpack.c.l.b16 %v472
        %v3435 = vunpack.c.h.b16 %v472
        %v3436 = vunpack.c.l.b16 %v473
        %v3437 = vunpack.c.h.b16 %v473
        %v3438 = vunpack.c.l.b16 %v474
        %v3439 = vunpack.c.h.b16 %v474
        %v3440 = vunpack.c.l.b16 %v475
        %v3441 = vunpack.c.h.b16 %v475
        %v3442 = vunpack.c.l.b16 %v476
        %v3443 = vunpack.c.h.b16 %v476
        %v3444 = vunpack.c.l.b16 %v477
        %v3445 = vunpack.c.h.b16 %v477
        %v3446 = vunpack.c.l.b16 %v478
        %v3447 = vunpack.c.h.b16 %v478
        %v3448 = vunpack.c.l.b16 %v479
        %v3449 = vunpack.c.h.b16 %v479
        %v3450 = vunpack.c.l.b16 %v480
        %v3451 = vunpack.c.h.b16 %v480
        %v3452 = vunpack.c.l.b16 %v481
        %v3453 = vunpack.c.h.b16 %v481
        %v3454 = vunpack.c.l.b16 %v482
        %v3455 = vunpack.c.h.b16 %v482
        %v3456 = vunpack.c.l.b16 %v483
        %v3457 = vunpack.c.h.b16 %v483
        %v3458 = vunpack.c.l.b16 %v484
        %v3459 = vunpack.c.h.b16 %v484
        %v3460 = vunpack.c.l.b16 %v485
        %v3461 = vunpack.c.h.b16 %v485
        %v3462 = vunpack.c.l.b16 %v486
        %v3463 = vunpack.c.h.b16 %v486
        %v3464 = vunpack.c.l.b16 %v487
        %v3465 = vunpack.c.h.b16 %v487
        %v3466 = vunpack.c.l.b16 %v488
        %v3467 = vunpack.c.h.b16 %v488
        %v3468 = vunpack.c.l.b16 %v489
        %v3469 = vunpack.c.h.b16 %v489
        %v3470 = vunpack.c.l.b16 %v490
        %v3471 = vunpack.c.h.b16 %v490
        %v3472 = vunpack.c.l.b16 %v491
        %v3473 = vunpack.c.h.b16 %v491
        %v3474 = vunpack.c.l.b16 %v492
        %v3475 = vunpack.c.h.b16 %v492
        %v3476 = vunpack.c.l.b16 %v493
        %v3477 = vunpack.c.h.b16 %v493
        %v3478 = vunpack.c.l.b16 %v494
        %v3479 = vunpack.c.h.b16 %v494
        %v3480 = vunpack.c.l.b16 %v495
        %v3481 = vunpack.c.h.b16 %v495
        %v3482 = vunpack.c.l.b16 %v496
        %v3483 = vunpack.c.h.b16 %v496
        %v3484 = vunpack.c.l.b16 %v497
        %v3485 = vunpack.c.h.b16 %v497
        %v3486 = vunpack.c.l.b16 %v498
        %v3487 = vunpack.c.h.b16 %v498
        %v3488 = vunpack.c.l.b16 %v499
        %v3489 = vunpack.c.h.b16 %v499
        %v3490 = vunpack.c.l.b16 %v500
        %v3491 = vunpack.c.h.b16 %v500
        %v3492 = vunpack.c.l.b16 %v501
        %v3493 = vunpack.c.h.b16 %v501
        %v3494 = vunpack.c.l.b16 %v502
        %v3495 = vunpack.c.h.b16 %v502
        %v3496 = vunpack.c.l.b16 %v503
        %v3497 = vunpack.c.h.b16 %v503
        %v3498 = vunpack.c.l.b16 %v504
        %v3499 = vunpack.c.h.b16 %v504
        %v3500 = vunpack.c.l.b16 %v505
        %v3501 = vunpack.c.h.b16 %v505
        %v3502 = vunpack.c.l.b16 %v506
        %v3503 = vunpack.c.h.b16 %v506
        %v3504 = vunpack.c.l.b16 %v507
        %v3505 = vunpack.c.h.b16 %v507
        %v3506 = vunpack.c.l.b16 %v508
        %v3507 = vunpack.c.h.b16 %v508
        %v3508 = vunpack.c.l.b16 %v509
        %v3509 = vunpack.c.h.b16 %v509
        %v3510 = vunpack.c.l.b16 %v510
        %v3511 = vunpack.c.h.b16 %v510
        %v3512 = vunpack.c.l.b16 %v511
        %v3513 = vunpack.c.h.b16 %v511
        %v3514 = vunpack.c.l.b16 %v512
        %v3515 = vunpack.c.h.b16 %v512
        %v3516 = vunpack.c.l.b16 %v513
        %v3517 = vunpack.c.h.b16 %v513
        %v3518 = vunpack.c.l.b16 %v514
        %v3519 = vunpack.c.h.b16 %v514
        %v3520 = vunpack.c.l.b16 %v515
        %v3521 = vunpack.c.h.b16 %v515
        %v3522 = vunpack.c.l.b16 %v516
        %v3523 = vunpack.c.h.b16 %v516
        %v3524 = vunpack.c.l.b16 %v517
        %v3525 = vunpack.c.h.b16 %v517
        %v3526 = vunpack.c.l.b16 %v518
        %v3527 = vunpack.c.h.b16 %v518
        %v3528 = vunpack.c.l.b16 %v519
        %v3529 = vunpack.c.h.b16 %v519
        %v3530 = vunpack.c.l.b16 %v520
        %v3531 = vunpack.c.h.b16 %v520
        %v3532 = vunpack.c.l.b16 %v521
        %v3533 = vunpack.c.h.b16 %v521
        %v3534 = vunpack.c.l.b16 %v522
        %v3535 = vunpack.c.h.b16 %v522
        %v3536 = vunpack.c.l.b16 %v523
        %v3537 = vunpack.c.h.b16 %v523
        %v3538 = vunpack.c.l.b16 %v524
        %v3539 = vunpack.c.h.b16 %v524
        %v3540 = vunpack.c.l.b16 %v525
        %v3541 = vunpack.c.h.b16 %v525
        %v3542 = vunpack.c.l.b16 %v526
        %v3543 = vunpack.c.h.b16 %v526
        %v3544 = vunpack.c.l.b16 %v527
        %v3545 = vunpack.c.h.b16 %v527
        %v3546 = vunpack.c.l.b16 %v528
        %v3547 = vunpack.c.h.b16 %v528
        %v3548 = vunpack.c.l.b16 %v529
        %v3549 = vunpack.c.h.b16 %v529
        %v3550 = vunpack.c.l.b16 %v530
        %v3551 = vunpack.c.h.b16 %v530
        %v3552 = vunpack.c.l.b16 %v531
        %v3553 = vunpack.c.h.b16 %v531
        %v3554 = vunpack.c.l.b16 %v532
        %v3555 = vunpack.c.h.b16 %v532
        %v3556 = vunpack.c.l.b16 %v533
        %v3557 = vunpack.c.h.b16 %v533
        %v3558 = vunpack.c.l.b16 %v534
        %v3559 = vunpack.c.h.b16 %v534
        %v3560 = vunpack.c.l.b16 %v535
        %v3561 = vunpack.c.h.b16 %v535
        %v3562 = vunpack.c.l.b16 %v536
        %v3563 = vunpack.c.h.b16 %v536
        %v3564 = vunpack.c.l.b16 %v537
        %v3565 = vunpack.c.h.b16 %v537
        %v3566 = vunpack.c.l.b16 %v538
        %v3567 = vunpack.c.h.b16 %v538
        %v3568 = vunpack.c.l.b16 %v539
        %v3569 = vunpack.c.h.b16 %v539
        %v3570 = vunpack.c.l.b16 %v540
        %v3571 = vunpack.c.h.b16 %v540
        %v3572 = vunpack.c.l.b16 %v541
        %v3573 = vunpack.c.h.b16 %v541
        %v3574 = vunpack.c.l.b16 %v542
        %v3575 = vunpack.c.h.b16 %v542
        %v3576 = vunpack.c.l.b16 %v543
        %v3577 = vunpack.c.h.b16 %v543
        %v3578 = vunpack.c.l.b16 %v544
        %v3579 = vunpack.c.h.b16 %v544
        %v3580 = vunpack.c.l.b16 %v545
        %v3581 = vunpack.c.h.b16 %v545
        %v3582 = vunpack.c.l.b16 %v546
        %v3583 = vunpack.c.h.b16 %v546
        %v3584 = vunpack.c.l.b16 %v547
        %v3585 = vunpack.c.h.b16 %v547
        %v3586 = vunpack.c.l.b16 %v548
        %v3587 = vunpack.c.h.b16 %v548
        %v3588 = vunpack.c.l.b16 %v549
        %v3589 = vunpack.c.h.b16 %v549
        %v3590 = vunpack.c.l.b16 %v550
        %v3591 = vunpack.c.h.b16 %v550
        %v3592 = vunpack.c.l.b16 %v551
        %v3593 = vunpack.c.h.b16 %v551
        %v3594 = vunpack.c.l.b16 %v552
        %v3595 = vunpack.c.h.b16 %v552
        %v3596 = vunpack.c.l.b16 %v553
        %v3597 = vunpack.c.h.b16 %v553
        %v3598 = vunpack.c.l.b16 %v554
        %v3599 = vunpack.c.h.b16 %v554
        %v3600 = vunpack.c.l.b16 %v555
        %v3601 = vunpack.c.h.b16 %v555
        %v3602 = vunpack.c.l.b16 %v556
        %v3603 = vunpack.c.h.b16 %v556
        %v3604 = vunpack.c.l.b16 %v557
        %v3605 = vunpack.c.h.b16 %v557
        %v3606 = vunpack.c.l.b16 %v558
        %v3607 = vunpack.c.h.b16 %v558
        %v3608 = vunpack.c.l.b16 %v559
        %v3609 = vunpack.c.h.b16 %v559
        %v3610 = vunpack.c.l.b16 %v560
        %v3611 = vunpack.c.h.b16 %v560
        %v3612 = vunpack.c.l.b16 %v561
        %v3613 = vunpack.c.h.b16 %v561
        %v3614 = vunpack.c.l.b16 %v562
        %v3615 = vunpack.c.h.b16 %v562
        %v3616 = vunpack.c.l.b16 %v563
        %v3617 = vunpack.c.h.b16 %v563
        %v3618 = vunpack.c.l.b16 %v564
        %v3619 = vunpack.c.h.b16 %v564
        %v3620 = vunpack.c.l.b16 %v565
        %v3621 = vunpack.c.h.b16 %v565
        %v3622 = vunpack.c.l.b16 %v566
        %v3623 = vunpack.c.h.b16 %v566
        %v3624 = vunpack.c.l.b16 %v567
        %v3625 = vunpack.c.h.b16 %v567
        %v3626 = vunpack.c.l.b16 %v568
        %v3627 = vunpack.c.h.b16 %v568
        %v3628 = vunpack.c.l.b16 %v569
        %v3629 = vunpack.c.h.b16 %v569
        %v3630 = vunpack.c.l.b16 %v570
        %v3631 = vunpack.c.h.b16 %v570
        %v3632 = vunpack.c.l.b16 %v571
        %v3633 = vunpack.c.h.b16 %v571
        %v3634 = vunpack.c.l.b16 %v572
        %v3635 = vunpack.c.h.b16 %v572
        %v3636 = vunpack.c.l.b16 %v573
        %v3637 = vunpack.c.h.b16 %v573
        %v3638 = vunpack.c.l.b16 %v574
        %v3639 = vunpack.c.h.b16 %v574
        %v3640 = vunpack.c.l.b16 %v575
        %v3641 = vunpack.c.h.b16 %v575
        %v3642 = vunpack.c.l.b16 %v576
        %v3643 = vunpack.c.h.b16 %v576
        %v3644 = vunpack.c.l.b16 %v577
        %v3645 = vunpack.c.h.b16 %v577
        %v3646 = vunpack.c.l.b16 %v578
        %v3647 = vunpack.c.h.b16 %v578
        %v3648 = vunpack.c.l.b16 %v579
        %v3649 = vunpack.c.h.b16 %v579
        %v3650 = vunpack.c.l.b16 %v580
        %v3651 = vunpack.c.h.b16 %v580
        %v3652 = vunpack.c.l.b16 %v581
        %v3653 = vunpack.c.h.b16 %v581
        %v3654 = vunpack.c.l.b16 %v582
        %v3655 = vunpack.c.h.b16 %v582
        %v3656 = vunpack.c.l.b16 %v583
        %v3657 = vunpack.c.h.b16 %v583
        %v3658 = vunpack.c.l.b16 %v584
        %v3659 = vunpack.c.h.b16 %v584
        %v3660 = vunpack.c.l.b16 %v585
        %v3661 = vunpack.c.h.b16 %v585
        %v3662 = vunpack.c.l.b16 %v586
        %v3663 = vunpack.c.h.b16 %v586
        %v3664 = vunpack.c.l.b16 %v587
        %v3665 = vunpack.c.h.b16 %v587
        %v3666 = vunpack.c.l.b16 %v588
        %v3667 = vunpack.c.h.b16 %v588
        %v3668 = vunpack.c.l.b16 %v589
        %v3669 = vunpack.c.h.b16 %v589
        %v3670 = vunpack.c.l.b16 %v590
        %v3671 = vunpack.c.h.b16 %v590
        %v3672 = vunpack.c.l.b16 %v591
        %v3673 = vunpack.c.h.b16 %v591
        %v3674 = vunpack.c.l.b16 %v592
        %v3675 = vunpack.c.h.b16 %v592
        %v3676 = vunpack.c.l.b16 %v593
        %v3677 = vunpack.c.h.b16 %v593
        %v3678 = vunpack.c.l.b16 %v594
        %v3679 = vunpack.c.h.b16 %v594
        %v3680 = vunpack.c.l.b16 %v595
        %v3681 = vunpack.c.h.b16 %v595
        %v3682 = vunpack.c.l.b16 %v596
        %v3683 = vunpack.c.h.b16 %v596
        %v3684 = vunpack.c.l.b16 %v597
        %v3685 = vunpack.c.h.b16 %v597
        %v3686 = vunpack.c.l.b16 %v598
        %v3687 = vunpack.c.h.b16 %v598
        %v3688 = vunpack.c.l.b16 %v599
        %v3689 = vunpack.c.h.b16 %v599
        %v3690 = vunpack.c.l.b16 %v600
        %v3691 = vunpack.c.h.b16 %v600
        %v3692 = vunpack.c.l.b16 %v601
        %v3693 = vunpack.c.h.b16 %v601
        %v3694 = vunpack.c.l.b16 %v602
        %v3695 = vunpack.c.h.b16 %v602
        %v3696 = vunpack.c.l.b16 %v603
        %v3697 = vunpack.c.h.b16 %v603
        %v3698 = vunpack.c.l.b16 %v604
        %v3699 = vunpack.c.h.b16 %v604
        %v3700 = vunpack.c.l.b16 %v605
        %v3701 = vunpack.c.h.b16 %v605
        %v3702 = vunpack.c.l.b16 %v606
        %v3703 = vunpack.c.h.b16 %v606
        %v3704 = vunpack.c.l.b16 %v607
        %v3705 = vunpack.c.h.b16 %v607
        %v3706 = vunpack.c.l.b16 %v608
        %v3707 = vunpack.c.h.b16 %v608
        %v3708 = vunpack.c.l.b16 %v609
        %v3709 = vunpack.c.h.b16 %v609
        %v3710 = vunpack.c.l.b16 %v610
        %v3711 = vunpack.c.h.b16 %v610
        %v3712 = vunpack.c.l.b16 %v611
        %v3713 = vunpack.c.h.b16 %v611
        %v3714 = vunpack.c.l.b16 %v612
        %v3715 = vunpack.c.h.b16 %v612
        %v3716 = vunpack.c.l.b16 %v613
        %v3717 = vunpack.c.h.b16 %v613
        %v3718 = vunpack.c.l.b16 %v614
        %v3719 = vunpack.c.h.b16 %v614
        %v3720 = vunpack.c.l.b16 %v615
        %v3721 = vunpack.c.h.b16 %v615
        %v3722 = vunpack.c.l.b16 %v616
        %v3723 = vunpack.c.h.b16 %v616
        %v3724 = vunpack.c.l.b16 %v617
        %v3725 = vunpack.c.h.b16 %v617
        %v3726 = vunpack.c.l.b16 %v618
        %v3727 = vunpack.c.h.b16 %v618
        %v3728 = vunpack.c.l.b16 %v619
        %v3729 = vunpack.c.h.b16 %v619
        %v3730 = vunpack.c.l.b16 %v620
        %v3731 = vunpack.c.h.b16 %v620
        %v3732 = vunpack.c.l.b16 %v621
        %v3733 = vunpack.c.h.b16 %v621
        %v3734 = vunpack.c.l.b16 %v622
        %v3735 = vunpack.c.h.b16 %v622
        %v3736 = vunpack.c.l.b16 %v623
        %v3737 = vunpack.c.h.b16 %v623
        %v3738 = vunpack.c.l.b16 %v624
        %v3739 = vunpack.c.h.b16 %v624
        %v3740 = vunpack.c.l.b16 %v625
        %v3741 = vunpack.c.h.b16 %v625
        %v3742 = vunpack.c.l.b16 %v626
        %v3743 = vunpack.c.h.b16 %v626
        %v3744 = vunpack.c.l.b16 %v627
        %v3745 = vunpack.c.h.b16 %v627
        %v3746 = vunpack.c.l.b16 %v628
        %v3747 = vunpack.c.h.b16 %v628
        %v3748 = vunpack.c.l.b16 %v629
        %v3749 = vunpack.c.h.b16 %v629
        %v3750 = vunpack.c.l.b16 %v630
        %v3751 = vunpack.c.h.b16 %v630
        %v3752 = vunpack.c.l.b16 %v631
        %v3753 = vunpack.c.h.b16 %v631
        %v3754 = vunpack.c.l.b16 %v632
        %v3755 = vunpack.c.h.b16 %v632
        %v3756 = vunpack.c.l.b16 %v633
        %v3757 = vunpack.c.h.b16 %v633
        %v3758 = vunpack.c.l.b16 %v634
        %v3759 = vunpack.c.h.b16 %v634
        %v3760 = vunpack.c.l.b16 %v635
        %v3761 = vunpack.c.h.b16 %v635
        %v3762 = vunpack.c.l.b16 %v636
        %v3763 = vunpack.c.h.b16 %v636
        %v3764 = vunpack.c.l.b16 %v637
        %v3765 = vunpack.c.h.b16 %v637
        %v3766 = vunpack.c.l.b16 %v638
        %v3767 = vunpack.c.h.b16 %v638
        %v3768 = vunpack.c.l.b16 %v639
        %v3769 = vunpack.c.h.b16 %v639
        %v3770 = vunpack.c.l.b16 %v640
        %v3771 = vunpack.c.h.b16 %v640
        %v3772 = vunpack.c.l.b16 %v641
        %v3773 = vunpack.c.h.b16 %v641
        %v3774 = vunpack.c.l.b16 %v642
        %v3775 = vunpack.c.h.b16 %v642
        %v3776 = vunpack.c.l.b16 %v643
        %v3777 = vunpack.c.h.b16 %v643
        %v3778 = vunpack.c.l.b16 %v644
        %v3779 = vunpack.c.h.b16 %v644
        %v3780 = vunpack.c.l.b16 %v645
        %v3781 = vunpack.c.h.b16 %v645
        %v3782 = vunpack.c.l.b16 %v646
        %v3783 = vunpack.c.h.b16 %v646
        %v3784 = vunpack.c.l.b16 %v647
        %v3785 = vunpack.c.h.b16 %v647
        %v3786 = vunpack.c.l.b16 %v648
        %v3787 = vunpack.c.h.b16 %v648
        %v3788 = vunpack.c.l.b16 %v649
        %v3789 = vunpack.c.h.b16 %v649
        %v3790 = vunpack.c.l.b16 %v650
        %v3791 = vunpack.c.h.b16 %v650
        %v3792 = vunpack.c.l.b16 %v651
        %v3793 = vunpack.c.h.b16 %v651
        %v3794 = vunpack.c.l.b16 %v652
        %v3795 = vunpack.c.h.b16 %v652
        %v3796 = vunpack.c.l.b16 %v653
        %v3797 = vunpack.c.h.b16 %v653
        %v3798 = vunpack.c.l.b16 %v654
        %v3799 = vunpack.c.h.b16 %v654
        %v3800 = vunpack.c.l.b16 %v655
        %v3801 = vunpack.c.h.b16 %v655
        %v3802 = vunpack.c.l.b16 %v656
        %v3803 = vunpack.c.h.b16 %v656
        %v3804 = vunpack.c.l.b16 %v657
        %v3805 = vunpack.c.h.b16 %v657
        %v3806 = vunpack.c.l.b16 %v658
        %v3807 = vunpack.c.h.b16 %v658
        %v3808 = vunpack.c.l.b16 %v659
        %v3809 = vunpack.c.h.b16 %v659
        %v3810 = vunpack.c.l.b16 %v660
        %v3811 = vunpack.c.h.b16 %v660
        %v3812 = vunpack.c.l.b16 %v661
        %v3813 = vunpack.c.h.b16 %v661
        %v3814 = vunpack.c.l.b16 %v662
        %v3815 = vunpack.c.h.b16 %v662
        %v3816 = vunpack.c.l.b16 %v663
        %v3817 = vunpack.c.h.b16 %v663
        %v3818 = vunpack.c.l.b16 %v664
        %v3819 = vunpack.c.h.b16 %v664
        %v3820 = vunpack.c.l.b16 %v665
        %v3821 = vunpack.c.h.b16 %v665
        %v3822 = vunpack.c.l.b16 %v666
        %v3823 = vunpack.c.h.b16 %v666
        %v3824 = vunpack.c.l.b16 %v667
        %v3825 = vunpack.c.h.b16 %v667
        %v3826 = vunpack.c.l.b16 %v668
        %v3827 = vunpack.c.h.b16 %v668
        %v3828 = vunpack.c.l.b16 %v669
        %v3829 = vunpack.c.h.b16 %v669
        %v3830 = vunpack.c.l.b16 %v670
        %v3831 = vunpack.c.h.b16 %v670
        %v3832 = vunpack.c.l.b16 %v671
        %v3833 = vunpack.c.h.b16 %v671
        %v3834 = vunpack.c.l.b16 %v672
        %v3835 = vunpack.c.h.b16 %v672
        %v3836 = vunpack.c.l.b16 %v673
        %v3837 = vunpack.c.h.b16 %v673
        %v3838 = vunpack.c.l.b16 %v674
        %v3839 = vunpack.c.h.b16 %v674
        %v3840 = vunpack.c.l.b16 %v675
        %v3841 = vunpack.c.h.b16 %v675
        %v3842 = vunpack.c.l.b16 %v676
        %v3843 = vunpack.c.h.b16 %v676
        %v3844 = vunpack.c.l.b16 %v677
        %v3845 = vunpack.c.h.b16 %v677
        %v3846 = vunpack.c.l.b16 %v678
        %v3847 = vunpack.c.h.b16 %v678
        %v3848 = vunpack.c.l.b16 %v679
        %v3849 = vunpack.c.h.b16 %v679
        %v3850 = vunpack.c.l.b16 %v680
        %v3851 = vunpack.c.h.b16 %v680
        %v3852 = vunpack.c.l.b16 %v681
        %v3853 = vunpack.c.h.b16 %v681
        %v3854 = vunpack.c.l.b16 %v682
        %v3855 = vunpack.c.h.b16 %v682
        %v3856 = vunpack.c.l.b16 %v683
        %v3857 = vunpack.c.h.b16 %v683
        %v3858 = vunpack.c.l.b16 %v684
        %v3859 = vunpack.c.h.b16 %v684
        %v3860 = vunpack.c.l.b16 %v685
        %v3861 = vunpack.c.h.b16 %v685
        %v3862 = vunpack.c.l.b16 %v686
        %v3863 = vunpack.c.h.b16 %v686
        %v3864 = vunpack.c.l.b16 %v687
        %v3865 = vunpack.c.h.b16 %v687
        %v3866 = vunpack.c.l.b16 %v688
        %v3867 = vunpack.c.h.b16 %v688
        %v3868 = vunpack.c.l.b16 %v689
        %v3869 = vunpack.c.h.b16 %v689
        %v3870 = vunpack.c.l.b16 %v690
        %v3871 = vunpack.c.h.b16 %v690
        %v3872 = vunpack.c.l.b16 %v691
        %v3873 = vunpack.c.h.b16 %v691
        %v3874 = vunpack.c.l.b16 %v692
        %v3875 = vunpack.c.h.b16 %v692
        %v3876 = vunpack.c.l.b16 %v693
        %v3877 = vunpack.c.h.b16 %v693
        %v3878 = vunpack.c.l.b16 %v694
        %v3879 = vunpack.c.h.b16 %v694
        %v3880 = vunpack.c.l.b16 %v695
        %v3881 = vunpack.c.h.b16 %v695
        %v3882 = vunpack.c.l.b16 %v696
        %v3883 = vunpack.c.h.b16 %v696
        %v3884 = vunpack.c.l.b16 %v697
        %v3885 = vunpack.c.h.b16 %v697
        %v3886 = vunpack.c.l.b16 %v698
        %v3887 = vunpack.c.h.b16 %v698
        %v3888 = vunpack.c.l.b16 %v699
        %v3889 = vunpack.c.h.b16 %v699
        %v3890 = vunpack.c.l.b16 %v700
        %v3891 = vunpack.c.h.b16 %v700
        %v3892 = vunpack.c.l.b16 %v701
        %v3893 = vunpack.c.h.b16 %v701
        %v3894 = vunpack.c.l.b16 %v702
        %v3895 = vunpack.c.h.b16 %v702
        %v3896 = vunpack.c.l.b16 %v703
        %v3897 = vunpack.c.h.b16 %v703
        %v3898 = vunpack.c.l.b16 %v704
        %v3899 = vunpack.c.h.b16 %v704
        %v3900 = vunpack.c.l.b16 %v705
        %v3901 = vunpack.c.h.b16 %v705
        %v3902 = vunpack.c.l.b16 %v706
        %v3903 = vunpack.c.h.b16 %v706
        %v3904 = vunpack.c.l.b16 %v707
        %v3905 = vunpack.c.h.b16 %v707
        %v3906 = vunpack.c.l.b16 %v708
        %v3907 = vunpack.c.h.b16 %v708
        %v3908 = vunpack.c.l.b16 %v709
        %v3909 = vunpack.c.h.b16 %v709
        %v3910 = vunpack.c.l.b16 %v710
        %v3911 = vunpack.c.h.b16 %v710
        %v3912 = vpack.c.b16 %v3342, %v3336
        %v3913 = vpack.c.b16 %v3343, %v3337
        %v3914 = vpack.c.b16 %v3344, %v3338
        %v3915 = vpack.c.b16 %v3345, %v3339
        %v3916 = vpack.c.b16 %v3346, %v3340
        %v3917 = vpack.c.b16 %v3347, %v3341
        %v3918 = vpack.c.b16 %v3354, %v3348
        %v3919 = vpack.c.b16 %v3355, %v3349
        %v3920 = vpack.c.b16 %v3356, %v3350
        %v3921 = vpack.c.b16 %v3357, %v3351
        %v3922 = vpack.c.b16 %v3358, %v3352
        %v3923 = vpack.c.b16 %v3359, %v3353
        %v3924 = vpack.c.b16 %v3366, %v3360
        %v3925 = vpack.c.b16 %v3367, %v3361
        %v3926 = vpack.c.b16 %v3368, %v3362
        %v3927 = vpack.c.b16 %v3369, %v3363
        %v3928 = vpack.c.b16 %v3370, %v3364
        %v3929 = vpack.c.b16 %v3371, %v3365
        %v3930 = vpack.c.b16 %v3378, %v3372
        %v3931 = vpack.c.b16 %v3379, %v3373
        %v3932 = vpack.c.b16 %v3380, %v3374
        %v3933 = vpack.c.b16 %v3381, %v3375
        %v3934 = vpack.c.b16 %v3382, %v3376
        %v3935 = vpack.c.b16 %v3383, %v3377
        %v3936 = vpack.c.b16 %v3390, %v3384
        %v3937 = vpack.c.b16 %v3391, %v3385
        %v3938 = vpack.c.b16 %v3392, %v3386
        %v3939 = vpack.c.b16 %v3393, %v3387
        %v3940 = vpack.c.b16 %v3394, %v3388
        %v3941 = vpack.c.b16 %v3395, %v3389
        %v3942 = vpack.c.b16 %v3402, %v3396
        %v3943 = vpack.c.b16 %v3403, %v3397
        %v3944 = vpack.c.b16 %v3404, %v3398
        %v3945 = vpack.c.b16 %v3405, %v3399
        %v3946 = vpack.c.b16 %v3406, %v3400
        %v3947 = vpack.c.b16 %v3407, %v3401
        %v3948 = vpack.c.b16 %v3414, %v3408
        %v3949 = vpack.c.b16 %v3415, %v3409
        %v3950 = vpack.c.b16 %v3416, %v3410
        %v3951 = vpack.c.b16 %v3417, %v3411
        %v3952 = vpack.c.b16 %v3418, %v3412
        %v3953 = vpack.c.b16 %v3419, %v3413
        %v3954 = vpack.c.b16 %v3426, %v3420
        %v3955 = vpack.c.b16 %v3427, %v3421
        %v3956 = vpack.c.b16 %v3428, %v3422
        %v3957 = vpack.c.b16 %v3429, %v3423
        %v3958 = vpack.c.b16 %v3430, %v3424
        %v3959 = vpack.c.b16 %v3431, %v3425
        %v3960 = vpack.c.b16 %v3438, %v3432
        %v3961 = vpack.c.b16 %v3439, %v3433
        %v3962 = vpack.c.b16 %v3440, %v3434
        %v3963 = vpack.c.b16 %v3441, %v3435
        %v3964 = vpack.c.b16 %v3442, %v3436
        %v3965 = vpack.c.b16 %v3443, %v3437
        %v3966 = vpack.c.b16 %v3450, %v3444
        %v3967 = vpack.c.b16 %v3451, %v3445
        %v3968 = vpack.c.b16 %v3452, %v3446
        %v3969 = vpack.c.b16 %v3453, %v3447
        %v3970 = vpack.c.b16 %v3454, %v3448
        %v3971 = vpack.c.b16 %v3455, %v3449
        %v3972 = vpack.c.b16 %v3462, %v3456
        %v3973 = vpack.c.b16 %v3463, %v3457
        %v3974 = vpack.c.b16 %v3464, %v3458
        %v3975 = vpack.c.b16 %v3465, %v3459
        %v3976 = vpack.c.b16 %v3466, %v3460
        %v3977 = vpack.c.b16 %v3467, %v3461
        %v3978 = vpack.c.b16 %v3474, %v3468
        %v3979 = vpack.c.b16 %v3475, %v3469
        %v3980 = vpack.c.b16 %v3476, %v3470
        %v3981 = vpack.c.b16 %v3477, %v3471
        %v3982 = vpack.c.b16 %v3478, %v3472
        %v3983 = vpack.c.b16 %v3479, %v3473
        %v3984 = vpack.c.b16 %v3486, %v3480
        %v3985 = vpack.c.b16 %v3487, %v3481
        %v3986 = vpack.c.b16 %v3488, %v3482
        %v3987 = vpack.c.b16 %v3489, %v3483
        %v3988 = vpack.c.b16 %v3490, %v3484
        %v3989 = vpack.c.b16 %v3491, %v3485
        %v3990 = vpack.c.b16 %v3498, %v3492
        %v3991 = vpack.c.b16 %v3499, %v3493
        %v3992 = vpack.c.b16 %v3500, %v3494
        %v3993 = vpack.c.b16 %v3501, %v3495
        %v3994 = vpack.c.b16 %v3502, %v3496
        %v3995 = vpack.c.b16 %v3503, %v3497
        %v3996 = vpack.c.b16 %v3510, %v3504
        %v3997 = vpack.c.b16 %v3511, %v3505
        %v3998 = vpack.c.b16 %v3512, %v3506
        %v3999 = vpack.c.b16 %v3513, %v3507
        %v4000 = vpack.c.b16 %v3514, %v3508
        %v4001 = vpack.c.b16 %v3515, %v3509
        %v4002 = vpack.c.b16 %v3522, %v3516
        %v4003 = vpack.c.b16 %v3523, %v3517
        %v4004 = vpack.c.b16 %v3524, %v3518
        %v4005 = vpack.c.b16 %v3525, %v3519
        %v4006 = vpack.c.b16 %v3526, %v3520
        %v4007 = vpack.c.b16 %v3527, %v3521
        %v4008 = vpack.c.b16 %v3534, %v3528
        %v4009 = vpack.c.b16 %v3535, %v3529
        %v4010 = vpack.c.b16 %v3536, %v3530
        %v4011 = vpack.c.b16 %v3537, %v3531
        %v4012 = vpack.c.b16 %v3538, %v3532
        %v4013 = vpack.c.b16 %v3539, %v3533
        %v4014 = vpack.c.b16 %v3546, %v3540
        %v4015 = vpack.c.b16 %v3547, %v3541
        %v4016 = vpack.c.b16 %v3548, %v3542
        %v4017 = vpack.c.b16 %v3549, %v3543
        %v4018 = vpack.c.b16 %v3550, %v3544
        %v4019 = vpack.c.b16 %v3551, %v3545
        %v4020 = vpack.c.b16 %v3558, %v3552
        %v4021 = vpack.c.b16 %v3559, %v3553
        %v4022 = vpack.c.b16 %v3560, %v3554
        %v4023 = vpack.c.b16 %v3561, %v3555
        %v4024 = vpack.c.b16 %v3562, %v3556
        %v4025 = vpack.c.b16 %v3563, %v3557
        %v4026 = vpack.c.b16 %v3570, %v3564
        %v4027 = vpack.c.b16 %v3571, %v3565
        %v4028 = vpack.c.b16 %v3572, %v3566
        %v4029 = vpack.c.b16 %v3573, %v3567
        %v4030 = vpack.c.b16 %v3574, %v3568
        %v4031 = vpack.c.b16 %v3575, %v3569
        %v4032 = vpack.c.b16 %v3582, %v3576
        %v4033 = vpack.c.b16 %v3583, %v3577
        %v4034 = vpack.c.b16 %v3584, %v3578
        %v4035 = vpack.c.b16 %v3585, %v3579
        %v4036 = vpack.c.b16 %v3586, %v3580
        %v4037 = vpack.c.b16 %v3587, %v3581
        %v4038 = vpack.c.b16 %v3594, %v3588
        %v4039 = vpack.c.b16 %v3595, %v3589
        %v4040 = vpack.c.b16 %v3596, %v3590
        %v4041 = vpack.c.b16 %v3597, %v3591
        %v4042 = vpack.c.b16 %v3598, %v3592
        %v4043 = vpack.c.b16 %v3599, %v3593
        %v4044 = vpack.c.b16 %v3606, %v3600
        %v4045 = vpack.c.b16 %v3607, %v3601
        %v4046 = vpack.c.b16 %v3608, %v3602
        %v4047 = vpack.c.b16 %v3609, %v3603
        %v4048 = vpack.c.b16 %v3610, %v3604
        %v4049 = vpack.c.b16 %v3611, %v3605
        %v4050 = vpack.c.b16 %v3618, %v3612
        %v4051 = vpack.c.b16 %v3619, %v3613
        %v4052 = vpack.c.b16 %v3620, %v3614
        %v4053 = vpack.c.b16 %v3621, %v3615
        %v4054 = vpack.c.b16 %v3622, %v3616
        %v4055 = vpack.c.b16 %v3623, %v3617
        %v4056 = vpack.c.b16 %v3630, %v3624
        %v4057 = vpack.c.b16 %v3631, %v3625
        %v4058 = vpack.c.b16 %v3632, %v3626
        %v4059 = vpack.c.b16 %v3633, %v3627
        %v4060 = vpack.c.b16 %v3634, %v3628
        %v4061 = vpack.c.b16 %v3635, %v3629
        %v4062 = vpack.c.b16 %v3642, %v3636
        %v4063 = vpack.c.b16 %v3643, %v3637
        %v4064 = vpack.c.b16 %v3644, %v3638
        %v4065 = vpack.c.b16 %v3645, %v3639
        %v4066 = vpack.c.b16 %v3646, %v3640
        %v4067 = vpack.c.b16 %v3647, %v3641
        %v4068 = vpack.c.b16 %v3654, %v3648
        %v4069 = vpack.c.b16 %v3655, %v3649
        %v4070 = vpack.c.b16 %v3656, %v3650
        %v4071 = vpack.c.b16 %v3657, %v3651
        %v4072 = vpack.c.b16 %v3658, %v3652
        %v4073 = vpack.c.b16 %v3659, %v3653
        %v4074 = vpack.c.b16 %v3666, %v3660
        %v4075 = vpack.c.b16 %v3667, %v3661
        %v4076 = vpack.c.b16 %v3668, %v3662
        %v4077 = vpack.c.b16 %v3669, %v3663
        %v4078 = vpack.c.b16 %v3670, %v3664
        %v4079 = vpack.c.b16 %v3671, %v3665
        %v4080 = vpack.c.b16 %v3678, %v3672
        %v4081 = vpack.c.b16 %v3679, %v3673
        %v4082 = vpack.c.b16 %v3680, %v3674
        %v4083 = vpack.c.b16 %v3681, %v3675
        %v4084 = vpack.c.b16 %v3682, %v3676
        %v4085 = vpack.c.b16 %v3683, %v3677
        %v4086 = vpack.c.b16 %v3690, %v3684
        %v4087 = vpack.c.b16 %v3691, %v3685
        %v4088 = vpack.c.b16 %v3692, %v3686
        %v4089 = vpack.c.b16 %v3693, %v3687
        %v4090 = vpack.c.b16 %v3694, %v3688
        %v4091 = vpack.c.b16 %v3695, %v3689
        %v4092 = vpack.c.b16 %v3702, %v3696
        %v4093 = vpack.c.b16 %v3703, %v3697
        %v4094 = vpack.c.b16 %v3704, %v3698
        %v4095 = vpack.c.b16 %v3705, %v3699
        %v4096 = vpack.c.b16 %v3706, %v3700
        %v4097 = vpack.c.b16 %v3707, %v3701
        %v4098 = vpack.c.b16 %v3714, %v3708
        %v4099 = vpack.c.b16 %v3715, %v3709
        %v4100 = vpack.c.b16 %v3716, %v3710
        %v4101 = vpack.c.b16 %v3717, %v3711
        %v4102 = vpack.c.b16 %v3718, %v3712
        %v4103 = vpack.c.b16 %v3719, %v3713
        %v4104 = vpack.c.b16 %v3726, %v3720
        %v4105 = vpack.c.b16 %v3727, %v3721
        %v4106 = vpack.c.b16 %v3728, %v3722
        %v4107 = vpack.c.b16 %v3729, %v3723
        %v4108 = vpack.c.b16 %v3730, %v3724
        %v4109 = vpack.c.b16 %v3731, %v3725
        %v4110 = vpack.c.b16 %v3738, %v3732
        %v4111 = vpack.c.b16 %v3739, %v3733
        %v4112 = vpack.c.b16 %v3740, %v3734
        %v4113 = vpack.c.b16 %v3741, %v3735
        %v4114 = vpack.c.b16 %v3742, %v3736
        %v4115 = vpack.c.b16 %v3743, %v3737
        %v4116 = vpack.c.b16 %v3750, %v3744
        %v4117 = vpack.c.b16 %v3751, %v3745
        %v4118 = vpack.c.b16 %v3752, %v3746
        %v4119 = vpack.c.b16 %v3753, %v3747
        %v4120 = vpack.c.b16 %v3754, %v3748
        %v4121 = vpack.c.b16 %v3755, %v3749
        %v4122 = vpack.c.b16 %v3762, %v3756
        %v4123 = vpack.c.b16 %v3763, %v3757
        %v4124 = vpack.c.b16 %v3764, %v3758
        %v4125 = vpack.c.b16 %v3765, %v3759
        %v4126 = vpack.c.b16 %v3766, %v3760
        %v4127 = vpack.c.b16 %v3767, %v3761
        %v4128 = vpack.c.b16 %v3774, %v3768
        %v4129 = vpack.c.b16 %v3775, %v3769
        %v4130 = vpack.c.b16 %v3776, %v3770
        %v4131 = vpack.c.b16 %v3777, %v3771
        %v4132 = vpack.c.b16 %v3778, %v3772
        %v4133 = vpack.c.b16 %v3779, %v3773
        %v4134 = vpack.c.b16 %v3786, %v3780
        %v4135 = vpack.c.b16 %v3787, %v3781
        %v4136 = vpack.c.b16 %v3788, %v3782
        %v4137 = vpack.c.b16 %v3789, %v3783
        %v4138 = vpack.c.b16 %v3790, %v3784
        %v4139 = vpack.c.b16 %v3791, %v3785
        %v4140 = vpack.c.b16 %v3798, %v3792
        %v4141 = vpack.c.b16 %v3799, %v3793
        %v4142 = vpack.c.b16 %v3800, %v3794
        %v4143 = vpack.c.b16 %v3801, %v3795
        %v4144 = vpack.c.b16 %v3802, %v3796
        %v4145 = vpack.c.b16 %v3803, %v3797
        %v4146 = vpack.c.b16 %v3810, %v3804
        %v4147 = vpack.c.b16 %v3811, %v3805
        %v4148 = vpack.c.b16 %v3812, %v3806
        %v4149 = vpack.c.b16 %v3813, %v3807
        %v4150 = vpack.c.b16 %v3814, %v3808
        %v4151 = vpack.c.b16 %v3815, %v3809
        %v4152 = vpack.c.b16 %v3822, %v3816
        %v4153 = vpack.c.b16 %v3823, %v3817
        %v4154 = vpack.c.b16 %v3824, %v3818
        %v4155 = vpack.c.b16 %v3825, %v3819
        %v4156 = vpack.c.b16 %v3826, %v3820
        %v4157 = vpack.c.b16 %v3827, %v3821
        %v4158 = vpack.c.b16 %v3834, %v3828
        %v4159 = vpack.c.b16 %v3835, %v3829
        %v4160 = vpack.c.b16 %v3836, %v3830
        %v4161 = vpack.c.b16 %v3837, %v3831
        %v4162 = vpack.c.b16 %v3838, %v3832
        %v4163 = vpack.c.b16 %v3839, %v3833
        %v4164 = vpack.c.b16 %v3846, %v3840
        %v4165 = vpack.c.b16 %v3847, %v3841
        %v4166 = vpack.c.b16 %v3848, %v3842
        %v4167 = vpack.c.b16 %v3849, %v3843
        %v4168 = vpack.c.b16 %v3850, %v3844
        %v4169 = vpack.c.b16 %v3851, %v3845
        %v4170 = vpack.c.b16 %v3858, %v3852
        %v4171 = vpack.c.b16 %v3859, %v3853
        %v4172 = vpack.c.b16 %v3860, %v3854
        %v4173 = vpack.c.b16 %v3861, %v3855
        %v4174 = vpack.c.b16 %v3862, %v3856
        %v4175 = vpack.c.b16 %v3863, %v3857
        %v4176 = vpack.c.b16 %v3870, %v3864
        %v4177 = vpack.c.b16 %v3871, %v3865
        %v4178 = vpack.c.b16 %v3872, %v3866
        %v4179 = vpack.c.b16 %v3873, %v3867
        %v4180 = vpack.c.b16 %v3874, %v3868
        %v4181 = vpack.c.b16 %v3875, %v3869
        %v4182 = vpack.c.b16 %v3882, %v3876
        %v4183 = vpack.c.b16 %v3883, %v3877
        %v4184 = vpack.c.b16 %v3884, %v3878
        %v4185 = vpack.c.b16 %v3885, %v3879
        %v4186 = vpack.c.b16 %v3886, %v3880
        %v4187 = vpack.c.b16 %v3887, %v3881
        %v4188 = vpack.c.b16 %v3894, %v3888
        %v4189 = vpack.c.b16 %v3895, %v3889
        %v4190 = vpack.c.b16 %v3896, %v3890
        %v4191 = vpack.c.b16 %v3897, %v3891
        %v4192 = vpack.c.b16 %v3898, %v3892
        %v4193 = vpack.c.b16 %v3899, %v3893
        %v4194 = vpack.c.b16 %v3906, %v3900
        %v4195 = vpack.c.b16 %v3907, %v3901
        %v4196 = vpack.c.b16 %v3908, %v3902
        %v4197 = vpack.c.b16 %v3909, %v3903
        %v4198 = vpack.c.b16 %v3910, %v3904
        %v4199 = vpack.c.b16 %v3911, %v3905
        %4488 = vmatprep.subr.bf16.mxu0 %v3913
        %4489 = vmatpush1.bf16.msra.mxu0 %v3912
        %4490 = vmatprep.subr.bf16.mxu0 %v3919
        %4491 = vmatpush1.bf16.msra.mxu0 %v3918
        %4492 = vmatprep.subr.bf16.mxu0 %v3925
        %4493 = vmatpush1.bf16.msra.mxu0 %v3924
        %4494 = vmatprep.subr.bf16.mxu0 %v3931
        %4495 = vmatpush1.bf16.msra.mxu0 %v3930
        %4496 = vmatprep.subr.bf16.mxu0 %v3937
        %4497 = vmatpush1.bf16.msra.mxu0 %v3936
        %4498 = vmatprep.subr.bf16.mxu0 %v3943
        %4499 = vmatpush1.bf16.msra.mxu0 %v3942
        %4500 = vmatprep.subr.bf16.mxu0 %v3949
        %4501 = vmatpush1.bf16.msra.mxu0 %v3948
        %4502 = vmatprep.subr.bf16.mxu0 %v3955
        %4503 = vmatpush1.bf16.msra.mxu0 %v3954
        %4504 = vmatprep.subr.bf16.mxu0 %v3961
        %4505 = vmatpush1.bf16.msra.mxu0 %v3960
        %4506 = vmatprep.subr.bf16.mxu0 %v3967
        %4507 = vmatpush1.bf16.msra.mxu0 %v3966
        %4508 = vmatprep.subr.bf16.mxu0 %v3973
        %4509 = vmatpush1.bf16.msra.mxu0 %v3972
        %4510 = vmatprep.subr.bf16.mxu0 %v3979
        %4511 = vmatpush1.bf16.msra.mxu0 %v3978
        %4512 = vmatprep.subr.bf16.mxu0 %v3985
        %4513 = vmatpush1.bf16.msra.mxu0 %v3984
        %4514 = vmatprep.subr.bf16.mxu0 %v3991
        %4515 = vmatpush1.bf16.msra.mxu0 %v3990
        %4516 = vmatprep.subr.bf16.mxu0 %v3997
        %4517 = vmatpush1.bf16.msra.mxu0 %v3996
        %4518 = vmatprep.subr.bf16.mxu0 %v4003
        %4519 = vmatpush1.bf16.msra.mxu0 %v4002
        %4520 = vmatprep.mubr.bf16.mxu0 %v3025
        %4521 = vmatmul.mubr.bf16.gmra.mrb[0].mxu0 %v3024
        %v4522 = vpop.f32.mrb[0].mxu0
        %v4523 = vadd.f32 %v2652, %v4522
        %v4524 = vpop.f32.mrb[0].mxu0
        %v4525 = vadd.f32 %v2654, %v4524
        %v4526 = vpop.f32.mrb[0].mxu0
        %v4527 = vadd.f32 %v2656, %v4526
        %v4528 = vpop.f32.mrb[0].mxu0
        %v4529 = vadd.f32 %v2658, %v4528
        %4530 = vmatprep.mubr.bf16.mxu0 %v3031
        %4531 = vmatmul.mubr.bf16.gmra.mrb[0].mxu0 %v3030
        %v4532 = vpop.f32.mrb[0].mxu0
        %v4533 = vadd.f32 %v2662, %v4532
        %v4534 = vpop.f32.mrb[0].mxu0
        %v4535 = vadd.f32 %v2664, %v4534
        %v4536 = vpop.f32.mrb[0].mxu0
        %v4537 = vadd.f32 %v2666, %v4536
        %v4538 = vpop.f32.mrb[0].mxu0
        %v4539 = vadd.f32 %v2668, %v4538
        %4540 = vdwg.mxu0
        %4541 = vmatprep.subr.bf16.mxu0 %v4009
        %4542 = vmatpush1.bf16.msra.mxu0 %v4008
        %4543 = vmatprep.subr.bf16.mxu0 %v4015
        %4544 = vmatpush1.bf16.msra.mxu0 %v4014
        %4545 = vmatprep.subr.bf16.mxu0 %v4021
        %4546 = vmatpush1.bf16.msra.mxu0 %v4020
        %4547 = vmatprep.subr.bf16.mxu0 %v4027
        %4548 = vmatpush1.bf16.msra.mxu0 %v4026
        %4549 = vmatprep.subr.bf16.mxu0 %v4033
        %4550 = vmatpush1.bf16.msra.mxu0 %v4032
        %4551 = vmatprep.subr.bf16.mxu0 %v4039
        %4552 = vmatpush1.bf16.msra.mxu0 %v4038
        %4553 = vmatprep.subr.bf16.mxu0 %v4045
        %4554 = vmatpush1.bf16.msra.mxu0 %v4044
        %4555 = vmatprep.subr.bf16.mxu0 %v4051
        %4556 = vmatpush1.bf16.msra.mxu0 %v4050
        %4557 = vmatprep.subr.bf16.mxu0 %v4057
        %4558 = vmatpush1.bf16.msra.mxu0 %v4056
        %4559 = vmatprep.subr.bf16.mxu0 %v4063
        %4560 = vmatpush1.bf16.msra.mxu0 %v4062
        %4561 = vmatprep.subr.bf16.mxu0 %v4069
        %4562 = vmatpush1.bf16.msra.mxu0 %v4068
        %4563 = vmatprep.subr.bf16.mxu0 %v4075
        %4564 = vmatpush1.bf16.msra.mxu0 %v4074
        %4565 = vmatprep.subr.bf16.mxu0 %v4081
        %4566 = vmatpush1.bf16.msra.mxu0 %v4080
        %4567 = vmatprep.subr.bf16.mxu0 %v4087
        %4568 = vmatpush1.bf16.msra.mxu0 %v4086
        %4569 = vmatprep.subr.bf16.mxu0 %v4093
        %4570 = vmatpush1.bf16.msra.mxu0 %v4092
        %4571 = vmatprep.subr.bf16.mxu0 %v4099
        %4572 = vmatpush1.bf16.msra.mxu0 %v4098
        %4573 = vmatprep.mubr.bf16.mxu0 %v3027
        %4574 = vmatmul.mubr.bf16.gmra.mrb[0].mxu0 %v3026
        %v4575 = vpop.f32.mrb[0].mxu0
        %v4576 = vadd.f32 %v4523, %v4575
        %v4577 = vpop.f32.mrb[0].mxu0
        %v4578 = vadd.f32 %v4525, %v4577
        %v4579 = vpop.f32.mrb[0].mxu0
        %v4580 = vadd.f32 %v4527, %v4579
        %v4581 = vpop.f32.mrb[0].mxu0
        %v4582 = vadd.f32 %v4529, %v4581
        %4583 = vmatprep.mubr.bf16.mxu0 %v3033
        %4584 = vmatmul.mubr.bf16.gmra.mrb[0].mxu0 %v3032
        %v4585 = vpop.f32.mrb[0].mxu0
        %v4586 = vadd.f32 %v4533, %v4585
        %v4587 = vpop.f32.mrb[0].mxu0
        %v4588 = vadd.f32 %v4535, %v4587
        %v4589 = vpop.f32.mrb[0].mxu0
        %v4590 = vadd.f32 %v4537, %v4589
        %v4591 = vpop.f32.mrb[0].mxu0
        %v4592 = vadd.f32 %v4539, %v4591
        %4593 = vdwg.mxu0
        %4594 = vmatprep.subr.bf16.mxu0 %v4105
        %4595 = vmatpush1.bf16.msra.mxu0 %v4104
        %4596 = vmatprep.subr.bf16.mxu0 %v4111
        %4597 = vmatpush1.bf16.msra.mxu0 %v4110
        %4598 = vmatprep.subr.bf16.mxu0 %v4117
        %4599 = vmatpush1.bf16.msra.mxu0 %v4116
        %4600 = vmatprep.subr.bf16.mxu0 %v4123
        %4601 = vmatpush1.bf16.msra.mxu0 %v4122
        %4602 = vmatprep.subr.bf16.mxu0 %v4129
        %4603 = vmatpush1.bf16.msra.mxu0 %v4128
        %4604 = vmatprep.subr.bf16.mxu0 %v4135
        %4605 = vmatpush1.bf16.msra.mxu0 %v4134
        %4606 = vmatprep.subr.bf16.mxu0 %v4141
        %4607 = vmatpush1.bf16.msra.mxu0 %v4140
        %4608 = vmatprep.subr.bf16.mxu0 %v4147
        %4609 = vmatpush1.bf16.msra.mxu0 %v4146
        %4610 = vmatprep.subr.bf16.mxu0 %v4153
        %4611 = vmatpush1.bf16.msra.mxu0 %v4152
        %4612 = vmatprep.subr.bf16.mxu0 %v4159
        %4613 = vmatpush1.bf16.msra.mxu0 %v4158
        %4614 = vmatprep.subr.bf16.mxu0 %v4165
        %4615 = vmatpush1.bf16.msra.mxu0 %v4164
        %4616 = vmatprep.subr.bf16.mxu0 %v4171
        %4617 = vmatpush1.bf16.msra.mxu0 %v4170
        %4618 = vmatprep.subr.bf16.mxu0 %v4177
        %4619 = vmatpush1.bf16.msra.mxu0 %v4176
        %4620 = vmatprep.subr.bf16.mxu0 %v4183
        %4621 = vmatpush1.bf16.msra.mxu0 %v4182
        %4622 = vmatprep.subr.bf16.mxu0 %v4189
        %4623 = vmatpush1.bf16.msra.mxu0 %v4188
        %4624 = vmatprep.subr.bf16.mxu0 %v4195
        %4625 = vmatpush1.bf16.msra.mxu0 %v4194
        %4626 = vmatprep.mubr.bf16.mxu0 %v3029
        %4627 = vmatmul.mubr.bf16.gmra.mrb[0].mxu0 %v3028
        %v4628 = vpop.f32.mrb[0].mxu0
        %v4629 = vadd.f32 %v4576, %v4628
        %v4630 = vpop.f32.mrb[0].mxu0
        %v4631 = vadd.f32 %v4578, %v4630
        %v4632 = vpop.f32.mrb[0].mxu0
        %v4633 = vadd.f32 %v4580, %v4632
        %v4634 = vpop.f32.mrb[0].mxu0
        %v4635 = vadd.f32 %v4582, %v4634
        %4636 = vmatprep.mubr.bf16.mxu0 %v3035
        %4637 = vmatmul.mubr.bf16.gmra.mrb[0].mxu0 %v3034
        %v4638 = vpop.f32.mrb[0].mxu0
        %v4639 = vadd.f32 %v4586, %v4638
        %v4640 = vpop.f32.mrb[0].mxu0
        %v4641 = vadd.f32 %v4588, %v4640
        %v4642 = vpop.f32.mrb[0].mxu0
        %v4643 = vadd.f32 %v4590, %v4642
        %v4644 = vpop.f32.mrb[0].mxu0
        %v4645 = vadd.f32 %v4592, %v4644
        %4646 = vdwg.mxu0
        %4647 = vmatprep.subr.bf16.mxu0 %v3915
        %4648 = vmatpush1.bf16.msra.mxu0 %v3914
        %4649 = vmatprep.subr.bf16.mxu0 %v3921
        %4650 = vmatpush1.bf16.msra.mxu0 %v3920
        %4651 = vmatprep.subr.bf16.mxu0 %v3927
        %4652 = vmatpush1.bf16.msra.mxu0 %v3926
        %4653 = vmatprep.subr.bf16.mxu0 %v3933
        %4654 = vmatpush1.bf16.msra.mxu0 %v3932
        %4655 = vmatprep.subr.bf16.mxu0 %v3939
        %4656 = vmatpush1.bf16.msra.mxu0 %v3938
        %4657 = vmatprep.subr.bf16.mxu0 %v3945
        %4658 = vmatpush1.bf16.msra.mxu0 %v3944
        %4659 = vmatprep.subr.bf16.mxu0 %v3951
        %4660 = vmatpush1.bf16.msra.mxu0 %v3950
        %4661 = vmatprep.subr.bf16.mxu0 %v3957
        %4662 = vmatpush1.bf16.msra.mxu0 %v3956
        %4663 = vmatprep.subr.bf16.mxu0 %v3963
        %4664 = vmatpush1.bf16.msra.mxu0 %v3962
        %4665 = vmatprep.subr.bf16.mxu0 %v3969
        %4666 = vmatpush1.bf16.msra.mxu0 %v3968
        %4667 = vmatprep.subr.bf16.mxu0 %v3975
        %4668 = vmatpush1.bf16.msra.mxu0 %v3974
        %4669 = vmatprep.subr.bf16.mxu0 %v3981
        %4670 = vmatpush1.bf16.msra.mxu0 %v3980
        %4671 = vmatprep.subr.bf16.mxu0 %v3987
        %4672 = vmatpush1.bf16.msra.mxu0 %v3986
        %4673 = vmatprep.subr.bf16.mxu0 %v3993
        %4674 = vmatpush1.bf16.msra.mxu0 %v3992
        %4675 = vmatprep.subr.bf16.mxu0 %v3999
        %4676 = vmatpush1.bf16.msra.mxu0 %v3998
        %4677 = vmatprep.subr.bf16.mxu0 %v4005
        %4678 = vmatpush1.bf16.msra.mxu0 %v4004
        %4679 = vmatprep.mubr.bf16.mxu0 %v3025
        %4680 = vmatmul.mubr.bf16.gmra.mrb[0].mxu0 %v3024
        %v4681 = vpop.f32.mrb[0].mxu0
        %v4682 = vadd.f32 %v2811, %v4681
        %v4683 = vpop.f32.mrb[0].mxu0
        %v4684 = vadd.f32 %v2813, %v4683
        %v4685 = vpop.f32.mrb[0].mxu0
        %v4686 = vadd.f32 %v2815, %v4685
        %v4687 = vpop.f32.mrb[0].mxu0
        %v4688 = vadd.f32 %v2817, %v4687
        %4689 = vmatprep.mubr.bf16.mxu0 %v3031
        %4690 = vmatmul.mubr.bf16.gmra.mrb[0].mxu0 %v3030
        %v4691 = vpop.f32.mrb[0].mxu0
        %v4692 = vadd.f32 %v2821, %v4691
        %v4693 = vpop.f32.mrb[0].mxu0
        %v4694 = vadd.f32 %v2823, %v4693
        %v4695 = vpop.f32.mrb[0].mxu0
        %v4696 = vadd.f32 %v2825, %v4695
        %v4697 = vpop.f32.mrb[0].mxu0
        %v4698 = vadd.f32 %v2827, %v4697
        %4699 = vdwg.mxu0
        %4700 = vmatprep.subr.bf16.mxu0 %v4011
        %4701 = vmatpush1.bf16.msra.mxu0 %v4010
        %4702 = vmatprep.subr.bf16.mxu0 %v4017
        %4703 = vmatpush1.bf16.msra.mxu0 %v4016
        %4704 = vmatprep.subr.bf16.mxu0 %v4023
        %4705 = vmatpush1.bf16.msra.mxu0 %v4022
        %4706 = vmatprep.subr.bf16.mxu0 %v4029
        %4707 = vmatpush1.bf16.msra.mxu0 %v4028
        %4708 = vmatprep.subr.bf16.mxu0 %v4035
        %4709 = vmatpush1.bf16.msra.mxu0 %v4034
        %4710 = vmatprep.subr.bf16.mxu0 %v4041
        %4711 = vmatpush1.bf16.msra.mxu0 %v4040
        %4712 = vmatprep.subr.bf16.mxu0 %v4047
        %4713 = vmatpush1.bf16.msra.mxu0 %v4046
        %4714 = vmatprep.subr.bf16.mxu0 %v4053
        %4715 = vmatpush1.bf16.msra.mxu0 %v4052
        %4716 = vmatprep.subr.bf16.mxu0 %v4059
        %4717 = vmatpush1.bf16.msra.mxu0 %v4058
        %4718 = vmatprep.subr.bf16.mxu0 %v4065
        %4719 = vmatpush1.bf16.msra.mxu0 %v4064
        %4720 = vmatprep.subr.bf16.mxu0 %v4071
        %4721 = vmatpush1.bf16.msra.mxu0 %v4070
        %4722 = vmatprep.subr.bf16.mxu0 %v4077
        %4723 = vmatpush1.bf16.msra.mxu0 %v4076
        %4724 = vmatprep.subr.bf16.mxu0 %v4083
        %4725 = vmatpush1.bf16.msra.mxu0 %v4082
        %4726 = vmatprep.subr.bf16.mxu0 %v4089
        %4727 = vmatpush1.bf16.msra.mxu0 %v4088
        %4728 = vmatprep.subr.bf16.mxu0 %v4095
        %4729 = vmatpush1.bf16.msra.mxu0 %v4094
        %4730 = vmatprep.subr.bf16.mxu0 %v4101
        %4731 = vmatpush1.bf16.msra.mxu0 %v4100
        %4732 = vmatprep.mubr.bf16.mxu0 %v3027
        %4733 = vmatmul.mubr.bf16.gmra.mrb[0].mxu0 %v3026
        %v4734 = vpop.f32.mrb[0].mxu0
        %v4735 = vadd.f32 %v4682, %v4734
        %v4736 = vpop.f32.mrb[0].mxu0
        %v4737 = vadd.f32 %v4684, %v4736
        %v4738 = vpop.f32.mrb[0].mxu0
        %v4739 = vadd.f32 %v4686, %v4738
        %v4740 = vpop.f32.mrb[0].mxu0
        %v4741 = vadd.f32 %v4688, %v4740
        %4742 = vmatprep.mubr.bf16.mxu0 %v3033
        %4743 = vmatmul.mubr.bf16.gmra.mrb[0].mxu0 %v3032
        %v4744 = vpop.f32.mrb[0].mxu0
        %v4745 = vadd.f32 %v4692, %v4744
        %v4746 = vpop.f32.mrb[0].mxu0
        %v4747 = vadd.f32 %v4694, %v4746
        %v4748 = vpop.f32.mrb[0].mxu0
        %v4749 = vadd.f32 %v4696, %v4748
        %v4750 = vpop.f32.mrb[0].mxu0
        %v4751 = vadd.f32 %v4698, %v4750
        %4752 = vdwg.mxu0
        %4753 = vmatprep.subr.bf16.mxu0 %v4107
        %4754 = vmatpush1.bf16.msra.mxu0 %v4106
        %4755 = vmatprep.subr.bf16.mxu0 %v4113
        %4756 = vmatpush1.bf16.msra.mxu0 %v4112
        %4757 = vmatprep.subr.bf16.mxu0 %v4119
        %4758 = vmatpush1.bf16.msra.mxu0 %v4118
        %4759 = vmatprep.subr.bf16.mxu0 %v4125
        %4760 = vmatpush1.bf16.msra.mxu0 %v4124
        %4761 = vmatprep.subr.bf16.mxu0 %v4131
        %4762 = vmatpush1.bf16.msra.mxu0 %v4130
        %4763 = vmatprep.subr.bf16.mxu0 %v4137
        %4764 = vmatpush1.bf16.msra.mxu0 %v4136
        %4765 = vmatprep.subr.bf16.mxu0 %v4143
        %4766 = vmatpush1.bf16.msra.mxu0 %v4142
        %4767 = vmatprep.subr.bf16.mxu0 %v4149
        %4768 = vmatpush1.bf16.msra.mxu0 %v4148
        %4769 = vmatprep.subr.bf16.mxu0 %v4155
        %4770 = vmatpush1.bf16.msra.mxu0 %v4154
        %4771 = vmatprep.subr.bf16.mxu0 %v4161
        %4772 = vmatpush1.bf16.msra.mxu0 %v4160
        %4773 = vmatprep.subr.bf16.mxu0 %v4167
        %4774 = vmatpush1.bf16.msra.mxu0 %v4166
        %4775 = vmatprep.subr.bf16.mxu0 %v4173
        %4776 = vmatpush1.bf16.msra.mxu0 %v4172
        %4777 = vmatprep.subr.bf16.mxu0 %v4179
        %4778 = vmatpush1.bf16.msra.mxu0 %v4178
        %4779 = vmatprep.subr.bf16.mxu0 %v4185
        %4780 = vmatpush1.bf16.msra.mxu0 %v4184
        %4781 = vmatprep.subr.bf16.mxu0 %v4191
        %4782 = vmatpush1.bf16.msra.mxu0 %v4190
        %4783 = vmatprep.subr.bf16.mxu0 %v4197
        %4784 = vmatpush1.bf16.msra.mxu0 %v4196
        %4785 = vmatprep.mubr.bf16.mxu0 %v3029
        %4786 = vmatmul.mubr.bf16.gmra.mrb[0].mxu0 %v3028
        %v4787 = vpop.f32.mrb[0].mxu0
        %v4788 = vadd.f32 %v4735, %v4787
        %v4789 = vpop.f32.mrb[0].mxu0
        %v4790 = vadd.f32 %v4737, %v4789
        %v4791 = vpop.f32.mrb[0].mxu0
        %v4792 = vadd.f32 %v4739, %v4791
        %v4793 = vpop.f32.mrb[0].mxu0
        %v4794 = vadd.f32 %v4741, %v4793
        %4795 = vmatprep.mubr.bf16.mxu0 %v3035
        %4796 = vmatmul.mubr.bf16.gmra.mrb[0].mxu0 %v3034
        %v4797 = vpop.f32.mrb[0].mxu0
        %v4798 = vadd.f32 %v4745, %v4797
        %v4799 = vpop.f32.mrb[0].mxu0
        %v4800 = vadd.f32 %v4747, %v4799
        %v4801 = vpop.f32.mrb[0].mxu0
        %v4802 = vadd.f32 %v4749, %v4801
        %v4803 = vpop.f32.mrb[0].mxu0
        %v4804 = vadd.f32 %v4751, %v4803
        %4805 = vdwg.mxu0
        %4806 = vmatprep.subr.bf16.mxu0 %v3917
        %4807 = vmatpush1.bf16.msra.mxu0 %v3916
        %4808 = vmatprep.subr.bf16.mxu0 %v3923
        %4809 = vmatpush1.bf16.msra.mxu0 %v3922
        %4810 = vmatprep.subr.bf16.mxu0 %v3929
        %4811 = vmatpush1.bf16.msra.mxu0 %v3928
        %4812 = vmatprep.subr.bf16.mxu0 %v3935
        %4813 = vmatpush1.bf16.msra.mxu0 %v3934
        %4814 = vmatprep.subr.bf16.mxu0 %v3941
        %4815 = vmatpush1.bf16.msra.mxu0 %v3940
        %4816 = vmatprep.subr.bf16.mxu0 %v3947
        %4817 = vmatpush1.bf16.msra.mxu0 %v3946
        %4818 = vmatprep.subr.bf16.mxu0 %v3953
        %4819 = vmatpush1.bf16.msra.mxu0 %v3952
        %4820 = vmatprep.subr.bf16.mxu0 %v3959
        %4821 = vmatpush1.bf16.msra.mxu0 %v3958
        %4822 = vmatprep.subr.bf16.mxu0 %v3965
        %4823 = vmatpush1.bf16.msra.mxu0 %v3964
        %4824 = vmatprep.subr.bf16.mxu0 %v3971
        %4825 = vmatpush1.bf16.msra.mxu0 %v3970
        %4826 = vmatprep.subr.bf16.mxu0 %v3977
        %4827 = vmatpush1.bf16.msra.mxu0 %v3976
        %4828 = vmatprep.subr.bf16.mxu0 %v3983
        %4829 = vmatpush1.bf16.msra.mxu0 %v3982
        %4830 = vmatprep.subr.bf16.mxu0 %v3989
        %4831 = vmatpush1.bf16.msra.mxu0 %v3988
        %4832 = vmatprep.subr.bf16.mxu0 %v3995
        %4833 = vmatpush1.bf16.msra.mxu0 %v3994
        %4834 = vmatprep.subr.bf16.mxu0 %v4001
        %4835 = vmatpush1.bf16.msra.mxu0 %v4000
        %4836 = vmatprep.subr.bf16.mxu0 %v4007
        %4837 = vmatpush1.bf16.msra.mxu0 %v4006
        %4838 = vmatprep.mubr.bf16.mxu0 %v3025
        %4839 = vmatmul.mubr.bf16.gmra.mrb[0].mxu0 %v3024
        %v4840 = vpop.f32.mrb[0].mxu0
        %v4841 = vadd.f32 %v2970, %v4840
        %v4842 = vpop.f32.mrb[0].mxu0
        %v4843 = vadd.f32 %v2972, %v4842
        %v4844 = vpop.f32.mrb[0].mxu0
        %v4845 = vadd.f32 %v2974, %v4844
        %v4846 = vpop.f32.mrb[0].mxu0
        %v4847 = vadd.f32 %v2976, %v4846
        %4848 = vmatprep.mubr.bf16.mxu0 %v3031
        %4849 = vmatmul.mubr.bf16.gmra.mrb[0].mxu0 %v3030
        %v4850 = vpop.f32.mrb[0].mxu0
        %v4851 = vadd.f32 %v2980, %v4850
        %v4852 = vpop.f32.mrb[0].mxu0
        %v4853 = vadd.f32 %v2982, %v4852
        %v4854 = vpop.f32.mrb[0].mxu0
        %v4855 = vadd.f32 %v2984, %v4854
        %v4856 = vpop.f32.mrb[0].mxu0
        %v4857 = vadd.f32 %v2986, %v4856
        %4858 = vdwg.mxu0
        %4859 = vmatprep.subr.bf16.mxu0 %v4013
        %4860 = vmatpush1.bf16.msra.mxu0 %v4012
        %4861 = vmatprep.subr.bf16.mxu0 %v4019
        %4862 = vmatpush1.bf16.msra.mxu0 %v4018
        %4863 = vmatprep.subr.bf16.mxu0 %v4025
        %4864 = vmatpush1.bf16.msra.mxu0 %v4024
        %4865 = vmatprep.subr.bf16.mxu0 %v4031
        %4866 = vmatpush1.bf16.msra.mxu0 %v4030
        %4867 = vmatprep.subr.bf16.mxu0 %v4037
        %4868 = vmatpush1.bf16.msra.mxu0 %v4036
        %4869 = vmatprep.subr.bf16.mxu0 %v4043
        %4870 = vmatpush1.bf16.msra.mxu0 %v4042
        %4871 = vmatprep.subr.bf16.mxu0 %v4049
        %4872 = vmatpush1.bf16.msra.mxu0 %v4048
        %4873 = vmatprep.subr.bf16.mxu0 %v4055
        %4874 = vmatpush1.bf16.msra.mxu0 %v4054
        %4875 = vmatprep.subr.bf16.mxu0 %v4061
        %4876 = vmatpush1.bf16.msra.mxu0 %v4060
        %4877 = vmatprep.subr.bf16.mxu0 %v4067
        %4878 = vmatpush1.bf16.msra.mxu0 %v4066
        %4879 = vmatprep.subr.bf16.mxu0 %v4073
        %4880 = vmatpush1.bf16.msra.mxu0 %v4072
        %4881 = vmatprep.subr.bf16.mxu0 %v4079
        %4882 = vmatpush1.bf16.msra.mxu0 %v4078
        %4883 = vmatprep.subr.bf16.mxu0 %v4085
        %4884 = vmatpush1.bf16.msra.mxu0 %v4084
        %4885 = vmatprep.subr.bf16.mxu0 %v4091
        %4886 = vmatpush1.bf16.msra.mxu0 %v4090
        %4887 = vmatprep.subr.bf16.mxu0 %v4097
        %4888 = vmatpush1.bf16.msra.mxu0 %v4096
        %4889 = vmatprep.subr.bf16.mxu0 %v4103
        %4890 = vmatpush1.bf16.msra.mxu0 %v4102
        %4891 = vmatprep.mubr.bf16.mxu0 %v3027
        %4892 = vmatmul.mubr.bf16.gmra.mrb[0].mxu0 %v3026
        %v4893 = vpop.f32.mrb[0].mxu0
        %v4894 = vadd.f32 %v4841, %v4893
        %v4895 = vpop.f32.mrb[0].mxu0
        %v4896 = vadd.f32 %v4843, %v4895
        %v4897 = vpop.f32.mrb[0].mxu0
        %v4898 = vadd.f32 %v4845, %v4897
        %v4899 = vpop.f32.mrb[0].mxu0
        %v4900 = vadd.f32 %v4847, %v4899
        %4901 = vmatprep.mubr.bf16.mxu0 %v3033
        %4902 = vmatmul.mubr.bf16.gmra.mrb[0].mxu0 %v3032
        %v4903 = vpop.f32.mrb[0].mxu0
        %v4904 = vadd.f32 %v4851, %v4903
        %v4905 = vpop.f32.mrb[0].mxu0
        %v4906 = vadd.f32 %v4853, %v4905
        %v4907 = vpop.f32.mrb[0].mxu0
        %v4908 = vadd.f32 %v4855, %v4907
        %v4909 = vpop.f32.mrb[0].mxu0
        %v4910 = vadd.f32 %v4857, %v4909
        %4911 = vdwg.mxu0
        %4912 = vmatprep.subr.bf16.mxu0 %v4109
        %4913 = vmatpush1.bf16.msra.mxu0 %v4108
        %4914 = vmatprep.subr.bf16.mxu0 %v4115
        %4915 = vmatpush1.bf16.msra.mxu0 %v4114
        %4916 = vmatprep.subr.bf16.mxu0 %v4121
        %4917 = vmatpush1.bf16.msra.mxu0 %v4120
        %4918 = vmatprep.subr.bf16.mxu0 %v4127
        %4919 = vmatpush1.bf16.msra.mxu0 %v4126
        %4920 = vmatprep.subr.bf16.mxu0 %v4133
        %4921 = vmatpush1.bf16.msra.mxu0 %v4132
        %4922 = vmatprep.subr.bf16.mxu0 %v4139
        %4923 = vmatpush1.bf16.msra.mxu0 %v4138
        %4924 = vmatprep.subr.bf16.mxu0 %v4145
        %4925 = vmatpush1.bf16.msra.mxu0 %v4144
        %4926 = vmatprep.subr.bf16.mxu0 %v4151
        %4927 = vmatpush1.bf16.msra.mxu0 %v4150
        %4928 = vmatprep.subr.bf16.mxu0 %v4157
        %4929 = vmatpush1.bf16.msra.mxu0 %v4156
        %4930 = vmatprep.subr.bf16.mxu0 %v4163
        %4931 = vmatpush1.bf16.msra.mxu0 %v4162
        %4932 = vmatprep.subr.bf16.mxu0 %v4169
        %4933 = vmatpush1.bf16.msra.mxu0 %v4168
        %4934 = vmatprep.subr.bf16.mxu0 %v4175
        %4935 = vmatpush1.bf16.msra.mxu0 %v4174
        %4936 = vmatprep.subr.bf16.mxu0 %v4181
        %4937 = vmatpush1.bf16.msra.mxu0 %v4180
        %4938 = vmatprep.subr.bf16.mxu0 %v4187
        %4939 = vmatpush1.bf16.msra.mxu0 %v4186
        %4940 = vmatprep.subr.bf16.mxu0 %v4193
        %4941 = vmatpush1.bf16.msra.mxu0 %v4192
        %4942 = vmatprep.subr.bf16.mxu0 %v4199
        %4943 = vmatpush1.bf16.msra.mxu0 %v4198
        %4944 = vmatprep.mubr.bf16.mxu0 %v3029
        %4945 = vmatmul.mubr.bf16.gmra.mrb[0].mxu0 %v3028
        %v4946 = vpop.f32.mrb[0].mxu0
        %v4947 = vadd.f32 %v4894, %v4946
        %v4948 = vpop.f32.mrb[0].mxu0
        %v4949 = vadd.f32 %v4896, %v4948
        %v4950 = vpop.f32.mrb[0].mxu0
        %v4951 = vadd.f32 %v4898, %v4950
        %v4952 = vpop.f32.mrb[0].mxu0
        %v4953 = vadd.f32 %v4900, %v4952
        %4954 = vmatprep.mubr.bf16.mxu0 %v3035
        %4955 = vmatmul.mubr.bf16.gmra.mrb[0].mxu0 %v3034
        %v4956 = vpop.f32.mrb[0].mxu0
        %v4957 = vadd.f32 %v4904, %v4956
        %v4958 = vpop.f32.mrb[0].mxu0
        %v4959 = vadd.f32 %v4906, %v4958
        %v4960 = vpop.f32.mrb[0].mxu0
        %v4961 = vadd.f32 %v4908, %v4960
        %v4962 = vpop.f32.mrb[0].mxu0
        %v4963 = vadd.f32 %v4910, %v4962
        %4964 = vdwg.mxu0
        %v4965 = vld [vmem:[#allocation10] sm:$0x3f]
        %v4967 = vlaneseq
        %v4968 = vshrl.u32 %v4967, 7
        %v4969 = vsub.s32 0, %v4968
        %v4970 = vrot.slane %v4965, %v4969
        %v4971 = vlaneseq
        %v4972 = vshrl.u32 %v4971, 7
        %v4973 = vsub.s32 1, %v4972
        %v4974 = vrot.slane %v4965, %v4973
        %v4975 = vlaneseq
        %v4976 = vshrl.u32 %v4975, 7
        %v4977 = vsub.s32 2, %v4976
        %v4978 = vrot.slane %v4965, %v4977
        %v4979 = vlaneseq
        %v4980 = vshrl.u32 %v4979, 7
        %v4981 = vsub.s32 3, %v4980
        %v4982 = vrot.slane %v4965, %v4981
        %v4983 = vlaneseq
        %v4984 = vshrl.u32 %v4983, 7
        %v4985 = vsub.s32 4, %v4984
        %v4986 = vrot.slane %v4965, %v4985
        %v4987 = vlaneseq
        %v4988 = vshrl.u32 %v4987, 7
        %v4989 = vsub.s32 5, %v4988
        %v4990 = vrot.slane %v4965, %v4989
        %v4997 = vadd.f32 %v4629, %v4970
        %v4998 = vadd.f32 %v4631, %v4974
        %v4999 = vadd.f32 %v4788, %v4978
        %v5000 = vadd.f32 %v4790, %v4982
        %v5001 = vadd.f32 %v4947, %v4986
        %v5002 = vadd.f32 %v4949, %v4990
        %v5003 = vadd.f32 %v4633, %v4970
        %v5004 = vadd.f32 %v4635, %v4974
        %v5005 = vadd.f32 %v4792, %v4978
        %v5006 = vadd.f32 %v4794, %v4982
        %v5007 = vadd.f32 %v4951, %v4986
        %v5008 = vadd.f32 %v4953, %v4990
        %v5009 = vadd.f32 %v4639, %v4970
        %v5010 = vadd.f32 %v4641, %v4974
        %v5011 = vadd.f32 %v4798, %v4978
        %v5012 = vadd.f32 %v4800, %v4982
        %v5013 = vadd.f32 %v4957, %v4986
        %v5014 = vadd.f32 %v4959, %v4990
        %v5015 = vadd.f32 %v4643, %v4970
        %v5016 = vadd.f32 %v4645, %v4974
        %v5017 = vadd.f32 %v4802, %v4978
        %v5018 = vadd.f32 %v4804, %v4982
        %v5019 = vadd.f32 %v4961, %v4986
        %v5020 = vadd.f32 %v4963, %v4990
        %v5021 = vmax.f32 %v4997, 0.0
        %v5022 = vmax.f32 %v4998, 0.0
        %v5023 = vmax.f32 %v4999, 0.0
        %v5024 = vmax.f32 %v5000, 0.0
        %v5025 = vmax.f32 %v5001, 0.0
        %v5026 = vmax.f32 %v5002, 0.0
        %v5027 = vmax.f32 %v5003, 0.0
        %v5028 = vmax.f32 %v5004, 0.0
        %v5029 = vmax.f32 %v5005, 0.0
        %v5030 = vmax.f32 %v5006, 0.0
        %v5031 = vmax.f32 %v5007, 0.0
        %v5032 = vmax.f32 %v5008, 0.0
        %v5033 = vmax.f32 %v5009, 0.0
        %v5034 = vmax.f32 %v5010, 0.0
        %v5035 = vmax.f32 %v5011, 0.0
        %v5036 = vmax.f32 %v5012, 0.0
        %v5037 = vmax.f32 %v5013, 0.0
        %v5038 = vmax.f32 %v5014, 0.0
        %v5039 = vmax.f32 %v5015, 0.0
        %v5040 = vmax.f32 %v5016, 0.0
        %v5041 = vmax.f32 %v5017, 0.0
        %v5042 = vmax.f32 %v5018, 0.0
        %v5043 = vmax.f32 %v5019, 0.0
        %v5044 = vmax.f32 %v5020, 0.0
        %v5045 = vpack.c.bf16 %v5027, %v5021
        %v5046 = vpack.c.bf16 %v5028, %v5022
        %v5047 = vpack.c.bf16 %v5029, %v5023
        %v5048 = vpack.c.bf16 %v5030, %v5024
        %v5049 = vpack.c.bf16 %v5031, %v5025
        %v5050 = vpack.c.bf16 %v5032, %v5026
        %v5051 = vpack.c.bf16 %v5039, %v5033
        %v5052 = vpack.c.bf16 %v5040, %v5034
        %v5053 = vpack.c.bf16 %v5041, %v5035
        %v5054 = vpack.c.bf16 %v5042, %v5036
        %v5055 = vpack.c.bf16 %v5043, %v5037
        %v5056 = vpack.c.bf16 %v5044, %v5038
        %v5057 = vld [vmem:[#allocation11] sm:$0xf]
        %v5058 = vld [vmem:[#allocation11 + $0x4] sm:$0xf]
        %v5059 = vld [vmem:[#allocation11 + $0x8] sm:$0xf]
        %v5060 = vld [vmem:[#allocation11 + $0xc] sm:$0xf]
        %v5061 = vld [vmem:[#allocation11 + $0x10] sm:$0xf]
        %v5062 = vld [vmem:[#allocation11 + $0x14] sm:$0xf]
        %v5063 = vld [vmem:[#allocation11 + $0x18] sm:$0xf]
        %v5064 = vld [vmem:[#allocation11 + $0x1c] sm:$0xf]
        %v5065 = vld [vmem:[#allocation11 + $0x20] sm:$0xf]
        %v5066 = vld [vmem:[#allocation11 + $0x24] sm:$0xf]
        %v5067 = vld [vmem:[#allocation11 + $0x28] sm:$0xf]
        %v5068 = vld [vmem:[#allocation11 + $0x2c] sm:$0xf]
        %v5069 = vld [vmem:[#allocation11 + $0x30] sm:$0xf]
        %v5070 = vld [vmem:[#allocation11 + $0x34] sm:$0xf]
        %v5071 = vld [vmem:[#allocation11 + $0x38] sm:$0xf]
        %v5072 = vld [vmem:[#allocation11 + $0x3c] sm:$0xf]
        %v5073 = vld [vmem:[#allocation11 + $0x40] sm:$0xf]
        %v5074 = vld [vmem:[#allocation11 + $0x44] sm:$0xf]
        %v5075 = vld [vmem:[#allocation11 + $0x48] sm:$0xf]
        %v5076 = vld [vmem:[#allocation11 + $0x4c] sm:$0xf]
        %v5077 = vld [vmem:[#allocation11 + $0x50] sm:$0xf]
        %v5078 = vld [vmem:[#allocation11 + $0x54] sm:$0xf]
        %v5079 = vld [vmem:[#allocation11 + $0x58] sm:$0xf]
        %v5080 = vld [vmem:[#allocation11 + $0x5c] sm:$0xf]
        %v5081 = vld [vmem:[#allocation11 + $0x60] sm:$0xf]
        %v5082 = vld [vmem:[#allocation11 + $0x64] sm:$0xf]
        %v5083 = vld [vmem:[#allocation11 + $0x68] sm:$0xf]
        %v5084 = vld [vmem:[#allocation11 + $0x6c] sm:$0xf]
        %v5085 = vld [vmem:[#allocation11 + $0x70] sm:$0xf]
        %v5086 = vld [vmem:[#allocation11 + $0x74] sm:$0xf]
        %v5087 = vld [vmem:[#allocation11 + $0x78] sm:$0xf]
        %v5088 = vld [vmem:[#allocation11 + $0x7c] sm:$0xf]
        %v5089 = vld [vmem:[#allocation11 + $0x80] sm:$0xf]
        %v5090 = vld [vmem:[#allocation11 + $0x84] sm:$0xf]
        %v5091 = vld [vmem:[#allocation11 + $0x88] sm:$0xf]
        %v5092 = vld [vmem:[#allocation11 + $0x8c] sm:$0xf]
        %v5093 = vld [vmem:[#allocation11 + $0x90] sm:$0xf]
        %v5094 = vld [vmem:[#allocation11 + $0x94] sm:$0xf]
        %v5095 = vld [vmem:[#allocation11 + $0x98] sm:$0xf]
        %v5096 = vld [vmem:[#allocation11 + $0x9c] sm:$0xf]
        %v5097 = vld [vmem:[#allocation11 + $0xa0] sm:$0xf]
        %v5098 = vld [vmem:[#allocation11 + $0xa4] sm:$0xf]
        %v5099 = vld [vmem:[#allocation11 + $0xa8] sm:$0xf]
        %v5100 = vld [vmem:[#allocation11 + $0xac] sm:$0xf]
        %v5101 = vld [vmem:[#allocation11 + $0xb0] sm:$0xf]
        %v5102 = vld [vmem:[#allocation11 + $0xb4] sm:$0xf]
        %v5103 = vld [vmem:[#allocation11 + $0xb8] sm:$0xf]
        %v5104 = vld [vmem:[#allocation11 + $0xbc] sm:$0xf]
        %v5105 = vld [vmem:[#allocation11 + $0xc0] sm:$0xf]
        %v5106 = vld [vmem:[#allocation11 + $0xc4] sm:$0xf]
        %v5107 = vld [vmem:[#allocation11 + $0xc8] sm:$0xf]
        %v5108 = vld [vmem:[#allocation11 + $0xcc] sm:$0xf]
        %v5109 = vld [vmem:[#allocation11 + $0xd0] sm:$0xf]
        %v5110 = vld [vmem:[#allocation11 + $0xd4] sm:$0xf]
        %v5111 = vld [vmem:[#allocation11 + $0xd8] sm:$0xf]
        %v5112 = vld [vmem:[#allocation11 + $0xdc] sm:$0xf]
        %v5113 = vld [vmem:[#allocation11 + $0xe0] sm:$0xf]
        %v5114 = vld [vmem:[#allocation11 + $0xe4] sm:$0xf]
        %v5115 = vld [vmem:[#allocation11 + $0xe8] sm:$0xf]
        %v5116 = vld [vmem:[#allocation11 + $0xec] sm:$0xf]
        %v5117 = vld [vmem:[#allocation11 + $0xf0] sm:$0xf]
        %v5118 = vld [vmem:[#allocation11 + $0xf4] sm:$0xf]
        %v5119 = vld [vmem:[#allocation11 + $0xf8] sm:$0xf]
        %v5120 = vld [vmem:[#allocation11 + $0xfc] sm:$0xf]
        %v5121 = vld [vmem:[#allocation11 + $0x100] sm:$0xf]
        %v5122 = vld [vmem:[#allocation11 + $0x104] sm:$0xf]
        %v5123 = vld [vmem:[#allocation11 + $0x108] sm:$0xf]
        %v5124 = vld [vmem:[#allocation11 + $0x10c] sm:$0xf]
        %v5125 = vld [vmem:[#allocation11 + $0x110] sm:$0xf]
        %v5126 = vld [vmem:[#allocation11 + $0x114] sm:$0xf]
        %v5127 = vld [vmem:[#allocation11 + $0x118] sm:$0xf]
        %v5128 = vld [vmem:[#allocation11 + $0x11c] sm:$0xf]
        %v5129 = vld [vmem:[#allocation11 + $0x120] sm:$0xf]
        %v5130 = vld [vmem:[#allocation11 + $0x124] sm:$0xf]
        %v5131 = vld [vmem:[#allocation11 + $0x128] sm:$0xf]
        %v5132 = vld [vmem:[#allocation11 + $0x12c] sm:$0xf]
        %v5133 = vld [vmem:[#allocation11 + $0x130] sm:$0xf]
        %v5134 = vld [vmem:[#allocation11 + $0x134] sm:$0xf]
        %v5135 = vld [vmem:[#allocation11 + $0x138] sm:$0xf]
        %v5136 = vld [vmem:[#allocation11 + $0x13c] sm:$0xf]
        %v5137 = vld [vmem:[#allocation11 + $0x140] sm:$0xf]
        %v5138 = vld [vmem:[#allocation11 + $0x144] sm:$0xf]
        %v5139 = vld [vmem:[#allocation11 + $0x148] sm:$0xf]
        %v5140 = vld [vmem:[#allocation11 + $0x14c] sm:$0xf]
        %v5141 = vld [vmem:[#allocation11 + $0x150] sm:$0xf]
        %v5142 = vld [vmem:[#allocation11 + $0x154] sm:$0xf]
        %v5143 = vld [vmem:[#allocation11 + $0x158] sm:$0xf]
        %v5144 = vld [vmem:[#allocation11 + $0x15c] sm:$0xf]
        %v5145 = vld [vmem:[#allocation11 + $0x160] sm:$0xf]
        %v5146 = vld [vmem:[#allocation11 + $0x164] sm:$0xf]
        %v5147 = vld [vmem:[#allocation11 + $0x168] sm:$0xf]
        %v5148 = vld [vmem:[#allocation11 + $0x16c] sm:$0xf]
        %v5149 = vld [vmem:[#allocation11 + $0x170] sm:$0xf]
        %v5150 = vld [vmem:[#allocation11 + $0x174] sm:$0xf]
        %v5151 = vld [vmem:[#allocation11 + $0x178] sm:$0xf]
        %v5152 = vld [vmem:[#allocation11 + $0x17c] sm:$0xf]
        %v5153 = vld [vmem:[#allocation13] sm:$0x1]
        %v5155 = vlaneseq
        %v5156 = vshrl.u32 %v5155, 7
        %v5157 = vsub.s32 0, %v5156
        %v5158 = vrot.slane %v5153, %v5157
        %v5256 = vunpack.c.l.b16 %v5057
        %v5257 = vunpack.c.l.b16 %v5058
        %v5258 = vunpack.c.l.b16 %v5059
        %v5259 = vunpack.c.l.b16 %v5060
        %v5260 = vunpack.c.l.b16 %v5061
        %v5261 = vunpack.c.l.b16 %v5062
        %v5262 = vunpack.c.l.b16 %v5063
        %v5263 = vunpack.c.l.b16 %v5064
        %v5264 = vunpack.c.l.b16 %v5065
        %v5265 = vunpack.c.l.b16 %v5066
        %v5266 = vunpack.c.l.b16 %v5067
        %v5267 = vunpack.c.l.b16 %v5068
        %v5268 = vunpack.c.l.b16 %v5069
        %v5269 = vunpack.c.l.b16 %v5070
        %v5270 = vunpack.c.l.b16 %v5071
        %v5271 = vunpack.c.l.b16 %v5072
        %v5272 = vunpack.c.l.b16 %v5073
        %v5273 = vunpack.c.l.b16 %v5074
        %v5274 = vunpack.c.l.b16 %v5075
        %v5275 = vunpack.c.l.b16 %v5076
        %v5276 = vunpack.c.l.b16 %v5077
        %v5277 = vunpack.c.l.b16 %v5078
        %v5278 = vunpack.c.l.b16 %v5079
        %v5279 = vunpack.c.l.b16 %v5080
        %v5280 = vunpack.c.l.b16 %v5081
        %v5281 = vunpack.c.l.b16 %v5082
        %v5282 = vunpack.c.l.b16 %v5083
        %v5283 = vunpack.c.l.b16 %v5084
        %v5284 = vunpack.c.l.b16 %v5085
        %v5285 = vunpack.c.l.b16 %v5086
        %v5286 = vunpack.c.l.b16 %v5087
        %v5287 = vunpack.c.l.b16 %v5088
        %v5288 = vunpack.c.l.b16 %v5089
        %v5289 = vunpack.c.l.b16 %v5090
        %v5290 = vunpack.c.l.b16 %v5091
        %v5291 = vunpack.c.l.b16 %v5092
        %v5292 = vunpack.c.l.b16 %v5093
        %v5293 = vunpack.c.l.b16 %v5094
        %v5294 = vunpack.c.l.b16 %v5095
        %v5295 = vunpack.c.l.b16 %v5096
        %v5296 = vunpack.c.l.b16 %v5097
        %v5297 = vunpack.c.l.b16 %v5098
        %v5298 = vunpack.c.l.b16 %v5099
        %v5299 = vunpack.c.l.b16 %v5100
        %v5300 = vunpack.c.l.b16 %v5101
        %v5301 = vunpack.c.l.b16 %v5102
        %v5302 = vunpack.c.l.b16 %v5103
        %v5303 = vunpack.c.l.b16 %v5104
        %v5304 = vunpack.c.l.b16 %v5105
        %v5305 = vunpack.c.l.b16 %v5106
        %v5306 = vunpack.c.l.b16 %v5107
        %v5307 = vunpack.c.l.b16 %v5108
        %v5308 = vunpack.c.l.b16 %v5109
        %v5309 = vunpack.c.l.b16 %v5110
        %v5310 = vunpack.c.l.b16 %v5111
        %v5311 = vunpack.c.l.b16 %v5112
        %v5312 = vunpack.c.l.b16 %v5113
        %v5313 = vunpack.c.l.b16 %v5114
        %v5314 = vunpack.c.l.b16 %v5115
        %v5315 = vunpack.c.l.b16 %v5116
        %v5316 = vunpack.c.l.b16 %v5117
        %v5317 = vunpack.c.l.b16 %v5118
        %v5318 = vunpack.c.l.b16 %v5119
        %v5319 = vunpack.c.l.b16 %v5120
        %v5320 = vunpack.c.l.b16 %v5121
        %v5321 = vunpack.c.l.b16 %v5122
        %v5322 = vunpack.c.l.b16 %v5123
        %v5323 = vunpack.c.l.b16 %v5124
        %v5324 = vunpack.c.l.b16 %v5125
        %v5325 = vunpack.c.l.b16 %v5126
        %v5326 = vunpack.c.l.b16 %v5127
        %v5327 = vunpack.c.l.b16 %v5128
        %v5328 = vunpack.c.l.b16 %v5129
        %v5329 = vunpack.c.l.b16 %v5130
        %v5330 = vunpack.c.l.b16 %v5131
        %v5331 = vunpack.c.l.b16 %v5132
        %v5332 = vunpack.c.l.b16 %v5133
        %v5333 = vunpack.c.l.b16 %v5134
        %v5334 = vunpack.c.l.b16 %v5135
        %v5335 = vunpack.c.l.b16 %v5136
        %v5336 = vunpack.c.l.b16 %v5137
        %v5337 = vunpack.c.l.b16 %v5138
        %v5338 = vunpack.c.l.b16 %v5139
        %v5339 = vunpack.c.l.b16 %v5140
        %v5340 = vunpack.c.l.b16 %v5141
        %v5341 = vunpack.c.l.b16 %v5142
        %v5342 = vunpack.c.l.b16 %v5143
        %v5343 = vunpack.c.l.b16 %v5144
        %v5344 = vunpack.c.l.b16 %v5145
        %v5345 = vunpack.c.l.b16 %v5146
        %v5346 = vunpack.c.l.b16 %v5147
        %v5347 = vunpack.c.l.b16 %v5148
        %v5348 = vunpack.c.l.b16 %v5149
        %v5349 = vunpack.c.l.b16 %v5150
        %v5350 = vunpack.c.l.b16 %v5151
        %v5351 = vunpack.c.l.b16 %v5152
        %v5352 = vpack.c.b16 %v5257, %v5256
        %v5353 = vpack.c.b16 %v5259, %v5258
        %v5354 = vpack.c.b16 %v5261, %v5260
        %v5355 = vpack.c.b16 %v5263, %v5262
        %v5356 = vpack.c.b16 %v5265, %v5264
        %v5357 = vpack.c.b16 %v5267, %v5266
        %v5358 = vpack.c.b16 %v5269, %v5268
        %v5359 = vpack.c.b16 %v5271, %v5270
        %v5360 = vpack.c.b16 %v5273, %v5272
        %v5361 = vpack.c.b16 %v5275, %v5274
        %v5362 = vpack.c.b16 %v5277, %v5276
        %v5363 = vpack.c.b16 %v5279, %v5278
        %v5364 = vpack.c.b16 %v5281, %v5280
        %v5365 = vpack.c.b16 %v5283, %v5282
        %v5366 = vpack.c.b16 %v5285, %v5284
        %v5367 = vpack.c.b16 %v5287, %v5286
        %v5368 = vpack.c.b16 %v5289, %v5288
        %v5369 = vpack.c.b16 %v5291, %v5290
        %v5370 = vpack.c.b16 %v5293, %v5292
        %v5371 = vpack.c.b16 %v5295, %v5294
        %v5372 = vpack.c.b16 %v5297, %v5296
        %v5373 = vpack.c.b16 %v5299, %v5298
        %v5374 = vpack.c.b16 %v5301, %v5300
        %v5375 = vpack.c.b16 %v5303, %v5302
        %v5376 = vpack.c.b16 %v5305, %v5304
        %v5377 = vpack.c.b16 %v5307, %v5306
        %v5378 = vpack.c.b16 %v5309, %v5308
        %v5379 = vpack.c.b16 %v5311, %v5310
        %v5380 = vpack.c.b16 %v5313, %v5312
        %v5381 = vpack.c.b16 %v5315, %v5314
        %v5382 = vpack.c.b16 %v5317, %v5316
        %v5383 = vpack.c.b16 %v5319, %v5318
        %v5384 = vpack.c.b16 %v5321, %v5320
        %v5385 = vpack.c.b16 %v5323, %v5322
        %v5386 = vpack.c.b16 %v5325, %v5324
        %v5387 = vpack.c.b16 %v5327, %v5326
        %v5388 = vpack.c.b16 %v5329, %v5328
        %v5389 = vpack.c.b16 %v5331, %v5330
        %v5390 = vpack.c.b16 %v5333, %v5332
        %v5391 = vpack.c.b16 %v5335, %v5334
        %v5392 = vpack.c.b16 %v5337, %v5336
        %v5393 = vpack.c.b16 %v5339, %v5338
        %v5394 = vpack.c.b16 %v5341, %v5340
        %v5395 = vpack.c.b16 %v5343, %v5342
        %v5396 = vpack.c.b16 %v5345, %v5344
        %v5397 = vpack.c.b16 %v5347, %v5346
        %v5398 = vpack.c.b16 %v5349, %v5348
        %v5399 = vpack.c.b16 %v5351, %v5350
        %5448 = vmatprep.subr.bf16.mxu0 0
        %5449 = vmatpush1.bf16.msra.mxu0 %v5352
        %5450 = vmatprep.subr.bf16.mxu0 0
        %5451 = vmatpush1.bf16.msra.mxu0 %v5353
        %5452 = vmatprep.subr.bf16.mxu0 0
        %5453 = vmatpush1.bf16.msra.mxu0 %v5354
        %5454 = vmatprep.subr.bf16.mxu0 0
        %5455 = vmatpush1.bf16.msra.mxu0 %v5355
        %5456 = vmatprep.subr.bf16.mxu0 0
        %5457 = vmatpush1.bf16.msra.mxu0 %v5356
        %5458 = vmatprep.subr.bf16.mxu0 0
        %5459 = vmatpush1.bf16.msra.mxu0 %v5357
        %5460 = vmatprep.subr.bf16.mxu0 0
        %5461 = vmatpush1.bf16.msra.mxu0 %v5358
        %5462 = vmatprep.subr.bf16.mxu0 0
        %5463 = vmatpush1.bf16.msra.mxu0 %v5359
        %5464 = vmatprep.subr.bf16.mxu0 0
        %5465 = vmatpush1.bf16.msra.mxu0 %v5360
        %5466 = vmatprep.subr.bf16.mxu0 0
        %5467 = vmatpush1.bf16.msra.mxu0 %v5361
        %5468 = vmatprep.subr.bf16.mxu0 0
        %5469 = vmatpush1.bf16.msra.mxu0 %v5362
        %5470 = vmatprep.subr.bf16.mxu0 0
        %5471 = vmatpush1.bf16.msra.mxu0 %v5363
        %5472 = vmatprep.subr.bf16.mxu0 0
        %5473 = vmatpush1.bf16.msra.mxu0 %v5364
        %5474 = vmatprep.subr.bf16.mxu0 0
        %5475 = vmatpush1.bf16.msra.mxu0 %v5365
        %5476 = vmatprep.subr.bf16.mxu0 0
        %5477 = vmatpush1.bf16.msra.mxu0 %v5366
        %5478 = vmatprep.subr.bf16.mxu0 0
        %5479 = vmatpush1.bf16.msra.mxu0 %v5367
        %5480 = vmatprep.mubr.bf16.mxu0 %v5046
        %5481 = vmatmul.mubr.bf16.gmra.mrb[0].mxu0 %v5045
        %v5482 = vpop.f32.mrb[0].mxu0
        %v5483 = vadd.f32 %v5158, %v5482
        %v5484 = vpop.f32.mrb[0].mxu0
        %v5485 = vpop.f32.mrb[0].mxu0
        %v5486 = vadd.f32 %v5158, %v5485
        %v5487 = vpop.f32.mrb[0].mxu0
        %5488 = vmatprep.mubr.bf16.mxu0 %v5052
        %5489 = vmatmul.mubr.bf16.gmra.mrb[0].mxu0 %v5051
        %v5490 = vpop.f32.mrb[0].mxu0
        %v5491 = vadd.f32 %v5158, %v5490
        %v5492 = vpop.f32.mrb[0].mxu0
        %v5493 = vpop.f32.mrb[0].mxu0
        %v5494 = vadd.f32 %v5158, %v5493
        %v5495 = vpop.f32.mrb[0].mxu0
        %5496 = vdwg.mxu0
        %5497 = vmatprep.subr.bf16.mxu0 0
        %5498 = vmatpush1.bf16.msra.mxu0 %v5368
        %5499 = vmatprep.subr.bf16.mxu0 0
        %5500 = vmatpush1.bf16.msra.mxu0 %v5369
        %5501 = vmatprep.subr.bf16.mxu0 0
        %5502 = vmatpush1.bf16.msra.mxu0 %v5370
        %5503 = vmatprep.subr.bf16.mxu0 0
        %5504 = vmatpush1.bf16.msra.mxu0 %v5371
        %5505 = vmatprep.subr.bf16.mxu0 0
        %5506 = vmatpush1.bf16.msra.mxu0 %v5372
        %5507 = vmatprep.subr.bf16.mxu0 0
        %5508 = vmatpush1.bf16.msra.mxu0 %v5373
        %5509 = vmatprep.subr.bf16.mxu0 0
        %5510 = vmatpush1.bf16.msra.mxu0 %v5374
        %5511 = vmatprep.subr.bf16.mxu0 0
        %5512 = vmatpush1.bf16.msra.mxu0 %v5375
        %5513 = vmatprep.subr.bf16.mxu0 0
        %5514 = vmatpush1.bf16.msra.mxu0 %v5376
        %5515 = vmatprep.subr.bf16.mxu0 0
        %5516 = vmatpush1.bf16.msra.mxu0 %v5377
        %5517 = vmatprep.subr.bf16.mxu0 0
        %5518 = vmatpush1.bf16.msra.mxu0 %v5378
        %5519 = vmatprep.subr.bf16.mxu0 0
        %5520 = vmatpush1.bf16.msra.mxu0 %v5379
        %5521 = vmatprep.subr.bf16.mxu0 0
        %5522 = vmatpush1.bf16.msra.mxu0 %v5380
        %5523 = vmatprep.subr.bf16.mxu0 0
        %5524 = vmatpush1.bf16.msra.mxu0 %v5381
        %5525 = vmatprep.subr.bf16.mxu0 0
        %5526 = vmatpush1.bf16.msra.mxu0 %v5382
        %5527 = vmatprep.subr.bf16.mxu0 0
        %5528 = vmatpush1.bf16.msra.mxu0 %v5383
        %5529 = vmatprep.mubr.bf16.mxu0 %v5048
        %5530 = vmatmul.mubr.bf16.gmra.mrb[0].mxu0 %v5047
        %v5531 = vpop.f32.mrb[0].mxu0
        %v5532 = vadd.f32 %v5483, %v5531
        %v5533 = vpop.f32.mrb[0].mxu0
        %v5534 = vpop.f32.mrb[0].mxu0
        %v5535 = vadd.f32 %v5486, %v5534
        %v5536 = vpop.f32.mrb[0].mxu0
        %5537 = vmatprep.mubr.bf16.mxu0 %v5054
        %5538 = vmatmul.mubr.bf16.gmra.mrb[0].mxu0 %v5053
        %v5539 = vpop.f32.mrb[0].mxu0
        %v5540 = vadd.f32 %v5491, %v5539
        %v5541 = vpop.f32.mrb[0].mxu0
        %v5542 = vpop.f32.mrb[0].mxu0
        %v5543 = vadd.f32 %v5494, %v5542
        %v5544 = vpop.f32.mrb[0].mxu0
        %5545 = vdwg.mxu0
        %5546 = vmatprep.subr.bf16.mxu0 0
        %5547 = vmatpush1.bf16.msra.mxu0 %v5384
        %5548 = vmatprep.subr.bf16.mxu0 0
        %5549 = vmatpush1.bf16.msra.mxu0 %v5385
        %5550 = vmatprep.subr.bf16.mxu0 0
        %5551 = vmatpush1.bf16.msra.mxu0 %v5386
        %5552 = vmatprep.subr.bf16.mxu0 0
        %5553 = vmatpush1.bf16.msra.mxu0 %v5387
        %5554 = vmatprep.subr.bf16.mxu0 0
        %5555 = vmatpush1.bf16.msra.mxu0 %v5388
        %5556 = vmatprep.subr.bf16.mxu0 0
        %5557 = vmatpush1.bf16.msra.mxu0 %v5389
        %5558 = vmatprep.subr.bf16.mxu0 0
        %5559 = vmatpush1.bf16.msra.mxu0 %v5390
        %5560 = vmatprep.subr.bf16.mxu0 0
        %5561 = vmatpush1.bf16.msra.mxu0 %v5391
        %5562 = vmatprep.subr.bf16.mxu0 0
        %5563 = vmatpush1.bf16.msra.mxu0 %v5392
        %5564 = vmatprep.subr.bf16.mxu0 0
        %5565 = vmatpush1.bf16.msra.mxu0 %v5393
        %5566 = vmatprep.subr.bf16.mxu0 0
        %5567 = vmatpush1.bf16.msra.mxu0 %v5394
        %5568 = vmatprep.subr.bf16.mxu0 0
        %5569 = vmatpush1.bf16.msra.mxu0 %v5395
        %5570 = vmatprep.subr.bf16.mxu0 0
        %5571 = vmatpush1.bf16.msra.mxu0 %v5396
        %5572 = vmatprep.subr.bf16.mxu0 0
        %5573 = vmatpush1.bf16.msra.mxu0 %v5397
        %5574 = vmatprep.subr.bf16.mxu0 0
        %5575 = vmatpush1.bf16.msra.mxu0 %v5398
        %5576 = vmatprep.subr.bf16.mxu0 0
        %5577 = vmatpush1.bf16.msra.mxu0 %v5399
        %5578 = vmatprep.mubr.bf16.mxu0 %v5050
        %5579 = vmatmul.mubr.bf16.gmra.mrb[0].mxu0 %v5049
        %v5580 = vpop.f32.mrb[0].mxu0
        %v5581 = vadd.f32 %v5532, %v5580
        %v5582 = vpop.f32.mrb[0].mxu0
        %v5583 = vpop.f32.mrb[0].mxu0
        %v5584 = vadd.f32 %v5535, %v5583
        %v5585 = vpop.f32.mrb[0].mxu0
        %5586 = vmatprep.mubr.bf16.mxu0 %v5056
        %5587 = vmatmul.mubr.bf16.gmra.mrb[0].mxu0 %v5055
        %v5588 = vpop.f32.mrb[0].mxu0
        %v5589 = vadd.f32 %v5540, %v5588
        %v5590 = vpop.f32.mrb[0].mxu0
        %v5591 = vpop.f32.mrb[0].mxu0
        %v5592 = vadd.f32 %v5543, %v5591
        %v5593 = vpop.f32.mrb[0].mxu0
        %5594 = vdwg.mxu0
        %v5595 = vpack.c.bf16 %v5584, %v5581
        %v5596 = vpack.c.bf16 %v5592, %v5589
        %v5599 = vunpack.c.l.b16 %v5595
        %v5600 = vunpack.c.h.b16 %v5595
        %v5601 = vunpack.c.l.b16 %v5596
        %v5602 = vunpack.c.h.b16 %v5596
        %v5603 = vpack.c.b16 %v5599, %v5599
        %v5604 = vpack.c.b16 %v5600, %v5600
        %v5605 = vpack.c.b16 %v5601, %v5601
        %v5606 = vpack.c.b16 %v5602, %v5602
        %5611 = vst [vmem:[%s406] sm:$0xf] %v5603
        %5612 = vst [vmem:[%s406 + $0x4] sm:$0xf] %v5604
        %5613 = vst [vmem:[%s406 + $0x8] sm:$0xf] %v5605
        %5614 = vst [vmem:[%s406 + $0xc] sm:$0xf] %v5606
        %s5615 = sand.u32 %s194, 1
        %s5616 = scalar_lea.sflag [#allocation4], %s5615
        %s5617 = sand.u32 %s194, 1
        %s5618 = smul.addr %s5617, 16
        %s5619 = scalar_lea.vmem [#allocation14], %s5618
        // Predicated region
        $region77: #{tpu_custom_call.1} parent=47 // pred_check
          %p5620 = pneg %p204
        $region78: #{tpu_custom_call.1} parent=47 // pred_check_branch
          %5622 = sbr.rel (%p5620) target = $region80
        $region79: #{tpu_custom_call.1} parent=47 // pred_region
          %s5623 = smul.u32 4, %s29
          %s5625 = ssub.s32 256, 256
          %5626 = vsyncadd %s5616, %s5625
          %s5627 = smul.addr %s5623, 64
          %s5628 = scalar_lea.hbm %s7, %s5627
          %s5629 = sshll.u32 %s5619, 4
          %s5630 = int_to_ptr.vmem [resolvable:$true] %s5629
          %5635 = dma.vmem_to_hbm [thread:$0]  %s5630, 256, %s5628, %s5616, 64, 64, 4
        $region80: #{tpu_custom_call.1} parent=47 // pred_fallthru
          _
      $region48: #{tpu_custom_call.1} parent=5 // pred_fallthru
        _
      %p5636 = scmp.le.s32.totalorder 2, %s24
      // Predicated region
      $region81: #{tpu_custom_call.1} parent=5 // pred_check
        %p5637 = pneg %p5636
      $region82: #{tpu_custom_call.1} parent=5 // pred_check_branch
        %5639 = sbr.rel (%p5637) target = $region84
      $region83: #{tpu_custom_call.1} parent=5 // pred_region
        %s5640 = ssub.s32 %s24, 2
        // Predicated region
        $region85: #{tpu_custom_call.1} parent=83 // pred_check
          %p5641 = pneg %p210
        $region86: #{tpu_custom_call.1} parent=83 // pred_check_branch
          %5643 = sbr.rel (%p5641) target = $region88
        $region87: #{tpu_custom_call.1} parent=83 // pred_region
          %s5644 = sand.u32 %s195, 1
          %s5645 = scalar_lea.sflag [#allocation4], %s5644
          %s5646 = sand.u32 %s195, 1
          %s5647 = smul.addr %s5646, 16
          %s5648 = scalar_lea.vmem [#allocation14], %s5647
          %5649 = dma.done %s5645, 256
        $region88: #{tpu_custom_call.1} parent=83 // pred_fallthru
          _
      $region84: #{tpu_custom_call.1} parent=5 // pred_fallthru
        _
    $region6: #{tpu_custom_call.1} parent=1 // loop_footer
      %s28 = sadd.s32 1, %s24
    $region7: #{tpu_custom_call.1} parent=1 // loop_footer_branch
      %23 = sbr.rel target = $region3
    $region8: #{tpu_custom_call.1} parent=1 // loop_exit
      _
    %5650 = vsyncpa [#allocation3], 1
    %s5651 = scalar_lea.sflag [#allocation3], 1
    %5652 = vsyncpa %s5651, 1
    %5653 = vsyncpa [#allocation6], 1
    %s5654 = scalar_lea.sflag [#allocation6], 1
    %5655 = vsyncpa %s5654, 1
    %5656 = vsyncpa [#allocation9], 1
    %5657 = vsyncpa [#allocation12], 1
    %5658 = vsyncpa [#allocation4], 1
    %s5659 = scalar_lea.sflag [#allocation4], 1
    %5660 = vsyncpa %s5659, 1

</llo_original>
